<compile_context>
chip_gen: v6e
topology: v6e:2x2x1
jax: 0.10.0
libtpu: 0.0.40
codegen_flags: <defaults>
</compile_context>

<pallas_src>
import functools
import math

import jax
import jax.numpy as jnp
from jax import lax
from jax.experimental import pallas as pl
from jax.experimental.pallas import tpu as pltpu

HIDDEN = 32           # __C.HIDDEN_SIZE
FF = 64               # __C.FF_SIZE
HEADS = 4             # __C.MULTI_HEAD
DH = HIDDEN // HEADS  # __C.HIDDEN_SIZE_HEAD
LAYERS = 2            # __C.LAYER
EPS = 1e-6            # LayerNorm eps
NEG = -1e9            # masked_fill value
PACK = 4 * HIDDEN     # lane width of packed parameter slabs
assert PACK == 128 and 2 * FF == PACK

# Packed parameter slab layout (per layer, lane width 128):
#   encoder ep[l] : (67, 128)
#     rows  0:32   [Wv | Wk | Wq*s | Wm]            (s = 1/sqrt(DH) folded in)
#     rows 32:64   [W1 | W2^T]
#     row  64      [bv | bk | bq*s | bm]
#     row  65      [b1(64) | b2(32) | 0(32)]
#     row  66      [ln_g0 | ln_b0 | ln_g1 | ln_b1]
#   decoder dp[l] : (101, 128)
#     rows  0:32   self-attn  [Wv|Wk|Wq*s|Wm]
#     rows 32:64   cross-attn [Wv|Wk|Wq*s|Wm]
#     rows 64:96   [W1 | W2^T]
#     row  96      self-attn biases;  row 97  cross-attn biases
#     row  98      [b1 | b2 | 0]
#     row  99      [ln_g0|ln_b0|ln_g1|ln_b1];  row 100  [ln_g2|ln_b2|0|0]


# ------------------------------ fused kernel --------------------------------

def _mca_ed_kernel(x_ref, y_ref, bxx_ref, byy_ref, byx_ref, ep_ref, dp_ref,
                   xo_ref, yo_ref):
    H = HIDDEN
    inv_nm1 = 1.0 / (H - 1)

    def add_ln(h, res, gamma, beta):
        # Residual add + MCAN LayerNorm: a*(s-mean)/(std+eps)+b, unbiased std.
        s = h + res
        mean = jnp.mean(s, axis=-1, keepdims=True)
        d = s - mean
        var = jnp.sum(d * d, axis=-1, keepdims=True) * inv_nm1
        inv = pl.reciprocal(jnp.sqrt(var) + EPS)      # (M,1) EUP reciprocal
        return gamma * d * inv + beta

    def heads_attend(q, k, v, wm, bm, bias):
        # q:(Mq,H)  k,v:(Mk,H)  wm:(H,H)  bm:(1,H)  bias:(Mq,Mk) additive mask
        # (block-diagonal -1e9 on cross-batch pairs and padded key positions).
        merged = None
        for h in range(HEADS):
            qh = q[:, h * DH:(h + 1) * DH]
            kh = k[:, h * DH:(h + 1) * DH]
            vh = v[:, h * DH:(h + 1) * DH]
            # Q @ K^T without transposing K (contract last dims). 1/sqrt(DH)
            # is already folded into the q projection weights.
            s = lax.dot_general(qh, kh, (((1,), (1,)), ((), ())),
                                preferred_element_type=jnp.float32)
            s = s + bias
            s = s - jnp.max(s, axis=-1, keepdims=True)   # stable softmax
            e = jnp.exp(s)
            p = e * pl.reciprocal(jnp.sum(e, axis=-1, keepdims=True),
                                  approx=True)
            head = jnp.dot(p, vh, preferred_element_type=jnp.float32)
            # Merge projection folded into the head loop as an accumulate-of-
            # dots chain (rows [h*DH,(h+1)*DH) of W_merge act on this head).
            part = jnp.dot(head, wm[h * DH:(h + 1) * DH, :],
                           preferred_element_type=jnp.float32)
            merged = part if merged is None else merged + part
        return merged + bm

    def self_att(xin, aw, ab, bias):
        # Single projection matmul for v, k, q (lanes [0:96) of the packed aw).
        vkq = jnp.dot(xin, aw[:, :3 * H],
                      preferred_element_type=jnp.float32) + ab[:, :3 * H]
        return heads_attend(vkq[:, 2 * H:3 * H], vkq[:, H:2 * H], vkq[:, :H],
                            aw[:, 3 * H:], ab[:, 3 * H:], bias)

    def cross_att(q_in, kv_in, aw, ab, bias):
        vk = jnp.dot(kv_in, aw[:, :2 * H],
                     preferred_element_type=jnp.float32) + ab[:, :2 * H]
        q = jnp.dot(q_in, aw[:, 2 * H:3 * H],
                    preferred_element_type=jnp.float32) + ab[:, 2 * H:3 * H]
        return heads_attend(q, vk[:, H:2 * H], vk[:, :H],
                            aw[:, 3 * H:], ab[:, 3 * H:], bias)

    def ffn(xin, fw, fb):
        hid = jnp.maximum(
            jnp.dot(xin, fw[:, :FF], preferred_element_type=jnp.float32)
            + fb[:, :FF], 0.0)
        # Second FFN matmul against W2 stored transposed (contract last dims).
        return lax.dot_general(hid, fw[:, FF:], (((1,), (1,)), ((), ())),
                               preferred_element_type=jnp.float32) \
            + fb[:, FF:FF + H]

    x = x_ref[...]        # (nb*lx, H)
    y = y_ref[...]        # (nb*ly, H)
    bxx = bxx_ref[...]    # (nb*lx, nb*lx) additive bias
    byy = byy_ref[...]    # (nb*ly, nb*ly)
    byx = byx_ref[...]    # (nb*ly, nb*lx)

    # --------------------------- encoder: SA x LAYERS -----------------------
    for l in range(LAYERS):
        aw = ep_ref[l, 0:H, :]
        fw = ep_ref[l, H:2 * H, :]
        ab = ep_ref[l, 2 * H:2 * H + 1, :]
        fb = ep_ref[l, 2 * H + 1:2 * H + 2, :]
        ln = ep_ref[l, 2 * H + 2:2 * H + 3, :]
        x = add_ln(self_att(x, aw, ab, bxx), x, ln[:, 0:H], ln[:, H:2 * H])
        x = add_ln(ffn(x, fw, fb), x, ln[:, 2 * H:3 * H], ln[:, 3 * H:4 * H])

    # --------------------------- decoder: SGA x LAYERS ----------------------
    for l in range(LAYERS):
        aw_s = dp_ref[l, 0:H, :]
        aw_c = dp_ref[l, H:2 * H, :]
        fw = dp_ref[l, 2 * H:3 * H, :]
        ab_s = dp_ref[l, 3 * H:3 * H + 1, :]
        ab_c = dp_ref[l, 3 * H + 1:3 * H + 2, :]
        fb = dp_ref[l, 3 * H + 2:3 * H + 3, :]
        ln_a = dp_ref[l, 3 * H + 3:3 * H + 4, :]
        ln_b = dp_ref[l, 3 * H + 4:3 * H + 5, :]
        y = add_ln(self_att(y, aw_s, ab_s, byy), y,
                   ln_a[:, 0:H], ln_a[:, H:2 * H])
        y = add_ln(cross_att(y, x, aw_c, ab_c, byx), y,         # q=y, kv=enc(x)
                   ln_a[:, 2 * H:3 * H], ln_a[:, 3 * H:4 * H])
        y = add_ln(ffn(y, fw, fb), y, ln_b[:, 0:H], ln_b[:, H:2 * H])

    xo_ref[...] = x
    yo_ref[...] = y


# ------------------------------ JAX wrapper ----------------------------------

def _block_bias(key_mask, nb, lq, lk):
    """(nb*lq, nb*lk) additive bias: 0 for same-batch unmasked keys, -1e9 else."""
    qb = jnp.arange(nb * lq, dtype=jnp.int32) // lq
    kb = jnp.arange(nb * lk, dtype=jnp.int32) // lk
    same = qb[:, None] == kb[None, :]
    key_ok = jnp.logical_not(key_mask.reshape(nb * lk))[None, :]
    return jnp.where(same & key_ok, 0.0, NEG).astype(jnp.float32)


def mca_ed(params, x, y, x_mask, y_mask):
    nb, lx, d = x.shape
    ly = y.shape[1]
    assert d == HIDDEN
    xm = x_mask.reshape(nb, lx)          # True == masked (padding)
    ym = y_mask.reshape(nb, ly)
    bxx = _block_bias(xm, nb, lx, lx)    # encoder self-attention
    byy = _block_bias(ym, nb, ly, ly)    # decoder self-attention
    byx = _block_bias(xm, nb, ly, lx)    # decoder cross-attention (keys = x)

    vmem = pl.BlockSpec(memory_space=pltpu.MemorySpace.VMEM)
    xo, yo = pl.pallas_call(
        _mca_ed_kernel,
        out_shape=(jax.ShapeDtypeStruct((nb * lx, HIDDEN), jnp.float32),
                   jax.ShapeDtypeStruct((nb * ly, HIDDEN), jnp.float32)),
        in_specs=[vmem] * 7,
        out_specs=(vmem, vmem),
    )(x.reshape(nb * lx, HIDDEN), y.reshape(nb * ly, HIDDEN),
      bxx, byy, byx, params["enc"], params["dec"])
    return xo.reshape(nb, lx, HIDDEN), yo.reshape(nb, ly, HIDDEN)


# ------------------------- deterministic parameters --------------------------

def _init_linear(key, din, dout):
    kw, kb = jax.random.split(key)
    bound = 1.0 / math.sqrt(din)
    w = jax.random.uniform(kw, (din, dout), jnp.float32, -bound, bound)  # x @ w
    b = jax.random.uniform(kb, (dout,), jnp.float32, -bound, bound)
    return w, b


def _init_mhatt(key):
    # Order [v, k, q, merge]; the 1/sqrt(DH) attention scale is folded into
    # the q projection (weight + bias) so the kernel never multiplies by it.
    scale = 1.0 / math.sqrt(DH)
    ws, bs = [], []
    for i, k in enumerate(jax.random.split(key, 4)):
        w, b = _init_linear(k, HIDDEN, HIDDEN)
        if i == 2:
            w, b = w * scale, b * scale
        ws.append(w)
        bs.append(b)
    return jnp.concatenate(ws, axis=1), jnp.concatenate(bs)   # (32,128), (128,)


def _init_ffn(key):
    k1, k2 = jax.random.split(key)
    w1, b1 = _init_linear(k1, HIDDEN, FF)
    w2, b2 = _init_linear(k2, FF, HIDDEN)
    fw = jnp.concatenate([w1, w2.T], axis=1)                            # (32,128)
    fb = jnp.concatenate([b1, b2, jnp.zeros((HIDDEN,), jnp.float32)])   # (128,)
    return fw, fb


def _pack_enc_layer(key):
    k1, k2 = jax.random.split(key)
    aw, ab = _init_mhatt(k1)
    fw, fb = _init_ffn(k2)
    lg = jnp.ones((HIDDEN,), jnp.float32)
    lb = jnp.zeros((HIDDEN,), jnp.float32)
    ln = jnp.concatenate([lg, lb, lg, lb])                              # (128,)
    return jnp.concatenate([aw, fw, jnp.stack([ab, fb, ln])], axis=0)   # (67,128)


def _pack_dec_layer(key):
    k1, k2, k3 = jax.random.split(key, 3)
    aw_s, ab_s = _init_mhatt(k1)     # self-attention
    aw_c, ab_c = _init_mhatt(k2)     # cross-attention
    fw, fb = _init_ffn(k3)
    lg = jnp.ones((HIDDEN,), jnp.float32)
    lb = jnp.zeros((HIDDEN,), jnp.float32)
    ln_a = jnp.concatenate([lg, lb, lg, lb])
    ln_b = jnp.concatenate([lg, lb, jnp.zeros((2 * HIDDEN,), jnp.float32)])
    return jnp.concatenate(
        [aw_s, aw_c, fw, jnp.stack([ab_s, ab_c, fb, ln_a, ln_b])], axis=0)  # (101,128)


def init_params(key):
    ke, kd = jax.random.split(key)
    enc = jnp.stack([_pack_enc_layer(k) for k in jax.random.split(ke, LAYERS)])
    dec = jnp.stack([_pack_dec_layer(k) for k in jax.random.split(kd, LAYERS)])
    return {"enc": enc, "dec": dec}     # (L,67,128), (L,101,128)


if __name__ == "__main__":
    key = jax.random.PRNGKey(0)
    k_params, k_x, k_y = jax.random.split(key, 3)
    params = init_params(k_params)

    B, LX, LY = 2, 8, 8
    x = jax.random.normal(k_x, (B, LX, HIDDEN), jnp.float32)
    y = jax.random.normal(k_y, (B, LY, HIDDEN), jnp.float32)
    # Padding masks, True == masked (same convention as masked_fill in MCAN).
    x_mask = jnp.broadcast_to(jnp.arange(LX)[None, None, None, :] >= (LX - 2),
                              (B, 1, 1, LX))
    y_mask = jnp.broadcast_to(jnp.arange(LY)[None, None, None, :] >= (LY - 1),
                              (B, 1, 1, LY))

    fwd = jax.jit(functools.partial(mca_ed, params))
    x_out, y_out = fwd(x, y, x_mask, y_mask)
    jax.block_until_ready((x_out, y_out))
    assert x_out.shape == (B, LX, HIDDEN) and y_out.shape == (B, LY, HIDDEN)
    assert bool(jnp.all(jnp.isfinite(x_out))) and bool(jnp.all(jnp.isfinite(y_out)))
    print("KERNEL_OK")
</pallas_src>

<mosaic_0001>
module attributes {stable_mosaic.version = 11 : i64} {
  func.func @_mca_ed_kernel(%arg0: memref<16x32xf32, #tpu.memory_space<vmem>>, %arg1: memref<16x32xf32, #tpu.memory_space<vmem>>, %arg2: memref<16x16xf32, #tpu.memory_space<vmem>>, %arg3: memref<16x16xf32, #tpu.memory_space<vmem>>, %arg4: memref<16x16xf32, #tpu.memory_space<vmem>>, %arg5: memref<2x67x128xf32, #tpu.memory_space<vmem>>, %arg6: memref<2x101x128xf32, #tpu.memory_space<vmem>>, %arg7: memref<16x32xf32, #tpu.memory_space<vmem>>, %arg8: memref<16x32xf32, #tpu.memory_space<vmem>>) attributes {dimension_semantics = [], scalar_prefetch = 0 : i64, scratch_operands = 0 : i64, tpu.core_type = #tpu.core_type<tc>} {
    %c0 = arith.constant 0 : index
    %c0_0 = arith.constant 0 : index
    %0 = vector.load %arg0[%c0, %c0_0] : memref<16x32xf32, #tpu.memory_space<vmem>>, vector<16x32xf32>
    %c0_1 = arith.constant 0 : index
    %c0_2 = arith.constant 0 : index
    %1 = vector.load %arg1[%c0_1, %c0_2] : memref<16x32xf32, #tpu.memory_space<vmem>>, vector<16x32xf32>
    %c0_3 = arith.constant 0 : index
    %c0_4 = arith.constant 0 : index
    %2 = vector.load %arg2[%c0_3, %c0_4] : memref<16x16xf32, #tpu.memory_space<vmem>>, vector<16x16xf32>
    %c0_5 = arith.constant 0 : index
    %c0_6 = arith.constant 0 : index
    %3 = vector.load %arg3[%c0_5, %c0_6] : memref<16x16xf32, #tpu.memory_space<vmem>>, vector<16x16xf32>
    %c0_7 = arith.constant 0 : index
    %c0_8 = arith.constant 0 : index
    %4 = vector.load %arg4[%c0_7, %c0_8] : memref<16x16xf32, #tpu.memory_space<vmem>>, vector<16x16xf32>
    %c0_9 = arith.constant 0 : index
    %c0_10 = arith.constant 0 : index
    %c0_11 = arith.constant 0 : index
    %5 = vector.load %arg5[%c0_9, %c0_10, %c0_11] : memref<2x67x128xf32, #tpu.memory_space<vmem>>, vector<1x32x128xf32>
    %6 = vector.shape_cast %5 : vector<1x32x128xf32> to vector<32x128xf32>
    %c0_12 = arith.constant 0 : index
    %c32 = arith.constant 32 : index
    %c0_13 = arith.constant 0 : index
    %7 = vector.load %arg5[%c0_12, %c32, %c0_13] : memref<2x67x128xf32, #tpu.memory_space<vmem>>, vector<1x32x128xf32>
    %8 = vector.shape_cast %7 : vector<1x32x128xf32> to vector<32x128xf32>
    %c0_14 = arith.constant 0 : index
    %c64 = arith.constant 64 : index
    %c0_15 = arith.constant 0 : index
    %9 = vector.load %arg5[%c0_14, %c64, %c0_15] : memref<2x67x128xf32, #tpu.memory_space<vmem>>, vector<1x1x128xf32>
    %10 = vector.shape_cast %9 : vector<1x1x128xf32> to vector<1x128xf32>
    %c0_16 = arith.constant 0 : index
    %c65 = arith.constant 65 : index
    %c0_17 = arith.constant 0 : index
    %11 = vector.load %arg5[%c0_16, %c65, %c0_17] : memref<2x67x128xf32, #tpu.memory_space<vmem>>, vector<1x1x128xf32>
    %12 = vector.shape_cast %11 : vector<1x1x128xf32> to vector<1x128xf32>
    %c0_18 = arith.constant 0 : index
    %c66 = arith.constant 66 : index
    %c0_19 = arith.constant 0 : index
    %13 = vector.load %arg5[%c0_18, %c66, %c0_19] : memref<2x67x128xf32, #tpu.memory_space<vmem>>, vector<1x1x128xf32>
    %14 = vector.shape_cast %13 : vector<1x1x128xf32> to vector<1x128xf32>
    %15 = vector.extract_strided_slice %6 {offsets = [0, 0], sizes = [32, 96], strides = [1, 1]} : vector<32x128xf32> to vector<32x96xf32>
    %cst = arith.constant dense<0.000000e+00> : vector<16x96xf32>
    %16 = tpu.matmul %0, %15, %cst {dimension_numbers = #tpu.dot_dimension_numbers<[1], [0], [0], [1], [0, 0, 1, 1], [], []>} : vector<16x32xf32>, vector<32x96xf32>, vector<16x96xf32> -> vector<16x96xf32>
    %17 = vector.extract_strided_slice %10 {offsets = [0, 0], sizes = [1, 96], strides = [1, 1]} : vector<1x128xf32> to vector<1x96xf32>
    %18 = vector.broadcast %17 : vector<1x96xf32> to vector<16x96xf32>
    %19 = arith.addf %16, %18 : vector<16x96xf32>
    %20 = vector.extract_strided_slice %19 {offsets = [0, 64], sizes = [16, 32], strides = [1, 1]} : vector<16x96xf32> to vector<16x32xf32>
    %21 = vector.extract_strided_slice %19 {offsets = [0, 32], sizes = [16, 32], strides = [1, 1]} : vector<16x96xf32> to vector<16x32xf32>
    %22 = vector.extract_strided_slice %19 {offsets = [0, 0], sizes = [16, 32], strides = [1, 1]} : vector<16x96xf32> to vector<16x32xf32>
    %23 = vector.extract_strided_slice %6 {offsets = [0, 96], sizes = [32, 32], strides = [1, 1]} : vector<32x128xf32> to vector<32x32xf32>
    %24 = vector.extract_strided_slice %10 {offsets = [0, 96], sizes = [1, 32], strides = [1, 1]} : vector<1x128xf32> to vector<1x32xf32>
    %25 = vector.extract_strided_slice %20 {offsets = [0, 0], sizes = [16, 8], strides = [1, 1]} : vector<16x32xf32> to vector<16x8xf32>
    %26 = vector.extract_strided_slice %21 {offsets = [0, 0], sizes = [16, 8], strides = [1, 1]} : vector<16x32xf32> to vector<16x8xf32>
    %27 = vector.extract_strided_slice %22 {offsets = [0, 0], sizes = [16, 8], strides = [1, 1]} : vector<16x32xf32> to vector<16x8xf32>
    %cst_20 = arith.constant dense<0.000000e+00> : vector<16x16xf32>
    %28 = tpu.matmul %25, %26, %cst_20 {dimension_numbers = #tpu.dot_dimension_numbers<[1], [1], [0], [0], [0, 0, 1, 0], [], []>} : vector<16x8xf32>, vector<16x8xf32>, vector<16x16xf32> -> vector<16x16xf32>
    %29 = arith.addf %28, %2 : vector<16x16xf32>
    %cst_21 = arith.constant dense<0xFF800000> : vector<16xf32>
    %30 = vector.multi_reduction <maximumf>, %29, %cst_21 [1] : vector<16x16xf32> to vector<16xf32>
    %31 = vector.shape_cast %30 : vector<16xf32> to vector<16x1xf32>
    %32 = vector.broadcast %31 : vector<16x1xf32> to vector<16x16xf32>
    %33 = arith.subf %29, %32 : vector<16x16xf32>
    %34 = math.exp %33 : vector<16x16xf32>
    %cst_22 = arith.constant dense<0.000000e+00> : vector<16xf32>
    %35 = vector.multi_reduction <add>, %34, %cst_22 [1] : vector<16x16xf32> to vector<16xf32>
    %36 = vector.shape_cast %35 : vector<16xf32> to vector<16x1xf32>
    %37 = tpu.reciprocal %36 {approx = true} : vector<16x1xf32> -> vector<16x1xf32>
    %38 = vector.broadcast %37 : vector<16x1xf32> to vector<16x16xf32>
    %39 = arith.mulf %34, %38 : vector<16x16xf32>
    %cst_23 = arith.constant dense<0.000000e+00> : vector<16x8xf32>
    %40 = tpu.matmul %39, %27, %cst_23 {dimension_numbers = #tpu.dot_dimension_numbers<[1], [0], [0], [1], [0, 0, 1, 1], [], []>} : vector<16x16xf32>, vector<16x8xf32>, vector<16x8xf32> -> vector<16x8xf32>
    %41 = vector.extract_strided_slice %23 {offsets = [0, 0], sizes = [8, 32], strides = [1, 1]} : vector<32x32xf32> to vector<8x32xf32>
    %cst_24 = arith.constant dense<0.000000e+00> : vector<16x32xf32>
    %42 = tpu.matmul %40, %41, %cst_24 {dimension_numbers = #tpu.dot_dimension_numbers<[1], [0], [0], [1], [0, 0, 1, 1], [], []>} : vector<16x8xf32>, vector<8x32xf32>, vector<16x32xf32> -> vector<16x32xf32>
    %43 = vector.extract_strided_slice %20 {offsets = [0, 8], sizes = [16, 8], strides = [1, 1]} : vector<16x32xf32> to vector<16x8xf32>
    %44 = vector.extract_strided_slice %21 {offsets = [0, 8], sizes = [16, 8], strides = [1, 1]} : vector<16x32xf32> to vector<16x8xf32>
    %45 = vector.extract_strided_slice %22 {offsets = [0, 8], sizes = [16, 8], strides = [1, 1]} : vector<16x32xf32> to vector<16x8xf32>
    %cst_25 = arith.constant dense<0.000000e+00> : vector<16x16xf32>
    %46 = tpu.matmul %43, %44, %cst_25 {dimension_numbers = #tpu.dot_dimension_numbers<[1], [1], [0], [0], [0, 0, 1, 0], [], []>} : vector<16x8xf32>, vector<16x8xf32>, vector<16x16xf32> -> vector<16x16xf32>
    %47 = arith.addf %46, %2 : vector<16x16xf32>
    %cst_26 = arith.constant dense<0xFF800000> : vector<16xf32>
    %48 = vector.multi_reduction <maximumf>, %47, %cst_26 [1] : vector<16x16xf32> to vector<16xf32>
    %49 = vector.shape_cast %48 : vector<16xf32> to vector<16x1xf32>
    %50 = vector.broadcast %49 : vector<16x1xf32> to vector<16x16xf32>
    %51 = arith.subf %47, %50 : vector<16x16xf32>
    %52 = math.exp %51 : vector<16x16xf32>
    %cst_27 = arith.constant dense<0.000000e+00> : vector<16xf32>
    %53 = vector.multi_reduction <add>, %52, %cst_27 [1] : vector<16x16xf32> to vector<16xf32>
    %54 = vector.shape_cast %53 : vector<16xf32> to vector<16x1xf32>
    %55 = tpu.reciprocal %54 {approx = true} : vector<16x1xf32> -> vector<16x1xf32>
    %56 = vector.broadcast %55 : vector<16x1xf32> to vector<16x16xf32>
    %57 = arith.mulf %52, %56 : vector<16x16xf32>
    %cst_28 = arith.constant dense<0.000000e+00> : vector<16x8xf32>
    %58 = tpu.matmul %57, %45, %cst_28 {dimension_numbers = #tpu.dot_dimension_numbers<[1], [0], [0], [1], [0, 0, 1, 1], [], []>} : vector<16x16xf32>, vector<16x8xf32>, vector<16x8xf32> -> vector<16x8xf32>
    %59 = vector.extract_strided_slice %23 {offsets = [8, 0], sizes = [8, 32], strides = [1, 1]} : vector<32x32xf32> to vector<8x32xf32>
    %cst_29 = arith.constant dense<0.000000e+00> : vector<16x32xf32>
    %60 = tpu.matmul %58, %59, %cst_29 {dimension_numbers = #tpu.dot_dimension_numbers<[1], [0], [0], [1], [0, 0, 1, 1], [], []>} : vector<16x8xf32>, vector<8x32xf32>, vector<16x32xf32> -> vector<16x32xf32>
    %61 = arith.addf %42, %60 : vector<16x32xf32>
    %62 = vector.extract_strided_slice %20 {offsets = [0, 16], sizes = [16, 8], strides = [1, 1]} : vector<16x32xf32> to vector<16x8xf32>
    %63 = vector.extract_strided_slice %21 {offsets = [0, 16], sizes = [16, 8], strides = [1, 1]} : vector<16x32xf32> to vector<16x8xf32>
    %64 = vector.extract_strided_slice %22 {offsets = [0, 16], sizes = [16, 8], strides = [1, 1]} : vector<16x32xf32> to vector<16x8xf32>
    %cst_30 = arith.constant dense<0.000000e+00> : vector<16x16xf32>
    %65 = tpu.matmul %62, %63, %cst_30 {dimension_numbers = #tpu.dot_dimension_numbers<[1], [1], [0], [0], [0, 0, 1, 0], [], []>} : vector<16x8xf32>, vector<16x8xf32>, vector<16x16xf32> -> vector<16x16xf32>
    %66 = arith.addf %65, %2 : vector<16x16xf32>
    %cst_31 = arith.constant dense<0xFF800000> : vector<16xf32>
    %67 = vector.multi_reduction <maximumf>, %66, %cst_31 [1] : vector<16x16xf32> to vector<16xf32>
    %68 = vector.shape_cast %67 : vector<16xf32> to vector<16x1xf32>
    %69 = vector.broadcast %68 : vector<16x1xf32> to vector<16x16xf32>
    %70 = arith.subf %66, %69 : vector<16x16xf32>
    %71 = math.exp %70 : vector<16x16xf32>
    %cst_32 = arith.constant dense<0.000000e+00> : vector<16xf32>
    %72 = vector.multi_reduction <add>, %71, %cst_32 [1] : vector<16x16xf32> to vector<16xf32>
    %73 = vector.shape_cast %72 : vector<16xf32> to vector<16x1xf32>
    %74 = tpu.reciprocal %73 {approx = true} : vector<16x1xf32> -> vector<16x1xf32>
    %75 = vector.broadcast %74 : vector<16x1xf32> to vector<16x16xf32>
    %76 = arith.mulf %71, %75 : vector<16x16xf32>
    %cst_33 = arith.constant dense<0.000000e+00> : vector<16x8xf32>
    %77 = tpu.matmul %76, %64, %cst_33 {dimension_numbers = #tpu.dot_dimension_numbers<[1], [0], [0], [1], [0, 0, 1, 1], [], []>} : vector<16x16xf32>, vector<16x8xf32>, vector<16x8xf32> -> vector<16x8xf32>
    %78 = vector.extract_strided_slice %23 {offsets = [16, 0], sizes = [8, 32], strides = [1, 1]} : vector<32x32xf32> to vector<8x32xf32>
    %cst_34 = arith.constant dense<0.000000e+00> : vector<16x32xf32>
    %79 = tpu.matmul %77, %78, %cst_34 {dimension_numbers = #tpu.dot_dimension_numbers<[1], [0], [0], [1], [0, 0, 1, 1], [], []>} : vector<16x8xf32>, vector<8x32xf32>, vector<16x32xf32> -> vector<16x32xf32>
    %80 = arith.addf %61, %79 : vector<16x32xf32>
    %81 = vector.extract_strided_slice %20 {offsets = [0, 24], sizes = [16, 8], strides = [1, 1]} : vector<16x32xf32> to vector<16x8xf32>
    %82 = vector.extract_strided_slice %21 {offsets = [0, 24], sizes = [16, 8], strides = [1, 1]} : vector<16x32xf32> to vector<16x8xf32>
    %83 = vector.extract_strided_slice %22 {offsets = [0, 24], sizes = [16, 8], strides = [1, 1]} : vector<16x32xf32> to vector<16x8xf32>
    %cst_35 = arith.constant dense<0.000000e+00> : vector<16x16xf32>
    %84 = tpu.matmul %81, %82, %cst_35 {dimension_numbers = #tpu.dot_dimension_numbers<[1], [1], [0], [0], [0, 0, 1, 0], [], []>} : vector<16x8xf32>, vector<16x8xf32>, vector<16x16xf32> -> vector<16x16xf32>
    %85 = arith.addf %84, %2 : vector<16x16xf32>
    %cst_36 = arith.constant dense<0xFF800000> : vector<16xf32>
    %86 = vector.multi_reduction <maximumf>, %85, %cst_36 [1] : vector<16x16xf32> to vector<16xf32>
    %87 = vector.shape_cast %86 : vector<16xf32> to vector<16x1xf32>
    %88 = vector.broadcast %87 : vector<16x1xf32> to vector<16x16xf32>
    %89 = arith.subf %85, %88 : vector<16x16xf32>
    %90 = math.exp %89 : vector<16x16xf32>
    %cst_37 = arith.constant dense<0.000000e+00> : vector<16xf32>
    %91 = vector.multi_reduction <add>, %90, %cst_37 [1] : vector<16x16xf32> to vector<16xf32>
    %92 = vector.shape_cast %91 : vector<16xf32> to vector<16x1xf32>
    %93 = tpu.reciprocal %92 {approx = true} : vector<16x1xf32> -> vector<16x1xf32>
    %94 = vector.broadcast %93 : vector<16x1xf32> to vector<16x16xf32>
    %95 = arith.mulf %90, %94 : vector<16x16xf32>
    %cst_38 = arith.constant dense<0.000000e+00> : vector<16x8xf32>
    %96 = tpu.matmul %95, %83, %cst_38 {dimension_numbers = #tpu.dot_dimension_numbers<[1], [0], [0], [1], [0, 0, 1, 1], [], []>} : vector<16x16xf32>, vector<16x8xf32>, vector<16x8xf32> -> vector<16x8xf32>
    %97 = vector.extract_strided_slice %23 {offsets = [24, 0], sizes = [8, 32], strides = [1, 1]} : vector<32x32xf32> to vector<8x32xf32>
    %cst_39 = arith.constant dense<0.000000e+00> : vector<16x32xf32>
    %98 = tpu.matmul %96, %97, %cst_39 {dimension_numbers = #tpu.dot_dimension_numbers<[1], [0], [0], [1], [0, 0, 1, 1], [], []>} : vector<16x8xf32>, vector<8x32xf32>, vector<16x32xf32> -> vector<16x32xf32>
    %99 = arith.addf %80, %98 : vector<16x32xf32>
    %100 = vector.broadcast %24 : vector<1x32xf32> to vector<16x32xf32>
    %101 = arith.addf %99, %100 : vector<16x32xf32>
    %102 = vector.extract_strided_slice %14 {offsets = [0, 0], sizes = [1, 32], strides = [1, 1]} : vector<1x128xf32> to vector<1x32xf32>
    %103 = vector.extract_strided_slice %14 {offsets = [0, 32], sizes = [1, 32], strides = [1, 1]} : vector<1x128xf32> to vector<1x32xf32>
    %104 = arith.addf %101, %0 : vector<16x32xf32>
    %cst_40 = arith.constant dense<0.000000e+00> : vector<16xf32>
    %105 = vector.multi_reduction <add>, %104, %cst_40 [1] : vector<16x32xf32> to vector<16xf32>
    %106 = vector.shape_cast %105 : vector<16xf32> to vector<16x1xf32>
    %cst_41 = arith.constant 3.200000e+01 : f32
    %107 = vector.broadcast %cst_41 : f32 to vector<16x1xf32>
    %108 = arith.divf %106, %107 : vector<16x1xf32>
    %109 = vector.broadcast %108 : vector<16x1xf32> to vector<16x32xf32>
    %110 = arith.subf %104, %109 : vector<16x32xf32>
    %111 = arith.mulf %110, %110 : vector<16x32xf32>
    %cst_42 = arith.constant dense<0.000000e+00> : vector<16xf32>
    %112 = vector.multi_reduction <add>, %111, %cst_42 [1] : vector<16x32xf32> to vector<16xf32>
    %113 = vector.shape_cast %112 : vector<16xf32> to vector<16x1xf32>
    %cst_43 = arith.constant 0.0322580636 : f32
    %114 = vector.broadcast %cst_43 : f32 to vector<16x1xf32>
    %115 = arith.mulf %113, %114 : vector<16x1xf32>
    %116 = math.sqrt %115 : vector<16x1xf32>
    %cst_44 = arith.constant 9.99999997E-7 : f32
    %117 = vector.broadcast %cst_44 : f32 to vector<16x1xf32>
    %118 = arith.addf %116, %117 : vector<16x1xf32>
    %119 = tpu.reciprocal %118 : vector<16x1xf32> -> vector<16x1xf32>
    %120 = vector.broadcast %102 : vector<1x32xf32> to vector<16x32xf32>
    %121 = arith.mulf %120, %110 : vector<16x32xf32>
    %122 = vector.broadcast %119 : vector<16x1xf32> to vector<16x32xf32>
    %123 = arith.mulf %121, %122 : vector<16x32xf32>
    %124 = vector.broadcast %103 : vector<1x32xf32> to vector<16x32xf32>
    %125 = arith.addf %123, %124 : vector<16x32xf32>
    %126 = vector.extract_strided_slice %8 {offsets = [0, 0], sizes = [32, 64], strides = [1, 1]} : vector<32x128xf32> to vector<32x64xf32>
    %cst_45 = arith.constant dense<0.000000e+00> : vector<16x64xf32>
    %127 = tpu.matmul %125, %126, %cst_45 {dimension_numbers = #tpu.dot_dimension_numbers<[1], [0], [0], [1], [0, 0, 1, 1], [], []>} : vector<16x32xf32>, vector<32x64xf32>, vector<16x64xf32> -> vector<16x64xf32>
    %128 = vector.extract_strided_slice %12 {offsets = [0, 0], sizes = [1, 64], strides = [1, 1]} : vector<1x128xf32> to vector<1x64xf32>
    %129 = vector.broadcast %128 : vector<1x64xf32> to vector<16x64xf32>
    %130 = arith.addf %127, %129 : vector<16x64xf32>
    %cst_46 = arith.constant 0.000000e+00 : f32
    %131 = vector.broadcast %cst_46 : f32 to vector<16x64xf32>
    %132 = arith.maximumf %130, %131 : vector<16x64xf32>
    %133 = vector.extract_strided_slice %8 {offsets = [0, 64], sizes = [32, 64], strides = [1, 1]} : vector<32x128xf32> to vector<32x64xf32>
    %cst_47 = arith.constant dense<0.000000e+00> : vector<16x32xf32>
    %134 = tpu.matmul %132, %133, %cst_47 {dimension_numbers = #tpu.dot_dimension_numbers<[1], [1], [0], [0], [0, 0, 1, 0], [], []>} : vector<16x64xf32>, vector<32x64xf32>, vector<16x32xf32> -> vector<16x32xf32>
    %135 = vector.extract_strided_slice %12 {offsets = [0, 64], sizes = [1, 32], strides = [1, 1]} : vector<1x128xf32> to vector<1x32xf32>
    %136 = vector.broadcast %135 : vector<1x32xf32> to vector<16x32xf32>
    %137 = arith.addf %134, %136 : vector<16x32xf32>
    %138 = vector.extract_strided_slice %14 {offsets = [0, 64], sizes = [1, 32], strides = [1, 1]} : vector<1x128xf32> to vector<1x32xf32>
    %139 = vector.extract_strided_slice %14 {offsets = [0, 96], sizes = [1, 32], strides = [1, 1]} : vector<1x128xf32> to vector<1x32xf32>
    %140 = arith.addf %137, %125 : vector<16x32xf32>
    %cst_48 = arith.constant dense<0.000000e+00> : vector<16xf32>
    %141 = vector.multi_reduction <add>, %140, %cst_48 [1] : vector<16x32xf32> to vector<16xf32>
    %142 = vector.shape_cast %141 : vector<16xf32> to vector<16x1xf32>
    %cst_49 = arith.constant 3.200000e+01 : f32
    %143 = vector.broadcast %cst_49 : f32 to vector<16x1xf32>
    %144 = arith.divf %142, %143 : vector<16x1xf32>
    %145 = vector.broadcast %144 : vector<16x1xf32> to vector<16x32xf32>
    %146 = arith.subf %140, %145 : vector<16x32xf32>
    %147 = arith.mulf %146, %146 : vector<16x32xf32>
    %cst_50 = arith.constant dense<0.000000e+00> : vector<16xf32>
    %148 = vector.multi_reduction <add>, %147, %cst_50 [1] : vector<16x32xf32> to vector<16xf32>
    %149 = vector.shape_cast %148 : vector<16xf32> to vector<16x1xf32>
    %cst_51 = arith.constant 0.0322580636 : f32
    %150 = vector.broadcast %cst_51 : f32 to vector<16x1xf32>
    %151 = arith.mulf %149, %150 : vector<16x1xf32>
    %152 = math.sqrt %151 : vector<16x1xf32>
    %cst_52 = arith.constant 9.99999997E-7 : f32
    %153 = vector.broadcast %cst_52 : f32 to vector<16x1xf32>
    %154 = arith.addf %152, %153 : vector<16x1xf32>
    %155 = tpu.reciprocal %154 : vector<16x1xf32> -> vector<16x1xf32>
    %156 = vector.broadcast %138 : vector<1x32xf32> to vector<16x32xf32>
    %157 = arith.mulf %156, %146 : vector<16x32xf32>
    %158 = vector.broadcast %155 : vector<16x1xf32> to vector<16x32xf32>
    %159 = arith.mulf %157, %158 : vector<16x32xf32>
    %160 = vector.broadcast %139 : vector<1x32xf32> to vector<16x32xf32>
    %161 = arith.addf %159, %160 : vector<16x32xf32>
    %c1 = arith.constant 1 : index
    %c0_53 = arith.constant 0 : index
    %c0_54 = arith.constant 0 : index
    %162 = vector.load %arg5[%c1, %c0_53, %c0_54] : memref<2x67x128xf32, #tpu.memory_space<vmem>>, vector<1x32x128xf32>
    %163 = vector.shape_cast %162 : vector<1x32x128xf32> to vector<32x128xf32>
    %c1_55 = arith.constant 1 : index
    %c32_56 = arith.constant 32 : index
    %c0_57 = arith.constant 0 : index
    %164 = vector.load %arg5[%c1_55, %c32_56, %c0_57] : memref<2x67x128xf32, #tpu.memory_space<vmem>>, vector<1x32x128xf32>
    %165 = vector.shape_cast %164 : vector<1x32x128xf32> to vector<32x128xf32>
    %c1_58 = arith.constant 1 : index
    %c64_59 = arith.constant 64 : index
    %c0_60 = arith.constant 0 : index
    %166 = vector.load %arg5[%c1_58, %c64_59, %c0_60] : memref<2x67x128xf32, #tpu.memory_space<vmem>>, vector<1x1x128xf32>
    %167 = vector.shape_cast %166 : vector<1x1x128xf32> to vector<1x128xf32>
    %c1_61 = arith.constant 1 : index
    %c65_62 = arith.constant 65 : index
    %c0_63 = arith.constant 0 : index
    %168 = vector.load %arg5[%c1_61, %c65_62, %c0_63] : memref<2x67x128xf32, #tpu.memory_space<vmem>>, vector<1x1x128xf32>
    %169 = vector.shape_cast %168 : vector<1x1x128xf32> to vector<1x128xf32>
    %c1_64 = arith.constant 1 : index
    %c66_65 = arith.constant 66 : index
    %c0_66 = arith.constant 0 : index
    %170 = vector.load %arg5[%c1_64, %c66_65, %c0_66] : memref<2x67x128xf32, #tpu.memory_space<vmem>>, vector<1x1x128xf32>
    %171 = vector.shape_cast %170 : vector<1x1x128xf32> to vector<1x128xf32>
    %172 = vector.extract_strided_slice %163 {offsets = [0, 0], sizes = [32, 96], strides = [1, 1]} : vector<32x128xf32> to vector<32x96xf32>
    %cst_67 = arith.constant dense<0.000000e+00> : vector<16x96xf32>
    %173 = tpu.matmul %161, %172, %cst_67 {dimension_numbers = #tpu.dot_dimension_numbers<[1], [0], [0], [1], [0, 0, 1, 1], [], []>} : vector<16x32xf32>, vector<32x96xf32>, vector<16x96xf32> -> vector<16x96xf32>
    %174 = vector.extract_strided_slice %167 {offsets = [0, 0], sizes = [1, 96], strides = [1, 1]} : vector<1x128xf32> to vector<1x96xf32>
    %175 = vector.broadcast %174 : vector<1x96xf32> to vector<16x96xf32>
    %176 = arith.addf %173, %175 : vector<16x96xf32>
    %177 = vector.extract_strided_slice %176 {offsets = [0, 64], sizes = [16, 32], strides = [1, 1]} : vector<16x96xf32> to vector<16x32xf32>
    %178 = vector.extract_strided_slice %176 {offsets = [0, 32], sizes = [16, 32], strides = [1, 1]} : vector<16x96xf32> to vector<16x32xf32>
    %179 = vector.extract_strided_slice %176 {offsets = [0, 0], sizes = [16, 32], strides = [1, 1]} : vector<16x96xf32> to vector<16x32xf32>
    %180 = vector.extract_strided_slice %163 {offsets = [0, 96], sizes = [32, 32], strides = [1, 1]} : vector<32x128xf32> to vector<32x32xf32>
    %181 = vector.extract_strided_slice %167 {offsets = [0, 96], sizes = [1, 32], strides = [1, 1]} : vector<1x128xf32> to vector<1x32xf32>
    %182 = vector.extract_strided_slice %177 {offsets = [0, 0], sizes = [16, 8], strides = [1, 1]} : vector<16x32xf32> to vector<16x8xf32>
    %183 = vector.extract_strided_slice %178 {offsets = [0, 0], sizes = [16, 8], strides = [1, 1]} : vector<16x32xf32> to vector<16x8xf32>
    %184 = vector.extract_strided_slice %179 {offsets = [0, 0], sizes = [16, 8], strides = [1, 1]} : vector<16x32xf32> to vector<16x8xf32>
    %cst_68 = arith.constant dense<0.000000e+00> : vector<16x16xf32>
    %185 = tpu.matmul %182, %183, %cst_68 {dimension_numbers = #tpu.dot_dimension_numbers<[1], [1], [0], [0], [0, 0, 1, 0], [], []>} : vector<16x8xf32>, vector<16x8xf32>, vector<16x16xf32> -> vector<16x16xf32>
    %186 = arith.addf %185, %2 : vector<16x16xf32>
    %cst_69 = arith.constant dense<0xFF800000> : vector<16xf32>
    %187 = vector.multi_reduction <maximumf>, %186, %cst_69 [1] : vector<16x16xf32> to vector<16xf32>
    %188 = vector.shape_cast %187 : vector<16xf32> to vector<16x1xf32>
    %189 = vector.broadcast %188 : vector<16x1xf32> to vector<16x16xf32>
    %190 = arith.subf %186, %189 : vector<16x16xf32>
    %191 = math.exp %190 : vector<16x16xf32>
    %cst_70 = arith.constant dense<0.000000e+00> : vector<16xf32>
    %192 = vector.multi_reduction <add>, %191, %cst_70 [1] : vector<16x16xf32> to vector<16xf32>
    %193 = vector.shape_cast %192 : vector<16xf32> to vector<16x1xf32>
    %194 = tpu.reciprocal %193 {approx = true} : vector<16x1xf32> -> vector<16x1xf32>
    %195 = vector.broadcast %194 : vector<16x1xf32> to vector<16x16xf32>
    %196 = arith.mulf %191, %195 : vector<16x16xf32>
    %cst_71 = arith.constant dense<0.000000e+00> : vector<16x8xf32>
    %197 = tpu.matmul %196, %184, %cst_71 {dimension_numbers = #tpu.dot_dimension_numbers<[1], [0], [0], [1], [0, 0, 1, 1], [], []>} : vector<16x16xf32>, vector<16x8xf32>, vector<16x8xf32> -> vector<16x8xf32>
    %198 = vector.extract_strided_slice %180 {offsets = [0, 0], sizes = [8, 32], strides = [1, 1]} : vector<32x32xf32> to vector<8x32xf32>
    %cst_72 = arith.constant dense<0.000000e+00> : vector<16x32xf32>
    %199 = tpu.matmul %197, %198, %cst_72 {dimension_numbers = #tpu.dot_dimension_numbers<[1], [0], [0], [1], [0, 0, 1, 1], [], []>} : vector<16x8xf32>, vector<8x32xf32>, vector<16x32xf32> -> vector<16x32xf32>
    %200 = vector.extract_strided_slice %177 {offsets = [0, 8], sizes = [16, 8], strides = [1, 1]} : vector<16x32xf32> to vector<16x8xf32>
    %201 = vector.extract_strided_slice %178 {offsets = [0, 8], sizes = [16, 8], strides = [1, 1]} : vector<16x32xf32> to vector<16x8xf32>
    %202 = vector.extract_strided_slice %179 {offsets = [0, 8], sizes = [16, 8], strides = [1, 1]} : vector<16x32xf32> to vector<16x8xf32>
    %cst_73 = arith.constant dense<0.000000e+00> : vector<16x16xf32>
    %203 = tpu.matmul %200, %201, %cst_73 {dimension_numbers = #tpu.dot_dimension_numbers<[1], [1], [0], [0], [0, 0, 1, 0], [], []>} : vector<16x8xf32>, vector<16x8xf32>, vector<16x16xf32> -> vector<16x16xf32>
    %204 = arith.addf %203, %2 : vector<16x16xf32>
    %cst_74 = arith.constant dense<0xFF800000> : vector<16xf32>
    %205 = vector.multi_reduction <maximumf>, %204, %cst_74 [1] : vector<16x16xf32> to vector<16xf32>
    %206 = vector.shape_cast %205 : vector<16xf32> to vector<16x1xf32>
    %207 = vector.broadcast %206 : vector<16x1xf32> to vector<16x16xf32>
    %208 = arith.subf %204, %207 : vector<16x16xf32>
    %209 = math.exp %208 : vector<16x16xf32>
    %cst_75 = arith.constant dense<0.000000e+00> : vector<16xf32>
    %210 = vector.multi_reduction <add>, %209, %cst_75 [1] : vector<16x16xf32> to vector<16xf32>
    %211 = vector.shape_cast %210 : vector<16xf32> to vector<16x1xf32>
    %212 = tpu.reciprocal %211 {approx = true} : vector<16x1xf32> -> vector<16x1xf32>
    %213 = vector.broadcast %212 : vector<16x1xf32> to vector<16x16xf32>
    %214 = arith.mulf %209, %213 : vector<16x16xf32>
    %cst_76 = arith.constant dense<0.000000e+00> : vector<16x8xf32>
    %215 = tpu.matmul %214, %202, %cst_76 {dimension_numbers = #tpu.dot_dimension_numbers<[1], [0], [0], [1], [0, 0, 1, 1], [], []>} : vector<16x16xf32>, vector<16x8xf32>, vector<16x8xf32> -> vector<16x8xf32>
    %216 = vector.extract_strided_slice %180 {offsets = [8, 0], sizes = [8, 32], strides = [1, 1]} : vector<32x32xf32> to vector<8x32xf32>
    %cst_77 = arith.constant dense<0.000000e+00> : vector<16x32xf32>
    %217 = tpu.matmul %215, %216, %cst_77 {dimension_numbers = #tpu.dot_dimension_numbers<[1], [0], [0], [1], [0, 0, 1, 1], [], []>} : vector<16x8xf32>, vector<8x32xf32>, vector<16x32xf32> -> vector<16x32xf32>
    %218 = arith.addf %199, %217 : vector<16x32xf32>
    %219 = vector.extract_strided_slice %177 {offsets = [0, 16], sizes = [16, 8], strides = [1, 1]} : vector<16x32xf32> to vector<16x8xf32>
    %220 = vector.extract_strided_slice %178 {offsets = [0, 16], sizes = [16, 8], strides = [1, 1]} : vector<16x32xf32> to vector<16x8xf32>
    %221 = vector.extract_strided_slice %179 {offsets = [0, 16], sizes = [16, 8], strides = [1, 1]} : vector<16x32xf32> to vector<16x8xf32>
    %cst_78 = arith.constant dense<0.000000e+00> : vector<16x16xf32>
    %222 = tpu.matmul %219, %220, %cst_78 {dimension_numbers = #tpu.dot_dimension_numbers<[1], [1], [0], [0], [0, 0, 1, 0], [], []>} : vector<16x8xf32>, vector<16x8xf32>, vector<16x16xf32> -> vector<16x16xf32>
    %223 = arith.addf %222, %2 : vector<16x16xf32>
    %cst_79 = arith.constant dense<0xFF800000> : vector<16xf32>
    %224 = vector.multi_reduction <maximumf>, %223, %cst_79 [1] : vector<16x16xf32> to vector<16xf32>
    %225 = vector.shape_cast %224 : vector<16xf32> to vector<16x1xf32>
    %226 = vector.broadcast %225 : vector<16x1xf32> to vector<16x16xf32>
    %227 = arith.subf %223, %226 : vector<16x16xf32>
    %228 = math.exp %227 : vector<16x16xf32>
    %cst_80 = arith.constant dense<0.000000e+00> : vector<16xf32>
    %229 = vector.multi_reduction <add>, %228, %cst_80 [1] : vector<16x16xf32> to vector<16xf32>
    %230 = vector.shape_cast %229 : vector<16xf32> to vector<16x1xf32>
    %231 = tpu.reciprocal %230 {approx = true} : vector<16x1xf32> -> vector<16x1xf32>
    %232 = vector.broadcast %231 : vector<16x1xf32> to vector<16x16xf32>
    %233 = arith.mulf %228, %232 : vector<16x16xf32>
    %cst_81 = arith.constant dense<0.000000e+00> : vector<16x8xf32>
    %234 = tpu.matmul %233, %221, %cst_81 {dimension_numbers = #tpu.dot_dimension_numbers<[1], [0], [0], [1], [0, 0, 1, 1], [], []>} : vector<16x16xf32>, vector<16x8xf32>, vector<16x8xf32> -> vector<16x8xf32>
    %235 = vector.extract_strided_slice %180 {offsets = [16, 0], sizes = [8, 32], strides = [1, 1]} : vector<32x32xf32> to vector<8x32xf32>
    %cst_82 = arith.constant dense<0.000000e+00> : vector<16x32xf32>
    %236 = tpu.matmul %234, %235, %cst_82 {dimension_numbers = #tpu.dot_dimension_numbers<[1], [0], [0], [1], [0, 0, 1, 1], [], []>} : vector<16x8xf32>, vector<8x32xf32>, vector<16x32xf32> -> vector<16x32xf32>
    %237 = arith.addf %218, %236 : vector<16x32xf32>
    %238 = vector.extract_strided_slice %177 {offsets = [0, 24], sizes = [16, 8], strides = [1, 1]} : vector<16x32xf32> to vector<16x8xf32>
    %239 = vector.extract_strided_slice %178 {offsets = [0, 24], sizes = [16, 8], strides = [1, 1]} : vector<16x32xf32> to vector<16x8xf32>
    %240 = vector.extract_strided_slice %179 {offsets = [0, 24], sizes = [16, 8], strides = [1, 1]} : vector<16x32xf32> to vector<16x8xf32>
    %cst_83 = arith.constant dense<0.000000e+00> : vector<16x16xf32>
    %241 = tpu.matmul %238, %239, %cst_83 {dimension_numbers = #tpu.dot_dimension_numbers<[1], [1], [0], [0], [0, 0, 1, 0], [], []>} : vector<16x8xf32>, vector<16x8xf32>, vector<16x16xf32> -> vector<16x16xf32>
    %242 = arith.addf %241, %2 : vector<16x16xf32>
    %cst_84 = arith.constant dense<0xFF800000> : vector<16xf32>
    %243 = vector.multi_reduction <maximumf>, %242, %cst_84 [1] : vector<16x16xf32> to vector<16xf32>
    %244 = vector.shape_cast %243 : vector<16xf32> to vector<16x1xf32>
    %245 = vector.broadcast %244 : vector<16x1xf32> to vector<16x16xf32>
    %246 = arith.subf %242, %245 : vector<16x16xf32>
    %247 = math.exp %246 : vector<16x16xf32>
    %cst_85 = arith.constant dense<0.000000e+00> : vector<16xf32>
    %248 = vector.multi_reduction <add>, %247, %cst_85 [1] : vector<16x16xf32> to vector<16xf32>
    %249 = vector.shape_cast %248 : vector<16xf32> to vector<16x1xf32>
    %250 = tpu.reciprocal %249 {approx = true} : vector<16x1xf32> -> vector<16x1xf32>
    %251 = vector.broadcast %250 : vector<16x1xf32> to vector<16x16xf32>
    %252 = arith.mulf %247, %251 : vector<16x16xf32>
    %cst_86 = arith.constant dense<0.000000e+00> : vector<16x8xf32>
    %253 = tpu.matmul %252, %240, %cst_86 {dimension_numbers = #tpu.dot_dimension_numbers<[1], [0], [0], [1], [0, 0, 1, 1], [], []>} : vector<16x16xf32>, vector<16x8xf32>, vector<16x8xf32> -> vector<16x8xf32>
    %254 = vector.extract_strided_slice %180 {offsets = [24, 0], sizes = [8, 32], strides = [1, 1]} : vector<32x32xf32> to vector<8x32xf32>
    %cst_87 = arith.constant dense<0.000000e+00> : vector<16x32xf32>
    %255 = tpu.matmul %253, %254, %cst_87 {dimension_numbers = #tpu.dot_dimension_numbers<[1], [0], [0], [1], [0, 0, 1, 1], [], []>} : vector<16x8xf32>, vector<8x32xf32>, vector<16x32xf32> -> vector<16x32xf32>
    %256 = arith.addf %237, %255 : vector<16x32xf32>
    %257 = vector.broadcast %181 : vector<1x32xf32> to vector<16x32xf32>
    %258 = arith.addf %256, %257 : vector<16x32xf32>
    %259 = vector.extract_strided_slice %171 {offsets = [0, 0], sizes = [1, 32], strides = [1, 1]} : vector<1x128xf32> to vector<1x32xf32>
    %260 = vector.extract_strided_slice %171 {offsets = [0, 32], sizes = [1, 32], strides = [1, 1]} : vector<1x128xf32> to vector<1x32xf32>
    %261 = arith.addf %258, %161 : vector<16x32xf32>
    %cst_88 = arith.constant dense<0.000000e+00> : vector<16xf32>
    %262 = vector.multi_reduction <add>, %261, %cst_88 [1] : vector<16x32xf32> to vector<16xf32>
    %263 = vector.shape_cast %262 : vector<16xf32> to vector<16x1xf32>
    %cst_89 = arith.constant 3.200000e+01 : f32
    %264 = vector.broadcast %cst_89 : f32 to vector<16x1xf32>
    %265 = arith.divf %263, %264 : vector<16x1xf32>
    %266 = vector.broadcast %265 : vector<16x1xf32> to vector<16x32xf32>
    %267 = arith.subf %261, %266 : vector<16x32xf32>
    %268 = arith.mulf %267, %267 : vector<16x32xf32>
    %cst_90 = arith.constant dense<0.000000e+00> : vector<16xf32>
    %269 = vector.multi_reduction <add>, %268, %cst_90 [1] : vector<16x32xf32> to vector<16xf32>
    %270 = vector.shape_cast %269 : vector<16xf32> to vector<16x1xf32>
    %cst_91 = arith.constant 0.0322580636 : f32
    %271 = vector.broadcast %cst_91 : f32 to vector<16x1xf32>
    %272 = arith.mulf %270, %271 : vector<16x1xf32>
    %273 = math.sqrt %272 : vector<16x1xf32>
    %cst_92 = arith.constant 9.99999997E-7 : f32
    %274 = vector.broadcast %cst_92 : f32 to vector<16x1xf32>
    %275 = arith.addf %273, %274 : vector<16x1xf32>
    %276 = tpu.reciprocal %275 : vector<16x1xf32> -> vector<16x1xf32>
    %277 = vector.broadcast %259 : vector<1x32xf32> to vector<16x32xf32>
    %278 = arith.mulf %277, %267 : vector<16x32xf32>
    %279 = vector.broadcast %276 : vector<16x1xf32> to vector<16x32xf32>
    %280 = arith.mulf %278, %279 : vector<16x32xf32>
    %281 = vector.broadcast %260 : vector<1x32xf32> to vector<16x32xf32>
    %282 = arith.addf %280, %281 : vector<16x32xf32>
    %283 = vector.extract_strided_slice %165 {offsets = [0, 0], sizes = [32, 64], strides = [1, 1]} : vector<32x128xf32> to vector<32x64xf32>
    %cst_93 = arith.constant dense<0.000000e+00> : vector<16x64xf32>
    %284 = tpu.matmul %282, %283, %cst_93 {dimension_numbers = #tpu.dot_dimension_numbers<[1], [0], [0], [1], [0, 0, 1, 1], [], []>} : vector<16x32xf32>, vector<32x64xf32>, vector<16x64xf32> -> vector<16x64xf32>
    %285 = vector.extract_strided_slice %169 {offsets = [0, 0], sizes = [1, 64], strides = [1, 1]} : vector<1x128xf32> to vector<1x64xf32>
    %286 = vector.broadcast %285 : vector<1x64xf32> to vector<16x64xf32>
    %287 = arith.addf %284, %286 : vector<16x64xf32>
    %cst_94 = arith.constant 0.000000e+00 : f32
    %288 = vector.broadcast %cst_94 : f32 to vector<16x64xf32>
    %289 = arith.maximumf %287, %288 : vector<16x64xf32>
    %290 = vector.extract_strided_slice %165 {offsets = [0, 64], sizes = [32, 64], strides = [1, 1]} : vector<32x128xf32> to vector<32x64xf32>
    %cst_95 = arith.constant dense<0.000000e+00> : vector<16x32xf32>
    %291 = tpu.matmul %289, %290, %cst_95 {dimension_numbers = #tpu.dot_dimension_numbers<[1], [1], [0], [0], [0, 0, 1, 0], [], []>} : vector<16x64xf32>, vector<32x64xf32>, vector<16x32xf32> -> vector<16x32xf32>
    %292 = vector.extract_strided_slice %169 {offsets = [0, 64], sizes = [1, 32], strides = [1, 1]} : vector<1x128xf32> to vector<1x32xf32>
    %293 = vector.broadcast %292 : vector<1x32xf32> to vector<16x32xf32>
    %294 = arith.addf %291, %293 : vector<16x32xf32>
    %295 = vector.extract_strided_slice %171 {offsets = [0, 64], sizes = [1, 32], strides = [1, 1]} : vector<1x128xf32> to vector<1x32xf32>
    %296 = vector.extract_strided_slice %171 {offsets = [0, 96], sizes = [1, 32], strides = [1, 1]} : vector<1x128xf32> to vector<1x32xf32>
    %297 = arith.addf %294, %282 : vector<16x32xf32>
    %cst_96 = arith.constant dense<0.000000e+00> : vector<16xf32>
    %298 = vector.multi_reduction <add>, %297, %cst_96 [1] : vector<16x32xf32> to vector<16xf32>
    %299 = vector.shape_cast %298 : vector<16xf32> to vector<16x1xf32>
    %cst_97 = arith.constant 3.200000e+01 : f32
    %300 = vector.broadcast %cst_97 : f32 to vector<16x1xf32>
    %301 = arith.divf %299, %300 : vector<16x1xf32>
    %302 = vector.broadcast %301 : vector<16x1xf32> to vector<16x32xf32>
    %303 = arith.subf %297, %302 : vector<16x32xf32>
    %304 = arith.mulf %303, %303 : vector<16x32xf32>
    %cst_98 = arith.constant dense<0.000000e+00> : vector<16xf32>
    %305 = vector.multi_reduction <add>, %304, %cst_98 [1] : vector<16x32xf32> to vector<16xf32>
    %306 = vector.shape_cast %305 : vector<16xf32> to vector<16x1xf32>
    %cst_99 = arith.constant 0.0322580636 : f32
    %307 = vector.broadcast %cst_99 : f32 to vector<16x1xf32>
    %308 = arith.mulf %306, %307 : vector<16x1xf32>
    %309 = math.sqrt %308 : vector<16x1xf32>
    %cst_100 = arith.constant 9.99999997E-7 : f32
    %310 = vector.broadcast %cst_100 : f32 to vector<16x1xf32>
    %311 = arith.addf %309, %310 : vector<16x1xf32>
    %312 = tpu.reciprocal %311 : vector<16x1xf32> -> vector<16x1xf32>
    %313 = vector.broadcast %295 : vector<1x32xf32> to vector<16x32xf32>
    %314 = arith.mulf %313, %303 : vector<16x32xf32>
    %315 = vector.broadcast %312 : vector<16x1xf32> to vector<16x32xf32>
    %316 = arith.mulf %314, %315 : vector<16x32xf32>
    %317 = vector.broadcast %296 : vector<1x32xf32> to vector<16x32xf32>
    %318 = arith.addf %316, %317 : vector<16x32xf32>
    %c0_101 = arith.constant 0 : index
    %c0_102 = arith.constant 0 : index
    %c0_103 = arith.constant 0 : index
    %319 = vector.load %arg6[%c0_101, %c0_102, %c0_103] : memref<2x101x128xf32, #tpu.memory_space<vmem>>, vector<1x32x128xf32>
    %320 = vector.shape_cast %319 : vector<1x32x128xf32> to vector<32x128xf32>
    %c0_104 = arith.constant 0 : index
    %c32_105 = arith.constant 32 : index
    %c0_106 = arith.constant 0 : index
    %321 = vector.load %arg6[%c0_104, %c32_105, %c0_106] : memref<2x101x128xf32, #tpu.memory_space<vmem>>, vector<1x32x128xf32>
    %322 = vector.shape_cast %321 : vector<1x32x128xf32> to vector<32x128xf32>
    %c0_107 = arith.constant 0 : index
    %c64_108 = arith.constant 64 : index
    %c0_109 = arith.constant 0 : index
    %323 = vector.load %arg6[%c0_107, %c64_108, %c0_109] : memref<2x101x128xf32, #tpu.memory_space<vmem>>, vector<1x32x128xf32>
    %324 = vector.shape_cast %323 : vector<1x32x128xf32> to vector<32x128xf32>
    %c0_110 = arith.constant 0 : index
    %c96 = arith.constant 96 : index
    %c0_111 = arith.constant 0 : index
    %325 = vector.load %arg6[%c0_110, %c96, %c0_111] : memref<2x101x128xf32, #tpu.memory_space<vmem>>, vector<1x1x128xf32>
    %326 = vector.shape_cast %325 : vector<1x1x128xf32> to vector<1x128xf32>
    %c0_112 = arith.constant 0 : index
    %c97 = arith.constant 97 : index
    %c0_113 = arith.constant 0 : index
    %327 = vector.load %arg6[%c0_112, %c97, %c0_113] : memref<2x101x128xf32, #tpu.memory_space<vmem>>, vector<1x1x128xf32>
    %328 = vector.shape_cast %327 : vector<1x1x128xf32> to vector<1x128xf32>
    %c0_114 = arith.constant 0 : index
    %c98 = arith.constant 98 : index
    %c0_115 = arith.constant 0 : index
    %329 = vector.load %arg6[%c0_114, %c98, %c0_115] : memref<2x101x128xf32, #tpu.memory_space<vmem>>, vector<1x1x128xf32>
    %330 = vector.shape_cast %329 : vector<1x1x128xf32> to vector<1x128xf32>
    %c0_116 = arith.constant 0 : index
    %c99 = arith.constant 99 : index
    %c0_117 = arith.constant 0 : index
    %331 = vector.load %arg6[%c0_116, %c99, %c0_117] : memref<2x101x128xf32, #tpu.memory_space<vmem>>, vector<1x1x128xf32>
    %332 = vector.shape_cast %331 : vector<1x1x128xf32> to vector<1x128xf32>
    %c0_118 = arith.constant 0 : index
    %c100 = arith.constant 100 : index
    %c0_119 = arith.constant 0 : index
    %333 = vector.load %arg6[%c0_118, %c100, %c0_119] : memref<2x101x128xf32, #tpu.memory_space<vmem>>, vector<1x1x128xf32>
    %334 = vector.shape_cast %333 : vector<1x1x128xf32> to vector<1x128xf32>
    %335 = vector.extract_strided_slice %320 {offsets = [0, 0], sizes = [32, 96], strides = [1, 1]} : vector<32x128xf32> to vector<32x96xf32>
    %cst_120 = arith.constant dense<0.000000e+00> : vector<16x96xf32>
    %336 = tpu.matmul %1, %335, %cst_120 {dimension_numbers = #tpu.dot_dimension_numbers<[1], [0], [0], [1], [0, 0, 1, 1], [], []>} : vector<16x32xf32>, vector<32x96xf32>, vector<16x96xf32> -> vector<16x96xf32>
    %337 = vector.extract_strided_slice %326 {offsets = [0, 0], sizes = [1, 96], strides = [1, 1]} : vector<1x128xf32> to vector<1x96xf32>
    %338 = vector.broadcast %337 : vector<1x96xf32> to vector<16x96xf32>
    %339 = arith.addf %336, %338 : vector<16x96xf32>
    %340 = vector.extract_strided_slice %339 {offsets = [0, 64], sizes = [16, 32], strides = [1, 1]} : vector<16x96xf32> to vector<16x32xf32>
    %341 = vector.extract_strided_slice %339 {offsets = [0, 32], sizes = [16, 32], strides = [1, 1]} : vector<16x96xf32> to vector<16x32xf32>
    %342 = vector.extract_strided_slice %339 {offsets = [0, 0], sizes = [16, 32], strides = [1, 1]} : vector<16x96xf32> to vector<16x32xf32>
    %343 = vector.extract_strided_slice %320 {offsets = [0, 96], sizes = [32, 32], strides = [1, 1]} : vector<32x128xf32> to vector<32x32xf32>
    %344 = vector.extract_strided_slice %326 {offsets = [0, 96], sizes = [1, 32], strides = [1, 1]} : vector<1x128xf32> to vector<1x32xf32>
    %345 = vector.extract_strided_slice %340 {offsets = [0, 0], sizes = [16, 8], strides = [1, 1]} : vector<16x32xf32> to vector<16x8xf32>
    %346 = vector.extract_strided_slice %341 {offsets = [0, 0], sizes = [16, 8], strides = [1, 1]} : vector<16x32xf32> to vector<16x8xf32>
    %347 = vector.extract_strided_slice %342 {offsets = [0, 0], sizes = [16, 8], strides = [1, 1]} : vector<16x32xf32> to vector<16x8xf32>
    %cst_121 = arith.constant dense<0.000000e+00> : vector<16x16xf32>
    %348 = tpu.matmul %345, %346, %cst_121 {dimension_numbers = #tpu.dot_dimension_numbers<[1], [1], [0], [0], [0, 0, 1, 0], [], []>} : vector<16x8xf32>, vector<16x8xf32>, vector<16x16xf32> -> vector<16x16xf32>
    %349 = arith.addf %348, %3 : vector<16x16xf32>
    %cst_122 = arith.constant dense<0xFF800000> : vector<16xf32>
    %350 = vector.multi_reduction <maximumf>, %349, %cst_122 [1] : vector<16x16xf32> to vector<16xf32>
    %351 = vector.shape_cast %350 : vector<16xf32> to vector<16x1xf32>
    %352 = vector.broadcast %351 : vector<16x1xf32> to vector<16x16xf32>
    %353 = arith.subf %349, %352 : vector<16x16xf32>
    %354 = math.exp %353 : vector<16x16xf32>
    %cst_123 = arith.constant dense<0.000000e+00> : vector<16xf32>
    %355 = vector.multi_reduction <add>, %354, %cst_123 [1] : vector<16x16xf32> to vector<16xf32>
    %356 = vector.shape_cast %355 : vector<16xf32> to vector<16x1xf32>
    %357 = tpu.reciprocal %356 {approx = true} : vector<16x1xf32> -> vector<16x1xf32>
    %358 = vector.broadcast %357 : vector<16x1xf32> to vector<16x16xf32>
    %359 = arith.mulf %354, %358 : vector<16x16xf32>
    %cst_124 = arith.constant dense<0.000000e+00> : vector<16x8xf32>
    %360 = tpu.matmul %359, %347, %cst_124 {dimension_numbers = #tpu.dot_dimension_numbers<[1], [0], [0], [1], [0, 0, 1, 1], [], []>} : vector<16x16xf32>, vector<16x8xf32>, vector<16x8xf32> -> vector<16x8xf32>
    %361 = vector.extract_strided_slice %343 {offsets = [0, 0], sizes = [8, 32], strides = [1, 1]} : vector<32x32xf32> to vector<8x32xf32>
    %cst_125 = arith.constant dense<0.000000e+00> : vector<16x32xf32>
    %362 = tpu.matmul %360, %361, %cst_125 {dimension_numbers = #tpu.dot_dimension_numbers<[1], [0], [0], [1], [0, 0, 1, 1], [], []>} : vector<16x8xf32>, vector<8x32xf32>, vector<16x32xf32> -> vector<16x32xf32>
    %363 = vector.extract_strided_slice %340 {offsets = [0, 8], sizes = [16, 8], strides = [1, 1]} : vector<16x32xf32> to vector<16x8xf32>
    %364 = vector.extract_strided_slice %341 {offsets = [0, 8], sizes = [16, 8], strides = [1, 1]} : vector<16x32xf32> to vector<16x8xf32>
    %365 = vector.extract_strided_slice %342 {offsets = [0, 8], sizes = [16, 8], strides = [1, 1]} : vector<16x32xf32> to vector<16x8xf32>
    %cst_126 = arith.constant dense<0.000000e+00> : vector<16x16xf32>
    %366 = tpu.matmul %363, %364, %cst_126 {dimension_numbers = #tpu.dot_dimension_numbers<[1], [1], [0], [0], [0, 0, 1, 0], [], []>} : vector<16x8xf32>, vector<16x8xf32>, vector<16x16xf32> -> vector<16x16xf32>
    %367 = arith.addf %366, %3 : vector<16x16xf32>
    %cst_127 = arith.constant dense<0xFF800000> : vector<16xf32>
    %368 = vector.multi_reduction <maximumf>, %367, %cst_127 [1] : vector<16x16xf32> to vector<16xf32>
    %369 = vector.shape_cast %368 : vector<16xf32> to vector<16x1xf32>
    %370 = vector.broadcast %369 : vector<16x1xf32> to vector<16x16xf32>
    %371 = arith.subf %367, %370 : vector<16x16xf32>
    %372 = math.exp %371 : vector<16x16xf32>
    %cst_128 = arith.constant dense<0.000000e+00> : vector<16xf32>
    %373 = vector.multi_reduction <add>, %372, %cst_128 [1] : vector<16x16xf32> to vector<16xf32>
    %374 = vector.shape_cast %373 : vector<16xf32> to vector<16x1xf32>
    %375 = tpu.reciprocal %374 {approx = true} : vector<16x1xf32> -> vector<16x1xf32>
    %376 = vector.broadcast %375 : vector<16x1xf32> to vector<16x16xf32>
    %377 = arith.mulf %372, %376 : vector<16x16xf32>
    %cst_129 = arith.constant dense<0.000000e+00> : vector<16x8xf32>
    %378 = tpu.matmul %377, %365, %cst_129 {dimension_numbers = #tpu.dot_dimension_numbers<[1], [0], [0], [1], [0, 0, 1, 1], [], []>} : vector<16x16xf32>, vector<16x8xf32>, vector<16x8xf32> -> vector<16x8xf32>
    %379 = vector.extract_strided_slice %343 {offsets = [8, 0], sizes = [8, 32], strides = [1, 1]} : vector<32x32xf32> to vector<8x32xf32>
    %cst_130 = arith.constant dense<0.000000e+00> : vector<16x32xf32>
    %380 = tpu.matmul %378, %379, %cst_130 {dimension_numbers = #tpu.dot_dimension_numbers<[1], [0], [0], [1], [0, 0, 1, 1], [], []>} : vector<16x8xf32>, vector<8x32xf32>, vector<16x32xf32> -> vector<16x32xf32>
    %381 = arith.addf %362, %380 : vector<16x32xf32>
    %382 = vector.extract_strided_slice %340 {offsets = [0, 16], sizes = [16, 8], strides = [1, 1]} : vector<16x32xf32> to vector<16x8xf32>
    %383 = vector.extract_strided_slice %341 {offsets = [0, 16], sizes = [16, 8], strides = [1, 1]} : vector<16x32xf32> to vector<16x8xf32>
    %384 = vector.extract_strided_slice %342 {offsets = [0, 16], sizes = [16, 8], strides = [1, 1]} : vector<16x32xf32> to vector<16x8xf32>
    %cst_131 = arith.constant dense<0.000000e+00> : vector<16x16xf32>
    %385 = tpu.matmul %382, %383, %cst_131 {dimension_numbers = #tpu.dot_dimension_numbers<[1], [1], [0], [0], [0, 0, 1, 0], [], []>} : vector<16x8xf32>, vector<16x8xf32>, vector<16x16xf32> -> vector<16x16xf32>
    %386 = arith.addf %385, %3 : vector<16x16xf32>
    %cst_132 = arith.constant dense<0xFF800000> : vector<16xf32>
    %387 = vector.multi_reduction <maximumf>, %386, %cst_132 [1] : vector<16x16xf32> to vector<16xf32>
    %388 = vector.shape_cast %387 : vector<16xf32> to vector<16x1xf32>
    %389 = vector.broadcast %388 : vector<16x1xf32> to vector<16x16xf32>
    %390 = arith.subf %386, %389 : vector<16x16xf32>
    %391 = math.exp %390 : vector<16x16xf32>
    %cst_133 = arith.constant dense<0.000000e+00> : vector<16xf32>
    %392 = vector.multi_reduction <add>, %391, %cst_133 [1] : vector<16x16xf32> to vector<16xf32>
    %393 = vector.shape_cast %392 : vector<16xf32> to vector<16x1xf32>
    %394 = tpu.reciprocal %393 {approx = true} : vector<16x1xf32> -> vector<16x1xf32>
    %395 = vector.broadcast %394 : vector<16x1xf32> to vector<16x16xf32>
    %396 = arith.mulf %391, %395 : vector<16x16xf32>
    %cst_134 = arith.constant dense<0.000000e+00> : vector<16x8xf32>
    %397 = tpu.matmul %396, %384, %cst_134 {dimension_numbers = #tpu.dot_dimension_numbers<[1], [0], [0], [1], [0, 0, 1, 1], [], []>} : vector<16x16xf32>, vector<16x8xf32>, vector<16x8xf32> -> vector<16x8xf32>
    %398 = vector.extract_strided_slice %343 {offsets = [16, 0], sizes = [8, 32], strides = [1, 1]} : vector<32x32xf32> to vector<8x32xf32>
    %cst_135 = arith.constant dense<0.000000e+00> : vector<16x32xf32>
    %399 = tpu.matmul %397, %398, %cst_135 {dimension_numbers = #tpu.dot_dimension_numbers<[1], [0], [0], [1], [0, 0, 1, 1], [], []>} : vector<16x8xf32>, vector<8x32xf32>, vector<16x32xf32> -> vector<16x32xf32>
    %400 = arith.addf %381, %399 : vector<16x32xf32>
    %401 = vector.extract_strided_slice %340 {offsets = [0, 24], sizes = [16, 8], strides = [1, 1]} : vector<16x32xf32> to vector<16x8xf32>
    %402 = vector.extract_strided_slice %341 {offsets = [0, 24], sizes = [16, 8], strides = [1, 1]} : vector<16x32xf32> to vector<16x8xf32>
    %403 = vector.extract_strided_slice %342 {offsets = [0, 24], sizes = [16, 8], strides = [1, 1]} : vector<16x32xf32> to vector<16x8xf32>
    %cst_136 = arith.constant dense<0.000000e+00> : vector<16x16xf32>
    %404 = tpu.matmul %401, %402, %cst_136 {dimension_numbers = #tpu.dot_dimension_numbers<[1], [1], [0], [0], [0, 0, 1, 0], [], []>} : vector<16x8xf32>, vector<16x8xf32>, vector<16x16xf32> -> vector<16x16xf32>
    %405 = arith.addf %404, %3 : vector<16x16xf32>
    %cst_137 = arith.constant dense<0xFF800000> : vector<16xf32>
    %406 = vector.multi_reduction <maximumf>, %405, %cst_137 [1] : vector<16x16xf32> to vector<16xf32>
    %407 = vector.shape_cast %406 : vector<16xf32> to vector<16x1xf32>
    %408 = vector.broadcast %407 : vector<16x1xf32> to vector<16x16xf32>
    %409 = arith.subf %405, %408 : vector<16x16xf32>
    %410 = math.exp %409 : vector<16x16xf32>
    %cst_138 = arith.constant dense<0.000000e+00> : vector<16xf32>
    %411 = vector.multi_reduction <add>, %410, %cst_138 [1] : vector<16x16xf32> to vector<16xf32>
    %412 = vector.shape_cast %411 : vector<16xf32> to vector<16x1xf32>
    %413 = tpu.reciprocal %412 {approx = true} : vector<16x1xf32> -> vector<16x1xf32>
    %414 = vector.broadcast %413 : vector<16x1xf32> to vector<16x16xf32>
    %415 = arith.mulf %410, %414 : vector<16x16xf32>
    %cst_139 = arith.constant dense<0.000000e+00> : vector<16x8xf32>
    %416 = tpu.matmul %415, %403, %cst_139 {dimension_numbers = #tpu.dot_dimension_numbers<[1], [0], [0], [1], [0, 0, 1, 1], [], []>} : vector<16x16xf32>, vector<16x8xf32>, vector<16x8xf32> -> vector<16x8xf32>
    %417 = vector.extract_strided_slice %343 {offsets = [24, 0], sizes = [8, 32], strides = [1, 1]} : vector<32x32xf32> to vector<8x32xf32>
    %cst_140 = arith.constant dense<0.000000e+00> : vector<16x32xf32>
    %418 = tpu.matmul %416, %417, %cst_140 {dimension_numbers = #tpu.dot_dimension_numbers<[1], [0], [0], [1], [0, 0, 1, 1], [], []>} : vector<16x8xf32>, vector<8x32xf32>, vector<16x32xf32> -> vector<16x32xf32>
    %419 = arith.addf %400, %418 : vector<16x32xf32>
    %420 = vector.broadcast %344 : vector<1x32xf32> to vector<16x32xf32>
    %421 = arith.addf %419, %420 : vector<16x32xf32>
    %422 = vector.extract_strided_slice %332 {offsets = [0, 0], sizes = [1, 32], strides = [1, 1]} : vector<1x128xf32> to vector<1x32xf32>
    %423 = vector.extract_strided_slice %332 {offsets = [0, 32], sizes = [1, 32], strides = [1, 1]} : vector<1x128xf32> to vector<1x32xf32>
    %424 = arith.addf %421, %1 : vector<16x32xf32>
    %cst_141 = arith.constant dense<0.000000e+00> : vector<16xf32>
    %425 = vector.multi_reduction <add>, %424, %cst_141 [1] : vector<16x32xf32> to vector<16xf32>
    %426 = vector.shape_cast %425 : vector<16xf32> to vector<16x1xf32>
    %cst_142 = arith.constant 3.200000e+01 : f32
    %427 = vector.broadcast %cst_142 : f32 to vector<16x1xf32>
    %428 = arith.divf %426, %427 : vector<16x1xf32>
    %429 = vector.broadcast %428 : vector<16x1xf32> to vector<16x32xf32>
    %430 = arith.subf %424, %429 : vector<16x32xf32>
    %431 = arith.mulf %430, %430 : vector<16x32xf32>
    %cst_143 = arith.constant dense<0.000000e+00> : vector<16xf32>
    %432 = vector.multi_reduction <add>, %431, %cst_143 [1] : vector<16x32xf32> to vector<16xf32>
    %433 = vector.shape_cast %432 : vector<16xf32> to vector<16x1xf32>
    %cst_144 = arith.constant 0.0322580636 : f32
    %434 = vector.broadcast %cst_144 : f32 to vector<16x1xf32>
    %435 = arith.mulf %433, %434 : vector<16x1xf32>
    %436 = math.sqrt %435 : vector<16x1xf32>
    %cst_145 = arith.constant 9.99999997E-7 : f32
    %437 = vector.broadcast %cst_145 : f32 to vector<16x1xf32>
    %438 = arith.addf %436, %437 : vector<16x1xf32>
    %439 = tpu.reciprocal %438 : vector<16x1xf32> -> vector<16x1xf32>
    %440 = vector.broadcast %422 : vector<1x32xf32> to vector<16x32xf32>
    %441 = arith.mulf %440, %430 : vector<16x32xf32>
    %442 = vector.broadcast %439 : vector<16x1xf32> to vector<16x32xf32>
    %443 = arith.mulf %441, %442 : vector<16x32xf32>
    %444 = vector.broadcast %423 : vector<1x32xf32> to vector<16x32xf32>
    %445 = arith.addf %443, %444 : vector<16x32xf32>
    %446 = vector.extract_strided_slice %322 {offsets = [0, 0], sizes = [32, 64], strides = [1, 1]} : vector<32x128xf32> to vector<32x64xf32>
    %cst_146 = arith.constant dense<0.000000e+00> : vector<16x64xf32>
    %447 = tpu.matmul %318, %446, %cst_146 {dimension_numbers = #tpu.dot_dimension_numbers<[1], [0], [0], [1], [0, 0, 1, 1], [], []>} : vector<16x32xf32>, vector<32x64xf32>, vector<16x64xf32> -> vector<16x64xf32>
    %448 = vector.extract_strided_slice %328 {offsets = [0, 0], sizes = [1, 64], strides = [1, 1]} : vector<1x128xf32> to vector<1x64xf32>
    %449 = vector.broadcast %448 : vector<1x64xf32> to vector<16x64xf32>
    %450 = arith.addf %447, %449 : vector<16x64xf32>
    %451 = vector.extract_strided_slice %322 {offsets = [0, 64], sizes = [32, 32], strides = [1, 1]} : vector<32x128xf32> to vector<32x32xf32>
    %cst_147 = arith.constant dense<0.000000e+00> : vector<16x32xf32>
    %452 = tpu.matmul %445, %451, %cst_147 {dimension_numbers = #tpu.dot_dimension_numbers<[1], [0], [0], [1], [0, 0, 1, 1], [], []>} : vector<16x32xf32>, vector<32x32xf32>, vector<16x32xf32> -> vector<16x32xf32>
    %453 = vector.extract_strided_slice %328 {offsets = [0, 64], sizes = [1, 32], strides = [1, 1]} : vector<1x128xf32> to vector<1x32xf32>
    %454 = vector.broadcast %453 : vector<1x32xf32> to vector<16x32xf32>
    %455 = arith.addf %452, %454 : vector<16x32xf32>
    %456 = vector.extract_strided_slice %450 {offsets = [0, 32], sizes = [16, 32], strides = [1, 1]} : vector<16x64xf32> to vector<16x32xf32>
    %457 = vector.extract_strided_slice %450 {offsets = [0, 0], sizes = [16, 32], strides = [1, 1]} : vector<16x64xf32> to vector<16x32xf32>
    %458 = vector.extract_strided_slice %322 {offsets = [0, 96], sizes = [32, 32], strides = [1, 1]} : vector<32x128xf32> to vector<32x32xf32>
    %459 = vector.extract_strided_slice %328 {offsets = [0, 96], sizes = [1, 32], strides = [1, 1]} : vector<1x128xf32> to vector<1x32xf32>
    %460 = vector.extract_strided_slice %455 {offsets = [0, 0], sizes = [16, 8], strides = [1, 1]} : vector<16x32xf32> to vector<16x8xf32>
    %461 = vector.extract_strided_slice %456 {offsets = [0, 0], sizes = [16, 8], strides = [1, 1]} : vector<16x32xf32> to vector<16x8xf32>
    %462 = vector.extract_strided_slice %457 {offsets = [0, 0], sizes = [16, 8], strides = [1, 1]} : vector<16x32xf32> to vector<16x8xf32>
    %cst_148 = arith.constant dense<0.000000e+00> : vector<16x16xf32>
    %463 = tpu.matmul %460, %461, %cst_148 {dimension_numbers = #tpu.dot_dimension_numbers<[1], [1], [0], [0], [0, 0, 1, 0], [], []>} : vector<16x8xf32>, vector<16x8xf32>, vector<16x16xf32> -> vector<16x16xf32>
    %464 = arith.addf %463, %4 : vector<16x16xf32>
    %cst_149 = arith.constant dense<0xFF800000> : vector<16xf32>
    %465 = vector.multi_reduction <maximumf>, %464, %cst_149 [1] : vector<16x16xf32> to vector<16xf32>
    %466 = vector.shape_cast %465 : vector<16xf32> to vector<16x1xf32>
    %467 = vector.broadcast %466 : vector<16x1xf32> to vector<16x16xf32>
    %468 = arith.subf %464, %467 : vector<16x16xf32>
    %469 = math.exp %468 : vector<16x16xf32>
    %cst_150 = arith.constant dense<0.000000e+00> : vector<16xf32>
    %470 = vector.multi_reduction <add>, %469, %cst_150 [1] : vector<16x16xf32> to vector<16xf32>
    %471 = vector.shape_cast %470 : vector<16xf32> to vector<16x1xf32>
    %472 = tpu.reciprocal %471 {approx = true} : vector<16x1xf32> -> vector<16x1xf32>
    %473 = vector.broadcast %472 : vector<16x1xf32> to vector<16x16xf32>
    %474 = arith.mulf %469, %473 : vector<16x16xf32>
    %cst_151 = arith.constant dense<0.000000e+00> : vector<16x8xf32>
    %475 = tpu.matmul %474, %462, %cst_151 {dimension_numbers = #tpu.dot_dimension_numbers<[1], [0], [0], [1], [0, 0, 1, 1], [], []>} : vector<16x16xf32>, vector<16x8xf32>, vector<16x8xf32> -> vector<16x8xf32>
    %476 = vector.extract_strided_slice %458 {offsets = [0, 0], sizes = [8, 32], strides = [1, 1]} : vector<32x32xf32> to vector<8x32xf32>
    %cst_152 = arith.constant dense<0.000000e+00> : vector<16x32xf32>
    %477 = tpu.matmul %475, %476, %cst_152 {dimension_numbers = #tpu.dot_dimension_numbers<[1], [0], [0], [1], [0, 0, 1, 1], [], []>} : vector<16x8xf32>, vector<8x32xf32>, vector<16x32xf32> -> vector<16x32xf32>
    %478 = vector.extract_strided_slice %455 {offsets = [0, 8], sizes = [16, 8], strides = [1, 1]} : vector<16x32xf32> to vector<16x8xf32>
    %479 = vector.extract_strided_slice %456 {offsets = [0, 8], sizes = [16, 8], strides = [1, 1]} : vector<16x32xf32> to vector<16x8xf32>
    %480 = vector.extract_strided_slice %457 {offsets = [0, 8], sizes = [16, 8], strides = [1, 1]} : vector<16x32xf32> to vector<16x8xf32>
    %cst_153 = arith.constant dense<0.000000e+00> : vector<16x16xf32>
    %481 = tpu.matmul %478, %479, %cst_153 {dimension_numbers = #tpu.dot_dimension_numbers<[1], [1], [0], [0], [0, 0, 1, 0], [], []>} : vector<16x8xf32>, vector<16x8xf32>, vector<16x16xf32> -> vector<16x16xf32>
    %482 = arith.addf %481, %4 : vector<16x16xf32>
    %cst_154 = arith.constant dense<0xFF800000> : vector<16xf32>
    %483 = vector.multi_reduction <maximumf>, %482, %cst_154 [1] : vector<16x16xf32> to vector<16xf32>
    %484 = vector.shape_cast %483 : vector<16xf32> to vector<16x1xf32>
    %485 = vector.broadcast %484 : vector<16x1xf32> to vector<16x16xf32>
    %486 = arith.subf %482, %485 : vector<16x16xf32>
    %487 = math.exp %486 : vector<16x16xf32>
    %cst_155 = arith.constant dense<0.000000e+00> : vector<16xf32>
    %488 = vector.multi_reduction <add>, %487, %cst_155 [1] : vector<16x16xf32> to vector<16xf32>
    %489 = vector.shape_cast %488 : vector<16xf32> to vector<16x1xf32>
    %490 = tpu.reciprocal %489 {approx = true} : vector<16x1xf32> -> vector<16x1xf32>
    %491 = vector.broadcast %490 : vector<16x1xf32> to vector<16x16xf32>
    %492 = arith.mulf %487, %491 : vector<16x16xf32>
    %cst_156 = arith.constant dense<0.000000e+00> : vector<16x8xf32>
    %493 = tpu.matmul %492, %480, %cst_156 {dimension_numbers = #tpu.dot_dimension_numbers<[1], [0], [0], [1], [0, 0, 1, 1], [], []>} : vector<16x16xf32>, vector<16x8xf32>, vector<16x8xf32> -> vector<16x8xf32>
    %494 = vector.extract_strided_slice %458 {offsets = [8, 0], sizes = [8, 32], strides = [1, 1]} : vector<32x32xf32> to vector<8x32xf32>
    %cst_157 = arith.constant dense<0.000000e+00> : vector<16x32xf32>
    %495 = tpu.matmul %493, %494, %cst_157 {dimension_numbers = #tpu.dot_dimension_numbers<[1], [0], [0], [1], [0, 0, 1, 1], [], []>} : vector<16x8xf32>, vector<8x32xf32>, vector<16x32xf32> -> vector<16x32xf32>
    %496 = arith.addf %477, %495 : vector<16x32xf32>
    %497 = vector.extract_strided_slice %455 {offsets = [0, 16], sizes = [16, 8], strides = [1, 1]} : vector<16x32xf32> to vector<16x8xf32>
    %498 = vector.extract_strided_slice %456 {offsets = [0, 16], sizes = [16, 8], strides = [1, 1]} : vector<16x32xf32> to vector<16x8xf32>
    %499 = vector.extract_strided_slice %457 {offsets = [0, 16], sizes = [16, 8], strides = [1, 1]} : vector<16x32xf32> to vector<16x8xf32>
    %cst_158 = arith.constant dense<0.000000e+00> : vector<16x16xf32>
    %500 = tpu.matmul %497, %498, %cst_158 {dimension_numbers = #tpu.dot_dimension_numbers<[1], [1], [0], [0], [0, 0, 1, 0], [], []>} : vector<16x8xf32>, vector<16x8xf32>, vector<16x16xf32> -> vector<16x16xf32>
    %501 = arith.addf %500, %4 : vector<16x16xf32>
    %cst_159 = arith.constant dense<0xFF800000> : vector<16xf32>
    %502 = vector.multi_reduction <maximumf>, %501, %cst_159 [1] : vector<16x16xf32> to vector<16xf32>
    %503 = vector.shape_cast %502 : vector<16xf32> to vector<16x1xf32>
    %504 = vector.broadcast %503 : vector<16x1xf32> to vector<16x16xf32>
    %505 = arith.subf %501, %504 : vector<16x16xf32>
    %506 = math.exp %505 : vector<16x16xf32>
    %cst_160 = arith.constant dense<0.000000e+00> : vector<16xf32>
    %507 = vector.multi_reduction <add>, %506, %cst_160 [1] : vector<16x16xf32> to vector<16xf32>
    %508 = vector.shape_cast %507 : vector<16xf32> to vector<16x1xf32>
    %509 = tpu.reciprocal %508 {approx = true} : vector<16x1xf32> -> vector<16x1xf32>
    %510 = vector.broadcast %509 : vector<16x1xf32> to vector<16x16xf32>
    %511 = arith.mulf %506, %510 : vector<16x16xf32>
    %cst_161 = arith.constant dense<0.000000e+00> : vector<16x8xf32>
    %512 = tpu.matmul %511, %499, %cst_161 {dimension_numbers = #tpu.dot_dimension_numbers<[1], [0], [0], [1], [0, 0, 1, 1], [], []>} : vector<16x16xf32>, vector<16x8xf32>, vector<16x8xf32> -> vector<16x8xf32>
    %513 = vector.extract_strided_slice %458 {offsets = [16, 0], sizes = [8, 32], strides = [1, 1]} : vector<32x32xf32> to vector<8x32xf32>
    %cst_162 = arith.constant dense<0.000000e+00> : vector<16x32xf32>
    %514 = tpu.matmul %512, %513, %cst_162 {dimension_numbers = #tpu.dot_dimension_numbers<[1], [0], [0], [1], [0, 0, 1, 1], [], []>} : vector<16x8xf32>, vector<8x32xf32>, vector<16x32xf32> -> vector<16x32xf32>
    %515 = arith.addf %496, %514 : vector<16x32xf32>
    %516 = vector.extract_strided_slice %455 {offsets = [0, 24], sizes = [16, 8], strides = [1, 1]} : vector<16x32xf32> to vector<16x8xf32>
    %517 = vector.extract_strided_slice %456 {offsets = [0, 24], sizes = [16, 8], strides = [1, 1]} : vector<16x32xf32> to vector<16x8xf32>
    %518 = vector.extract_strided_slice %457 {offsets = [0, 24], sizes = [16, 8], strides = [1, 1]} : vector<16x32xf32> to vector<16x8xf32>
    %cst_163 = arith.constant dense<0.000000e+00> : vector<16x16xf32>
    %519 = tpu.matmul %516, %517, %cst_163 {dimension_numbers = #tpu.dot_dimension_numbers<[1], [1], [0], [0], [0, 0, 1, 0], [], []>} : vector<16x8xf32>, vector<16x8xf32>, vector<16x16xf32> -> vector<16x16xf32>
    %520 = arith.addf %519, %4 : vector<16x16xf32>
    %cst_164 = arith.constant dense<0xFF800000> : vector<16xf32>
    %521 = vector.multi_reduction <maximumf>, %520, %cst_164 [1] : vector<16x16xf32> to vector<16xf32>
    %522 = vector.shape_cast %521 : vector<16xf32> to vector<16x1xf32>
    %523 = vector.broadcast %522 : vector<16x1xf32> to vector<16x16xf32>
    %524 = arith.subf %520, %523 : vector<16x16xf32>
    %525 = math.exp %524 : vector<16x16xf32>
    %cst_165 = arith.constant dense<0.000000e+00> : vector<16xf32>
    %526 = vector.multi_reduction <add>, %525, %cst_165 [1] : vector<16x16xf32> to vector<16xf32>
    %527 = vector.shape_cast %526 : vector<16xf32> to vector<16x1xf32>
    %528 = tpu.reciprocal %527 {approx = true} : vector<16x1xf32> -> vector<16x1xf32>
    %529 = vector.broadcast %528 : vector<16x1xf32> to vector<16x16xf32>
    %530 = arith.mulf %525, %529 : vector<16x16xf32>
    %cst_166 = arith.constant dense<0.000000e+00> : vector<16x8xf32>
    %531 = tpu.matmul %530, %518, %cst_166 {dimension_numbers = #tpu.dot_dimension_numbers<[1], [0], [0], [1], [0, 0, 1, 1], [], []>} : vector<16x16xf32>, vector<16x8xf32>, vector<16x8xf32> -> vector<16x8xf32>
    %532 = vector.extract_strided_slice %458 {offsets = [24, 0], sizes = [8, 32], strides = [1, 1]} : vector<32x32xf32> to vector<8x32xf32>
    %cst_167 = arith.constant dense<0.000000e+00> : vector<16x32xf32>
    %533 = tpu.matmul %531, %532, %cst_167 {dimension_numbers = #tpu.dot_dimension_numbers<[1], [0], [0], [1], [0, 0, 1, 1], [], []>} : vector<16x8xf32>, vector<8x32xf32>, vector<16x32xf32> -> vector<16x32xf32>
    %534 = arith.addf %515, %533 : vector<16x32xf32>
    %535 = vector.broadcast %459 : vector<1x32xf32> to vector<16x32xf32>
    %536 = arith.addf %534, %535 : vector<16x32xf32>
    %537 = vector.extract_strided_slice %332 {offsets = [0, 64], sizes = [1, 32], strides = [1, 1]} : vector<1x128xf32> to vector<1x32xf32>
    %538 = vector.extract_strided_slice %332 {offsets = [0, 96], sizes = [1, 32], strides = [1, 1]} : vector<1x128xf32> to vector<1x32xf32>
    %539 = arith.addf %536, %445 : vector<16x32xf32>
    %cst_168 = arith.constant dense<0.000000e+00> : vector<16xf32>
    %540 = vector.multi_reduction <add>, %539, %cst_168 [1] : vector<16x32xf32> to vector<16xf32>
    %541 = vector.shape_cast %540 : vector<16xf32> to vector<16x1xf32>
    %cst_169 = arith.constant 3.200000e+01 : f32
    %542 = vector.broadcast %cst_169 : f32 to vector<16x1xf32>
    %543 = arith.divf %541, %542 : vector<16x1xf32>
    %544 = vector.broadcast %543 : vector<16x1xf32> to vector<16x32xf32>
    %545 = arith.subf %539, %544 : vector<16x32xf32>
    %546 = arith.mulf %545, %545 : vector<16x32xf32>
    %cst_170 = arith.constant dense<0.000000e+00> : vector<16xf32>
    %547 = vector.multi_reduction <add>, %546, %cst_170 [1] : vector<16x32xf32> to vector<16xf32>
    %548 = vector.shape_cast %547 : vector<16xf32> to vector<16x1xf32>
    %cst_171 = arith.constant 0.0322580636 : f32
    %549 = vector.broadcast %cst_171 : f32 to vector<16x1xf32>
    %550 = arith.mulf %548, %549 : vector<16x1xf32>
    %551 = math.sqrt %550 : vector<16x1xf32>
    %cst_172 = arith.constant 9.99999997E-7 : f32
    %552 = vector.broadcast %cst_172 : f32 to vector<16x1xf32>
    %553 = arith.addf %551, %552 : vector<16x1xf32>
    %554 = tpu.reciprocal %553 : vector<16x1xf32> -> vector<16x1xf32>
    %555 = vector.broadcast %537 : vector<1x32xf32> to vector<16x32xf32>
    %556 = arith.mulf %555, %545 : vector<16x32xf32>
    %557 = vector.broadcast %554 : vector<16x1xf32> to vector<16x32xf32>
    %558 = arith.mulf %556, %557 : vector<16x32xf32>
    %559 = vector.broadcast %538 : vector<1x32xf32> to vector<16x32xf32>
    %560 = arith.addf %558, %559 : vector<16x32xf32>
    %561 = vector.extract_strided_slice %324 {offsets = [0, 0], sizes = [32, 64], strides = [1, 1]} : vector<32x128xf32> to vector<32x64xf32>
    %cst_173 = arith.constant dense<0.000000e+00> : vector<16x64xf32>
    %562 = tpu.matmul %560, %561, %cst_173 {dimension_numbers = #tpu.dot_dimension_numbers<[1], [0], [0], [1], [0, 0, 1, 1], [], []>} : vector<16x32xf32>, vector<32x64xf32>, vector<16x64xf32> -> vector<16x64xf32>
    %563 = vector.extract_strided_slice %330 {offsets = [0, 0], sizes = [1, 64], strides = [1, 1]} : vector<1x128xf32> to vector<1x64xf32>
    %564 = vector.broadcast %563 : vector<1x64xf32> to vector<16x64xf32>
    %565 = arith.addf %562, %564 : vector<16x64xf32>
    %cst_174 = arith.constant 0.000000e+00 : f32
    %566 = vector.broadcast %cst_174 : f32 to vector<16x64xf32>
    %567 = arith.maximumf %565, %566 : vector<16x64xf32>
    %568 = vector.extract_strided_slice %324 {offsets = [0, 64], sizes = [32, 64], strides = [1, 1]} : vector<32x128xf32> to vector<32x64xf32>
    %cst_175 = arith.constant dense<0.000000e+00> : vector<16x32xf32>
    %569 = tpu.matmul %567, %568, %cst_175 {dimension_numbers = #tpu.dot_dimension_numbers<[1], [1], [0], [0], [0, 0, 1, 0], [], []>} : vector<16x64xf32>, vector<32x64xf32>, vector<16x32xf32> -> vector<16x32xf32>
    %570 = vector.extract_strided_slice %330 {offsets = [0, 64], sizes = [1, 32], strides = [1, 1]} : vector<1x128xf32> to vector<1x32xf32>
    %571 = vector.broadcast %570 : vector<1x32xf32> to vector<16x32xf32>
    %572 = arith.addf %569, %571 : vector<16x32xf32>
    %573 = vector.extract_strided_slice %334 {offsets = [0, 0], sizes = [1, 32], strides = [1, 1]} : vector<1x128xf32> to vector<1x32xf32>
    %574 = vector.extract_strided_slice %334 {offsets = [0, 32], sizes = [1, 32], strides = [1, 1]} : vector<1x128xf32> to vector<1x32xf32>
    %575 = arith.addf %572, %560 : vector<16x32xf32>
    %cst_176 = arith.constant dense<0.000000e+00> : vector<16xf32>
    %576 = vector.multi_reduction <add>, %575, %cst_176 [1] : vector<16x32xf32> to vector<16xf32>
    %577 = vector.shape_cast %576 : vector<16xf32> to vector<16x1xf32>
    %cst_177 = arith.constant 3.200000e+01 : f32
    %578 = vector.broadcast %cst_177 : f32 to vector<16x1xf32>
    %579 = arith.divf %577, %578 : vector<16x1xf32>
    %580 = vector.broadcast %579 : vector<16x1xf32> to vector<16x32xf32>
    %581 = arith.subf %575, %580 : vector<16x32xf32>
    %582 = arith.mulf %581, %581 : vector<16x32xf32>
    %cst_178 = arith.constant dense<0.000000e+00> : vector<16xf32>
    %583 = vector.multi_reduction <add>, %582, %cst_178 [1] : vector<16x32xf32> to vector<16xf32>
    %584 = vector.shape_cast %583 : vector<16xf32> to vector<16x1xf32>
    %cst_179 = arith.constant 0.0322580636 : f32
    %585 = vector.broadcast %cst_179 : f32 to vector<16x1xf32>
    %586 = arith.mulf %584, %585 : vector<16x1xf32>
    %587 = math.sqrt %586 : vector<16x1xf32>
    %cst_180 = arith.constant 9.99999997E-7 : f32
    %588 = vector.broadcast %cst_180 : f32 to vector<16x1xf32>
    %589 = arith.addf %587, %588 : vector<16x1xf32>
    %590 = tpu.reciprocal %589 : vector<16x1xf32> -> vector<16x1xf32>
    %591 = vector.broadcast %573 : vector<1x32xf32> to vector<16x32xf32>
    %592 = arith.mulf %591, %581 : vector<16x32xf32>
    %593 = vector.broadcast %590 : vector<16x1xf32> to vector<16x32xf32>
    %594 = arith.mulf %592, %593 : vector<16x32xf32>
    %595 = vector.broadcast %574 : vector<1x32xf32> to vector<16x32xf32>
    %596 = arith.addf %594, %595 : vector<16x32xf32>
    %c1_181 = arith.constant 1 : index
    %c0_182 = arith.constant 0 : index
    %c0_183 = arith.constant 0 : index
    %597 = vector.load %arg6[%c1_181, %c0_182, %c0_183] : memref<2x101x128xf32, #tpu.memory_space<vmem>>, vector<1x32x128xf32>
    %598 = vector.shape_cast %597 : vector<1x32x128xf32> to vector<32x128xf32>
    %c1_184 = arith.constant 1 : index
    %c32_185 = arith.constant 32 : index
    %c0_186 = arith.constant 0 : index
    %599 = vector.load %arg6[%c1_184, %c32_185, %c0_186] : memref<2x101x128xf32, #tpu.memory_space<vmem>>, vector<1x32x128xf32>
    %600 = vector.shape_cast %599 : vector<1x32x128xf32> to vector<32x128xf32>
    %c1_187 = arith.constant 1 : index
    %c64_188 = arith.constant 64 : index
    %c0_189 = arith.constant 0 : index
    %601 = vector.load %arg6[%c1_187, %c64_188, %c0_189] : memref<2x101x128xf32, #tpu.memory_space<vmem>>, vector<1x32x128xf32>
    %602 = vector.shape_cast %601 : vector<1x32x128xf32> to vector<32x128xf32>
    %c1_190 = arith.constant 1 : index
    %c96_191 = arith.constant 96 : index
    %c0_192 = arith.constant 0 : index
    %603 = vector.load %arg6[%c1_190, %c96_191, %c0_192] : memref<2x101x128xf32, #tpu.memory_space<vmem>>, vector<1x1x128xf32>
    %604 = vector.shape_cast %603 : vector<1x1x128xf32> to vector<1x128xf32>
    %c1_193 = arith.constant 1 : index
    %c97_194 = arith.constant 97 : index
    %c0_195 = arith.constant 0 : index
    %605 = vector.load %arg6[%c1_193, %c97_194, %c0_195] : memref<2x101x128xf32, #tpu.memory_space<vmem>>, vector<1x1x128xf32>
    %606 = vector.shape_cast %605 : vector<1x1x128xf32> to vector<1x128xf32>
    %c1_196 = arith.constant 1 : index
    %c98_197 = arith.constant 98 : index
    %c0_198 = arith.constant 0 : index
    %607 = vector.load %arg6[%c1_196, %c98_197, %c0_198] : memref<2x101x128xf32, #tpu.memory_space<vmem>>, vector<1x1x128xf32>
    %608 = vector.shape_cast %607 : vector<1x1x128xf32> to vector<1x128xf32>
    %c1_199 = arith.constant 1 : index
    %c99_200 = arith.constant 99 : index
    %c0_201 = arith.constant 0 : index
    %609 = vector.load %arg6[%c1_199, %c99_200, %c0_201] : memref<2x101x128xf32, #tpu.memory_space<vmem>>, vector<1x1x128xf32>
    %610 = vector.shape_cast %609 : vector<1x1x128xf32> to vector<1x128xf32>
    %c1_202 = arith.constant 1 : index
    %c100_203 = arith.constant 100 : index
    %c0_204 = arith.constant 0 : index
    %611 = vector.load %arg6[%c1_202, %c100_203, %c0_204] : memref<2x101x128xf32, #tpu.memory_space<vmem>>, vector<1x1x128xf32>
    %612 = vector.shape_cast %611 : vector<1x1x128xf32> to vector<1x128xf32>
    %613 = vector.extract_strided_slice %598 {offsets = [0, 0], sizes = [32, 96], strides = [1, 1]} : vector<32x128xf32> to vector<32x96xf32>
    %cst_205 = arith.constant dense<0.000000e+00> : vector<16x96xf32>
    %614 = tpu.matmul %596, %613, %cst_205 {dimension_numbers = #tpu.dot_dimension_numbers<[1], [0], [0], [1], [0, 0, 1, 1], [], []>} : vector<16x32xf32>, vector<32x96xf32>, vector<16x96xf32> -> vector<16x96xf32>
    %615 = vector.extract_strided_slice %604 {offsets = [0, 0], sizes = [1, 96], strides = [1, 1]} : vector<1x128xf32> to vector<1x96xf32>
    %616 = vector.broadcast %615 : vector<1x96xf32> to vector<16x96xf32>
    %617 = arith.addf %614, %616 : vector<16x96xf32>
    %618 = vector.extract_strided_slice %617 {offsets = [0, 64], sizes = [16, 32], strides = [1, 1]} : vector<16x96xf32> to vector<16x32xf32>
    %619 = vector.extract_strided_slice %617 {offsets = [0, 32], sizes = [16, 32], strides = [1, 1]} : vector<16x96xf32> to vector<16x32xf32>
    %620 = vector.extract_strided_slice %617 {offsets = [0, 0], sizes = [16, 32], strides = [1, 1]} : vector<16x96xf32> to vector<16x32xf32>
    %621 = vector.extract_strided_slice %598 {offsets = [0, 96], sizes = [32, 32], strides = [1, 1]} : vector<32x128xf32> to vector<32x32xf32>
    %622 = vector.extract_strided_slice %604 {offsets = [0, 96], sizes = [1, 32], strides = [1, 1]} : vector<1x128xf32> to vector<1x32xf32>
    %623 = vector.extract_strided_slice %618 {offsets = [0, 0], sizes = [16, 8], strides = [1, 1]} : vector<16x32xf32> to vector<16x8xf32>
    %624 = vector.extract_strided_slice %619 {offsets = [0, 0], sizes = [16, 8], strides = [1, 1]} : vector<16x32xf32> to vector<16x8xf32>
    %625 = vector.extract_strided_slice %620 {offsets = [0, 0], sizes = [16, 8], strides = [1, 1]} : vector<16x32xf32> to vector<16x8xf32>
    %cst_206 = arith.constant dense<0.000000e+00> : vector<16x16xf32>
    %626 = tpu.matmul %623, %624, %cst_206 {dimension_numbers = #tpu.dot_dimension_numbers<[1], [1], [0], [0], [0, 0, 1, 0], [], []>} : vector<16x8xf32>, vector<16x8xf32>, vector<16x16xf32> -> vector<16x16xf32>
    %627 = arith.addf %626, %3 : vector<16x16xf32>
    %cst_207 = arith.constant dense<0xFF800000> : vector<16xf32>
    %628 = vector.multi_reduction <maximumf>, %627, %cst_207 [1] : vector<16x16xf32> to vector<16xf32>
    %629 = vector.shape_cast %628 : vector<16xf32> to vector<16x1xf32>
    %630 = vector.broadcast %629 : vector<16x1xf32> to vector<16x16xf32>
    %631 = arith.subf %627, %630 : vector<16x16xf32>
    %632 = math.exp %631 : vector<16x16xf32>
    %cst_208 = arith.constant dense<0.000000e+00> : vector<16xf32>
    %633 = vector.multi_reduction <add>, %632, %cst_208 [1] : vector<16x16xf32> to vector<16xf32>
    %634 = vector.shape_cast %633 : vector<16xf32> to vector<16x1xf32>
    %635 = tpu.reciprocal %634 {approx = true} : vector<16x1xf32> -> vector<16x1xf32>
    %636 = vector.broadcast %635 : vector<16x1xf32> to vector<16x16xf32>
    %637 = arith.mulf %632, %636 : vector<16x16xf32>
    %cst_209 = arith.constant dense<0.000000e+00> : vector<16x8xf32>
    %638 = tpu.matmul %637, %625, %cst_209 {dimension_numbers = #tpu.dot_dimension_numbers<[1], [0], [0], [1], [0, 0, 1, 1], [], []>} : vector<16x16xf32>, vector<16x8xf32>, vector<16x8xf32> -> vector<16x8xf32>
    %639 = vector.extract_strided_slice %621 {offsets = [0, 0], sizes = [8, 32], strides = [1, 1]} : vector<32x32xf32> to vector<8x32xf32>
    %cst_210 = arith.constant dense<0.000000e+00> : vector<16x32xf32>
    %640 = tpu.matmul %638, %639, %cst_210 {dimension_numbers = #tpu.dot_dimension_numbers<[1], [0], [0], [1], [0, 0, 1, 1], [], []>} : vector<16x8xf32>, vector<8x32xf32>, vector<16x32xf32> -> vector<16x32xf32>
    %641 = vector.extract_strided_slice %618 {offsets = [0, 8], sizes = [16, 8], strides = [1, 1]} : vector<16x32xf32> to vector<16x8xf32>
    %642 = vector.extract_strided_slice %619 {offsets = [0, 8], sizes = [16, 8], strides = [1, 1]} : vector<16x32xf32> to vector<16x8xf32>
    %643 = vector.extract_strided_slice %620 {offsets = [0, 8], sizes = [16, 8], strides = [1, 1]} : vector<16x32xf32> to vector<16x8xf32>
    %cst_211 = arith.constant dense<0.000000e+00> : vector<16x16xf32>
    %644 = tpu.matmul %641, %642, %cst_211 {dimension_numbers = #tpu.dot_dimension_numbers<[1], [1], [0], [0], [0, 0, 1, 0], [], []>} : vector<16x8xf32>, vector<16x8xf32>, vector<16x16xf32> -> vector<16x16xf32>
    %645 = arith.addf %644, %3 : vector<16x16xf32>
    %cst_212 = arith.constant dense<0xFF800000> : vector<16xf32>
    %646 = vector.multi_reduction <maximumf>, %645, %cst_212 [1] : vector<16x16xf32> to vector<16xf32>
    %647 = vector.shape_cast %646 : vector<16xf32> to vector<16x1xf32>
    %648 = vector.broadcast %647 : vector<16x1xf32> to vector<16x16xf32>
    %649 = arith.subf %645, %648 : vector<16x16xf32>
    %650 = math.exp %649 : vector<16x16xf32>
    %cst_213 = arith.constant dense<0.000000e+00> : vector<16xf32>
    %651 = vector.multi_reduction <add>, %650, %cst_213 [1] : vector<16x16xf32> to vector<16xf32>
    %652 = vector.shape_cast %651 : vector<16xf32> to vector<16x1xf32>
    %653 = tpu.reciprocal %652 {approx = true} : vector<16x1xf32> -> vector<16x1xf32>
    %654 = vector.broadcast %653 : vector<16x1xf32> to vector<16x16xf32>
    %655 = arith.mulf %650, %654 : vector<16x16xf32>
    %cst_214 = arith.constant dense<0.000000e+00> : vector<16x8xf32>
    %656 = tpu.matmul %655, %643, %cst_214 {dimension_numbers = #tpu.dot_dimension_numbers<[1], [0], [0], [1], [0, 0, 1, 1], [], []>} : vector<16x16xf32>, vector<16x8xf32>, vector<16x8xf32> -> vector<16x8xf32>
    %657 = vector.extract_strided_slice %621 {offsets = [8, 0], sizes = [8, 32], strides = [1, 1]} : vector<32x32xf32> to vector<8x32xf32>
    %cst_215 = arith.constant dense<0.000000e+00> : vector<16x32xf32>
    %658 = tpu.matmul %656, %657, %cst_215 {dimension_numbers = #tpu.dot_dimension_numbers<[1], [0], [0], [1], [0, 0, 1, 1], [], []>} : vector<16x8xf32>, vector<8x32xf32>, vector<16x32xf32> -> vector<16x32xf32>
    %659 = arith.addf %640, %658 : vector<16x32xf32>
    %660 = vector.extract_strided_slice %618 {offsets = [0, 16], sizes = [16, 8], strides = [1, 1]} : vector<16x32xf32> to vector<16x8xf32>
    %661 = vector.extract_strided_slice %619 {offsets = [0, 16], sizes = [16, 8], strides = [1, 1]} : vector<16x32xf32> to vector<16x8xf32>
    %662 = vector.extract_strided_slice %620 {offsets = [0, 16], sizes = [16, 8], strides = [1, 1]} : vector<16x32xf32> to vector<16x8xf32>
    %cst_216 = arith.constant dense<0.000000e+00> : vector<16x16xf32>
    %663 = tpu.matmul %660, %661, %cst_216 {dimension_numbers = #tpu.dot_dimension_numbers<[1], [1], [0], [0], [0, 0, 1, 0], [], []>} : vector<16x8xf32>, vector<16x8xf32>, vector<16x16xf32> -> vector<16x16xf32>
    %664 = arith.addf %663, %3 : vector<16x16xf32>
    %cst_217 = arith.constant dense<0xFF800000> : vector<16xf32>
    %665 = vector.multi_reduction <maximumf>, %664, %cst_217 [1] : vector<16x16xf32> to vector<16xf32>
    %666 = vector.shape_cast %665 : vector<16xf32> to vector<16x1xf32>
    %667 = vector.broadcast %666 : vector<16x1xf32> to vector<16x16xf32>
    %668 = arith.subf %664, %667 : vector<16x16xf32>
    %669 = math.exp %668 : vector<16x16xf32>
    %cst_218 = arith.constant dense<0.000000e+00> : vector<16xf32>
    %670 = vector.multi_reduction <add>, %669, %cst_218 [1] : vector<16x16xf32> to vector<16xf32>
    %671 = vector.shape_cast %670 : vector<16xf32> to vector<16x1xf32>
    %672 = tpu.reciprocal %671 {approx = true} : vector<16x1xf32> -> vector<16x1xf32>
    %673 = vector.broadcast %672 : vector<16x1xf32> to vector<16x16xf32>
    %674 = arith.mulf %669, %673 : vector<16x16xf32>
    %cst_219 = arith.constant dense<0.000000e+00> : vector<16x8xf32>
    %675 = tpu.matmul %674, %662, %cst_219 {dimension_numbers = #tpu.dot_dimension_numbers<[1], [0], [0], [1], [0, 0, 1, 1], [], []>} : vector<16x16xf32>, vector<16x8xf32>, vector<16x8xf32> -> vector<16x8xf32>
    %676 = vector.extract_strided_slice %621 {offsets = [16, 0], sizes = [8, 32], strides = [1, 1]} : vector<32x32xf32> to vector<8x32xf32>
    %cst_220 = arith.constant dense<0.000000e+00> : vector<16x32xf32>
    %677 = tpu.matmul %675, %676, %cst_220 {dimension_numbers = #tpu.dot_dimension_numbers<[1], [0], [0], [1], [0, 0, 1, 1], [], []>} : vector<16x8xf32>, vector<8x32xf32>, vector<16x32xf32> -> vector<16x32xf32>
    %678 = arith.addf %659, %677 : vector<16x32xf32>
    %679 = vector.extract_strided_slice %618 {offsets = [0, 24], sizes = [16, 8], strides = [1, 1]} : vector<16x32xf32> to vector<16x8xf32>
    %680 = vector.extract_strided_slice %619 {offsets = [0, 24], sizes = [16, 8], strides = [1, 1]} : vector<16x32xf32> to vector<16x8xf32>
    %681 = vector.extract_strided_slice %620 {offsets = [0, 24], sizes = [16, 8], strides = [1, 1]} : vector<16x32xf32> to vector<16x8xf32>
    %cst_221 = arith.constant dense<0.000000e+00> : vector<16x16xf32>
    %682 = tpu.matmul %679, %680, %cst_221 {dimension_numbers = #tpu.dot_dimension_numbers<[1], [1], [0], [0], [0, 0, 1, 0], [], []>} : vector<16x8xf32>, vector<16x8xf32>, vector<16x16xf32> -> vector<16x16xf32>
    %683 = arith.addf %682, %3 : vector<16x16xf32>
    %cst_222 = arith.constant dense<0xFF800000> : vector<16xf32>
    %684 = vector.multi_reduction <maximumf>, %683, %cst_222 [1] : vector<16x16xf32> to vector<16xf32>
    %685 = vector.shape_cast %684 : vector<16xf32> to vector<16x1xf32>
    %686 = vector.broadcast %685 : vector<16x1xf32> to vector<16x16xf32>
    %687 = arith.subf %683, %686 : vector<16x16xf32>
    %688 = math.exp %687 : vector<16x16xf32>
    %cst_223 = arith.constant dense<0.000000e+00> : vector<16xf32>
    %689 = vector.multi_reduction <add>, %688, %cst_223 [1] : vector<16x16xf32> to vector<16xf32>
    %690 = vector.shape_cast %689 : vector<16xf32> to vector<16x1xf32>
    %691 = tpu.reciprocal %690 {approx = true} : vector<16x1xf32> -> vector<16x1xf32>
    %692 = vector.broadcast %691 : vector<16x1xf32> to vector<16x16xf32>
    %693 = arith.mulf %688, %692 : vector<16x16xf32>
    %cst_224 = arith.constant dense<0.000000e+00> : vector<16x8xf32>
    %694 = tpu.matmul %693, %681, %cst_224 {dimension_numbers = #tpu.dot_dimension_numbers<[1], [0], [0], [1], [0, 0, 1, 1], [], []>} : vector<16x16xf32>, vector<16x8xf32>, vector<16x8xf32> -> vector<16x8xf32>
    %695 = vector.extract_strided_slice %621 {offsets = [24, 0], sizes = [8, 32], strides = [1, 1]} : vector<32x32xf32> to vector<8x32xf32>
    %cst_225 = arith.constant dense<0.000000e+00> : vector<16x32xf32>
    %696 = tpu.matmul %694, %695, %cst_225 {dimension_numbers = #tpu.dot_dimension_numbers<[1], [0], [0], [1], [0, 0, 1, 1], [], []>} : vector<16x8xf32>, vector<8x32xf32>, vector<16x32xf32> -> vector<16x32xf32>
    %697 = arith.addf %678, %696 : vector<16x32xf32>
    %698 = vector.broadcast %622 : vector<1x32xf32> to vector<16x32xf32>
    %699 = arith.addf %697, %698 : vector<16x32xf32>
    %700 = vector.extract_strided_slice %610 {offsets = [0, 0], sizes = [1, 32], strides = [1, 1]} : vector<1x128xf32> to vector<1x32xf32>
    %701 = vector.extract_strided_slice %610 {offsets = [0, 32], sizes = [1, 32], strides = [1, 1]} : vector<1x128xf32> to vector<1x32xf32>
    %702 = arith.addf %699, %596 : vector<16x32xf32>
    %cst_226 = arith.constant dense<0.000000e+00> : vector<16xf32>
    %703 = vector.multi_reduction <add>, %702, %cst_226 [1] : vector<16x32xf32> to vector<16xf32>
    %704 = vector.shape_cast %703 : vector<16xf32> to vector<16x1xf32>
    %cst_227 = arith.constant 3.200000e+01 : f32
    %705 = vector.broadcast %cst_227 : f32 to vector<16x1xf32>
    %706 = arith.divf %704, %705 : vector<16x1xf32>
    %707 = vector.broadcast %706 : vector<16x1xf32> to vector<16x32xf32>
    %708 = arith.subf %702, %707 : vector<16x32xf32>
    %709 = arith.mulf %708, %708 : vector<16x32xf32>
    %cst_228 = arith.constant dense<0.000000e+00> : vector<16xf32>
    %710 = vector.multi_reduction <add>, %709, %cst_228 [1] : vector<16x32xf32> to vector<16xf32>
    %711 = vector.shape_cast %710 : vector<16xf32> to vector<16x1xf32>
    %cst_229 = arith.constant 0.0322580636 : f32
    %712 = vector.broadcast %cst_229 : f32 to vector<16x1xf32>
    %713 = arith.mulf %711, %712 : vector<16x1xf32>
    %714 = math.sqrt %713 : vector<16x1xf32>
    %cst_230 = arith.constant 9.99999997E-7 : f32
    %715 = vector.broadcast %cst_230 : f32 to vector<16x1xf32>
    %716 = arith.addf %714, %715 : vector<16x1xf32>
    %717 = tpu.reciprocal %716 : vector<16x1xf32> -> vector<16x1xf32>
    %718 = vector.broadcast %700 : vector<1x32xf32> to vector<16x32xf32>
    %719 = arith.mulf %718, %708 : vector<16x32xf32>
    %720 = vector.broadcast %717 : vector<16x1xf32> to vector<16x32xf32>
    %721 = arith.mulf %719, %720 : vector<16x32xf32>
    %722 = vector.broadcast %701 : vector<1x32xf32> to vector<16x32xf32>
    %723 = arith.addf %721, %722 : vector<16x32xf32>
    %724 = vector.extract_strided_slice %600 {offsets = [0, 0], sizes = [32, 64], strides = [1, 1]} : vector<32x128xf32> to vector<32x64xf32>
    %cst_231 = arith.constant dense<0.000000e+00> : vector<16x64xf32>
    %725 = tpu.matmul %318, %724, %cst_231 {dimension_numbers = #tpu.dot_dimension_numbers<[1], [0], [0], [1], [0, 0, 1, 1], [], []>} : vector<16x32xf32>, vector<32x64xf32>, vector<16x64xf32> -> vector<16x64xf32>
    %726 = vector.extract_strided_slice %606 {offsets = [0, 0], sizes = [1, 64], strides = [1, 1]} : vector<1x128xf32> to vector<1x64xf32>
    %727 = vector.broadcast %726 : vector<1x64xf32> to vector<16x64xf32>
    %728 = arith.addf %725, %727 : vector<16x64xf32>
    %729 = vector.extract_strided_slice %600 {offsets = [0, 64], sizes = [32, 32], strides = [1, 1]} : vector<32x128xf32> to vector<32x32xf32>
    %cst_232 = arith.constant dense<0.000000e+00> : vector<16x32xf32>
    %730 = tpu.matmul %723, %729, %cst_232 {dimension_numbers = #tpu.dot_dimension_numbers<[1], [0], [0], [1], [0, 0, 1, 1], [], []>} : vector<16x32xf32>, vector<32x32xf32>, vector<16x32xf32> -> vector<16x32xf32>
    %731 = vector.extract_strided_slice %606 {offsets = [0, 64], sizes = [1, 32], strides = [1, 1]} : vector<1x128xf32> to vector<1x32xf32>
    %732 = vector.broadcast %731 : vector<1x32xf32> to vector<16x32xf32>
    %733 = arith.addf %730, %732 : vector<16x32xf32>
    %734 = vector.extract_strided_slice %728 {offsets = [0, 32], sizes = [16, 32], strides = [1, 1]} : vector<16x64xf32> to vector<16x32xf32>
    %735 = vector.extract_strided_slice %728 {offsets = [0, 0], sizes = [16, 32], strides = [1, 1]} : vector<16x64xf32> to vector<16x32xf32>
    %736 = vector.extract_strided_slice %600 {offsets = [0, 96], sizes = [32, 32], strides = [1, 1]} : vector<32x128xf32> to vector<32x32xf32>
    %737 = vector.extract_strided_slice %606 {offsets = [0, 96], sizes = [1, 32], strides = [1, 1]} : vector<1x128xf32> to vector<1x32xf32>
    %738 = vector.extract_strided_slice %733 {offsets = [0, 0], sizes = [16, 8], strides = [1, 1]} : vector<16x32xf32> to vector<16x8xf32>
    %739 = vector.extract_strided_slice %734 {offsets = [0, 0], sizes = [16, 8], strides = [1, 1]} : vector<16x32xf32> to vector<16x8xf32>
    %740 = vector.extract_strided_slice %735 {offsets = [0, 0], sizes = [16, 8], strides = [1, 1]} : vector<16x32xf32> to vector<16x8xf32>
    %cst_233 = arith.constant dense<0.000000e+00> : vector<16x16xf32>
    %741 = tpu.matmul %738, %739, %cst_233 {dimension_numbers = #tpu.dot_dimension_numbers<[1], [1], [0], [0], [0, 0, 1, 0], [], []>} : vector<16x8xf32>, vector<16x8xf32>, vector<16x16xf32> -> vector<16x16xf32>
    %742 = arith.addf %741, %4 : vector<16x16xf32>
    %cst_234 = arith.constant dense<0xFF800000> : vector<16xf32>
    %743 = vector.multi_reduction <maximumf>, %742, %cst_234 [1] : vector<16x16xf32> to vector<16xf32>
    %744 = vector.shape_cast %743 : vector<16xf32> to vector<16x1xf32>
    %745 = vector.broadcast %744 : vector<16x1xf32> to vector<16x16xf32>
    %746 = arith.subf %742, %745 : vector<16x16xf32>
    %747 = math.exp %746 : vector<16x16xf32>
    %cst_235 = arith.constant dense<0.000000e+00> : vector<16xf32>
    %748 = vector.multi_reduction <add>, %747, %cst_235 [1] : vector<16x16xf32> to vector<16xf32>
    %749 = vector.shape_cast %748 : vector<16xf32> to vector<16x1xf32>
    %750 = tpu.reciprocal %749 {approx = true} : vector<16x1xf32> -> vector<16x1xf32>
    %751 = vector.broadcast %750 : vector<16x1xf32> to vector<16x16xf32>
    %752 = arith.mulf %747, %751 : vector<16x16xf32>
    %cst_236 = arith.constant dense<0.000000e+00> : vector<16x8xf32>
    %753 = tpu.matmul %752, %740, %cst_236 {dimension_numbers = #tpu.dot_dimension_numbers<[1], [0], [0], [1], [0, 0, 1, 1], [], []>} : vector<16x16xf32>, vector<16x8xf32>, vector<16x8xf32> -> vector<16x8xf32>
    %754 = vector.extract_strided_slice %736 {offsets = [0, 0], sizes = [8, 32], strides = [1, 1]} : vector<32x32xf32> to vector<8x32xf32>
    %cst_237 = arith.constant dense<0.000000e+00> : vector<16x32xf32>
    %755 = tpu.matmul %753, %754, %cst_237 {dimension_numbers = #tpu.dot_dimension_numbers<[1], [0], [0], [1], [0, 0, 1, 1], [], []>} : vector<16x8xf32>, vector<8x32xf32>, vector<16x32xf32> -> vector<16x32xf32>
    %756 = vector.extract_strided_slice %733 {offsets = [0, 8], sizes = [16, 8], strides = [1, 1]} : vector<16x32xf32> to vector<16x8xf32>
    %757 = vector.extract_strided_slice %734 {offsets = [0, 8], sizes = [16, 8], strides = [1, 1]} : vector<16x32xf32> to vector<16x8xf32>
    %758 = vector.extract_strided_slice %735 {offsets = [0, 8], sizes = [16, 8], strides = [1, 1]} : vector<16x32xf32> to vector<16x8xf32>
    %cst_238 = arith.constant dense<0.000000e+00> : vector<16x16xf32>
    %759 = tpu.matmul %756, %757, %cst_238 {dimension_numbers = #tpu.dot_dimension_numbers<[1], [1], [0], [0], [0, 0, 1, 0], [], []>} : vector<16x8xf32>, vector<16x8xf32>, vector<16x16xf32> -> vector<16x16xf32>
    %760 = arith.addf %759, %4 : vector<16x16xf32>
    %cst_239 = arith.constant dense<0xFF800000> : vector<16xf32>
    %761 = vector.multi_reduction <maximumf>, %760, %cst_239 [1] : vector<16x16xf32> to vector<16xf32>
    %762 = vector.shape_cast %761 : vector<16xf32> to vector<16x1xf32>
    %763 = vector.broadcast %762 : vector<16x1xf32> to vector<16x16xf32>
    %764 = arith.subf %760, %763 : vector<16x16xf32>
    %765 = math.exp %764 : vector<16x16xf32>
    %cst_240 = arith.constant dense<0.000000e+00> : vector<16xf32>
    %766 = vector.multi_reduction <add>, %765, %cst_240 [1] : vector<16x16xf32> to vector<16xf32>
    %767 = vector.shape_cast %766 : vector<16xf32> to vector<16x1xf32>
    %768 = tpu.reciprocal %767 {approx = true} : vector<16x1xf32> -> vector<16x1xf32>
    %769 = vector.broadcast %768 : vector<16x1xf32> to vector<16x16xf32>
    %770 = arith.mulf %765, %769 : vector<16x16xf32>
    %cst_241 = arith.constant dense<0.000000e+00> : vector<16x8xf32>
    %771 = tpu.matmul %770, %758, %cst_241 {dimension_numbers = #tpu.dot_dimension_numbers<[1], [0], [0], [1], [0, 0, 1, 1], [], []>} : vector<16x16xf32>, vector<16x8xf32>, vector<16x8xf32> -> vector<16x8xf32>
    %772 = vector.extract_strided_slice %736 {offsets = [8, 0], sizes = [8, 32], strides = [1, 1]} : vector<32x32xf32> to vector<8x32xf32>
    %cst_242 = arith.constant dense<0.000000e+00> : vector<16x32xf32>
    %773 = tpu.matmul %771, %772, %cst_242 {dimension_numbers = #tpu.dot_dimension_numbers<[1], [0], [0], [1], [0, 0, 1, 1], [], []>} : vector<16x8xf32>, vector<8x32xf32>, vector<16x32xf32> -> vector<16x32xf32>
    %774 = arith.addf %755, %773 : vector<16x32xf32>
    %775 = vector.extract_strided_slice %733 {offsets = [0, 16], sizes = [16, 8], strides = [1, 1]} : vector<16x32xf32> to vector<16x8xf32>
    %776 = vector.extract_strided_slice %734 {offsets = [0, 16], sizes = [16, 8], strides = [1, 1]} : vector<16x32xf32> to vector<16x8xf32>
    %777 = vector.extract_strided_slice %735 {offsets = [0, 16], sizes = [16, 8], strides = [1, 1]} : vector<16x32xf32> to vector<16x8xf32>
    %cst_243 = arith.constant dense<0.000000e+00> : vector<16x16xf32>
    %778 = tpu.matmul %775, %776, %cst_243 {dimension_numbers = #tpu.dot_dimension_numbers<[1], [1], [0], [0], [0, 0, 1, 0], [], []>} : vector<16x8xf32>, vector<16x8xf32>, vector<16x16xf32> -> vector<16x16xf32>
    %779 = arith.addf %778, %4 : vector<16x16xf32>
    %cst_244 = arith.constant dense<0xFF800000> : vector<16xf32>
    %780 = vector.multi_reduction <maximumf>, %779, %cst_244 [1] : vector<16x16xf32> to vector<16xf32>
    %781 = vector.shape_cast %780 : vector<16xf32> to vector<16x1xf32>
    %782 = vector.broadcast %781 : vector<16x1xf32> to vector<16x16xf32>
    %783 = arith.subf %779, %782 : vector<16x16xf32>
    %784 = math.exp %783 : vector<16x16xf32>
    %cst_245 = arith.constant dense<0.000000e+00> : vector<16xf32>
    %785 = vector.multi_reduction <add>, %784, %cst_245 [1] : vector<16x16xf32> to vector<16xf32>
    %786 = vector.shape_cast %785 : vector<16xf32> to vector<16x1xf32>
    %787 = tpu.reciprocal %786 {approx = true} : vector<16x1xf32> -> vector<16x1xf32>
    %788 = vector.broadcast %787 : vector<16x1xf32> to vector<16x16xf32>
    %789 = arith.mulf %784, %788 : vector<16x16xf32>
    %cst_246 = arith.constant dense<0.000000e+00> : vector<16x8xf32>
    %790 = tpu.matmul %789, %777, %cst_246 {dimension_numbers = #tpu.dot_dimension_numbers<[1], [0], [0], [1], [0, 0, 1, 1], [], []>} : vector<16x16xf32>, vector<16x8xf32>, vector<16x8xf32> -> vector<16x8xf32>
    %791 = vector.extract_strided_slice %736 {offsets = [16, 0], sizes = [8, 32], strides = [1, 1]} : vector<32x32xf32> to vector<8x32xf32>
    %cst_247 = arith.constant dense<0.000000e+00> : vector<16x32xf32>
    %792 = tpu.matmul %790, %791, %cst_247 {dimension_numbers = #tpu.dot_dimension_numbers<[1], [0], [0], [1], [0, 0, 1, 1], [], []>} : vector<16x8xf32>, vector<8x32xf32>, vector<16x32xf32> -> vector<16x32xf32>
    %793 = arith.addf %774, %792 : vector<16x32xf32>
    %794 = vector.extract_strided_slice %733 {offsets = [0, 24], sizes = [16, 8], strides = [1, 1]} : vector<16x32xf32> to vector<16x8xf32>
    %795 = vector.extract_strided_slice %734 {offsets = [0, 24], sizes = [16, 8], strides = [1, 1]} : vector<16x32xf32> to vector<16x8xf32>
    %796 = vector.extract_strided_slice %735 {offsets = [0, 24], sizes = [16, 8], strides = [1, 1]} : vector<16x32xf32> to vector<16x8xf32>
    %cst_248 = arith.constant dense<0.000000e+00> : vector<16x16xf32>
    %797 = tpu.matmul %794, %795, %cst_248 {dimension_numbers = #tpu.dot_dimension_numbers<[1], [1], [0], [0], [0, 0, 1, 0], [], []>} : vector<16x8xf32>, vector<16x8xf32>, vector<16x16xf32> -> vector<16x16xf32>
    %798 = arith.addf %797, %4 : vector<16x16xf32>
    %cst_249 = arith.constant dense<0xFF800000> : vector<16xf32>
    %799 = vector.multi_reduction <maximumf>, %798, %cst_249 [1] : vector<16x16xf32> to vector<16xf32>
    %800 = vector.shape_cast %799 : vector<16xf32> to vector<16x1xf32>
    %801 = vector.broadcast %800 : vector<16x1xf32> to vector<16x16xf32>
    %802 = arith.subf %798, %801 : vector<16x16xf32>
    %803 = math.exp %802 : vector<16x16xf32>
    %cst_250 = arith.constant dense<0.000000e+00> : vector<16xf32>
    %804 = vector.multi_reduction <add>, %803, %cst_250 [1] : vector<16x16xf32> to vector<16xf32>
    %805 = vector.shape_cast %804 : vector<16xf32> to vector<16x1xf32>
    %806 = tpu.reciprocal %805 {approx = true} : vector<16x1xf32> -> vector<16x1xf32>
    %807 = vector.broadcast %806 : vector<16x1xf32> to vector<16x16xf32>
    %808 = arith.mulf %803, %807 : vector<16x16xf32>
    %cst_251 = arith.constant dense<0.000000e+00> : vector<16x8xf32>
    %809 = tpu.matmul %808, %796, %cst_251 {dimension_numbers = #tpu.dot_dimension_numbers<[1], [0], [0], [1], [0, 0, 1, 1], [], []>} : vector<16x16xf32>, vector<16x8xf32>, vector<16x8xf32> -> vector<16x8xf32>
    %810 = vector.extract_strided_slice %736 {offsets = [24, 0], sizes = [8, 32], strides = [1, 1]} : vector<32x32xf32> to vector<8x32xf32>
    %cst_252 = arith.constant dense<0.000000e+00> : vector<16x32xf32>
    %811 = tpu.matmul %809, %810, %cst_252 {dimension_numbers = #tpu.dot_dimension_numbers<[1], [0], [0], [1], [0, 0, 1, 1], [], []>} : vector<16x8xf32>, vector<8x32xf32>, vector<16x32xf32> -> vector<16x32xf32>
    %812 = arith.addf %793, %811 : vector<16x32xf32>
    %813 = vector.broadcast %737 : vector<1x32xf32> to vector<16x32xf32>
    %814 = arith.addf %812, %813 : vector<16x32xf32>
    %815 = vector.extract_strided_slice %610 {offsets = [0, 64], sizes = [1, 32], strides = [1, 1]} : vector<1x128xf32> to vector<1x32xf32>
    %816 = vector.extract_strided_slice %610 {offsets = [0, 96], sizes = [1, 32], strides = [1, 1]} : vector<1x128xf32> to vector<1x32xf32>
    %817 = arith.addf %814, %723 : vector<16x32xf32>
    %cst_253 = arith.constant dense<0.000000e+00> : vector<16xf32>
    %818 = vector.multi_reduction <add>, %817, %cst_253 [1] : vector<16x32xf32> to vector<16xf32>
    %819 = vector.shape_cast %818 : vector<16xf32> to vector<16x1xf32>
    %cst_254 = arith.constant 3.200000e+01 : f32
    %820 = vector.broadcast %cst_254 : f32 to vector<16x1xf32>
    %821 = arith.divf %819, %820 : vector<16x1xf32>
    %822 = vector.broadcast %821 : vector<16x1xf32> to vector<16x32xf32>
    %823 = arith.subf %817, %822 : vector<16x32xf32>
    %824 = arith.mulf %823, %823 : vector<16x32xf32>
    %cst_255 = arith.constant dense<0.000000e+00> : vector<16xf32>
    %825 = vector.multi_reduction <add>, %824, %cst_255 [1] : vector<16x32xf32> to vector<16xf32>
    %826 = vector.shape_cast %825 : vector<16xf32> to vector<16x1xf32>
    %cst_256 = arith.constant 0.0322580636 : f32
    %827 = vector.broadcast %cst_256 : f32 to vector<16x1xf32>
    %828 = arith.mulf %826, %827 : vector<16x1xf32>
    %829 = math.sqrt %828 : vector<16x1xf32>
    %cst_257 = arith.constant 9.99999997E-7 : f32
    %830 = vector.broadcast %cst_257 : f32 to vector<16x1xf32>
    %831 = arith.addf %829, %830 : vector<16x1xf32>
    %832 = tpu.reciprocal %831 : vector<16x1xf32> -> vector<16x1xf32>
    %833 = vector.broadcast %815 : vector<1x32xf32> to vector<16x32xf32>
    %834 = arith.mulf %833, %823 : vector<16x32xf32>
    %835 = vector.broadcast %832 : vector<16x1xf32> to vector<16x32xf32>
    %836 = arith.mulf %834, %835 : vector<16x32xf32>
    %837 = vector.broadcast %816 : vector<1x32xf32> to vector<16x32xf32>
    %838 = arith.addf %836, %837 : vector<16x32xf32>
    %839 = vector.extract_strided_slice %602 {offsets = [0, 0], sizes = [32, 64], strides = [1, 1]} : vector<32x128xf32> to vector<32x64xf32>
    %cst_258 = arith.constant dense<0.000000e+00> : vector<16x64xf32>
    %840 = tpu.matmul %838, %839, %cst_258 {dimension_numbers = #tpu.dot_dimension_numbers<[1], [0], [0], [1], [0, 0, 1, 1], [], []>} : vector<16x32xf32>, vector<32x64xf32>, vector<16x64xf32> -> vector<16x64xf32>
    %841 = vector.extract_strided_slice %608 {offsets = [0, 0], sizes = [1, 64], strides = [1, 1]} : vector<1x128xf32> to vector<1x64xf32>
    %842 = vector.broadcast %841 : vector<1x64xf32> to vector<16x64xf32>
    %843 = arith.addf %840, %842 : vector<16x64xf32>
    %cst_259 = arith.constant 0.000000e+00 : f32
    %844 = vector.broadcast %cst_259 : f32 to vector<16x64xf32>
    %845 = arith.maximumf %843, %844 : vector<16x64xf32>
    %846 = vector.extract_strided_slice %602 {offsets = [0, 64], sizes = [32, 64], strides = [1, 1]} : vector<32x128xf32> to vector<32x64xf32>
    %cst_260 = arith.constant dense<0.000000e+00> : vector<16x32xf32>
    %847 = tpu.matmul %845, %846, %cst_260 {dimension_numbers = #tpu.dot_dimension_numbers<[1], [1], [0], [0], [0, 0, 1, 0], [], []>} : vector<16x64xf32>, vector<32x64xf32>, vector<16x32xf32> -> vector<16x32xf32>
    %848 = vector.extract_strided_slice %608 {offsets = [0, 64], sizes = [1, 32], strides = [1, 1]} : vector<1x128xf32> to vector<1x32xf32>
    %849 = vector.broadcast %848 : vector<1x32xf32> to vector<16x32xf32>
    %850 = arith.addf %847, %849 : vector<16x32xf32>
    %851 = vector.extract_strided_slice %612 {offsets = [0, 0], sizes = [1, 32], strides = [1, 1]} : vector<1x128xf32> to vector<1x32xf32>
    %852 = vector.extract_strided_slice %612 {offsets = [0, 32], sizes = [1, 32], strides = [1, 1]} : vector<1x128xf32> to vector<1x32xf32>
    %853 = arith.addf %850, %838 : vector<16x32xf32>
    %cst_261 = arith.constant dense<0.000000e+00> : vector<16xf32>
    %854 = vector.multi_reduction <add>, %853, %cst_261 [1] : vector<16x32xf32> to vector<16xf32>
    %855 = vector.shape_cast %854 : vector<16xf32> to vector<16x1xf32>
    %cst_262 = arith.constant 3.200000e+01 : f32
    %856 = vector.broadcast %cst_262 : f32 to vector<16x1xf32>
    %857 = arith.divf %855, %856 : vector<16x1xf32>
    %858 = vector.broadcast %857 : vector<16x1xf32> to vector<16x32xf32>
    %859 = arith.subf %853, %858 : vector<16x32xf32>
    %860 = arith.mulf %859, %859 : vector<16x32xf32>
    %cst_263 = arith.constant dense<0.000000e+00> : vector<16xf32>
    %861 = vector.multi_reduction <add>, %860, %cst_263 [1] : vector<16x32xf32> to vector<16xf32>
    %862 = vector.shape_cast %861 : vector<16xf32> to vector<16x1xf32>
    %cst_264 = arith.constant 0.0322580636 : f32
    %863 = vector.broadcast %cst_264 : f32 to vector<16x1xf32>
    %864 = arith.mulf %862, %863 : vector<16x1xf32>
    %865 = math.sqrt %864 : vector<16x1xf32>
    %cst_265 = arith.constant 9.99999997E-7 : f32
    %866 = vector.broadcast %cst_265 : f32 to vector<16x1xf32>
    %867 = arith.addf %865, %866 : vector<16x1xf32>
    %868 = tpu.reciprocal %867 : vector<16x1xf32> -> vector<16x1xf32>
    %869 = vector.broadcast %851 : vector<1x32xf32> to vector<16x32xf32>
    %870 = arith.mulf %869, %859 : vector<16x32xf32>
    %871 = vector.broadcast %868 : vector<16x1xf32> to vector<16x32xf32>
    %872 = arith.mulf %870, %871 : vector<16x32xf32>
    %873 = vector.broadcast %852 : vector<1x32xf32> to vector<16x32xf32>
    %874 = arith.addf %872, %873 : vector<16x32xf32>
    %c0_266 = arith.constant 0 : index
    %c0_267 = arith.constant 0 : index
    %875 = vector.load %arg7[%c0_266, %c0_267] : memref<16x32xf32, #tpu.memory_space<vmem>>, vector<16x32xf32>
    tpu.vector_store %arg7[%c0_266, %c0_267], %318 {strides = array<i32>} : memref<16x32xf32, #tpu.memory_space<vmem>>, vector<16x32xf32>,
    %c0_268 = arith.constant 0 : index
    %c0_269 = arith.constant 0 : index
    %876 = vector.load %arg8[%c0_268, %c0_269] : memref<16x32xf32, #tpu.memory_space<vmem>>, vector<16x32xf32>
    tpu.vector_store %arg8[%c0_268, %c0_269], %874 {strides = array<i32>} : memref<16x32xf32, #tpu.memory_space<vmem>>, vector<16x32xf32>,
    return
  }
}

</mosaic_0001>

<llo_original>
// kernel: mca_ed.1
$region0: #{mca_ed.1}
  #allocation0 [shape = 'u32[]', space=smem, size = 0x4, offset = 0x4, fixed_abs, tag = 'smem constant byte address 0x4 - core index']
  #allocation1 [shape = 'u32[144,128]{1,0:T(1,128)}', space=vmem, size = 0x12000, scoped, tag = 'internal scratch']
  %s0 = inlined_call_operand.vmem [shape: f32[16,32], index: 0, kind: input, shape index: {}]
  %s1 = inlined_call_operand.vmem [shape: f32[16,32], index: 1, kind: input, shape index: {}]
  %s2 = inlined_call_operand.vmem [shape: f32[16,16], index: 2, kind: input, shape index: {}, may-alias: {2,4}]
  %s3 = inlined_call_operand.vmem [shape: f32[16,16], index: 3, kind: input, shape index: {}]
  %s4 = inlined_call_operand.vmem [shape: f32[16,16], index: 4, kind: input, shape index: {}, may-alias: {2,4}]
  %s5 = inlined_call_operand.hbm [shape: f32[2,67,128], index: 5, kind: input, shape index: {}]
  %s6 = inlined_call_operand.hbm [shape: f32[2,101,128], index: 6, kind: input, shape index: {}]
  %s7 = inlined_call_operand.hbm [shape: f32[16,32], index: 7, kind: output, shape index: {0}]
  %s8 = inlined_call_operand.hbm [shape: f32[16,32], index: 8, kind: output, shape index: {1}]
  %9 = xla_tuple %s7, %s8
  %s10 = sld [smem:[#allocation0]]
  $region54: #{mca_ed.1} parent=0
    _
  %s12 = ssub.s32 1, %s10
  %s13 = scalar_select 0, %s12, %s10
  $region1: #{mca_ed.1} parent=0
    #allocation2 [shape = 'u8[73728]{0}', space=vmem, size = 0x12000, scoped, tag = 'input window, operand 5, single buffered']
    #allocation3 [shape = 's32[1]{0}', space=sflag, size = 0x4, scoped, tag = 'scoped memory for mca_ed.1']
    #allocation4 [shape = 's32[1]{0}', space=sflag, size = 0x4, scoped, tag = 'scoped memory for mca_ed.1']
    #allocation5 [shape = 'u8[106496]{0}', space=vmem, size = 0x1a000, scoped, tag = 'input window, operand 6, single buffered']
    #allocation6 [shape = 's32[1]{0}', space=sflag, size = 0x4, scoped, tag = 'scoped memory for mca_ed.1']
    #allocation7 [shape = 'u8[8192]{0}', space=vmem, size = 0x2000, scoped, tag = 'output window, operand 0, single buffered']
    #allocation8 [shape = 'u8[8192]{0}', space=vmem, size = 0x2000, scoped, tag = 'output window, operand 1, single buffered']
    #allocation9 [shape = 's32[1]{0}', space=sflag, size = 0x4, scoped, tag = 'scoped memory for mca_ed.1']
    %14 = vsyncpa [#allocation3], 0
    %15 = vsyncpa [#allocation6], 0
    %16 = vsyncpa [#allocation4], 0
    %17 = vsyncpa [#allocation9], 0
    // Predicated region
    $region2: #{mca_ed.1} parent=1 // pred_check
      _
    $region3: #{mca_ed.1} parent=1 // pred_check_branch
      %19 = sbr.rel (0) target = $region5
    $region4: #{mca_ed.1} parent=1 // pred_region
      _
    $region5: #{mca_ed.1} parent=1 // pred_fallthru
      _
    // Predicated region
    $region6: #{mca_ed.1} parent=1 // pred_check
      _
    $region7: #{mca_ed.1} parent=1 // pred_check_branch
      %21 = sbr.rel (0) target = $region9
    $region8: #{mca_ed.1} parent=1 // pred_region
      _
    $region9: #{mca_ed.1} parent=1 // pred_fallthru
      _
    // Predicated region
    $region10: #{mca_ed.1} parent=1 // pred_check
      _
    $region11: #{mca_ed.1} parent=1 // pred_check_branch
      %23 = sbr.rel (0) target = $region13
    $region12: #{mca_ed.1} parent=1 // pred_region
      _
    $region13: #{mca_ed.1} parent=1 // pred_fallthru
      _
    // Predicated region
    $region14: #{mca_ed.1} parent=1 // pred_check
      _
    $region15: #{mca_ed.1} parent=1 // pred_check_branch
      %25 = sbr.rel (0) target = $region17
    $region16: #{mca_ed.1} parent=1 // pred_region
      _
    $region17: #{mca_ed.1} parent=1 // pred_fallthru
      _
    // Predicated region
    $region18: #{mca_ed.1} parent=1 // pred_check
      _
    $region19: #{mca_ed.1} parent=1 // pred_check_branch
      %27 = sbr.rel (0) target = $region21
    $region20: #{mca_ed.1} parent=1 // pred_region
      _
    $region21: #{mca_ed.1} parent=1 // pred_fallthru
      _
    // Predicated region
    $region22: #{mca_ed.1} parent=1 // pred_check
      _
    $region23: #{mca_ed.1} parent=1 // pred_check_branch
      %29 = sbr.rel (0) target = $region25
    $region24: #{mca_ed.1} parent=1 // pred_region
      %s31 = ssub.s32 2304, 2304
      %32 = vsyncadd [#allocation3], %s31
      %s33 = sshll.u32 [#allocation2], 4
      %s34 = int_to_ptr.vmem [resolvable:$true] %s33
      %39 = dma.hbm_to_vmem [thread:$0]  %s5, 2304, %s34, [#allocation3], 128, 128, 8
    $region25: #{mca_ed.1} parent=1 // pred_fallthru
      _
    // Predicated region
    $region26: #{mca_ed.1} parent=1 // pred_check
      _
    $region27: #{mca_ed.1} parent=1 // pred_check_branch
      %41 = sbr.rel (0) target = $region29
    $region28: #{mca_ed.1} parent=1 // pred_region
      %s43 = ssub.s32 3328, 3328
      %44 = vsyncadd [#allocation6], %s43
      %s45 = sshll.u32 [#allocation5], 4
      %s46 = int_to_ptr.vmem [resolvable:$true] %s45
      %51 = dma.hbm_to_vmem [thread:$0]  %s6, 3328, %s46, [#allocation6], 128, 128, 8
    $region29: #{mca_ed.1} parent=1 // pred_fallthru
      _
    // Predicated region
    $region30: #{mca_ed.1} parent=1 // pred_check
      _
    $region31: #{mca_ed.1} parent=1 // pred_check_branch
      %53 = sbr.rel (0) target = $region33
    $region32: #{mca_ed.1} parent=1 // pred_region
      %54 = dma.done [#allocation3], 2304
    $region33: #{mca_ed.1} parent=1 // pred_fallthru
      _
    // Predicated region
    $region34: #{mca_ed.1} parent=1 // pred_check
      _
    $region35: #{mca_ed.1} parent=1 // pred_check_branch
      %56 = sbr.rel (0) target = $region37
    $region36: #{mca_ed.1} parent=1 // pred_region
      %57 = dma.done [#allocation6], 3328
    $region37: #{mca_ed.1} parent=1 // pred_fallthru
      _
    %v58 = vld [vmem:[%s0] sm:$0xff]
    %v59 = vld [vmem:[%s0 + $0x8] sm:$0xff]
    %v60 = vld [vmem:[%s1] sm:$0xff]
    %v61 = vld [vmem:[%s1 + $0x8] sm:$0xff]
    %v62 = vld [vmem:[%s2] sm:$0xff]
    %v63 = vld [vmem:[%s2 + $0x8] sm:$0xff]
    %v64 = vld [vmem:[%s3] sm:$0xff]
    %v65 = vld [vmem:[%s3 + $0x8] sm:$0xff]
    %v66 = vld [vmem:[%s4] sm:$0xff]
    %v67 = vld [vmem:[%s4 + $0x8] sm:$0xff]
    %v68 = vld [vmem:[#allocation2] sm:$0xff]
    %v69 = vld [vmem:[#allocation2 + $0x8] sm:$0xff]
    %v70 = vld [vmem:[#allocation2 + $0x10] sm:$0xff]
    %v71 = vld [vmem:[#allocation2 + $0x18] sm:$0xff]
    %v72 = vld [vmem:[#allocation2 + $0x20] sm:$0xff]
    %v73 = vld [vmem:[#allocation2 + $0x28] sm:$0xff]
    %v74 = vld [vmem:[#allocation2 + $0x30] sm:$0xff]
    %v75 = vld [vmem:[#allocation2 + $0x38] sm:$0xff]
    %v76 = vld [vmem:[#allocation2 + $0x40] sm:$0x1]
    %v77 = vld [vmem:[#allocation2 + $0x41] sm:$0x1]
    %v78 = vld [vmem:[#allocation2 + $0x42] sm:$0x1]
    %v79 = vlaneseq
    %v80 = vshrl.u32 %v79, 7
    %v81 = vsub.s32 0, %v80
    %v82 = vrot.slane %v76, %v81
    %vm83 = vcmask 261120
    %v85 = vsel %vm83, %v58, 0
    %v88 = vsel %vm83, %v59, 0
    %90 = vmatprep.subr.mxu0 0.0
    %91 = vmatpush1.msra.mxu0 0.0
    %92 = vmatprep.subr.mxu0 0.0
    %93 = vmatpush1.msra.mxu0 0.0
    %94 = vmatprep.subr.mxu0 0.0
    %95 = vmatpush1.msra.mxu0 0.0
    %96 = vmatprep.subr.mxu0 0.0
    %97 = vmatpush1.msra.mxu0 0.0
    %98 = vmatprep.subr.mxu0 0.0
    %99 = vmatpush1.msra.mxu0 0.0
    %100 = vmatprep.subr.mxu0 0.0
    %101 = vmatpush1.msra.mxu0 0.0
    %102 = vmatprep.subr.mxu0 0.0
    %103 = vmatpush1.msra.mxu0 0.0
    %104 = vmatprep.subr.mxu0 0.0
    %105 = vmatpush1.msra.mxu0 0.0
    %106 = vmatprep.subr.mxu0 0.0
    %107 = vmatpush1.msra.mxu0 0.0
    %108 = vmatprep.subr.mxu0 0.0
    %109 = vmatpush1.msra.mxu0 0.0
    %110 = vmatprep.subr.mxu0 0.0
    %111 = vmatpush1.msra.mxu0 0.0
    %112 = vmatprep.subr.mxu0 0.0
    %113 = vmatpush1.msra.mxu0 0.0
    %114 = vmatprep.subr.mxu0 0.0
    %115 = vmatpush1.msra.mxu0 %v71
    %116 = vmatprep.subr.mxu0 0.0
    %117 = vmatpush1.msra.mxu0 %v70
    %118 = vmatprep.subr.mxu0 0.0
    %119 = vmatpush1.msra.mxu0 %v69
    %120 = vmatprep.subr.mxu0 0.0
    %121 = vmatpush1.msra.mxu0 %v68
    %122 = vmatprep.subr.mxu0 0.0
    %123 = vmatpush2.msra.mxu0 0.0
    %124 = vmatprep.subr.mxu0 0.0
    %125 = vmatpush2.msra.mxu0 0.0
    %126 = vmatprep.subr.mxu0 0.0
    %127 = vmatpush2.msra.mxu0 0.0
    %128 = vmatprep.subr.mxu0 0.0
    %129 = vmatpush2.msra.mxu0 0.0
    %130 = vmatprep.subr.mxu0 0.0
    %131 = vmatpush2.msra.mxu0 0.0
    %132 = vmatprep.subr.mxu0 0.0
    %133 = vmatpush2.msra.mxu0 0.0
    %134 = vmatprep.subr.mxu0 0.0
    %135 = vmatpush2.msra.mxu0 0.0
    %136 = vmatprep.subr.mxu0 0.0
    %137 = vmatpush2.msra.mxu0 0.0
    %138 = vmatprep.subr.mxu0 0.0
    %139 = vmatpush2.msra.mxu0 0.0
    %140 = vmatprep.subr.mxu0 0.0
    %141 = vmatpush2.msra.mxu0 0.0
    %142 = vmatprep.subr.mxu0 0.0
    %143 = vmatpush2.msra.mxu0 0.0
    %144 = vmatprep.subr.mxu0 0.0
    %145 = vmatpush2.msra.mxu0 0.0
    %146 = vmatprep.subr.mxu0 0.0
    %147 = vmatpush2.msra.mxu0 0.0
    %148 = vmatprep.subr.mxu0 0.0
    %149 = vmatpush2.msra.mxu0 0.0
    %150 = vmatprep.subr.mxu0 0.0
    %151 = vmatpush2.msra.mxu0 0.0
    %152 = vmatprep.subr.mxu0 0.0
    %153 = vmatpush2.msra.mxu0 0.0
    %154 = vmatprep.mubr.f32.mxu0 0.0
    %155 = vmatmul.mubr.f32.gmra.mxu0 %v85
    %v156 = vpop.f32.mrf.mxu0
    %v157 = vadd.f32 %v82, %v156
    %v158 = vpop.f32.mrf.mxu0
    %159 = vmatprep.mubr.f32.mxu0 0.0
    %160 = vmatmul.mubr.f32.gmra.mxu0 %v88
    %v161 = vpop.f32.mrf.mxu0
    %v162 = vadd.f32 %v82, %v161
    %v163 = vpop.f32.mrf.mxu0
    %164 = vdwg.mxu0
    %167 = vrot.lane.b32.xlu0 %v157, 64
    %v168 = vpop.permute.xlu0 %167
    %169 = vrot.lane.b32.xlu0 %v162, 64
    %v170 = vpop.permute.xlu0 %169
    %171 = vrot.lane.b32.xlu0 %v157, 96
    %v172 = vpop.permute.xlu0 %171
    %173 = vrot.lane.b32.xlu0 %v162, 96
    %v174 = vpop.permute.xlu0 %173
    %vm175 = vcmask 64512
    %v176 = vsel %vm175, %v168, 0
    %v178 = vsel %vm175, %v170, 0
    %v180 = vsel %vm175, %v172, 0
    %v182 = vsel %vm175, %v174, 0
    %184 = vmatprep.subr.mxu0 0.0
    %185 = vmatpush1.xpose.msra.mxu0 0.0
    %186 = vmatprep.subr.mxu0 0.0
    %187 = vmatpush1.xpose.msra.mxu0 0.0
    %188 = vmatprep.subr.mxu0 0.0
    %189 = vmatpush1.xpose.msra.mxu0 0.0
    %190 = vmatprep.subr.mxu0 0.0
    %191 = vmatpush1.xpose.msra.mxu0 0.0
    %192 = vmatprep.subr.mxu0 0.0
    %193 = vmatpush1.xpose.msra.mxu0 0.0
    %194 = vmatprep.subr.mxu0 0.0
    %195 = vmatpush1.xpose.msra.mxu0 0.0
    %196 = vmatprep.subr.mxu0 0.0
    %197 = vmatpush1.xpose.msra.mxu0 0.0
    %198 = vmatprep.subr.mxu0 0.0
    %199 = vmatpush1.xpose.msra.mxu0 0.0
    %200 = vmatprep.subr.mxu0 0.0
    %201 = vmatpush1.xpose.msra.mxu0 0.0
    %202 = vmatprep.subr.mxu0 0.0
    %203 = vmatpush1.xpose.msra.mxu0 0.0
    %204 = vmatprep.subr.mxu0 0.0
    %205 = vmatpush1.xpose.msra.mxu0 0.0
    %206 = vmatprep.subr.mxu0 0.0
    %207 = vmatpush1.xpose.msra.mxu0 0.0
    %208 = vmatprep.subr.mxu0 0.0
    %209 = vmatpush1.xpose.msra.mxu0 0.0
    %210 = vmatprep.subr.mxu0 0.0
    %211 = vmatpush1.xpose.msra.mxu0 0.0
    %212 = vmatprep.subr.mxu0 0.0
    %213 = vmatpush1.xpose.msra.mxu0 %v182
    %214 = vmatprep.subr.mxu0 0.0
    %215 = vmatpush1.xpose.msra.mxu0 %v180
    %216 = vmatprep.subr.mxu0 0.0
    %217 = vmatpush2.xpose.msra.mxu0 0.0
    %218 = vmatprep.subr.mxu0 0.0
    %219 = vmatpush2.xpose.msra.mxu0 0.0
    %220 = vmatprep.subr.mxu0 0.0
    %221 = vmatpush2.xpose.msra.mxu0 0.0
    %222 = vmatprep.subr.mxu0 0.0
    %223 = vmatpush2.xpose.msra.mxu0 0.0
    %224 = vmatprep.subr.mxu0 0.0
    %225 = vmatpush2.xpose.msra.mxu0 0.0
    %226 = vmatprep.subr.mxu0 0.0
    %227 = vmatpush2.xpose.msra.mxu0 0.0
    %228 = vmatprep.subr.mxu0 0.0
    %229 = vmatpush2.xpose.msra.mxu0 0.0
    %230 = vmatprep.subr.mxu0 0.0
    %231 = vmatpush2.xpose.msra.mxu0 0.0
    %232 = vmatprep.subr.mxu0 0.0
    %233 = vmatpush2.xpose.msra.mxu0 0.0
    %234 = vmatprep.subr.mxu0 0.0
    %235 = vmatpush2.xpose.msra.mxu0 0.0
    %236 = vmatprep.subr.mxu0 0.0
    %237 = vmatpush2.xpose.msra.mxu0 0.0
    %238 = vmatprep.subr.mxu0 0.0
    %239 = vmatpush2.xpose.msra.mxu0 0.0
    %240 = vmatprep.subr.mxu0 0.0
    %241 = vmatpush2.xpose.msra.mxu0 0.0
    %242 = vmatprep.subr.mxu0 0.0
    %243 = vmatpush2.xpose.msra.mxu0 0.0
    %244 = vmatprep.subr.mxu0 0.0
    %245 = vmatpush2.xpose.msra.mxu0 0.0
    %246 = vmatprep.subr.mxu0 0.0
    %247 = vmatpush2.xpose.msra.mxu0 0.0
    %248 = vmatprep.mubr.f32.mxu0 0.0
    %249 = vmatmul.mubr.f32.gmra.mxu0 %v176
    %v250 = vpop.f32.mrf.mxu0
    %v251 = vadd.f32 %v62, %v250
    %v252 = vpop.f32.mrf.mxu0
    %253 = vmatprep.mubr.f32.mxu0 0.0
    %254 = vmatmul.mubr.f32.gmra.mxu0 %v178
    %v255 = vpop.f32.mrf.mxu0
    %v256 = vadd.f32 %v63, %v255
    %v257 = vpop.f32.mrf.mxu0
    %258 = vdwg.mxu0
    %vm259 = vcmask 130048
    %v260 = vsel %vm259, %v251, -inf
    %261 = vmax.xlane.f32.xlu0 %v260
    %v262 = vpop.xlane.xlu0 %261
    %v263 = vsel %vm259, %v256, -inf
    %264 = vmax.xlane.f32.xlu0 %v263
    %v265 = vpop.xlane.xlu0 %264
    %v266 = vsub.f32 %v251, %v262
    %v267 = vsub.f32 %v256, %v265
    %v268 = vmul.f32 %v266, 1.442695
    %v269 = vpow.pop %v268
    %v270 = vmul.f32 %v267, 1.442695
    %v271 = vpow.pop %v270
    %v272 = vsel %vm259, %v269, 0.0
    %273 = vadd.xlane.f32.xlu0 %v272
    %v274 = vpop.xlane.xlu0 %273
    %v275 = vsel %vm259, %v271, 0.0
    %276 = vadd.xlane.f32.xlu0 %v275
    %v277 = vpop.xlane.xlu0 %276
    %v278 = vrcp.pop %v274
    %v279 = vrcp.pop %v277
    %v280 = vmul.f32 %v269, %v278
    %v281 = vmul.f32 %v271, %v279
    %v283 = vsel %vm259, %v280, 0
    %v286 = vsel %vm259, %v281, 0
    %288 = vmatprep.subr.mxu0 0.0
    %289 = vmatpush1.msra.mxu0 0.0
    %290 = vmatprep.subr.mxu0 0.0
    %291 = vmatpush1.msra.mxu0 0.0
    %292 = vmatprep.subr.mxu0 0.0
    %293 = vmatpush1.msra.mxu0 0.0
    %294 = vmatprep.subr.mxu0 0.0
    %295 = vmatpush1.msra.mxu0 0.0
    %296 = vmatprep.subr.mxu0 0.0
    %297 = vmatpush1.msra.mxu0 0.0
    %298 = vmatprep.subr.mxu0 0.0
    %299 = vmatpush1.msra.mxu0 0.0
    %300 = vmatprep.subr.mxu0 0.0
    %301 = vmatpush1.msra.mxu0 0.0
    %302 = vmatprep.subr.mxu0 0.0
    %303 = vmatpush1.msra.mxu0 0.0
    %304 = vmatprep.subr.mxu0 0.0
    %305 = vmatpush1.msra.mxu0 0.0
    %306 = vmatprep.subr.mxu0 0.0
    %307 = vmatpush1.msra.mxu0 0.0
    %308 = vmatprep.subr.mxu0 0.0
    %309 = vmatpush1.msra.mxu0 0.0
    %310 = vmatprep.subr.mxu0 0.0
    %311 = vmatpush1.msra.mxu0 0.0
    %312 = vmatprep.subr.mxu0 0.0
    %313 = vmatpush1.msra.mxu0 0.0
    %314 = vmatprep.subr.mxu0 0.0
    %315 = vmatpush1.msra.mxu0 0.0
    %316 = vmatprep.subr.mxu0 0.0
    %317 = vmatpush1.msra.mxu0 %v162
    %318 = vmatprep.subr.mxu0 0.0
    %319 = vmatpush1.msra.mxu0 %v157
    %320 = vmatprep.subr.mxu0 0.0
    %321 = vmatpush2.msra.mxu0 0.0
    %322 = vmatprep.subr.mxu0 0.0
    %323 = vmatpush2.msra.mxu0 0.0
    %324 = vmatprep.subr.mxu0 0.0
    %325 = vmatpush2.msra.mxu0 0.0
    %326 = vmatprep.subr.mxu0 0.0
    %327 = vmatpush2.msra.mxu0 0.0
    %328 = vmatprep.subr.mxu0 0.0
    %329 = vmatpush2.msra.mxu0 0.0
    %330 = vmatprep.subr.mxu0 0.0
    %331 = vmatpush2.msra.mxu0 0.0
    %332 = vmatprep.subr.mxu0 0.0
    %333 = vmatpush2.msra.mxu0 0.0
    %334 = vmatprep.subr.mxu0 0.0
    %335 = vmatpush2.msra.mxu0 0.0
    %336 = vmatprep.subr.mxu0 0.0
    %337 = vmatpush2.msra.mxu0 0.0
    %338 = vmatprep.subr.mxu0 0.0
    %339 = vmatpush2.msra.mxu0 0.0
    %340 = vmatprep.subr.mxu0 0.0
    %341 = vmatpush2.msra.mxu0 0.0
    %342 = vmatprep.subr.mxu0 0.0
    %343 = vmatpush2.msra.mxu0 0.0
    %344 = vmatprep.subr.mxu0 0.0
    %345 = vmatpush2.msra.mxu0 0.0
    %346 = vmatprep.subr.mxu0 0.0
    %347 = vmatpush2.msra.mxu0 0.0
    %348 = vmatprep.subr.mxu0 0.0
    %349 = vmatpush2.msra.mxu0 0.0
    %350 = vmatprep.subr.mxu0 0.0
    %351 = vmatpush2.msra.mxu0 0.0
    %352 = vmatprep.mubr.f32.mxu0 0.0
    %353 = vmatmul.mubr.f32.gmra.mxu0 %v283
    %v354 = vpop.f32.mrf.mxu0
    %v355 = vadd.f32 0.0, %v354
    %v356 = vpop.f32.mrf.mxu0
    %357 = vmatprep.mubr.f32.mxu0 0.0
    %358 = vmatmul.mubr.f32.gmra.mxu0 %v286
    %v359 = vpop.f32.mrf.mxu0
    %v360 = vadd.f32 0.0, %v359
    %v361 = vpop.f32.mrf.mxu0
    %362 = vdwg.mxu0
    %363 = vrot.lane.b32.xlu0 %v157, 56
    %v364 = vpop.permute.xlu0 %363
    %365 = vrot.lane.b32.xlu0 %v162, 56
    %v366 = vpop.permute.xlu0 %365
    %367 = vrot.lane.b32.xlu0 %v157, 88
    %v368 = vpop.permute.xlu0 %367
    %369 = vrot.lane.b32.xlu0 %v162, 88
    %v370 = vpop.permute.xlu0 %369
    %v371 = vsel %vm175, %v364, 0
    %v373 = vsel %vm175, %v366, 0
    %v375 = vsel %vm175, %v368, 0
    %v377 = vsel %vm175, %v370, 0
    %379 = vmatprep.subr.mxu0 0.0
    %380 = vmatpush1.xpose.msra.mxu0 0.0
    %381 = vmatprep.subr.mxu0 0.0
    %382 = vmatpush1.xpose.msra.mxu0 0.0
    %383 = vmatprep.subr.mxu0 0.0
    %384 = vmatpush1.xpose.msra.mxu0 0.0
    %385 = vmatprep.subr.mxu0 0.0
    %386 = vmatpush1.xpose.msra.mxu0 0.0
    %387 = vmatprep.subr.mxu0 0.0
    %388 = vmatpush1.xpose.msra.mxu0 0.0
    %389 = vmatprep.subr.mxu0 0.0
    %390 = vmatpush1.xpose.msra.mxu0 0.0
    %391 = vmatprep.subr.mxu0 0.0
    %392 = vmatpush1.xpose.msra.mxu0 0.0
    %393 = vmatprep.subr.mxu0 0.0
    %394 = vmatpush1.xpose.msra.mxu0 0.0
    %395 = vmatprep.subr.mxu0 0.0
    %396 = vmatpush1.xpose.msra.mxu0 0.0
    %397 = vmatprep.subr.mxu0 0.0
    %398 = vmatpush1.xpose.msra.mxu0 0.0
    %399 = vmatprep.subr.mxu0 0.0
    %400 = vmatpush1.xpose.msra.mxu0 0.0
    %401 = vmatprep.subr.mxu0 0.0
    %402 = vmatpush1.xpose.msra.mxu0 0.0
    %403 = vmatprep.subr.mxu0 0.0
    %404 = vmatpush1.xpose.msra.mxu0 0.0
    %405 = vmatprep.subr.mxu0 0.0
    %406 = vmatpush1.xpose.msra.mxu0 0.0
    %407 = vmatprep.subr.mxu0 0.0
    %408 = vmatpush1.xpose.msra.mxu0 %v377
    %409 = vmatprep.subr.mxu0 0.0
    %410 = vmatpush1.xpose.msra.mxu0 %v375
    %411 = vmatprep.subr.mxu0 0.0
    %412 = vmatpush2.xpose.msra.mxu0 0.0
    %413 = vmatprep.subr.mxu0 0.0
    %414 = vmatpush2.xpose.msra.mxu0 0.0
    %415 = vmatprep.subr.mxu0 0.0
    %416 = vmatpush2.xpose.msra.mxu0 0.0
    %417 = vmatprep.subr.mxu0 0.0
    %418 = vmatpush2.xpose.msra.mxu0 0.0
    %419 = vmatprep.subr.mxu0 0.0
    %420 = vmatpush2.xpose.msra.mxu0 0.0
    %421 = vmatprep.subr.mxu0 0.0
    %422 = vmatpush2.xpose.msra.mxu0 0.0
    %423 = vmatprep.subr.mxu0 0.0
    %424 = vmatpush2.xpose.msra.mxu0 0.0
    %425 = vmatprep.subr.mxu0 0.0
    %426 = vmatpush2.xpose.msra.mxu0 0.0
    %427 = vmatprep.subr.mxu0 0.0
    %428 = vmatpush2.xpose.msra.mxu0 0.0
    %429 = vmatprep.subr.mxu0 0.0
    %430 = vmatpush2.xpose.msra.mxu0 0.0
    %431 = vmatprep.subr.mxu0 0.0
    %432 = vmatpush2.xpose.msra.mxu0 0.0
    %433 = vmatprep.subr.mxu0 0.0
    %434 = vmatpush2.xpose.msra.mxu0 0.0
    %435 = vmatprep.subr.mxu0 0.0
    %436 = vmatpush2.xpose.msra.mxu0 0.0
    %437 = vmatprep.subr.mxu0 0.0
    %438 = vmatpush2.xpose.msra.mxu0 0.0
    %439 = vmatprep.subr.mxu0 0.0
    %440 = vmatpush2.xpose.msra.mxu0 0.0
    %441 = vmatprep.subr.mxu0 0.0
    %442 = vmatpush2.xpose.msra.mxu0 0.0
    %443 = vmatprep.mubr.f32.mxu0 0.0
    %444 = vmatmul.mubr.f32.gmra.mxu0 %v371
    %v445 = vpop.f32.mrf.mxu0
    %v446 = vadd.f32 %v62, %v445
    %v447 = vpop.f32.mrf.mxu0
    %448 = vmatprep.mubr.f32.mxu0 0.0
    %449 = vmatmul.mubr.f32.gmra.mxu0 %v373
    %v450 = vpop.f32.mrf.mxu0
    %v451 = vadd.f32 %v63, %v450
    %v452 = vpop.f32.mrf.mxu0
    %453 = vdwg.mxu0
    %v454 = vsel %vm259, %v446, -inf
    %455 = vmax.xlane.f32.xlu0 %v454
    %v456 = vpop.xlane.xlu0 %455
    %v457 = vsel %vm259, %v451, -inf
    %458 = vmax.xlane.f32.xlu0 %v457
    %v459 = vpop.xlane.xlu0 %458
    %v460 = vsub.f32 %v446, %v456
    %v461 = vsub.f32 %v451, %v459
    %v462 = vmul.f32 %v460, 1.442695
    %v463 = vpow.pop %v462
    %v464 = vmul.f32 %v461, 1.442695
    %v465 = vpow.pop %v464
    %v466 = vsel %vm259, %v463, 0.0
    %467 = vadd.xlane.f32.xlu0 %v466
    %v468 = vpop.xlane.xlu0 %467
    %v469 = vsel %vm259, %v465, 0.0
    %470 = vadd.xlane.f32.xlu0 %v469
    %v471 = vpop.xlane.xlu0 %470
    %v472 = vrcp.pop %v468
    %v473 = vrcp.pop %v471
    %v474 = vmul.f32 %v463, %v472
    %v475 = vmul.f32 %v465, %v473
    %476 = vrot.lane.b32.xlu0 %v157, 120
    %v477 = vpop.permute.xlu0 %476
    %478 = vrot.lane.b32.xlu0 %v162, 120
    %v479 = vpop.permute.xlu0 %478
    %v483 = vsel %vm259, %v474, 0
    %v486 = vsel %vm259, %v475, 0
    %488 = vmatprep.subr.mxu0 0.0
    %489 = vmatpush1.msra.mxu0 0.0
    %490 = vmatprep.subr.mxu0 0.0
    %491 = vmatpush1.msra.mxu0 0.0
    %492 = vmatprep.subr.mxu0 0.0
    %493 = vmatpush1.msra.mxu0 0.0
    %494 = vmatprep.subr.mxu0 0.0
    %495 = vmatpush1.msra.mxu0 0.0
    %496 = vmatprep.subr.mxu0 0.0
    %497 = vmatpush1.msra.mxu0 0.0
    %498 = vmatprep.subr.mxu0 0.0
    %499 = vmatpush1.msra.mxu0 0.0
    %500 = vmatprep.subr.mxu0 0.0
    %501 = vmatpush1.msra.mxu0 0.0
    %502 = vmatprep.subr.mxu0 0.0
    %503 = vmatpush1.msra.mxu0 0.0
    %504 = vmatprep.subr.mxu0 0.0
    %505 = vmatpush1.msra.mxu0 0.0
    %506 = vmatprep.subr.mxu0 0.0
    %507 = vmatpush1.msra.mxu0 0.0
    %508 = vmatprep.subr.mxu0 0.0
    %509 = vmatpush1.msra.mxu0 0.0
    %510 = vmatprep.subr.mxu0 0.0
    %511 = vmatpush1.msra.mxu0 0.0
    %512 = vmatprep.subr.mxu0 0.0
    %513 = vmatpush1.msra.mxu0 0.0
    %514 = vmatprep.subr.mxu0 0.0
    %515 = vmatpush1.msra.mxu0 0.0
    %516 = vmatprep.subr.mxu0 0.0
    %517 = vmatpush1.msra.mxu0 %v479
    %518 = vmatprep.subr.mxu0 0.0
    %519 = vmatpush1.msra.mxu0 %v477
    %520 = vmatprep.subr.mxu0 0.0
    %521 = vmatpush2.msra.mxu0 0.0
    %522 = vmatprep.subr.mxu0 0.0
    %523 = vmatpush2.msra.mxu0 0.0
    %524 = vmatprep.subr.mxu0 0.0
    %525 = vmatpush2.msra.mxu0 0.0
    %526 = vmatprep.subr.mxu0 0.0
    %527 = vmatpush2.msra.mxu0 0.0
    %528 = vmatprep.subr.mxu0 0.0
    %529 = vmatpush2.msra.mxu0 0.0
    %530 = vmatprep.subr.mxu0 0.0
    %531 = vmatpush2.msra.mxu0 0.0
    %532 = vmatprep.subr.mxu0 0.0
    %533 = vmatpush2.msra.mxu0 0.0
    %534 = vmatprep.subr.mxu0 0.0
    %535 = vmatpush2.msra.mxu0 0.0
    %536 = vmatprep.subr.mxu0 0.0
    %537 = vmatpush2.msra.mxu0 0.0
    %538 = vmatprep.subr.mxu0 0.0
    %539 = vmatpush2.msra.mxu0 0.0
    %540 = vmatprep.subr.mxu0 0.0
    %541 = vmatpush2.msra.mxu0 0.0
    %542 = vmatprep.subr.mxu0 0.0
    %543 = vmatpush2.msra.mxu0 0.0
    %544 = vmatprep.subr.mxu0 0.0
    %545 = vmatpush2.msra.mxu0 0.0
    %546 = vmatprep.subr.mxu0 0.0
    %547 = vmatpush2.msra.mxu0 0.0
    %548 = vmatprep.subr.mxu0 0.0
    %549 = vmatpush2.msra.mxu0 0.0
    %550 = vmatprep.subr.mxu0 0.0
    %551 = vmatpush2.msra.mxu0 0.0
    %552 = vmatprep.mubr.f32.mxu0 0.0
    %553 = vmatmul.mubr.f32.gmra.mxu0 %v483
    %v554 = vpop.f32.mrf.mxu0
    %v555 = vadd.f32 0.0, %v554
    %v556 = vpop.f32.mrf.mxu0
    %557 = vmatprep.mubr.f32.mxu0 0.0
    %558 = vmatmul.mubr.f32.gmra.mxu0 %v486
    %v559 = vpop.f32.mrf.mxu0
    %v560 = vadd.f32 0.0, %v559
    %v561 = vpop.f32.mrf.mxu0
    %562 = vdwg.mxu0
    %564 = vrot.lane.b32.xlu0 %v69, 32
    %v565 = vpop.permute.xlu0 %564
    %v568 = vsel %vm175, %v555, 0
    %v571 = vsel %vm175, %v560, 0
    %573 = vmatprep.subr.mxu0 0.0
    %574 = vmatpush1.msra.mxu0 0.0
    %575 = vmatprep.subr.mxu0 0.0
    %576 = vmatpush1.msra.mxu0 0.0
    %577 = vmatprep.subr.mxu0 0.0
    %578 = vmatpush1.msra.mxu0 0.0
    %579 = vmatprep.subr.mxu0 0.0
    %580 = vmatpush1.msra.mxu0 0.0
    %581 = vmatprep.subr.mxu0 0.0
    %582 = vmatpush1.msra.mxu0 0.0
    %583 = vmatprep.subr.mxu0 0.0
    %584 = vmatpush1.msra.mxu0 0.0
    %585 = vmatprep.subr.mxu0 0.0
    %586 = vmatpush1.msra.mxu0 0.0
    %587 = vmatprep.subr.mxu0 0.0
    %588 = vmatpush1.msra.mxu0 0.0
    %589 = vmatprep.subr.mxu0 0.0
    %590 = vmatpush1.msra.mxu0 0.0
    %591 = vmatprep.subr.mxu0 0.0
    %592 = vmatpush1.msra.mxu0 0.0
    %593 = vmatprep.subr.mxu0 0.0
    %594 = vmatpush1.msra.mxu0 0.0
    %595 = vmatprep.subr.mxu0 0.0
    %596 = vmatpush1.msra.mxu0 0.0
    %597 = vmatprep.subr.mxu0 0.0
    %598 = vmatpush1.msra.mxu0 0.0
    %599 = vmatprep.subr.mxu0 0.0
    %600 = vmatpush1.msra.mxu0 0.0
    %601 = vmatprep.subr.mxu0 0.0
    %602 = vmatpush1.msra.mxu0 0.0
    %603 = vmatprep.subr.mxu0 0.0
    %604 = vmatpush1.msra.mxu0 %v565
    %605 = vmatprep.subr.mxu0 0.0
    %606 = vmatpush2.msra.mxu0 0.0
    %607 = vmatprep.subr.mxu0 0.0
    %608 = vmatpush2.msra.mxu0 0.0
    %609 = vmatprep.subr.mxu0 0.0
    %610 = vmatpush2.msra.mxu0 0.0
    %611 = vmatprep.subr.mxu0 0.0
    %612 = vmatpush2.msra.mxu0 0.0
    %613 = vmatprep.subr.mxu0 0.0
    %614 = vmatpush2.msra.mxu0 0.0
    %615 = vmatprep.subr.mxu0 0.0
    %616 = vmatpush2.msra.mxu0 0.0
    %617 = vmatprep.subr.mxu0 0.0
    %618 = vmatpush2.msra.mxu0 0.0
    %619 = vmatprep.subr.mxu0 0.0
    %620 = vmatpush2.msra.mxu0 0.0
    %621 = vmatprep.subr.mxu0 0.0
    %622 = vmatpush2.msra.mxu0 0.0
    %623 = vmatprep.subr.mxu0 0.0
    %624 = vmatpush2.msra.mxu0 0.0
    %625 = vmatprep.subr.mxu0 0.0
    %626 = vmatpush2.msra.mxu0 0.0
    %627 = vmatprep.subr.mxu0 0.0
    %628 = vmatpush2.msra.mxu0 0.0
    %629 = vmatprep.subr.mxu0 0.0
    %630 = vmatpush2.msra.mxu0 0.0
    %631 = vmatprep.subr.mxu0 0.0
    %632 = vmatpush2.msra.mxu0 0.0
    %633 = vmatprep.subr.mxu0 0.0
    %634 = vmatpush2.msra.mxu0 0.0
    %635 = vmatprep.subr.mxu0 0.0
    %636 = vmatpush2.msra.mxu0 0.0
    %637 = vmatprep.mubr.f32.mxu0 0.0
    %638 = vmatmul.mubr.f32.gmra.mxu0 %v568
    %v639 = vpop.f32.mrf.mxu0
    %v640 = vadd.f32 0.0, %v639
    %v641 = vpop.f32.mrf.mxu0
    %642 = vmatprep.mubr.f32.mxu0 0.0
    %643 = vmatmul.mubr.f32.gmra.mxu0 %v571
    %v644 = vpop.f32.mrf.mxu0
    %v645 = vadd.f32 0.0, %v644
    %v646 = vpop.f32.mrf.mxu0
    %647 = vdwg.mxu0
    %649 = vrot.lane.b32.xlu0 %v68, 32
    %v650 = vpop.permute.xlu0 %649
    %v653 = vsel %vm175, %v355, 0
    %v656 = vsel %vm175, %v360, 0
    %658 = vmatprep.subr.mxu0 0.0
    %659 = vmatpush1.msra.mxu0 0.0
    %660 = vmatprep.subr.mxu0 0.0
    %661 = vmatpush1.msra.mxu0 0.0
    %662 = vmatprep.subr.mxu0 0.0
    %663 = vmatpush1.msra.mxu0 0.0
    %664 = vmatprep.subr.mxu0 0.0
    %665 = vmatpush1.msra.mxu0 0.0
    %666 = vmatprep.subr.mxu0 0.0
    %667 = vmatpush1.msra.mxu0 0.0
    %668 = vmatprep.subr.mxu0 0.0
    %669 = vmatpush1.msra.mxu0 0.0
    %670 = vmatprep.subr.mxu0 0.0
    %671 = vmatpush1.msra.mxu0 0.0
    %672 = vmatprep.subr.mxu0 0.0
    %673 = vmatpush1.msra.mxu0 0.0
    %674 = vmatprep.subr.mxu0 0.0
    %675 = vmatpush1.msra.mxu0 0.0
    %676 = vmatprep.subr.mxu0 0.0
    %677 = vmatpush1.msra.mxu0 0.0
    %678 = vmatprep.subr.mxu0 0.0
    %679 = vmatpush1.msra.mxu0 0.0
    %680 = vmatprep.subr.mxu0 0.0
    %681 = vmatpush1.msra.mxu0 0.0
    %682 = vmatprep.subr.mxu0 0.0
    %683 = vmatpush1.msra.mxu0 0.0
    %684 = vmatprep.subr.mxu0 0.0
    %685 = vmatpush1.msra.mxu0 0.0
    %686 = vmatprep.subr.mxu0 0.0
    %687 = vmatpush1.msra.mxu0 0.0
    %688 = vmatprep.subr.mxu0 0.0
    %689 = vmatpush1.msra.mxu0 %v650
    %690 = vmatprep.subr.mxu0 0.0
    %691 = vmatpush2.msra.mxu0 0.0
    %692 = vmatprep.subr.mxu0 0.0
    %693 = vmatpush2.msra.mxu0 0.0
    %694 = vmatprep.subr.mxu0 0.0
    %695 = vmatpush2.msra.mxu0 0.0
    %696 = vmatprep.subr.mxu0 0.0
    %697 = vmatpush2.msra.mxu0 0.0
    %698 = vmatprep.subr.mxu0 0.0
    %699 = vmatpush2.msra.mxu0 0.0
    %700 = vmatprep.subr.mxu0 0.0
    %701 = vmatpush2.msra.mxu0 0.0
    %702 = vmatprep.subr.mxu0 0.0
    %703 = vmatpush2.msra.mxu0 0.0
    %704 = vmatprep.subr.mxu0 0.0
    %705 = vmatpush2.msra.mxu0 0.0
    %706 = vmatprep.subr.mxu0 0.0
    %707 = vmatpush2.msra.mxu0 0.0
    %708 = vmatprep.subr.mxu0 0.0
    %709 = vmatpush2.msra.mxu0 0.0
    %710 = vmatprep.subr.mxu0 0.0
    %711 = vmatpush2.msra.mxu0 0.0
    %712 = vmatprep.subr.mxu0 0.0
    %713 = vmatpush2.msra.mxu0 0.0
    %714 = vmatprep.subr.mxu0 0.0
    %715 = vmatpush2.msra.mxu0 0.0
    %716 = vmatprep.subr.mxu0 0.0
    %717 = vmatpush2.msra.mxu0 0.0
    %718 = vmatprep.subr.mxu0 0.0
    %719 = vmatpush2.msra.mxu0 0.0
    %720 = vmatprep.subr.mxu0 0.0
    %721 = vmatpush2.msra.mxu0 0.0
    %722 = vmatprep.mubr.f32.mxu0 0.0
    %723 = vmatmul.mubr.f32.gmra.mxu0 %v653
    %v724 = vpop.f32.mrf.mxu0
    %v725 = vadd.f32 %v640, %v724
    %v726 = vpop.f32.mrf.mxu0
    %727 = vmatprep.mubr.f32.mxu0 0.0
    %728 = vmatmul.mubr.f32.gmra.mxu0 %v656
    %v729 = vpop.f32.mrf.mxu0
    %v730 = vadd.f32 %v645, %v729
    %v731 = vpop.f32.mrf.mxu0
    %732 = vdwg.mxu0
    %733 = vrot.lane.b32.xlu0 %v157, 48
    %v734 = vpop.permute.xlu0 %733
    %735 = vrot.lane.b32.xlu0 %v162, 48
    %v736 = vpop.permute.xlu0 %735
    %737 = vrot.lane.b32.xlu0 %v157, 80
    %v738 = vpop.permute.xlu0 %737
    %739 = vrot.lane.b32.xlu0 %v162, 80
    %v740 = vpop.permute.xlu0 %739
    %v741 = vsel %vm175, %v734, 0
    %v743 = vsel %vm175, %v736, 0
    %v745 = vsel %vm175, %v738, 0
    %v747 = vsel %vm175, %v740, 0
    %749 = vmatprep.subr.mxu0 0.0
    %750 = vmatpush1.xpose.msra.mxu0 0.0
    %751 = vmatprep.subr.mxu0 0.0
    %752 = vmatpush1.xpose.msra.mxu0 0.0
    %753 = vmatprep.subr.mxu0 0.0
    %754 = vmatpush1.xpose.msra.mxu0 0.0
    %755 = vmatprep.subr.mxu0 0.0
    %756 = vmatpush1.xpose.msra.mxu0 0.0
    %757 = vmatprep.subr.mxu0 0.0
    %758 = vmatpush1.xpose.msra.mxu0 0.0
    %759 = vmatprep.subr.mxu0 0.0
    %760 = vmatpush1.xpose.msra.mxu0 0.0
    %761 = vmatprep.subr.mxu0 0.0
    %762 = vmatpush1.xpose.msra.mxu0 0.0
    %763 = vmatprep.subr.mxu0 0.0
    %764 = vmatpush1.xpose.msra.mxu0 0.0
    %765 = vmatprep.subr.mxu0 0.0
    %766 = vmatpush1.xpose.msra.mxu0 0.0
    %767 = vmatprep.subr.mxu0 0.0
    %768 = vmatpush1.xpose.msra.mxu0 0.0
    %769 = vmatprep.subr.mxu0 0.0
    %770 = vmatpush1.xpose.msra.mxu0 0.0
    %771 = vmatprep.subr.mxu0 0.0
    %772 = vmatpush1.xpose.msra.mxu0 0.0
    %773 = vmatprep.subr.mxu0 0.0
    %774 = vmatpush1.xpose.msra.mxu0 0.0
    %775 = vmatprep.subr.mxu0 0.0
    %776 = vmatpush1.xpose.msra.mxu0 0.0
    %777 = vmatprep.subr.mxu0 0.0
    %778 = vmatpush1.xpose.msra.mxu0 %v747
    %779 = vmatprep.subr.mxu0 0.0
    %780 = vmatpush1.xpose.msra.mxu0 %v745
    %781 = vmatprep.subr.mxu0 0.0
    %782 = vmatpush2.xpose.msra.mxu0 0.0
    %783 = vmatprep.subr.mxu0 0.0
    %784 = vmatpush2.xpose.msra.mxu0 0.0
    %785 = vmatprep.subr.mxu0 0.0
    %786 = vmatpush2.xpose.msra.mxu0 0.0
    %787 = vmatprep.subr.mxu0 0.0
    %788 = vmatpush2.xpose.msra.mxu0 0.0
    %789 = vmatprep.subr.mxu0 0.0
    %790 = vmatpush2.xpose.msra.mxu0 0.0
    %791 = vmatprep.subr.mxu0 0.0
    %792 = vmatpush2.xpose.msra.mxu0 0.0
    %793 = vmatprep.subr.mxu0 0.0
    %794 = vmatpush2.xpose.msra.mxu0 0.0
    %795 = vmatprep.subr.mxu0 0.0
    %796 = vmatpush2.xpose.msra.mxu0 0.0
    %797 = vmatprep.subr.mxu0 0.0
    %798 = vmatpush2.xpose.msra.mxu0 0.0
    %799 = vmatprep.subr.mxu0 0.0
    %800 = vmatpush2.xpose.msra.mxu0 0.0
    %801 = vmatprep.subr.mxu0 0.0
    %802 = vmatpush2.xpose.msra.mxu0 0.0
    %803 = vmatprep.subr.mxu0 0.0
    %804 = vmatpush2.xpose.msra.mxu0 0.0
    %805 = vmatprep.subr.mxu0 0.0
    %806 = vmatpush2.xpose.msra.mxu0 0.0
    %807 = vmatprep.subr.mxu0 0.0
    %808 = vmatpush2.xpose.msra.mxu0 0.0
    %809 = vmatprep.subr.mxu0 0.0
    %810 = vmatpush2.xpose.msra.mxu0 0.0
    %811 = vmatprep.subr.mxu0 0.0
    %812 = vmatpush2.xpose.msra.mxu0 0.0
    %813 = vmatprep.mubr.f32.mxu0 0.0
    %814 = vmatmul.mubr.f32.gmra.mxu0 %v741
    %v815 = vpop.f32.mrf.mxu0
    %v816 = vadd.f32 %v62, %v815
    %v817 = vpop.f32.mrf.mxu0
    %818 = vmatprep.mubr.f32.mxu0 0.0
    %819 = vmatmul.mubr.f32.gmra.mxu0 %v743
    %v820 = vpop.f32.mrf.mxu0
    %v821 = vadd.f32 %v63, %v820
    %v822 = vpop.f32.mrf.mxu0
    %823 = vdwg.mxu0
    %v824 = vsel %vm259, %v816, -inf
    %825 = vmax.xlane.f32.xlu0 %v824
    %v826 = vpop.xlane.xlu0 %825
    %v827 = vsel %vm259, %v821, -inf
    %828 = vmax.xlane.f32.xlu0 %v827
    %v829 = vpop.xlane.xlu0 %828
    %v830 = vsub.f32 %v816, %v826
    %v831 = vsub.f32 %v821, %v829
    %v832 = vmul.f32 %v830, 1.442695
    %v833 = vpow.pop %v832
    %v834 = vmul.f32 %v831, 1.442695
    %v835 = vpow.pop %v834
    %v836 = vsel %vm259, %v833, 0.0
    %837 = vadd.xlane.f32.xlu0 %v836
    %v838 = vpop.xlane.xlu0 %837
    %v839 = vsel %vm259, %v835, 0.0
    %840 = vadd.xlane.f32.xlu0 %v839
    %v841 = vpop.xlane.xlu0 %840
    %v842 = vrcp.pop %v838
    %v843 = vrcp.pop %v841
    %v844 = vmul.f32 %v833, %v842
    %v845 = vmul.f32 %v835, %v843
    %846 = vrot.lane.b32.xlu0 %v157, 112
    %v847 = vpop.permute.xlu0 %846
    %848 = vrot.lane.b32.xlu0 %v162, 112
    %v849 = vpop.permute.xlu0 %848
    %v853 = vsel %vm259, %v844, 0
    %v856 = vsel %vm259, %v845, 0
    %858 = vmatprep.subr.mxu0 0.0
    %859 = vmatpush1.msra.mxu0 0.0
    %860 = vmatprep.subr.mxu0 0.0
    %861 = vmatpush1.msra.mxu0 0.0
    %862 = vmatprep.subr.mxu0 0.0
    %863 = vmatpush1.msra.mxu0 0.0
    %864 = vmatprep.subr.mxu0 0.0
    %865 = vmatpush1.msra.mxu0 0.0
    %866 = vmatprep.subr.mxu0 0.0
    %867 = vmatpush1.msra.mxu0 0.0
    %868 = vmatprep.subr.mxu0 0.0
    %869 = vmatpush1.msra.mxu0 0.0
    %870 = vmatprep.subr.mxu0 0.0
    %871 = vmatpush1.msra.mxu0 0.0
    %872 = vmatprep.subr.mxu0 0.0
    %873 = vmatpush1.msra.mxu0 0.0
    %874 = vmatprep.subr.mxu0 0.0
    %875 = vmatpush1.msra.mxu0 0.0
    %876 = vmatprep.subr.mxu0 0.0
    %877 = vmatpush1.msra.mxu0 0.0
    %878 = vmatprep.subr.mxu0 0.0
    %879 = vmatpush1.msra.mxu0 0.0
    %880 = vmatprep.subr.mxu0 0.0
    %881 = vmatpush1.msra.mxu0 0.0
    %882 = vmatprep.subr.mxu0 0.0
    %883 = vmatpush1.msra.mxu0 0.0
    %884 = vmatprep.subr.mxu0 0.0
    %885 = vmatpush1.msra.mxu0 0.0
    %886 = vmatprep.subr.mxu0 0.0
    %887 = vmatpush1.msra.mxu0 %v849
    %888 = vmatprep.subr.mxu0 0.0
    %889 = vmatpush1.msra.mxu0 %v847
    %890 = vmatprep.subr.mxu0 0.0
    %891 = vmatpush2.msra.mxu0 0.0
    %892 = vmatprep.subr.mxu0 0.0
    %893 = vmatpush2.msra.mxu0 0.0
    %894 = vmatprep.subr.mxu0 0.0
    %895 = vmatpush2.msra.mxu0 0.0
    %896 = vmatprep.subr.mxu0 0.0
    %897 = vmatpush2.msra.mxu0 0.0
    %898 = vmatprep.subr.mxu0 0.0
    %899 = vmatpush2.msra.mxu0 0.0
    %900 = vmatprep.subr.mxu0 0.0
    %901 = vmatpush2.msra.mxu0 0.0
    %902 = vmatprep.subr.mxu0 0.0
    %903 = vmatpush2.msra.mxu0 0.0
    %904 = vmatprep.subr.mxu0 0.0
    %905 = vmatpush2.msra.mxu0 0.0
    %906 = vmatprep.subr.mxu0 0.0
    %907 = vmatpush2.msra.mxu0 0.0
    %908 = vmatprep.subr.mxu0 0.0
    %909 = vmatpush2.msra.mxu0 0.0
    %910 = vmatprep.subr.mxu0 0.0
    %911 = vmatpush2.msra.mxu0 0.0
    %912 = vmatprep.subr.mxu0 0.0
    %913 = vmatpush2.msra.mxu0 0.0
    %914 = vmatprep.subr.mxu0 0.0
    %915 = vmatpush2.msra.mxu0 0.0
    %916 = vmatprep.subr.mxu0 0.0
    %917 = vmatpush2.msra.mxu0 0.0
    %918 = vmatprep.subr.mxu0 0.0
    %919 = vmatpush2.msra.mxu0 0.0
    %920 = vmatprep.subr.mxu0 0.0
    %921 = vmatpush2.msra.mxu0 0.0
    %922 = vmatprep.mubr.f32.mxu0 0.0
    %923 = vmatmul.mubr.f32.gmra.mxu0 %v853
    %v924 = vpop.f32.mrf.mxu0
    %v925 = vadd.f32 0.0, %v924
    %v926 = vpop.f32.mrf.mxu0
    %927 = vmatprep.mubr.f32.mxu0 0.0
    %928 = vmatmul.mubr.f32.gmra.mxu0 %v856
    %v929 = vpop.f32.mrf.mxu0
    %v930 = vadd.f32 0.0, %v929
    %v931 = vpop.f32.mrf.mxu0
    %932 = vdwg.mxu0
    %934 = vrot.lane.b32.xlu0 %v70, 32
    %v935 = vpop.permute.xlu0 %934
    %v938 = vsel %vm175, %v925, 0
    %v941 = vsel %vm175, %v930, 0
    %943 = vmatprep.subr.mxu0 0.0
    %944 = vmatpush1.msra.mxu0 0.0
    %945 = vmatprep.subr.mxu0 0.0
    %946 = vmatpush1.msra.mxu0 0.0
    %947 = vmatprep.subr.mxu0 0.0
    %948 = vmatpush1.msra.mxu0 0.0
    %949 = vmatprep.subr.mxu0 0.0
    %950 = vmatpush1.msra.mxu0 0.0
    %951 = vmatprep.subr.mxu0 0.0
    %952 = vmatpush1.msra.mxu0 0.0
    %953 = vmatprep.subr.mxu0 0.0
    %954 = vmatpush1.msra.mxu0 0.0
    %955 = vmatprep.subr.mxu0 0.0
    %956 = vmatpush1.msra.mxu0 0.0
    %957 = vmatprep.subr.mxu0 0.0
    %958 = vmatpush1.msra.mxu0 0.0
    %959 = vmatprep.subr.mxu0 0.0
    %960 = vmatpush1.msra.mxu0 0.0
    %961 = vmatprep.subr.mxu0 0.0
    %962 = vmatpush1.msra.mxu0 0.0
    %963 = vmatprep.subr.mxu0 0.0
    %964 = vmatpush1.msra.mxu0 0.0
    %965 = vmatprep.subr.mxu0 0.0
    %966 = vmatpush1.msra.mxu0 0.0
    %967 = vmatprep.subr.mxu0 0.0
    %968 = vmatpush1.msra.mxu0 0.0
    %969 = vmatprep.subr.mxu0 0.0
    %970 = vmatpush1.msra.mxu0 0.0
    %971 = vmatprep.subr.mxu0 0.0
    %972 = vmatpush1.msra.mxu0 0.0
    %973 = vmatprep.subr.mxu0 0.0
    %974 = vmatpush1.msra.mxu0 %v935
    %975 = vmatprep.subr.mxu0 0.0
    %976 = vmatpush2.msra.mxu0 0.0
    %977 = vmatprep.subr.mxu0 0.0
    %978 = vmatpush2.msra.mxu0 0.0
    %979 = vmatprep.subr.mxu0 0.0
    %980 = vmatpush2.msra.mxu0 0.0
    %981 = vmatprep.subr.mxu0 0.0
    %982 = vmatpush2.msra.mxu0 0.0
    %983 = vmatprep.subr.mxu0 0.0
    %984 = vmatpush2.msra.mxu0 0.0
    %985 = vmatprep.subr.mxu0 0.0
    %986 = vmatpush2.msra.mxu0 0.0
    %987 = vmatprep.subr.mxu0 0.0
    %988 = vmatpush2.msra.mxu0 0.0
    %989 = vmatprep.subr.mxu0 0.0
    %990 = vmatpush2.msra.mxu0 0.0
    %991 = vmatprep.subr.mxu0 0.0
    %992 = vmatpush2.msra.mxu0 0.0
    %993 = vmatprep.subr.mxu0 0.0
    %994 = vmatpush2.msra.mxu0 0.0
    %995 = vmatprep.subr.mxu0 0.0
    %996 = vmatpush2.msra.mxu0 0.0
    %997 = vmatprep.subr.mxu0 0.0
    %998 = vmatpush2.msra.mxu0 0.0
    %999 = vmatprep.subr.mxu0 0.0
    %1000 = vmatpush2.msra.mxu0 0.0
    %1001 = vmatprep.subr.mxu0 0.0
    %1002 = vmatpush2.msra.mxu0 0.0
    %1003 = vmatprep.subr.mxu0 0.0
    %1004 = vmatpush2.msra.mxu0 0.0
    %1005 = vmatprep.subr.mxu0 0.0
    %1006 = vmatpush2.msra.mxu0 0.0
    %1007 = vmatprep.mubr.f32.mxu0 0.0
    %1008 = vmatmul.mubr.f32.gmra.mxu0 %v938
    %v1009 = vpop.f32.mrf.mxu0
    %v1010 = vadd.f32 0.0, %v1009
    %v1011 = vpop.f32.mrf.mxu0
    %1012 = vmatprep.mubr.f32.mxu0 0.0
    %1013 = vmatmul.mubr.f32.gmra.mxu0 %v941
    %v1014 = vpop.f32.mrf.mxu0
    %v1015 = vadd.f32 0.0, %v1014
    %v1016 = vpop.f32.mrf.mxu0
    %1017 = vdwg.mxu0
    %v1018 = vadd.f32 %v725, %v1010
    %v1019 = vadd.f32 %v730, %v1015
    %1020 = vrot.lane.b32.xlu0 %v157, 40
    %v1021 = vpop.permute.xlu0 %1020
    %1022 = vrot.lane.b32.xlu0 %v162, 40
    %v1023 = vpop.permute.xlu0 %1022
    %1024 = vrot.lane.b32.xlu0 %v157, 72
    %v1025 = vpop.permute.xlu0 %1024
    %1026 = vrot.lane.b32.xlu0 %v162, 72
    %v1027 = vpop.permute.xlu0 %1026
    %v1028 = vsel %vm175, %v1021, 0
    %v1030 = vsel %vm175, %v1023, 0
    %v1032 = vsel %vm175, %v1025, 0
    %v1034 = vsel %vm175, %v1027, 0
    %1036 = vmatprep.subr.mxu0 0.0
    %1037 = vmatpush1.xpose.msra.mxu0 0.0
    %1038 = vmatprep.subr.mxu0 0.0
    %1039 = vmatpush1.xpose.msra.mxu0 0.0
    %1040 = vmatprep.subr.mxu0 0.0
    %1041 = vmatpush1.xpose.msra.mxu0 0.0
    %1042 = vmatprep.subr.mxu0 0.0
    %1043 = vmatpush1.xpose.msra.mxu0 0.0
    %1044 = vmatprep.subr.mxu0 0.0
    %1045 = vmatpush1.xpose.msra.mxu0 0.0
    %1046 = vmatprep.subr.mxu0 0.0
    %1047 = vmatpush1.xpose.msra.mxu0 0.0
    %1048 = vmatprep.subr.mxu0 0.0
    %1049 = vmatpush1.xpose.msra.mxu0 0.0
    %1050 = vmatprep.subr.mxu0 0.0
    %1051 = vmatpush1.xpose.msra.mxu0 0.0
    %1052 = vmatprep.subr.mxu0 0.0
    %1053 = vmatpush1.xpose.msra.mxu0 0.0
    %1054 = vmatprep.subr.mxu0 0.0
    %1055 = vmatpush1.xpose.msra.mxu0 0.0
    %1056 = vmatprep.subr.mxu0 0.0
    %1057 = vmatpush1.xpose.msra.mxu0 0.0
    %1058 = vmatprep.subr.mxu0 0.0
    %1059 = vmatpush1.xpose.msra.mxu0 0.0
    %1060 = vmatprep.subr.mxu0 0.0
    %1061 = vmatpush1.xpose.msra.mxu0 0.0
    %1062 = vmatprep.subr.mxu0 0.0
    %1063 = vmatpush1.xpose.msra.mxu0 0.0
    %1064 = vmatprep.subr.mxu0 0.0
    %1065 = vmatpush1.xpose.msra.mxu0 %v1034
    %1066 = vmatprep.subr.mxu0 0.0
    %1067 = vmatpush1.xpose.msra.mxu0 %v1032
    %1068 = vmatprep.subr.mxu0 0.0
    %1069 = vmatpush2.xpose.msra.mxu0 0.0
    %1070 = vmatprep.subr.mxu0 0.0
    %1071 = vmatpush2.xpose.msra.mxu0 0.0
    %1072 = vmatprep.subr.mxu0 0.0
    %1073 = vmatpush2.xpose.msra.mxu0 0.0
    %1074 = vmatprep.subr.mxu0 0.0
    %1075 = vmatpush2.xpose.msra.mxu0 0.0
    %1076 = vmatprep.subr.mxu0 0.0
    %1077 = vmatpush2.xpose.msra.mxu0 0.0
    %1078 = vmatprep.subr.mxu0 0.0
    %1079 = vmatpush2.xpose.msra.mxu0 0.0
    %1080 = vmatprep.subr.mxu0 0.0
    %1081 = vmatpush2.xpose.msra.mxu0 0.0
    %1082 = vmatprep.subr.mxu0 0.0
    %1083 = vmatpush2.xpose.msra.mxu0 0.0
    %1084 = vmatprep.subr.mxu0 0.0
    %1085 = vmatpush2.xpose.msra.mxu0 0.0
    %1086 = vmatprep.subr.mxu0 0.0
    %1087 = vmatpush2.xpose.msra.mxu0 0.0
    %1088 = vmatprep.subr.mxu0 0.0
    %1089 = vmatpush2.xpose.msra.mxu0 0.0
    %1090 = vmatprep.subr.mxu0 0.0
    %1091 = vmatpush2.xpose.msra.mxu0 0.0
    %1092 = vmatprep.subr.mxu0 0.0
    %1093 = vmatpush2.xpose.msra.mxu0 0.0
    %1094 = vmatprep.subr.mxu0 0.0
    %1095 = vmatpush2.xpose.msra.mxu0 0.0
    %1096 = vmatprep.subr.mxu0 0.0
    %1097 = vmatpush2.xpose.msra.mxu0 0.0
    %1098 = vmatprep.subr.mxu0 0.0
    %1099 = vmatpush2.xpose.msra.mxu0 0.0
    %1100 = vmatprep.mubr.f32.mxu0 0.0
    %1101 = vmatmul.mubr.f32.gmra.mxu0 %v1028
    %v1102 = vpop.f32.mrf.mxu0
    %v1103 = vadd.f32 %v62, %v1102
    %v1104 = vpop.f32.mrf.mxu0
    %1105 = vmatprep.mubr.f32.mxu0 0.0
    %1106 = vmatmul.mubr.f32.gmra.mxu0 %v1030
    %v1107 = vpop.f32.mrf.mxu0
    %v1108 = vadd.f32 %v63, %v1107
    %v1109 = vpop.f32.mrf.mxu0
    %1110 = vdwg.mxu0
    %v1111 = vsel %vm259, %v1103, -inf
    %1112 = vmax.xlane.f32.xlu0 %v1111
    %v1113 = vpop.xlane.xlu0 %1112
    %v1114 = vsel %vm259, %v1108, -inf
    %1115 = vmax.xlane.f32.xlu0 %v1114
    %v1116 = vpop.xlane.xlu0 %1115
    %v1117 = vsub.f32 %v1103, %v1113
    %v1118 = vsub.f32 %v1108, %v1116
    %v1119 = vmul.f32 %v1117, 1.442695
    %v1120 = vpow.pop %v1119
    %v1121 = vmul.f32 %v1118, 1.442695
    %v1122 = vpow.pop %v1121
    %v1123 = vsel %vm259, %v1120, 0.0
    %1124 = vadd.xlane.f32.xlu0 %v1123
    %v1125 = vpop.xlane.xlu0 %1124
    %v1126 = vsel %vm259, %v1122, 0.0
    %1127 = vadd.xlane.f32.xlu0 %v1126
    %v1128 = vpop.xlane.xlu0 %1127
    %v1129 = vrcp.pop %v1125
    %v1130 = vrcp.pop %v1128
    %v1131 = vmul.f32 %v1120, %v1129
    %v1132 = vmul.f32 %v1122, %v1130
    %1133 = vrot.lane.b32.xlu0 %v157, 104
    %v1134 = vpop.permute.xlu0 %1133
    %1135 = vrot.lane.b32.xlu0 %v162, 104
    %v1136 = vpop.permute.xlu0 %1135
    %v1140 = vsel %vm259, %v1131, 0
    %v1143 = vsel %vm259, %v1132, 0
    %1145 = vmatprep.subr.mxu0 0.0
    %1146 = vmatpush1.msra.mxu0 0.0
    %1147 = vmatprep.subr.mxu0 0.0
    %1148 = vmatpush1.msra.mxu0 0.0
    %1149 = vmatprep.subr.mxu0 0.0
    %1150 = vmatpush1.msra.mxu0 0.0
    %1151 = vmatprep.subr.mxu0 0.0
    %1152 = vmatpush1.msra.mxu0 0.0
    %1153 = vmatprep.subr.mxu0 0.0
    %1154 = vmatpush1.msra.mxu0 0.0
    %1155 = vmatprep.subr.mxu0 0.0
    %1156 = vmatpush1.msra.mxu0 0.0
    %1157 = vmatprep.subr.mxu0 0.0
    %1158 = vmatpush1.msra.mxu0 0.0
    %1159 = vmatprep.subr.mxu0 0.0
    %1160 = vmatpush1.msra.mxu0 0.0
    %1161 = vmatprep.subr.mxu0 0.0
    %1162 = vmatpush1.msra.mxu0 0.0
    %1163 = vmatprep.subr.mxu0 0.0
    %1164 = vmatpush1.msra.mxu0 0.0
    %1165 = vmatprep.subr.mxu0 0.0
    %1166 = vmatpush1.msra.mxu0 0.0
    %1167 = vmatprep.subr.mxu0 0.0
    %1168 = vmatpush1.msra.mxu0 0.0
    %1169 = vmatprep.subr.mxu0 0.0
    %1170 = vmatpush1.msra.mxu0 0.0
    %1171 = vmatprep.subr.mxu0 0.0
    %1172 = vmatpush1.msra.mxu0 0.0
    %1173 = vmatprep.subr.mxu0 0.0
    %1174 = vmatpush1.msra.mxu0 %v1136
    %1175 = vmatprep.subr.mxu0 0.0
    %1176 = vmatpush1.msra.mxu0 %v1134
    %1177 = vmatprep.subr.mxu0 0.0
    %1178 = vmatpush2.msra.mxu0 0.0
    %1179 = vmatprep.subr.mxu0 0.0
    %1180 = vmatpush2.msra.mxu0 0.0
    %1181 = vmatprep.subr.mxu0 0.0
    %1182 = vmatpush2.msra.mxu0 0.0
    %1183 = vmatprep.subr.mxu0 0.0
    %1184 = vmatpush2.msra.mxu0 0.0
    %1185 = vmatprep.subr.mxu0 0.0
    %1186 = vmatpush2.msra.mxu0 0.0
    %1187 = vmatprep.subr.mxu0 0.0
    %1188 = vmatpush2.msra.mxu0 0.0
    %1189 = vmatprep.subr.mxu0 0.0
    %1190 = vmatpush2.msra.mxu0 0.0
    %1191 = vmatprep.subr.mxu0 0.0
    %1192 = vmatpush2.msra.mxu0 0.0
    %1193 = vmatprep.subr.mxu0 0.0
    %1194 = vmatpush2.msra.mxu0 0.0
    %1195 = vmatprep.subr.mxu0 0.0
    %1196 = vmatpush2.msra.mxu0 0.0
    %1197 = vmatprep.subr.mxu0 0.0
    %1198 = vmatpush2.msra.mxu0 0.0
    %1199 = vmatprep.subr.mxu0 0.0
    %1200 = vmatpush2.msra.mxu0 0.0
    %1201 = vmatprep.subr.mxu0 0.0
    %1202 = vmatpush2.msra.mxu0 0.0
    %1203 = vmatprep.subr.mxu0 0.0
    %1204 = vmatpush2.msra.mxu0 0.0
    %1205 = vmatprep.subr.mxu0 0.0
    %1206 = vmatpush2.msra.mxu0 0.0
    %1207 = vmatprep.subr.mxu0 0.0
    %1208 = vmatpush2.msra.mxu0 0.0
    %1209 = vmatprep.mubr.f32.mxu0 0.0
    %1210 = vmatmul.mubr.f32.gmra.mxu0 %v1140
    %v1211 = vpop.f32.mrf.mxu0
    %v1212 = vadd.f32 0.0, %v1211
    %v1213 = vpop.f32.mrf.mxu0
    %1214 = vmatprep.mubr.f32.mxu0 0.0
    %1215 = vmatmul.mubr.f32.gmra.mxu0 %v1143
    %v1216 = vpop.f32.mrf.mxu0
    %v1217 = vadd.f32 0.0, %v1216
    %v1218 = vpop.f32.mrf.mxu0
    %1219 = vdwg.mxu0
    %1221 = vrot.lane.b32.xlu0 %v71, 32
    %v1222 = vpop.permute.xlu0 %1221
    %v1225 = vsel %vm175, %v1212, 0
    %v1228 = vsel %vm175, %v1217, 0
    %1230 = vmatprep.subr.mxu0 0.0
    %1231 = vmatpush1.msra.mxu0 0.0
    %1232 = vmatprep.subr.mxu0 0.0
    %1233 = vmatpush1.msra.mxu0 0.0
    %1234 = vmatprep.subr.mxu0 0.0
    %1235 = vmatpush1.msra.mxu0 0.0
    %1236 = vmatprep.subr.mxu0 0.0
    %1237 = vmatpush1.msra.mxu0 0.0
    %1238 = vmatprep.subr.mxu0 0.0
    %1239 = vmatpush1.msra.mxu0 0.0
    %1240 = vmatprep.subr.mxu0 0.0
    %1241 = vmatpush1.msra.mxu0 0.0
    %1242 = vmatprep.subr.mxu0 0.0
    %1243 = vmatpush1.msra.mxu0 0.0
    %1244 = vmatprep.subr.mxu0 0.0
    %1245 = vmatpush1.msra.mxu0 0.0
    %1246 = vmatprep.subr.mxu0 0.0
    %1247 = vmatpush1.msra.mxu0 0.0
    %1248 = vmatprep.subr.mxu0 0.0
    %1249 = vmatpush1.msra.mxu0 0.0
    %1250 = vmatprep.subr.mxu0 0.0
    %1251 = vmatpush1.msra.mxu0 0.0
    %1252 = vmatprep.subr.mxu0 0.0
    %1253 = vmatpush1.msra.mxu0 0.0
    %1254 = vmatprep.subr.mxu0 0.0
    %1255 = vmatpush1.msra.mxu0 0.0
    %1256 = vmatprep.subr.mxu0 0.0
    %1257 = vmatpush1.msra.mxu0 0.0
    %1258 = vmatprep.subr.mxu0 0.0
    %1259 = vmatpush1.msra.mxu0 0.0
    %1260 = vmatprep.subr.mxu0 0.0
    %1261 = vmatpush1.msra.mxu0 %v1222
    %1262 = vmatprep.subr.mxu0 0.0
    %1263 = vmatpush2.msra.mxu0 0.0
    %1264 = vmatprep.subr.mxu0 0.0
    %1265 = vmatpush2.msra.mxu0 0.0
    %1266 = vmatprep.subr.mxu0 0.0
    %1267 = vmatpush2.msra.mxu0 0.0
    %1268 = vmatprep.subr.mxu0 0.0
    %1269 = vmatpush2.msra.mxu0 0.0
    %1270 = vmatprep.subr.mxu0 0.0
    %1271 = vmatpush2.msra.mxu0 0.0
    %1272 = vmatprep.subr.mxu0 0.0
    %1273 = vmatpush2.msra.mxu0 0.0
    %1274 = vmatprep.subr.mxu0 0.0
    %1275 = vmatpush2.msra.mxu0 0.0
    %1276 = vmatprep.subr.mxu0 0.0
    %1277 = vmatpush2.msra.mxu0 0.0
    %1278 = vmatprep.subr.mxu0 0.0
    %1279 = vmatpush2.msra.mxu0 0.0
    %1280 = vmatprep.subr.mxu0 0.0
    %1281 = vmatpush2.msra.mxu0 0.0
    %1282 = vmatprep.subr.mxu0 0.0
    %1283 = vmatpush2.msra.mxu0 0.0
    %1284 = vmatprep.subr.mxu0 0.0
    %1285 = vmatpush2.msra.mxu0 0.0
    %1286 = vmatprep.subr.mxu0 0.0
    %1287 = vmatpush2.msra.mxu0 0.0
    %1288 = vmatprep.subr.mxu0 0.0
    %1289 = vmatpush2.msra.mxu0 0.0
    %1290 = vmatprep.subr.mxu0 0.0
    %1291 = vmatpush2.msra.mxu0 0.0
    %1292 = vmatprep.subr.mxu0 0.0
    %1293 = vmatpush2.msra.mxu0 0.0
    %1294 = vmatprep.mubr.f32.mxu0 0.0
    %1295 = vmatmul.mubr.f32.gmra.mxu0 %v1225
    %v1296 = vpop.f32.mrf.mxu0
    %v1297 = vadd.f32 0.0, %v1296
    %v1298 = vpop.f32.mrf.mxu0
    %1299 = vmatprep.mubr.f32.mxu0 0.0
    %1300 = vmatmul.mubr.f32.gmra.mxu0 %v1228
    %v1301 = vpop.f32.mrf.mxu0
    %v1302 = vadd.f32 0.0, %v1301
    %v1303 = vpop.f32.mrf.mxu0
    %1304 = vdwg.mxu0
    %v1305 = vadd.f32 %v1018, %v1297
    %v1306 = vadd.f32 %v1019, %v1302
    %1308 = vrot.lane.b32.xlu0 %v82, 32
    %v1309 = vpop.permute.xlu0 %1308
    %v1311 = vadd.f32 %v1305, %v1309
    %v1312 = vadd.f32 %v1306, %v1309
    %v1313 = vadd.f32 %v1311, %v58
    %v1314 = vadd.f32 %v1312, %v59
    %v1315 = vsel %vm83, %v1313, 0.0
    %1316 = vadd.xlane.f32.xlu0 %v1315
    %v1317 = vpop.xlane.xlu0 %1316
    %v1318 = vsel %vm83, %v1314, 0.0
    %1319 = vadd.xlane.f32.xlu0 %v1318
    %v1320 = vpop.xlane.xlu0 %1319
    %v1321 = vrcp.pop 32.0
    %v1322 = vmul.f32 %v1317, %v1321
    %v1323 = vmul.f32 %v1320, %v1321
    %v1324 = vsub.f32 %v1313, %v1322
    %v1325 = vsub.f32 %v1314, %v1323
    %v1326 = vmul.f32 %v1324, %v1324
    %v1327 = vmul.f32 %v1325, %v1325
    %v1328 = vsel %vm83, %v1326, 0.0
    %1329 = vadd.xlane.f32.xlu0 %v1328
    %v1330 = vpop.xlane.xlu0 %1329
    %v1331 = vsel %vm83, %v1327, 0.0
    %1332 = vadd.xlane.f32.xlu0 %v1331
    %v1333 = vpop.xlane.xlu0 %1332
    %v1334 = vmul.f32 %v1330, 0.032258064
    %v1335 = vmul.f32 %v1333, 0.032258064
    %v1336 = vrsqrt.pop %v1334
    %v1337 = vmul.f32 %v1334, %v1336
    %vm1338 = vcmp.eq.f32.partialorder %v1334, inf
    %v1339 = vsel %vm1338, %v1334, %v1337
    %vm1340 = vcmp.eq.f32.partialorder %v1334, 0.0
    %v1341 = vand.u32 %v1334, 2147483648
    %v1342 = vsel %vm1340, %v1341, %v1339
    %v1343 = vrsqrt.pop %v1335
    %v1344 = vmul.f32 %v1335, %v1343
    %vm1345 = vcmp.eq.f32.partialorder %v1335, inf
    %v1346 = vsel %vm1345, %v1335, %v1344
    %vm1347 = vcmp.eq.f32.partialorder %v1335, 0.0
    %v1348 = vand.u32 %v1335, 2147483648
    %v1349 = vsel %vm1347, %v1348, %v1346
    %v1350 = vadd.f32 %v1342, 1e-06
    %v1351 = vadd.f32 %v1349, 1e-06
    %v1352 = vrcp.pop %v1350
    %v1353 = vrcp.pop %v1351
    %v1354 = vlaneseq
    %v1355 = vshrl.u32 %v1354, 7
    %v1356 = vsub.s32 0, %v1355
    %v1357 = vrot.slane %v78, %v1356
    %v1358 = vmul.f32 %v1357, %v1324
    %v1359 = vmul.f32 %v1357, %v1325
    %v1360 = vmul.f32 %v1358, %v1352
    %v1361 = vmul.f32 %v1359, %v1353
    %1363 = vrot.lane.b32.xlu0 %v1357, 96
    %v1364 = vpop.permute.xlu0 %1363
    %v1366 = vadd.f32 %v1360, %v1364
    %v1367 = vadd.f32 %v1361, %v1364
    %v1368 = vlaneseq
    %v1369 = vshrl.u32 %v1368, 7
    %v1370 = vsub.s32 0, %v1369
    %v1371 = vrot.slane %v77, %v1370
    %v1373 = vsel %vm83, %v1366, 0
    %v1376 = vsel %vm83, %v1367, 0
    %1378 = vmatprep.subr.mxu0 0.0
    %1379 = vmatpush1.msra.mxu0 0.0
    %1380 = vmatprep.subr.mxu0 0.0
    %1381 = vmatpush1.msra.mxu0 0.0
    %1382 = vmatprep.subr.mxu0 0.0
    %1383 = vmatpush1.msra.mxu0 0.0
    %1384 = vmatprep.subr.mxu0 0.0
    %1385 = vmatpush1.msra.mxu0 0.0
    %1386 = vmatprep.subr.mxu0 0.0
    %1387 = vmatpush1.msra.mxu0 0.0
    %1388 = vmatprep.subr.mxu0 0.0
    %1389 = vmatpush1.msra.mxu0 0.0
    %1390 = vmatprep.subr.mxu0 0.0
    %1391 = vmatpush1.msra.mxu0 0.0
    %1392 = vmatprep.subr.mxu0 0.0
    %1393 = vmatpush1.msra.mxu0 0.0
    %1394 = vmatprep.subr.mxu0 0.0
    %1395 = vmatpush1.msra.mxu0 0.0
    %1396 = vmatprep.subr.mxu0 0.0
    %1397 = vmatpush1.msra.mxu0 0.0
    %1398 = vmatprep.subr.mxu0 0.0
    %1399 = vmatpush1.msra.mxu0 0.0
    %1400 = vmatprep.subr.mxu0 0.0
    %1401 = vmatpush1.msra.mxu0 0.0
    %1402 = vmatprep.subr.mxu0 0.0
    %1403 = vmatpush1.msra.mxu0 %v75
    %1404 = vmatprep.subr.mxu0 0.0
    %1405 = vmatpush1.msra.mxu0 %v74
    %1406 = vmatprep.subr.mxu0 0.0
    %1407 = vmatpush1.msra.mxu0 %v73
    %1408 = vmatprep.subr.mxu0 0.0
    %1409 = vmatpush1.msra.mxu0 %v72
    %1410 = vmatprep.subr.mxu0 0.0
    %1411 = vmatpush2.msra.mxu0 0.0
    %1412 = vmatprep.subr.mxu0 0.0
    %1413 = vmatpush2.msra.mxu0 0.0
    %1414 = vmatprep.subr.mxu0 0.0
    %1415 = vmatpush2.msra.mxu0 0.0
    %1416 = vmatprep.subr.mxu0 0.0
    %1417 = vmatpush2.msra.mxu0 0.0
    %1418 = vmatprep.subr.mxu0 0.0
    %1419 = vmatpush2.msra.mxu0 0.0
    %1420 = vmatprep.subr.mxu0 0.0
    %1421 = vmatpush2.msra.mxu0 0.0
    %1422 = vmatprep.subr.mxu0 0.0
    %1423 = vmatpush2.msra.mxu0 0.0
    %1424 = vmatprep.subr.mxu0 0.0
    %1425 = vmatpush2.msra.mxu0 0.0
    %1426 = vmatprep.subr.mxu0 0.0
    %1427 = vmatpush2.msra.mxu0 0.0
    %1428 = vmatprep.subr.mxu0 0.0
    %1429 = vmatpush2.msra.mxu0 0.0
    %1430 = vmatprep.subr.mxu0 0.0
    %1431 = vmatpush2.msra.mxu0 0.0
    %1432 = vmatprep.subr.mxu0 0.0
    %1433 = vmatpush2.msra.mxu0 0.0
    %1434 = vmatprep.subr.mxu0 0.0
    %1435 = vmatpush2.msra.mxu0 0.0
    %1436 = vmatprep.subr.mxu0 0.0
    %1437 = vmatpush2.msra.mxu0 0.0
    %1438 = vmatprep.subr.mxu0 0.0
    %1439 = vmatpush2.msra.mxu0 0.0
    %1440 = vmatprep.subr.mxu0 0.0
    %1441 = vmatpush2.msra.mxu0 0.0
    %1442 = vmatprep.mubr.f32.mxu0 0.0
    %1443 = vmatmul.mubr.f32.gmra.mxu0 %v1373
    %v1444 = vpop.f32.mrf.mxu0
    %v1445 = vadd.f32 %v1371, %v1444
    %v1446 = vpop.f32.mrf.mxu0
    %1447 = vmatprep.mubr.f32.mxu0 0.0
    %1448 = vmatmul.mubr.f32.gmra.mxu0 %v1376
    %v1449 = vpop.f32.mrf.mxu0
    %v1450 = vadd.f32 %v1371, %v1449
    %v1451 = vpop.f32.mrf.mxu0
    %1452 = vdwg.mxu0
    %v1453 = vmax.f32 %v1445, 0.0
    %v1454 = vmax.f32 %v1450, 0.0
    %1459 = vrot.lane.b32.xlu0 %v72, 64
    %v1460 = vpop.permute.xlu0 %1459
    %1461 = vrot.lane.b32.xlu0 %v73, 64
    %v1462 = vpop.permute.xlu0 %1461
    %1463 = vrot.lane.b32.xlu0 %v74, 64
    %v1464 = vpop.permute.xlu0 %1463
    %1465 = vrot.lane.b32.xlu0 %v75, 64
    %v1466 = vpop.permute.xlu0 %1465
    %1468 = vrot.lane.b32.xlu0 %v1371, 64
    %v1469 = vpop.permute.xlu0 %1468
    %vm1471 = vcmask 523264
    %v1473 = vsel %vm1471, %v1453, 0
    %v1476 = vsel %vm1471, %v1454, 0
    %v1478 = vsel %vm1471, %v1460, 0
    %v1480 = vsel %vm1471, %v1462, 0
    %v1482 = vsel %vm1471, %v1464, 0
    %v1484 = vsel %vm1471, %v1466, 0
    %1486 = vmatprep.subr.mxu0 0.0
    %1487 = vmatpush1.xpose.msra.mxu0 0.0
    %1488 = vmatprep.subr.mxu0 0.0
    %1489 = vmatpush1.xpose.msra.mxu0 0.0
    %1490 = vmatprep.subr.mxu0 0.0
    %1491 = vmatpush1.xpose.msra.mxu0 0.0
    %1492 = vmatprep.subr.mxu0 0.0
    %1493 = vmatpush1.xpose.msra.mxu0 0.0
    %1494 = vmatprep.subr.mxu0 0.0
    %1495 = vmatpush1.xpose.msra.mxu0 0.0
    %1496 = vmatprep.subr.mxu0 0.0
    %1497 = vmatpush1.xpose.msra.mxu0 0.0
    %1498 = vmatprep.subr.mxu0 0.0
    %1499 = vmatpush1.xpose.msra.mxu0 0.0
    %1500 = vmatprep.subr.mxu0 0.0
    %1501 = vmatpush1.xpose.msra.mxu0 0.0
    %1502 = vmatprep.subr.mxu0 0.0
    %1503 = vmatpush1.xpose.msra.mxu0 0.0
    %1504 = vmatprep.subr.mxu0 0.0
    %1505 = vmatpush1.xpose.msra.mxu0 0.0
    %1506 = vmatprep.subr.mxu0 0.0
    %1507 = vmatpush1.xpose.msra.mxu0 0.0
    %1508 = vmatprep.subr.mxu0 0.0
    %1509 = vmatpush1.xpose.msra.mxu0 0.0
    %1510 = vmatprep.subr.mxu0 0.0
    %1511 = vmatpush1.xpose.msra.mxu0 %v1484
    %1512 = vmatprep.subr.mxu0 0.0
    %1513 = vmatpush1.xpose.msra.mxu0 %v1482
    %1514 = vmatprep.subr.mxu0 0.0
    %1515 = vmatpush1.xpose.msra.mxu0 %v1480
    %1516 = vmatprep.subr.mxu0 0.0
    %1517 = vmatpush1.xpose.msra.mxu0 %v1478
    %1518 = vmatprep.subr.mxu0 0.0
    %1519 = vmatpush2.xpose.msra.mxu0 0.0
    %1520 = vmatprep.subr.mxu0 0.0
    %1521 = vmatpush2.xpose.msra.mxu0 0.0
    %1522 = vmatprep.subr.mxu0 0.0
    %1523 = vmatpush2.xpose.msra.mxu0 0.0
    %1524 = vmatprep.subr.mxu0 0.0
    %1525 = vmatpush2.xpose.msra.mxu0 0.0
    %1526 = vmatprep.subr.mxu0 0.0
    %1527 = vmatpush2.xpose.msra.mxu0 0.0
    %1528 = vmatprep.subr.mxu0 0.0
    %1529 = vmatpush2.xpose.msra.mxu0 0.0
    %1530 = vmatprep.subr.mxu0 0.0
    %1531 = vmatpush2.xpose.msra.mxu0 0.0
    %1532 = vmatprep.subr.mxu0 0.0
    %1533 = vmatpush2.xpose.msra.mxu0 0.0
    %1534 = vmatprep.subr.mxu0 0.0
    %1535 = vmatpush2.xpose.msra.mxu0 0.0
    %1536 = vmatprep.subr.mxu0 0.0
    %1537 = vmatpush2.xpose.msra.mxu0 0.0
    %1538 = vmatprep.subr.mxu0 0.0
    %1539 = vmatpush2.xpose.msra.mxu0 0.0
    %1540 = vmatprep.subr.mxu0 0.0
    %1541 = vmatpush2.xpose.msra.mxu0 0.0
    %1542 = vmatprep.subr.mxu0 0.0
    %1543 = vmatpush2.xpose.msra.mxu0 0.0
    %1544 = vmatprep.subr.mxu0 0.0
    %1545 = vmatpush2.xpose.msra.mxu0 0.0
    %1546 = vmatprep.subr.mxu0 0.0
    %1547 = vmatpush2.xpose.msra.mxu0 0.0
    %1548 = vmatprep.subr.mxu0 0.0
    %1549 = vmatpush2.xpose.msra.mxu0 0.0
    %1550 = vmatprep.mubr.f32.mxu0 0.0
    %1551 = vmatmul.mubr.f32.gmra.mxu0 %v1473
    %v1552 = vpop.f32.mrf.mxu0
    %v1553 = vadd.f32 %v1469, %v1552
    %v1554 = vpop.f32.mrf.mxu0
    %1555 = vmatprep.mubr.f32.mxu0 0.0
    %1556 = vmatmul.mubr.f32.gmra.mxu0 %v1476
    %v1557 = vpop.f32.mrf.mxu0
    %v1558 = vadd.f32 %v1469, %v1557
    %v1559 = vpop.f32.mrf.mxu0
    %1560 = vdwg.mxu0
    %v1561 = vadd.f32 %v1553, %v1366
    %v1562 = vadd.f32 %v1558, %v1367
    %v1563 = vsel %vm83, %v1561, 0.0
    %1564 = vadd.xlane.f32.xlu0 %v1563
    %v1565 = vpop.xlane.xlu0 %1564
    %v1566 = vsel %vm83, %v1562, 0.0
    %1567 = vadd.xlane.f32.xlu0 %v1566
    %v1568 = vpop.xlane.xlu0 %1567
    %v1569 = vmul.f32 %v1565, %v1321
    %v1570 = vmul.f32 %v1568, %v1321
    %v1571 = vsub.f32 %v1561, %v1569
    %v1572 = vsub.f32 %v1562, %v1570
    %v1573 = vmul.f32 %v1571, %v1571
    %v1574 = vmul.f32 %v1572, %v1572
    %v1575 = vsel %vm83, %v1573, 0.0
    %1576 = vadd.xlane.f32.xlu0 %v1575
    %v1577 = vpop.xlane.xlu0 %1576
    %v1578 = vsel %vm83, %v1574, 0.0
    %1579 = vadd.xlane.f32.xlu0 %v1578
    %v1580 = vpop.xlane.xlu0 %1579
    %v1581 = vmul.f32 %v1577, 0.032258064
    %v1582 = vmul.f32 %v1580, 0.032258064
    %v1583 = vrsqrt.pop %v1581
    %v1584 = vmul.f32 %v1581, %v1583
    %vm1585 = vcmp.eq.f32.partialorder %v1581, inf
    %v1586 = vsel %vm1585, %v1581, %v1584
    %vm1587 = vcmp.eq.f32.partialorder %v1581, 0.0
    %v1588 = vand.u32 %v1581, 2147483648
    %v1589 = vsel %vm1587, %v1588, %v1586
    %v1590 = vrsqrt.pop %v1582
    %v1591 = vmul.f32 %v1582, %v1590
    %vm1592 = vcmp.eq.f32.partialorder %v1582, inf
    %v1593 = vsel %vm1592, %v1582, %v1591
    %vm1594 = vcmp.eq.f32.partialorder %v1582, 0.0
    %v1595 = vand.u32 %v1582, 2147483648
    %v1596 = vsel %vm1594, %v1595, %v1593
    %v1597 = vadd.f32 %v1589, 1e-06
    %v1598 = vadd.f32 %v1596, 1e-06
    %v1599 = vrcp.pop %v1597
    %v1600 = vrcp.pop %v1598
    %1603 = vrot.lane.b32.xlu0 %v1571, 64
    %v1604 = vpop.permute.xlu0 %1603
    %1605 = vrot.lane.b32.xlu0 %v1572, 64
    %v1606 = vpop.permute.xlu0 %1605
    %v1609 = vmul.f32 %v1357, %v1604
    %v1610 = vmul.f32 %v1357, %v1606
    %v1611 = vmul.f32 %v1609, %v1599
    %v1612 = vmul.f32 %v1610, %v1600
    %v1613 = vadd.f32 %v1611, %v1364
    %v1614 = vadd.f32 %v1612, %v1364
    %s1615 = scalar_lea.vmem [#allocation2], 72
    %v1616 = vld [vmem:[%s1615] sm:$0xff]
    %v1617 = vld [vmem:[%s1615 + $0x8] sm:$0xff]
    %v1618 = vld [vmem:[%s1615 + $0x10] sm:$0xff]
    %v1619 = vld [vmem:[%s1615 + $0x18] sm:$0xff]
    %v1620 = vld [vmem:[%s1615 + $0x20] sm:$0xff]
    %v1621 = vld [vmem:[%s1615 + $0x28] sm:$0xff]
    %v1622 = vld [vmem:[%s1615 + $0x30] sm:$0xff]
    %v1623 = vld [vmem:[%s1615 + $0x38] sm:$0xff]
    %v1624 = vld [vmem:[%s1615 + $0x40] sm:$0x1]
    %v1625 = vld [vmem:[%s1615 + $0x41] sm:$0x1]
    %v1626 = vld [vmem:[%s1615 + $0x42] sm:$0x1]
    %v1627 = vlaneseq
    %v1628 = vshrl.u32 %v1627, 7
    %v1629 = vsub.s32 0, %v1628
    %v1630 = vrot.slane %v1624, %v1629
    %1633 = vrot.lane.b32.xlu0 %v1613, 64
    %v1634 = vpop.permute.xlu0 %1633
    %1635 = vrot.lane.b32.xlu0 %v1614, 64
    %v1636 = vpop.permute.xlu0 %1635
    %v1637 = vsel %vm83, %v1634, 0
    %v1639 = vsel %vm83, %v1636, 0
    %1641 = vmatprep.subr.mxu0 0.0
    %1642 = vmatpush1.msra.mxu0 0.0
    %1643 = vmatprep.subr.mxu0 0.0
    %1644 = vmatpush1.msra.mxu0 0.0
    %1645 = vmatprep.subr.mxu0 0.0
    %1646 = vmatpush1.msra.mxu0 0.0
    %1647 = vmatprep.subr.mxu0 0.0
    %1648 = vmatpush1.msra.mxu0 0.0
    %1649 = vmatprep.subr.mxu0 0.0
    %1650 = vmatpush1.msra.mxu0 0.0
    %1651 = vmatprep.subr.mxu0 0.0
    %1652 = vmatpush1.msra.mxu0 0.0
    %1653 = vmatprep.subr.mxu0 0.0
    %1654 = vmatpush1.msra.mxu0 0.0
    %1655 = vmatprep.subr.mxu0 0.0
    %1656 = vmatpush1.msra.mxu0 0.0
    %1657 = vmatprep.subr.mxu0 0.0
    %1658 = vmatpush1.msra.mxu0 0.0
    %1659 = vmatprep.subr.mxu0 0.0
    %1660 = vmatpush1.msra.mxu0 0.0
    %1661 = vmatprep.subr.mxu0 0.0
    %1662 = vmatpush1.msra.mxu0 0.0
    %1663 = vmatprep.subr.mxu0 0.0
    %1664 = vmatpush1.msra.mxu0 0.0
    %1665 = vmatprep.subr.mxu0 0.0
    %1666 = vmatpush1.msra.mxu0 %v1619
    %1667 = vmatprep.subr.mxu0 0.0
    %1668 = vmatpush1.msra.mxu0 %v1618
    %1669 = vmatprep.subr.mxu0 0.0
    %1670 = vmatpush1.msra.mxu0 %v1617
    %1671 = vmatprep.subr.mxu0 0.0
    %1672 = vmatpush1.msra.mxu0 %v1616
    %1673 = vmatprep.subr.mxu0 0.0
    %1674 = vmatpush2.msra.mxu0 0.0
    %1675 = vmatprep.subr.mxu0 0.0
    %1676 = vmatpush2.msra.mxu0 0.0
    %1677 = vmatprep.subr.mxu0 0.0
    %1678 = vmatpush2.msra.mxu0 0.0
    %1679 = vmatprep.subr.mxu0 0.0
    %1680 = vmatpush2.msra.mxu0 0.0
    %1681 = vmatprep.subr.mxu0 0.0
    %1682 = vmatpush2.msra.mxu0 0.0
    %1683 = vmatprep.subr.mxu0 0.0
    %1684 = vmatpush2.msra.mxu0 0.0
    %1685 = vmatprep.subr.mxu0 0.0
    %1686 = vmatpush2.msra.mxu0 0.0
    %1687 = vmatprep.subr.mxu0 0.0
    %1688 = vmatpush2.msra.mxu0 0.0
    %1689 = vmatprep.subr.mxu0 0.0
    %1690 = vmatpush2.msra.mxu0 0.0
    %1691 = vmatprep.subr.mxu0 0.0
    %1692 = vmatpush2.msra.mxu0 0.0
    %1693 = vmatprep.subr.mxu0 0.0
    %1694 = vmatpush2.msra.mxu0 0.0
    %1695 = vmatprep.subr.mxu0 0.0
    %1696 = vmatpush2.msra.mxu0 0.0
    %1697 = vmatprep.subr.mxu0 0.0
    %1698 = vmatpush2.msra.mxu0 0.0
    %1699 = vmatprep.subr.mxu0 0.0
    %1700 = vmatpush2.msra.mxu0 0.0
    %1701 = vmatprep.subr.mxu0 0.0
    %1702 = vmatpush2.msra.mxu0 0.0
    %1703 = vmatprep.subr.mxu0 0.0
    %1704 = vmatpush2.msra.mxu0 0.0
    %1705 = vmatprep.mubr.f32.mxu0 0.0
    %1706 = vmatmul.mubr.f32.gmra.mxu0 %v1637
    %v1707 = vpop.f32.mrf.mxu0
    %v1708 = vadd.f32 %v1630, %v1707
    %v1709 = vpop.f32.mrf.mxu0
    %1710 = vmatprep.mubr.f32.mxu0 0.0
    %1711 = vmatmul.mubr.f32.gmra.mxu0 %v1639
    %v1712 = vpop.f32.mrf.mxu0
    %v1713 = vadd.f32 %v1630, %v1712
    %v1714 = vpop.f32.mrf.mxu0
    %1715 = vdwg.mxu0
    %1718 = vrot.lane.b32.xlu0 %v1708, 64
    %v1719 = vpop.permute.xlu0 %1718
    %1720 = vrot.lane.b32.xlu0 %v1713, 64
    %v1721 = vpop.permute.xlu0 %1720
    %1722 = vrot.lane.b32.xlu0 %v1708, 96
    %v1723 = vpop.permute.xlu0 %1722
    %1724 = vrot.lane.b32.xlu0 %v1713, 96
    %v1725 = vpop.permute.xlu0 %1724
    %v1726 = vsel %vm175, %v1719, 0
    %v1728 = vsel %vm175, %v1721, 0
    %v1730 = vsel %vm175, %v1723, 0
    %v1732 = vsel %vm175, %v1725, 0
    %1734 = vmatprep.subr.mxu0 0.0
    %1735 = vmatpush1.xpose.msra.mxu0 0.0
    %1736 = vmatprep.subr.mxu0 0.0
    %1737 = vmatpush1.xpose.msra.mxu0 0.0
    %1738 = vmatprep.subr.mxu0 0.0
    %1739 = vmatpush1.xpose.msra.mxu0 0.0
    %1740 = vmatprep.subr.mxu0 0.0
    %1741 = vmatpush1.xpose.msra.mxu0 0.0
    %1742 = vmatprep.subr.mxu0 0.0
    %1743 = vmatpush1.xpose.msra.mxu0 0.0
    %1744 = vmatprep.subr.mxu0 0.0
    %1745 = vmatpush1.xpose.msra.mxu0 0.0
    %1746 = vmatprep.subr.mxu0 0.0
    %1747 = vmatpush1.xpose.msra.mxu0 0.0
    %1748 = vmatprep.subr.mxu0 0.0
    %1749 = vmatpush1.xpose.msra.mxu0 0.0
    %1750 = vmatprep.subr.mxu0 0.0
    %1751 = vmatpush1.xpose.msra.mxu0 0.0
    %1752 = vmatprep.subr.mxu0 0.0
    %1753 = vmatpush1.xpose.msra.mxu0 0.0
    %1754 = vmatprep.subr.mxu0 0.0
    %1755 = vmatpush1.xpose.msra.mxu0 0.0
    %1756 = vmatprep.subr.mxu0 0.0
    %1757 = vmatpush1.xpose.msra.mxu0 0.0
    %1758 = vmatprep.subr.mxu0 0.0
    %1759 = vmatpush1.xpose.msra.mxu0 0.0
    %1760 = vmatprep.subr.mxu0 0.0
    %1761 = vmatpush1.xpose.msra.mxu0 0.0
    %1762 = vmatprep.subr.mxu0 0.0
    %1763 = vmatpush1.xpose.msra.mxu0 %v1732
    %1764 = vmatprep.subr.mxu0 0.0
    %1765 = vmatpush1.xpose.msra.mxu0 %v1730
    %1766 = vmatprep.subr.mxu0 0.0
    %1767 = vmatpush2.xpose.msra.mxu0 0.0
    %1768 = vmatprep.subr.mxu0 0.0
    %1769 = vmatpush2.xpose.msra.mxu0 0.0
    %1770 = vmatprep.subr.mxu0 0.0
    %1771 = vmatpush2.xpose.msra.mxu0 0.0
    %1772 = vmatprep.subr.mxu0 0.0
    %1773 = vmatpush2.xpose.msra.mxu0 0.0
    %1774 = vmatprep.subr.mxu0 0.0
    %1775 = vmatpush2.xpose.msra.mxu0 0.0
    %1776 = vmatprep.subr.mxu0 0.0
    %1777 = vmatpush2.xpose.msra.mxu0 0.0
    %1778 = vmatprep.subr.mxu0 0.0
    %1779 = vmatpush2.xpose.msra.mxu0 0.0
    %1780 = vmatprep.subr.mxu0 0.0
    %1781 = vmatpush2.xpose.msra.mxu0 0.0
    %1782 = vmatprep.subr.mxu0 0.0
    %1783 = vmatpush2.xpose.msra.mxu0 0.0
    %1784 = vmatprep.subr.mxu0 0.0
    %1785 = vmatpush2.xpose.msra.mxu0 0.0
    %1786 = vmatprep.subr.mxu0 0.0
    %1787 = vmatpush2.xpose.msra.mxu0 0.0
    %1788 = vmatprep.subr.mxu0 0.0
    %1789 = vmatpush2.xpose.msra.mxu0 0.0
    %1790 = vmatprep.subr.mxu0 0.0
    %1791 = vmatpush2.xpose.msra.mxu0 0.0
    %1792 = vmatprep.subr.mxu0 0.0
    %1793 = vmatpush2.xpose.msra.mxu0 0.0
    %1794 = vmatprep.subr.mxu0 0.0
    %1795 = vmatpush2.xpose.msra.mxu0 0.0
    %1796 = vmatprep.subr.mxu0 0.0
    %1797 = vmatpush2.xpose.msra.mxu0 0.0
    %1798 = vmatprep.mubr.f32.mxu0 0.0
    %1799 = vmatmul.mubr.f32.gmra.mxu0 %v1726
    %v1800 = vpop.f32.mrf.mxu0
    %v1801 = vadd.f32 %v62, %v1800
    %v1802 = vpop.f32.mrf.mxu0
    %1803 = vmatprep.mubr.f32.mxu0 0.0
    %1804 = vmatmul.mubr.f32.gmra.mxu0 %v1728
    %v1805 = vpop.f32.mrf.mxu0
    %v1806 = vadd.f32 %v63, %v1805
    %v1807 = vpop.f32.mrf.mxu0
    %1808 = vdwg.mxu0
    %v1809 = vsel %vm259, %v1801, -inf
    %1810 = vmax.xlane.f32.xlu0 %v1809
    %v1811 = vpop.xlane.xlu0 %1810
    %v1812 = vsel %vm259, %v1806, -inf
    %1813 = vmax.xlane.f32.xlu0 %v1812
    %v1814 = vpop.xlane.xlu0 %1813
    %v1815 = vsub.f32 %v1801, %v1811
    %v1816 = vsub.f32 %v1806, %v1814
    %v1817 = vmul.f32 %v1815, 1.442695
    %v1818 = vpow.pop %v1817
    %v1819 = vmul.f32 %v1816, 1.442695
    %v1820 = vpow.pop %v1819
    %v1821 = vsel %vm259, %v1818, 0.0
    %1822 = vadd.xlane.f32.xlu0 %v1821
    %v1823 = vpop.xlane.xlu0 %1822
    %v1824 = vsel %vm259, %v1820, 0.0
    %1825 = vadd.xlane.f32.xlu0 %v1824
    %v1826 = vpop.xlane.xlu0 %1825
    %v1827 = vrcp.pop %v1823
    %v1828 = vrcp.pop %v1826
    %v1829 = vmul.f32 %v1818, %v1827
    %v1830 = vmul.f32 %v1820, %v1828
    %v1832 = vsel %vm259, %v1829, 0
    %v1835 = vsel %vm259, %v1830, 0
    %1837 = vmatprep.subr.mxu0 0.0
    %1838 = vmatpush1.msra.mxu0 0.0
    %1839 = vmatprep.subr.mxu0 0.0
    %1840 = vmatpush1.msra.mxu0 0.0
    %1841 = vmatprep.subr.mxu0 0.0
    %1842 = vmatpush1.msra.mxu0 0.0
    %1843 = vmatprep.subr.mxu0 0.0
    %1844 = vmatpush1.msra.mxu0 0.0
    %1845 = vmatprep.subr.mxu0 0.0
    %1846 = vmatpush1.msra.mxu0 0.0
    %1847 = vmatprep.subr.mxu0 0.0
    %1848 = vmatpush1.msra.mxu0 0.0
    %1849 = vmatprep.subr.mxu0 0.0
    %1850 = vmatpush1.msra.mxu0 0.0
    %1851 = vmatprep.subr.mxu0 0.0
    %1852 = vmatpush1.msra.mxu0 0.0
    %1853 = vmatprep.subr.mxu0 0.0
    %1854 = vmatpush1.msra.mxu0 0.0
    %1855 = vmatprep.subr.mxu0 0.0
    %1856 = vmatpush1.msra.mxu0 0.0
    %1857 = vmatprep.subr.mxu0 0.0
    %1858 = vmatpush1.msra.mxu0 0.0
    %1859 = vmatprep.subr.mxu0 0.0
    %1860 = vmatpush1.msra.mxu0 0.0
    %1861 = vmatprep.subr.mxu0 0.0
    %1862 = vmatpush1.msra.mxu0 0.0
    %1863 = vmatprep.subr.mxu0 0.0
    %1864 = vmatpush1.msra.mxu0 0.0
    %1865 = vmatprep.subr.mxu0 0.0
    %1866 = vmatpush1.msra.mxu0 %v1713
    %1867 = vmatprep.subr.mxu0 0.0
    %1868 = vmatpush1.msra.mxu0 %v1708
    %1869 = vmatprep.subr.mxu0 0.0
    %1870 = vmatpush2.msra.mxu0 0.0
    %1871 = vmatprep.subr.mxu0 0.0
    %1872 = vmatpush2.msra.mxu0 0.0
    %1873 = vmatprep.subr.mxu0 0.0
    %1874 = vmatpush2.msra.mxu0 0.0
    %1875 = vmatprep.subr.mxu0 0.0
    %1876 = vmatpush2.msra.mxu0 0.0
    %1877 = vmatprep.subr.mxu0 0.0
    %1878 = vmatpush2.msra.mxu0 0.0
    %1879 = vmatprep.subr.mxu0 0.0
    %1880 = vmatpush2.msra.mxu0 0.0
    %1881 = vmatprep.subr.mxu0 0.0
    %1882 = vmatpush2.msra.mxu0 0.0
    %1883 = vmatprep.subr.mxu0 0.0
    %1884 = vmatpush2.msra.mxu0 0.0
    %1885 = vmatprep.subr.mxu0 0.0
    %1886 = vmatpush2.msra.mxu0 0.0
    %1887 = vmatprep.subr.mxu0 0.0
    %1888 = vmatpush2.msra.mxu0 0.0
    %1889 = vmatprep.subr.mxu0 0.0
    %1890 = vmatpush2.msra.mxu0 0.0
    %1891 = vmatprep.subr.mxu0 0.0
    %1892 = vmatpush2.msra.mxu0 0.0
    %1893 = vmatprep.subr.mxu0 0.0
    %1894 = vmatpush2.msra.mxu0 0.0
    %1895 = vmatprep.subr.mxu0 0.0
    %1896 = vmatpush2.msra.mxu0 0.0
    %1897 = vmatprep.subr.mxu0 0.0
    %1898 = vmatpush2.msra.mxu0 0.0
    %1899 = vmatprep.subr.mxu0 0.0
    %1900 = vmatpush2.msra.mxu0 0.0
    %1901 = vmatprep.mubr.f32.mxu0 0.0
    %1902 = vmatmul.mubr.f32.gmra.mxu0 %v1832
    %v1903 = vpop.f32.mrf.mxu0
    %v1904 = vadd.f32 0.0, %v1903
    %v1905 = vpop.f32.mrf.mxu0
    %1906 = vmatprep.mubr.f32.mxu0 0.0
    %1907 = vmatmul.mubr.f32.gmra.mxu0 %v1835
    %v1908 = vpop.f32.mrf.mxu0
    %v1909 = vadd.f32 0.0, %v1908
    %v1910 = vpop.f32.mrf.mxu0
    %1911 = vdwg.mxu0
    %1912 = vrot.lane.b32.xlu0 %v1708, 56
    %v1913 = vpop.permute.xlu0 %1912
    %1914 = vrot.lane.b32.xlu0 %v1713, 56
    %v1915 = vpop.permute.xlu0 %1914
    %1916 = vrot.lane.b32.xlu0 %v1708, 88
    %v1917 = vpop.permute.xlu0 %1916
    %1918 = vrot.lane.b32.xlu0 %v1713, 88
    %v1919 = vpop.permute.xlu0 %1918
    %v1920 = vsel %vm175, %v1913, 0
    %v1922 = vsel %vm175, %v1915, 0
    %v1924 = vsel %vm175, %v1917, 0
    %v1926 = vsel %vm175, %v1919, 0
    %1928 = vmatprep.subr.mxu0 0.0
    %1929 = vmatpush1.xpose.msra.mxu0 0.0
    %1930 = vmatprep.subr.mxu0 0.0
    %1931 = vmatpush1.xpose.msra.mxu0 0.0
    %1932 = vmatprep.subr.mxu0 0.0
    %1933 = vmatpush1.xpose.msra.mxu0 0.0
    %1934 = vmatprep.subr.mxu0 0.0
    %1935 = vmatpush1.xpose.msra.mxu0 0.0
    %1936 = vmatprep.subr.mxu0 0.0
    %1937 = vmatpush1.xpose.msra.mxu0 0.0
    %1938 = vmatprep.subr.mxu0 0.0
    %1939 = vmatpush1.xpose.msra.mxu0 0.0
    %1940 = vmatprep.subr.mxu0 0.0
    %1941 = vmatpush1.xpose.msra.mxu0 0.0
    %1942 = vmatprep.subr.mxu0 0.0
    %1943 = vmatpush1.xpose.msra.mxu0 0.0
    %1944 = vmatprep.subr.mxu0 0.0
    %1945 = vmatpush1.xpose.msra.mxu0 0.0
    %1946 = vmatprep.subr.mxu0 0.0
    %1947 = vmatpush1.xpose.msra.mxu0 0.0
    %1948 = vmatprep.subr.mxu0 0.0
    %1949 = vmatpush1.xpose.msra.mxu0 0.0
    %1950 = vmatprep.subr.mxu0 0.0
    %1951 = vmatpush1.xpose.msra.mxu0 0.0
    %1952 = vmatprep.subr.mxu0 0.0
    %1953 = vmatpush1.xpose.msra.mxu0 0.0
    %1954 = vmatprep.subr.mxu0 0.0
    %1955 = vmatpush1.xpose.msra.mxu0 0.0
    %1956 = vmatprep.subr.mxu0 0.0
    %1957 = vmatpush1.xpose.msra.mxu0 %v1926
    %1958 = vmatprep.subr.mxu0 0.0
    %1959 = vmatpush1.xpose.msra.mxu0 %v1924
    %1960 = vmatprep.subr.mxu0 0.0
    %1961 = vmatpush2.xpose.msra.mxu0 0.0
    %1962 = vmatprep.subr.mxu0 0.0
    %1963 = vmatpush2.xpose.msra.mxu0 0.0
    %1964 = vmatprep.subr.mxu0 0.0
    %1965 = vmatpush2.xpose.msra.mxu0 0.0
    %1966 = vmatprep.subr.mxu0 0.0
    %1967 = vmatpush2.xpose.msra.mxu0 0.0
    %1968 = vmatprep.subr.mxu0 0.0
    %1969 = vmatpush2.xpose.msra.mxu0 0.0
    %1970 = vmatprep.subr.mxu0 0.0
    %1971 = vmatpush2.xpose.msra.mxu0 0.0
    %1972 = vmatprep.subr.mxu0 0.0
    %1973 = vmatpush2.xpose.msra.mxu0 0.0
    %1974 = vmatprep.subr.mxu0 0.0
    %1975 = vmatpush2.xpose.msra.mxu0 0.0
    %1976 = vmatprep.subr.mxu0 0.0
    %1977 = vmatpush2.xpose.msra.mxu0 0.0
    %1978 = vmatprep.subr.mxu0 0.0
    %1979 = vmatpush2.xpose.msra.mxu0 0.0
    %1980 = vmatprep.subr.mxu0 0.0
    %1981 = vmatpush2.xpose.msra.mxu0 0.0
    %1982 = vmatprep.subr.mxu0 0.0
    %1983 = vmatpush2.xpose.msra.mxu0 0.0
    %1984 = vmatprep.subr.mxu0 0.0
    %1985 = vmatpush2.xpose.msra.mxu0 0.0
    %1986 = vmatprep.subr.mxu0 0.0
    %1987 = vmatpush2.xpose.msra.mxu0 0.0
    %1988 = vmatprep.subr.mxu0 0.0
    %1989 = vmatpush2.xpose.msra.mxu0 0.0
    %1990 = vmatprep.subr.mxu0 0.0
    %1991 = vmatpush2.xpose.msra.mxu0 0.0
    %1992 = vmatprep.mubr.f32.mxu0 0.0
    %1993 = vmatmul.mubr.f32.gmra.mxu0 %v1920
    %v1994 = vpop.f32.mrf.mxu0
    %v1995 = vadd.f32 %v62, %v1994
    %v1996 = vpop.f32.mrf.mxu0
    %1997 = vmatprep.mubr.f32.mxu0 0.0
    %1998 = vmatmul.mubr.f32.gmra.mxu0 %v1922
    %v1999 = vpop.f32.mrf.mxu0
    %v2000 = vadd.f32 %v63, %v1999
    %v2001 = vpop.f32.mrf.mxu0
    %2002 = vdwg.mxu0
    %v2003 = vsel %vm259, %v1995, -inf
    %2004 = vmax.xlane.f32.xlu0 %v2003
    %v2005 = vpop.xlane.xlu0 %2004
    %v2006 = vsel %vm259, %v2000, -inf
    %2007 = vmax.xlane.f32.xlu0 %v2006
    %v2008 = vpop.xlane.xlu0 %2007
    %v2009 = vsub.f32 %v1995, %v2005
    %v2010 = vsub.f32 %v2000, %v2008
    %v2011 = vmul.f32 %v2009, 1.442695
    %v2012 = vpow.pop %v2011
    %v2013 = vmul.f32 %v2010, 1.442695
    %v2014 = vpow.pop %v2013
    %v2015 = vsel %vm259, %v2012, 0.0
    %2016 = vadd.xlane.f32.xlu0 %v2015
    %v2017 = vpop.xlane.xlu0 %2016
    %v2018 = vsel %vm259, %v2014, 0.0
    %2019 = vadd.xlane.f32.xlu0 %v2018
    %v2020 = vpop.xlane.xlu0 %2019
    %v2021 = vrcp.pop %v2017
    %v2022 = vrcp.pop %v2020
    %v2023 = vmul.f32 %v2012, %v2021
    %v2024 = vmul.f32 %v2014, %v2022
    %2025 = vrot.lane.b32.xlu0 %v1708, 120
    %v2026 = vpop.permute.xlu0 %2025
    %2027 = vrot.lane.b32.xlu0 %v1713, 120
    %v2028 = vpop.permute.xlu0 %2027
    %v2032 = vsel %vm259, %v2023, 0
    %v2035 = vsel %vm259, %v2024, 0
    %2037 = vmatprep.subr.mxu0 0.0
    %2038 = vmatpush1.msra.mxu0 0.0
    %2039 = vmatprep.subr.mxu0 0.0
    %2040 = vmatpush1.msra.mxu0 0.0
    %2041 = vmatprep.subr.mxu0 0.0
    %2042 = vmatpush1.msra.mxu0 0.0
    %2043 = vmatprep.subr.mxu0 0.0
    %2044 = vmatpush1.msra.mxu0 0.0
    %2045 = vmatprep.subr.mxu0 0.0
    %2046 = vmatpush1.msra.mxu0 0.0
    %2047 = vmatprep.subr.mxu0 0.0
    %2048 = vmatpush1.msra.mxu0 0.0
    %2049 = vmatprep.subr.mxu0 0.0
    %2050 = vmatpush1.msra.mxu0 0.0
    %2051 = vmatprep.subr.mxu0 0.0
    %2052 = vmatpush1.msra.mxu0 0.0
    %2053 = vmatprep.subr.mxu0 0.0
    %2054 = vmatpush1.msra.mxu0 0.0
    %2055 = vmatprep.subr.mxu0 0.0
    %2056 = vmatpush1.msra.mxu0 0.0
    %2057 = vmatprep.subr.mxu0 0.0
    %2058 = vmatpush1.msra.mxu0 0.0
    %2059 = vmatprep.subr.mxu0 0.0
    %2060 = vmatpush1.msra.mxu0 0.0
    %2061 = vmatprep.subr.mxu0 0.0
    %2062 = vmatpush1.msra.mxu0 0.0
    %2063 = vmatprep.subr.mxu0 0.0
    %2064 = vmatpush1.msra.mxu0 0.0
    %2065 = vmatprep.subr.mxu0 0.0
    %2066 = vmatpush1.msra.mxu0 %v2028
    %2067 = vmatprep.subr.mxu0 0.0
    %2068 = vmatpush1.msra.mxu0 %v2026
    %2069 = vmatprep.subr.mxu0 0.0
    %2070 = vmatpush2.msra.mxu0 0.0
    %2071 = vmatprep.subr.mxu0 0.0
    %2072 = vmatpush2.msra.mxu0 0.0
    %2073 = vmatprep.subr.mxu0 0.0
    %2074 = vmatpush2.msra.mxu0 0.0
    %2075 = vmatprep.subr.mxu0 0.0
    %2076 = vmatpush2.msra.mxu0 0.0
    %2077 = vmatprep.subr.mxu0 0.0
    %2078 = vmatpush2.msra.mxu0 0.0
    %2079 = vmatprep.subr.mxu0 0.0
    %2080 = vmatpush2.msra.mxu0 0.0
    %2081 = vmatprep.subr.mxu0 0.0
    %2082 = vmatpush2.msra.mxu0 0.0
    %2083 = vmatprep.subr.mxu0 0.0
    %2084 = vmatpush2.msra.mxu0 0.0
    %2085 = vmatprep.subr.mxu0 0.0
    %2086 = vmatpush2.msra.mxu0 0.0
    %2087 = vmatprep.subr.mxu0 0.0
    %2088 = vmatpush2.msra.mxu0 0.0
    %2089 = vmatprep.subr.mxu0 0.0
    %2090 = vmatpush2.msra.mxu0 0.0
    %2091 = vmatprep.subr.mxu0 0.0
    %2092 = vmatpush2.msra.mxu0 0.0
    %2093 = vmatprep.subr.mxu0 0.0
    %2094 = vmatpush2.msra.mxu0 0.0
    %2095 = vmatprep.subr.mxu0 0.0
    %2096 = vmatpush2.msra.mxu0 0.0
    %2097 = vmatprep.subr.mxu0 0.0
    %2098 = vmatpush2.msra.mxu0 0.0
    %2099 = vmatprep.subr.mxu0 0.0
    %2100 = vmatpush2.msra.mxu0 0.0
    %2101 = vmatprep.mubr.f32.mxu0 0.0
    %2102 = vmatmul.mubr.f32.gmra.mxu0 %v2032
    %v2103 = vpop.f32.mrf.mxu0
    %v2104 = vadd.f32 0.0, %v2103
    %v2105 = vpop.f32.mrf.mxu0
    %2106 = vmatprep.mubr.f32.mxu0 0.0
    %2107 = vmatmul.mubr.f32.gmra.mxu0 %v2035
    %v2108 = vpop.f32.mrf.mxu0
    %v2109 = vadd.f32 0.0, %v2108
    %v2110 = vpop.f32.mrf.mxu0
    %2111 = vdwg.mxu0
    %2113 = vrot.lane.b32.xlu0 %v1617, 32
    %v2114 = vpop.permute.xlu0 %2113
    %v2117 = vsel %vm175, %v2104, 0
    %v2120 = vsel %vm175, %v2109, 0
    %2122 = vmatprep.subr.mxu0 0.0
    %2123 = vmatpush1.msra.mxu0 0.0
    %2124 = vmatprep.subr.mxu0 0.0
    %2125 = vmatpush1.msra.mxu0 0.0
    %2126 = vmatprep.subr.mxu0 0.0
    %2127 = vmatpush1.msra.mxu0 0.0
    %2128 = vmatprep.subr.mxu0 0.0
    %2129 = vmatpush1.msra.mxu0 0.0
    %2130 = vmatprep.subr.mxu0 0.0
    %2131 = vmatpush1.msra.mxu0 0.0
    %2132 = vmatprep.subr.mxu0 0.0
    %2133 = vmatpush1.msra.mxu0 0.0
    %2134 = vmatprep.subr.mxu0 0.0
    %2135 = vmatpush1.msra.mxu0 0.0
    %2136 = vmatprep.subr.mxu0 0.0
    %2137 = vmatpush1.msra.mxu0 0.0
    %2138 = vmatprep.subr.mxu0 0.0
    %2139 = vmatpush1.msra.mxu0 0.0
    %2140 = vmatprep.subr.mxu0 0.0
    %2141 = vmatpush1.msra.mxu0 0.0
    %2142 = vmatprep.subr.mxu0 0.0
    %2143 = vmatpush1.msra.mxu0 0.0
    %2144 = vmatprep.subr.mxu0 0.0
    %2145 = vmatpush1.msra.mxu0 0.0
    %2146 = vmatprep.subr.mxu0 0.0
    %2147 = vmatpush1.msra.mxu0 0.0
    %2148 = vmatprep.subr.mxu0 0.0
    %2149 = vmatpush1.msra.mxu0 0.0
    %2150 = vmatprep.subr.mxu0 0.0
    %2151 = vmatpush1.msra.mxu0 0.0
    %2152 = vmatprep.subr.mxu0 0.0
    %2153 = vmatpush1.msra.mxu0 %v2114
    %2154 = vmatprep.subr.mxu0 0.0
    %2155 = vmatpush2.msra.mxu0 0.0
    %2156 = vmatprep.subr.mxu0 0.0
    %2157 = vmatpush2.msra.mxu0 0.0
    %2158 = vmatprep.subr.mxu0 0.0
    %2159 = vmatpush2.msra.mxu0 0.0
    %2160 = vmatprep.subr.mxu0 0.0
    %2161 = vmatpush2.msra.mxu0 0.0
    %2162 = vmatprep.subr.mxu0 0.0
    %2163 = vmatpush2.msra.mxu0 0.0
    %2164 = vmatprep.subr.mxu0 0.0
    %2165 = vmatpush2.msra.mxu0 0.0
    %2166 = vmatprep.subr.mxu0 0.0
    %2167 = vmatpush2.msra.mxu0 0.0
    %2168 = vmatprep.subr.mxu0 0.0
    %2169 = vmatpush2.msra.mxu0 0.0
    %2170 = vmatprep.subr.mxu0 0.0
    %2171 = vmatpush2.msra.mxu0 0.0
    %2172 = vmatprep.subr.mxu0 0.0
    %2173 = vmatpush2.msra.mxu0 0.0
    %2174 = vmatprep.subr.mxu0 0.0
    %2175 = vmatpush2.msra.mxu0 0.0
    %2176 = vmatprep.subr.mxu0 0.0
    %2177 = vmatpush2.msra.mxu0 0.0
    %2178 = vmatprep.subr.mxu0 0.0
    %2179 = vmatpush2.msra.mxu0 0.0
    %2180 = vmatprep.subr.mxu0 0.0
    %2181 = vmatpush2.msra.mxu0 0.0
    %2182 = vmatprep.subr.mxu0 0.0
    %2183 = vmatpush2.msra.mxu0 0.0
    %2184 = vmatprep.subr.mxu0 0.0
    %2185 = vmatpush2.msra.mxu0 0.0
    %2186 = vmatprep.mubr.f32.mxu0 0.0
    %2187 = vmatmul.mubr.f32.gmra.mxu0 %v2117
    %v2188 = vpop.f32.mrf.mxu0
    %v2189 = vadd.f32 0.0, %v2188
    %v2190 = vpop.f32.mrf.mxu0
    %2191 = vmatprep.mubr.f32.mxu0 0.0
    %2192 = vmatmul.mubr.f32.gmra.mxu0 %v2120
    %v2193 = vpop.f32.mrf.mxu0
    %v2194 = vadd.f32 0.0, %v2193
    %v2195 = vpop.f32.mrf.mxu0
    %2196 = vdwg.mxu0
    %2198 = vrot.lane.b32.xlu0 %v1616, 32
    %v2199 = vpop.permute.xlu0 %2198
    %v2202 = vsel %vm175, %v1904, 0
    %v2205 = vsel %vm175, %v1909, 0
    %2207 = vmatprep.subr.mxu0 0.0
    %2208 = vmatpush1.msra.mxu0 0.0
    %2209 = vmatprep.subr.mxu0 0.0
    %2210 = vmatpush1.msra.mxu0 0.0
    %2211 = vmatprep.subr.mxu0 0.0
    %2212 = vmatpush1.msra.mxu0 0.0
    %2213 = vmatprep.subr.mxu0 0.0
    %2214 = vmatpush1.msra.mxu0 0.0
    %2215 = vmatprep.subr.mxu0 0.0
    %2216 = vmatpush1.msra.mxu0 0.0
    %2217 = vmatprep.subr.mxu0 0.0
    %2218 = vmatpush1.msra.mxu0 0.0
    %2219 = vmatprep.subr.mxu0 0.0
    %2220 = vmatpush1.msra.mxu0 0.0
    %2221 = vmatprep.subr.mxu0 0.0
    %2222 = vmatpush1.msra.mxu0 0.0
    %2223 = vmatprep.subr.mxu0 0.0
    %2224 = vmatpush1.msra.mxu0 0.0
    %2225 = vmatprep.subr.mxu0 0.0
    %2226 = vmatpush1.msra.mxu0 0.0
    %2227 = vmatprep.subr.mxu0 0.0
    %2228 = vmatpush1.msra.mxu0 0.0
    %2229 = vmatprep.subr.mxu0 0.0
    %2230 = vmatpush1.msra.mxu0 0.0
    %2231 = vmatprep.subr.mxu0 0.0
    %2232 = vmatpush1.msra.mxu0 0.0
    %2233 = vmatprep.subr.mxu0 0.0
    %2234 = vmatpush1.msra.mxu0 0.0
    %2235 = vmatprep.subr.mxu0 0.0
    %2236 = vmatpush1.msra.mxu0 0.0
    %2237 = vmatprep.subr.mxu0 0.0
    %2238 = vmatpush1.msra.mxu0 %v2199
    %2239 = vmatprep.subr.mxu0 0.0
    %2240 = vmatpush2.msra.mxu0 0.0
    %2241 = vmatprep.subr.mxu0 0.0
    %2242 = vmatpush2.msra.mxu0 0.0
    %2243 = vmatprep.subr.mxu0 0.0
    %2244 = vmatpush2.msra.mxu0 0.0
    %2245 = vmatprep.subr.mxu0 0.0
    %2246 = vmatpush2.msra.mxu0 0.0
    %2247 = vmatprep.subr.mxu0 0.0
    %2248 = vmatpush2.msra.mxu0 0.0
    %2249 = vmatprep.subr.mxu0 0.0
    %2250 = vmatpush2.msra.mxu0 0.0
    %2251 = vmatprep.subr.mxu0 0.0
    %2252 = vmatpush2.msra.mxu0 0.0
    %2253 = vmatprep.subr.mxu0 0.0
    %2254 = vmatpush2.msra.mxu0 0.0
    %2255 = vmatprep.subr.mxu0 0.0
    %2256 = vmatpush2.msra.mxu0 0.0
    %2257 = vmatprep.subr.mxu0 0.0
    %2258 = vmatpush2.msra.mxu0 0.0
    %2259 = vmatprep.subr.mxu0 0.0
    %2260 = vmatpush2.msra.mxu0 0.0
    %2261 = vmatprep.subr.mxu0 0.0
    %2262 = vmatpush2.msra.mxu0 0.0
    %2263 = vmatprep.subr.mxu0 0.0
    %2264 = vmatpush2.msra.mxu0 0.0
    %2265 = vmatprep.subr.mxu0 0.0
    %2266 = vmatpush2.msra.mxu0 0.0
    %2267 = vmatprep.subr.mxu0 0.0
    %2268 = vmatpush2.msra.mxu0 0.0
    %2269 = vmatprep.subr.mxu0 0.0
    %2270 = vmatpush2.msra.mxu0 0.0
    %2271 = vmatprep.mubr.f32.mxu0 0.0
    %2272 = vmatmul.mubr.f32.gmra.mxu0 %v2202
    %v2273 = vpop.f32.mrf.mxu0
    %v2274 = vadd.f32 %v2189, %v2273
    %v2275 = vpop.f32.mrf.mxu0
    %2276 = vmatprep.mubr.f32.mxu0 0.0
    %2277 = vmatmul.mubr.f32.gmra.mxu0 %v2205
    %v2278 = vpop.f32.mrf.mxu0
    %v2279 = vadd.f32 %v2194, %v2278
    %v2280 = vpop.f32.mrf.mxu0
    %2281 = vdwg.mxu0
    %2282 = vrot.lane.b32.xlu0 %v1708, 48
    %v2283 = vpop.permute.xlu0 %2282
    %2284 = vrot.lane.b32.xlu0 %v1713, 48
    %v2285 = vpop.permute.xlu0 %2284
    %2286 = vrot.lane.b32.xlu0 %v1708, 80
    %v2287 = vpop.permute.xlu0 %2286
    %2288 = vrot.lane.b32.xlu0 %v1713, 80
    %v2289 = vpop.permute.xlu0 %2288
    %v2290 = vsel %vm175, %v2283, 0
    %v2292 = vsel %vm175, %v2285, 0
    %v2294 = vsel %vm175, %v2287, 0
    %v2296 = vsel %vm175, %v2289, 0
    %2298 = vmatprep.subr.mxu0 0.0
    %2299 = vmatpush1.xpose.msra.mxu0 0.0
    %2300 = vmatprep.subr.mxu0 0.0
    %2301 = vmatpush1.xpose.msra.mxu0 0.0
    %2302 = vmatprep.subr.mxu0 0.0
    %2303 = vmatpush1.xpose.msra.mxu0 0.0
    %2304 = vmatprep.subr.mxu0 0.0
    %2305 = vmatpush1.xpose.msra.mxu0 0.0
    %2306 = vmatprep.subr.mxu0 0.0
    %2307 = vmatpush1.xpose.msra.mxu0 0.0
    %2308 = vmatprep.subr.mxu0 0.0
    %2309 = vmatpush1.xpose.msra.mxu0 0.0
    %2310 = vmatprep.subr.mxu0 0.0
    %2311 = vmatpush1.xpose.msra.mxu0 0.0
    %2312 = vmatprep.subr.mxu0 0.0
    %2313 = vmatpush1.xpose.msra.mxu0 0.0
    %2314 = vmatprep.subr.mxu0 0.0
    %2315 = vmatpush1.xpose.msra.mxu0 0.0
    %2316 = vmatprep.subr.mxu0 0.0
    %2317 = vmatpush1.xpose.msra.mxu0 0.0
    %2318 = vmatprep.subr.mxu0 0.0
    %2319 = vmatpush1.xpose.msra.mxu0 0.0
    %2320 = vmatprep.subr.mxu0 0.0
    %2321 = vmatpush1.xpose.msra.mxu0 0.0
    %2322 = vmatprep.subr.mxu0 0.0
    %2323 = vmatpush1.xpose.msra.mxu0 0.0
    %2324 = vmatprep.subr.mxu0 0.0
    %2325 = vmatpush1.xpose.msra.mxu0 0.0
    %2326 = vmatprep.subr.mxu0 0.0
    %2327 = vmatpush1.xpose.msra.mxu0 %v2296
    %2328 = vmatprep.subr.mxu0 0.0
    %2329 = vmatpush1.xpose.msra.mxu0 %v2294
    %2330 = vmatprep.subr.mxu0 0.0
    %2331 = vmatpush2.xpose.msra.mxu0 0.0
    %2332 = vmatprep.subr.mxu0 0.0
    %2333 = vmatpush2.xpose.msra.mxu0 0.0
    %2334 = vmatprep.subr.mxu0 0.0
    %2335 = vmatpush2.xpose.msra.mxu0 0.0
    %2336 = vmatprep.subr.mxu0 0.0
    %2337 = vmatpush2.xpose.msra.mxu0 0.0
    %2338 = vmatprep.subr.mxu0 0.0
    %2339 = vmatpush2.xpose.msra.mxu0 0.0
    %2340 = vmatprep.subr.mxu0 0.0
    %2341 = vmatpush2.xpose.msra.mxu0 0.0
    %2342 = vmatprep.subr.mxu0 0.0
    %2343 = vmatpush2.xpose.msra.mxu0 0.0
    %2344 = vmatprep.subr.mxu0 0.0
    %2345 = vmatpush2.xpose.msra.mxu0 0.0
    %2346 = vmatprep.subr.mxu0 0.0
    %2347 = vmatpush2.xpose.msra.mxu0 0.0
    %2348 = vmatprep.subr.mxu0 0.0
    %2349 = vmatpush2.xpose.msra.mxu0 0.0
    %2350 = vmatprep.subr.mxu0 0.0
    %2351 = vmatpush2.xpose.msra.mxu0 0.0
    %2352 = vmatprep.subr.mxu0 0.0
    %2353 = vmatpush2.xpose.msra.mxu0 0.0
    %2354 = vmatprep.subr.mxu0 0.0
    %2355 = vmatpush2.xpose.msra.mxu0 0.0
    %2356 = vmatprep.subr.mxu0 0.0
    %2357 = vmatpush2.xpose.msra.mxu0 0.0
    %2358 = vmatprep.subr.mxu0 0.0
    %2359 = vmatpush2.xpose.msra.mxu0 0.0
    %2360 = vmatprep.subr.mxu0 0.0
    %2361 = vmatpush2.xpose.msra.mxu0 0.0
    %2362 = vmatprep.mubr.f32.mxu0 0.0
    %2363 = vmatmul.mubr.f32.gmra.mxu0 %v2290
    %v2364 = vpop.f32.mrf.mxu0
    %v2365 = vadd.f32 %v62, %v2364
    %v2366 = vpop.f32.mrf.mxu0
    %2367 = vmatprep.mubr.f32.mxu0 0.0
    %2368 = vmatmul.mubr.f32.gmra.mxu0 %v2292
    %v2369 = vpop.f32.mrf.mxu0
    %v2370 = vadd.f32 %v63, %v2369
    %v2371 = vpop.f32.mrf.mxu0
    %2372 = vdwg.mxu0
    %v2373 = vsel %vm259, %v2365, -inf
    %2374 = vmax.xlane.f32.xlu0 %v2373
    %v2375 = vpop.xlane.xlu0 %2374
    %v2376 = vsel %vm259, %v2370, -inf
    %2377 = vmax.xlane.f32.xlu0 %v2376
    %v2378 = vpop.xlane.xlu0 %2377
    %v2379 = vsub.f32 %v2365, %v2375
    %v2380 = vsub.f32 %v2370, %v2378
    %v2381 = vmul.f32 %v2379, 1.442695
    %v2382 = vpow.pop %v2381
    %v2383 = vmul.f32 %v2380, 1.442695
    %v2384 = vpow.pop %v2383
    %v2385 = vsel %vm259, %v2382, 0.0
    %2386 = vadd.xlane.f32.xlu0 %v2385
    %v2387 = vpop.xlane.xlu0 %2386
    %v2388 = vsel %vm259, %v2384, 0.0
    %2389 = vadd.xlane.f32.xlu0 %v2388
    %v2390 = vpop.xlane.xlu0 %2389
    %v2391 = vrcp.pop %v2387
    %v2392 = vrcp.pop %v2390
    %v2393 = vmul.f32 %v2382, %v2391
    %v2394 = vmul.f32 %v2384, %v2392
    %2395 = vrot.lane.b32.xlu0 %v1708, 112
    %v2396 = vpop.permute.xlu0 %2395
    %2397 = vrot.lane.b32.xlu0 %v1713, 112
    %v2398 = vpop.permute.xlu0 %2397
    %v2402 = vsel %vm259, %v2393, 0
    %v2405 = vsel %vm259, %v2394, 0
    %2407 = vmatprep.subr.mxu0 0.0
    %2408 = vmatpush1.msra.mxu0 0.0
    %2409 = vmatprep.subr.mxu0 0.0
    %2410 = vmatpush1.msra.mxu0 0.0
    %2411 = vmatprep.subr.mxu0 0.0
    %2412 = vmatpush1.msra.mxu0 0.0
    %2413 = vmatprep.subr.mxu0 0.0
    %2414 = vmatpush1.msra.mxu0 0.0
    %2415 = vmatprep.subr.mxu0 0.0
    %2416 = vmatpush1.msra.mxu0 0.0
    %2417 = vmatprep.subr.mxu0 0.0
    %2418 = vmatpush1.msra.mxu0 0.0
    %2419 = vmatprep.subr.mxu0 0.0
    %2420 = vmatpush1.msra.mxu0 0.0
    %2421 = vmatprep.subr.mxu0 0.0
    %2422 = vmatpush1.msra.mxu0 0.0
    %2423 = vmatprep.subr.mxu0 0.0
    %2424 = vmatpush1.msra.mxu0 0.0
    %2425 = vmatprep.subr.mxu0 0.0
    %2426 = vmatpush1.msra.mxu0 0.0
    %2427 = vmatprep.subr.mxu0 0.0
    %2428 = vmatpush1.msra.mxu0 0.0
    %2429 = vmatprep.subr.mxu0 0.0
    %2430 = vmatpush1.msra.mxu0 0.0
    %2431 = vmatprep.subr.mxu0 0.0
    %2432 = vmatpush1.msra.mxu0 0.0
    %2433 = vmatprep.subr.mxu0 0.0
    %2434 = vmatpush1.msra.mxu0 0.0
    %2435 = vmatprep.subr.mxu0 0.0
    %2436 = vmatpush1.msra.mxu0 %v2398
    %2437 = vmatprep.subr.mxu0 0.0
    %2438 = vmatpush1.msra.mxu0 %v2396
    %2439 = vmatprep.subr.mxu0 0.0
    %2440 = vmatpush2.msra.mxu0 0.0
    %2441 = vmatprep.subr.mxu0 0.0
    %2442 = vmatpush2.msra.mxu0 0.0
    %2443 = vmatprep.subr.mxu0 0.0
    %2444 = vmatpush2.msra.mxu0 0.0
    %2445 = vmatprep.subr.mxu0 0.0
    %2446 = vmatpush2.msra.mxu0 0.0
    %2447 = vmatprep.subr.mxu0 0.0
    %2448 = vmatpush2.msra.mxu0 0.0
    %2449 = vmatprep.subr.mxu0 0.0
    %2450 = vmatpush2.msra.mxu0 0.0
    %2451 = vmatprep.subr.mxu0 0.0
    %2452 = vmatpush2.msra.mxu0 0.0
    %2453 = vmatprep.subr.mxu0 0.0
    %2454 = vmatpush2.msra.mxu0 0.0
    %2455 = vmatprep.subr.mxu0 0.0
    %2456 = vmatpush2.msra.mxu0 0.0
    %2457 = vmatprep.subr.mxu0 0.0
    %2458 = vmatpush2.msra.mxu0 0.0
    %2459 = vmatprep.subr.mxu0 0.0
    %2460 = vmatpush2.msra.mxu0 0.0
    %2461 = vmatprep.subr.mxu0 0.0
    %2462 = vmatpush2.msra.mxu0 0.0
    %2463 = vmatprep.subr.mxu0 0.0
    %2464 = vmatpush2.msra.mxu0 0.0
    %2465 = vmatprep.subr.mxu0 0.0
    %2466 = vmatpush2.msra.mxu0 0.0
    %2467 = vmatprep.subr.mxu0 0.0
    %2468 = vmatpush2.msra.mxu0 0.0
    %2469 = vmatprep.subr.mxu0 0.0
    %2470 = vmatpush2.msra.mxu0 0.0
    %2471 = vmatprep.mubr.f32.mxu0 0.0
    %2472 = vmatmul.mubr.f32.gmra.mxu0 %v2402
    %v2473 = vpop.f32.mrf.mxu0
    %v2474 = vadd.f32 0.0, %v2473
    %v2475 = vpop.f32.mrf.mxu0
    %2476 = vmatprep.mubr.f32.mxu0 0.0
    %2477 = vmatmul.mubr.f32.gmra.mxu0 %v2405
    %v2478 = vpop.f32.mrf.mxu0
    %v2479 = vadd.f32 0.0, %v2478
    %v2480 = vpop.f32.mrf.mxu0
    %2481 = vdwg.mxu0
    %2483 = vrot.lane.b32.xlu0 %v1618, 32
    %v2484 = vpop.permute.xlu0 %2483
    %v2487 = vsel %vm175, %v2474, 0
    %v2490 = vsel %vm175, %v2479, 0
    %2492 = vmatprep.subr.mxu0 0.0
    %2493 = vmatpush1.msra.mxu0 0.0
    %2494 = vmatprep.subr.mxu0 0.0
    %2495 = vmatpush1.msra.mxu0 0.0
    %2496 = vmatprep.subr.mxu0 0.0
    %2497 = vmatpush1.msra.mxu0 0.0
    %2498 = vmatprep.subr.mxu0 0.0
    %2499 = vmatpush1.msra.mxu0 0.0
    %2500 = vmatprep.subr.mxu0 0.0
    %2501 = vmatpush1.msra.mxu0 0.0
    %2502 = vmatprep.subr.mxu0 0.0
    %2503 = vmatpush1.msra.mxu0 0.0
    %2504 = vmatprep.subr.mxu0 0.0
    %2505 = vmatpush1.msra.mxu0 0.0
    %2506 = vmatprep.subr.mxu0 0.0
    %2507 = vmatpush1.msra.mxu0 0.0
    %2508 = vmatprep.subr.mxu0 0.0
    %2509 = vmatpush1.msra.mxu0 0.0
    %2510 = vmatprep.subr.mxu0 0.0
    %2511 = vmatpush1.msra.mxu0 0.0
    %2512 = vmatprep.subr.mxu0 0.0
    %2513 = vmatpush1.msra.mxu0 0.0
    %2514 = vmatprep.subr.mxu0 0.0
    %2515 = vmatpush1.msra.mxu0 0.0
    %2516 = vmatprep.subr.mxu0 0.0
    %2517 = vmatpush1.msra.mxu0 0.0
    %2518 = vmatprep.subr.mxu0 0.0
    %2519 = vmatpush1.msra.mxu0 0.0
    %2520 = vmatprep.subr.mxu0 0.0
    %2521 = vmatpush1.msra.mxu0 0.0
    %2522 = vmatprep.subr.mxu0 0.0
    %2523 = vmatpush1.msra.mxu0 %v2484
    %2524 = vmatprep.subr.mxu0 0.0
    %2525 = vmatpush2.msra.mxu0 0.0
    %2526 = vmatprep.subr.mxu0 0.0
    %2527 = vmatpush2.msra.mxu0 0.0
    %2528 = vmatprep.subr.mxu0 0.0
    %2529 = vmatpush2.msra.mxu0 0.0
    %2530 = vmatprep.subr.mxu0 0.0
    %2531 = vmatpush2.msra.mxu0 0.0
    %2532 = vmatprep.subr.mxu0 0.0
    %2533 = vmatpush2.msra.mxu0 0.0
    %2534 = vmatprep.subr.mxu0 0.0
    %2535 = vmatpush2.msra.mxu0 0.0
    %2536 = vmatprep.subr.mxu0 0.0
    %2537 = vmatpush2.msra.mxu0 0.0
    %2538 = vmatprep.subr.mxu0 0.0
    %2539 = vmatpush2.msra.mxu0 0.0
    %2540 = vmatprep.subr.mxu0 0.0
    %2541 = vmatpush2.msra.mxu0 0.0
    %2542 = vmatprep.subr.mxu0 0.0
    %2543 = vmatpush2.msra.mxu0 0.0
    %2544 = vmatprep.subr.mxu0 0.0
    %2545 = vmatpush2.msra.mxu0 0.0
    %2546 = vmatprep.subr.mxu0 0.0
    %2547 = vmatpush2.msra.mxu0 0.0
    %2548 = vmatprep.subr.mxu0 0.0
    %2549 = vmatpush2.msra.mxu0 0.0
    %2550 = vmatprep.subr.mxu0 0.0
    %2551 = vmatpush2.msra.mxu0 0.0
    %2552 = vmatprep.subr.mxu0 0.0
    %2553 = vmatpush2.msra.mxu0 0.0
    %2554 = vmatprep.subr.mxu0 0.0
    %2555 = vmatpush2.msra.mxu0 0.0
    %2556 = vmatprep.mubr.f32.mxu0 0.0
    %2557 = vmatmul.mubr.f32.gmra.mxu0 %v2487
    %v2558 = vpop.f32.mrf.mxu0
    %v2559 = vadd.f32 0.0, %v2558
    %v2560 = vpop.f32.mrf.mxu0
    %2561 = vmatprep.mubr.f32.mxu0 0.0
    %2562 = vmatmul.mubr.f32.gmra.mxu0 %v2490
    %v2563 = vpop.f32.mrf.mxu0
    %v2564 = vadd.f32 0.0, %v2563
    %v2565 = vpop.f32.mrf.mxu0
    %2566 = vdwg.mxu0
    %v2567 = vadd.f32 %v2274, %v2559
    %v2568 = vadd.f32 %v2279, %v2564
    %2569 = vrot.lane.b32.xlu0 %v1708, 40
    %v2570 = vpop.permute.xlu0 %2569
    %2571 = vrot.lane.b32.xlu0 %v1713, 40
    %v2572 = vpop.permute.xlu0 %2571
    %2573 = vrot.lane.b32.xlu0 %v1708, 72
    %v2574 = vpop.permute.xlu0 %2573
    %2575 = vrot.lane.b32.xlu0 %v1713, 72
    %v2576 = vpop.permute.xlu0 %2575
    %v2577 = vsel %vm175, %v2570, 0
    %v2579 = vsel %vm175, %v2572, 0
    %v2581 = vsel %vm175, %v2574, 0
    %v2583 = vsel %vm175, %v2576, 0
    %2585 = vmatprep.subr.mxu0 0.0
    %2586 = vmatpush1.xpose.msra.mxu0 0.0
    %2587 = vmatprep.subr.mxu0 0.0
    %2588 = vmatpush1.xpose.msra.mxu0 0.0
    %2589 = vmatprep.subr.mxu0 0.0
    %2590 = vmatpush1.xpose.msra.mxu0 0.0
    %2591 = vmatprep.subr.mxu0 0.0
    %2592 = vmatpush1.xpose.msra.mxu0 0.0
    %2593 = vmatprep.subr.mxu0 0.0
    %2594 = vmatpush1.xpose.msra.mxu0 0.0
    %2595 = vmatprep.subr.mxu0 0.0
    %2596 = vmatpush1.xpose.msra.mxu0 0.0
    %2597 = vmatprep.subr.mxu0 0.0
    %2598 = vmatpush1.xpose.msra.mxu0 0.0
    %2599 = vmatprep.subr.mxu0 0.0
    %2600 = vmatpush1.xpose.msra.mxu0 0.0
    %2601 = vmatprep.subr.mxu0 0.0
    %2602 = vmatpush1.xpose.msra.mxu0 0.0
    %2603 = vmatprep.subr.mxu0 0.0
    %2604 = vmatpush1.xpose.msra.mxu0 0.0
    %2605 = vmatprep.subr.mxu0 0.0
    %2606 = vmatpush1.xpose.msra.mxu0 0.0
    %2607 = vmatprep.subr.mxu0 0.0
    %2608 = vmatpush1.xpose.msra.mxu0 0.0
    %2609 = vmatprep.subr.mxu0 0.0
    %2610 = vmatpush1.xpose.msra.mxu0 0.0
    %2611 = vmatprep.subr.mxu0 0.0
    %2612 = vmatpush1.xpose.msra.mxu0 0.0
    %2613 = vmatprep.subr.mxu0 0.0
    %2614 = vmatpush1.xpose.msra.mxu0 %v2583
    %2615 = vmatprep.subr.mxu0 0.0
    %2616 = vmatpush1.xpose.msra.mxu0 %v2581
    %2617 = vmatprep.subr.mxu0 0.0
    %2618 = vmatpush2.xpose.msra.mxu0 0.0
    %2619 = vmatprep.subr.mxu0 0.0
    %2620 = vmatpush2.xpose.msra.mxu0 0.0
    %2621 = vmatprep.subr.mxu0 0.0
    %2622 = vmatpush2.xpose.msra.mxu0 0.0
    %2623 = vmatprep.subr.mxu0 0.0
    %2624 = vmatpush2.xpose.msra.mxu0 0.0
    %2625 = vmatprep.subr.mxu0 0.0
    %2626 = vmatpush2.xpose.msra.mxu0 0.0
    %2627 = vmatprep.subr.mxu0 0.0
    %2628 = vmatpush2.xpose.msra.mxu0 0.0
    %2629 = vmatprep.subr.mxu0 0.0
    %2630 = vmatpush2.xpose.msra.mxu0 0.0
    %2631 = vmatprep.subr.mxu0 0.0
    %2632 = vmatpush2.xpose.msra.mxu0 0.0
    %2633 = vmatprep.subr.mxu0 0.0
    %2634 = vmatpush2.xpose.msra.mxu0 0.0
    %2635 = vmatprep.subr.mxu0 0.0
    %2636 = vmatpush2.xpose.msra.mxu0 0.0
    %2637 = vmatprep.subr.mxu0 0.0
    %2638 = vmatpush2.xpose.msra.mxu0 0.0
    %2639 = vmatprep.subr.mxu0 0.0
    %2640 = vmatpush2.xpose.msra.mxu0 0.0
    %2641 = vmatprep.subr.mxu0 0.0
    %2642 = vmatpush2.xpose.msra.mxu0 0.0
    %2643 = vmatprep.subr.mxu0 0.0
    %2644 = vmatpush2.xpose.msra.mxu0 0.0
    %2645 = vmatprep.subr.mxu0 0.0
    %2646 = vmatpush2.xpose.msra.mxu0 0.0
    %2647 = vmatprep.subr.mxu0 0.0
    %2648 = vmatpush2.xpose.msra.mxu0 0.0
    %2649 = vmatprep.mubr.f32.mxu0 0.0
    %2650 = vmatmul.mubr.f32.gmra.mxu0 %v2577
    %v2651 = vpop.f32.mrf.mxu0
    %v2652 = vadd.f32 %v62, %v2651
    %v2653 = vpop.f32.mrf.mxu0
    %2654 = vmatprep.mubr.f32.mxu0 0.0
    %2655 = vmatmul.mubr.f32.gmra.mxu0 %v2579
    %v2656 = vpop.f32.mrf.mxu0
    %v2657 = vadd.f32 %v63, %v2656
    %v2658 = vpop.f32.mrf.mxu0
    %2659 = vdwg.mxu0
    %v2660 = vsel %vm259, %v2652, -inf
    %2661 = vmax.xlane.f32.xlu0 %v2660
    %v2662 = vpop.xlane.xlu0 %2661
    %v2663 = vsel %vm259, %v2657, -inf
    %2664 = vmax.xlane.f32.xlu0 %v2663
    %v2665 = vpop.xlane.xlu0 %2664
    %v2666 = vsub.f32 %v2652, %v2662
    %v2667 = vsub.f32 %v2657, %v2665
    %v2668 = vmul.f32 %v2666, 1.442695
    %v2669 = vpow.pop %v2668
    %v2670 = vmul.f32 %v2667, 1.442695
    %v2671 = vpow.pop %v2670
    %v2672 = vsel %vm259, %v2669, 0.0
    %2673 = vadd.xlane.f32.xlu0 %v2672
    %v2674 = vpop.xlane.xlu0 %2673
    %v2675 = vsel %vm259, %v2671, 0.0
    %2676 = vadd.xlane.f32.xlu0 %v2675
    %v2677 = vpop.xlane.xlu0 %2676
    %v2678 = vrcp.pop %v2674
    %v2679 = vrcp.pop %v2677
    %v2680 = vmul.f32 %v2669, %v2678
    %v2681 = vmul.f32 %v2671, %v2679
    %2682 = vrot.lane.b32.xlu0 %v1708, 104
    %v2683 = vpop.permute.xlu0 %2682
    %2684 = vrot.lane.b32.xlu0 %v1713, 104
    %v2685 = vpop.permute.xlu0 %2684
    %v2689 = vsel %vm259, %v2680, 0
    %v2692 = vsel %vm259, %v2681, 0
    %2694 = vmatprep.subr.mxu0 0.0
    %2695 = vmatpush1.msra.mxu0 0.0
    %2696 = vmatprep.subr.mxu0 0.0
    %2697 = vmatpush1.msra.mxu0 0.0
    %2698 = vmatprep.subr.mxu0 0.0
    %2699 = vmatpush1.msra.mxu0 0.0
    %2700 = vmatprep.subr.mxu0 0.0
    %2701 = vmatpush1.msra.mxu0 0.0
    %2702 = vmatprep.subr.mxu0 0.0
    %2703 = vmatpush1.msra.mxu0 0.0
    %2704 = vmatprep.subr.mxu0 0.0
    %2705 = vmatpush1.msra.mxu0 0.0
    %2706 = vmatprep.subr.mxu0 0.0
    %2707 = vmatpush1.msra.mxu0 0.0
    %2708 = vmatprep.subr.mxu0 0.0
    %2709 = vmatpush1.msra.mxu0 0.0
    %2710 = vmatprep.subr.mxu0 0.0
    %2711 = vmatpush1.msra.mxu0 0.0
    %2712 = vmatprep.subr.mxu0 0.0
    %2713 = vmatpush1.msra.mxu0 0.0
    %2714 = vmatprep.subr.mxu0 0.0
    %2715 = vmatpush1.msra.mxu0 0.0
    %2716 = vmatprep.subr.mxu0 0.0
    %2717 = vmatpush1.msra.mxu0 0.0
    %2718 = vmatprep.subr.mxu0 0.0
    %2719 = vmatpush1.msra.mxu0 0.0
    %2720 = vmatprep.subr.mxu0 0.0
    %2721 = vmatpush1.msra.mxu0 0.0
    %2722 = vmatprep.subr.mxu0 0.0
    %2723 = vmatpush1.msra.mxu0 %v2685
    %2724 = vmatprep.subr.mxu0 0.0
    %2725 = vmatpush1.msra.mxu0 %v2683
    %2726 = vmatprep.subr.mxu0 0.0
    %2727 = vmatpush2.msra.mxu0 0.0
    %2728 = vmatprep.subr.mxu0 0.0
    %2729 = vmatpush2.msra.mxu0 0.0
    %2730 = vmatprep.subr.mxu0 0.0
    %2731 = vmatpush2.msra.mxu0 0.0
    %2732 = vmatprep.subr.mxu0 0.0
    %2733 = vmatpush2.msra.mxu0 0.0
    %2734 = vmatprep.subr.mxu0 0.0
    %2735 = vmatpush2.msra.mxu0 0.0
    %2736 = vmatprep.subr.mxu0 0.0
    %2737 = vmatpush2.msra.mxu0 0.0
    %2738 = vmatprep.subr.mxu0 0.0
    %2739 = vmatpush2.msra.mxu0 0.0
    %2740 = vmatprep.subr.mxu0 0.0
    %2741 = vmatpush2.msra.mxu0 0.0
    %2742 = vmatprep.subr.mxu0 0.0
    %2743 = vmatpush2.msra.mxu0 0.0
    %2744 = vmatprep.subr.mxu0 0.0
    %2745 = vmatpush2.msra.mxu0 0.0
    %2746 = vmatprep.subr.mxu0 0.0
    %2747 = vmatpush2.msra.mxu0 0.0
    %2748 = vmatprep.subr.mxu0 0.0
    %2749 = vmatpush2.msra.mxu0 0.0
    %2750 = vmatprep.subr.mxu0 0.0
    %2751 = vmatpush2.msra.mxu0 0.0
    %2752 = vmatprep.subr.mxu0 0.0
    %2753 = vmatpush2.msra.mxu0 0.0
    %2754 = vmatprep.subr.mxu0 0.0
    %2755 = vmatpush2.msra.mxu0 0.0
    %2756 = vmatprep.subr.mxu0 0.0
    %2757 = vmatpush2.msra.mxu0 0.0
    %2758 = vmatprep.mubr.f32.mxu0 0.0
    %2759 = vmatmul.mubr.f32.gmra.mxu0 %v2689
    %v2760 = vpop.f32.mrf.mxu0
    %v2761 = vadd.f32 0.0, %v2760
    %v2762 = vpop.f32.mrf.mxu0
    %2763 = vmatprep.mubr.f32.mxu0 0.0
    %2764 = vmatmul.mubr.f32.gmra.mxu0 %v2692
    %v2765 = vpop.f32.mrf.mxu0
    %v2766 = vadd.f32 0.0, %v2765
    %v2767 = vpop.f32.mrf.mxu0
    %2768 = vdwg.mxu0
    %2770 = vrot.lane.b32.xlu0 %v1619, 32
    %v2771 = vpop.permute.xlu0 %2770
    %v2774 = vsel %vm175, %v2761, 0
    %v2777 = vsel %vm175, %v2766, 0
    %2779 = vmatprep.subr.mxu0 0.0
    %2780 = vmatpush1.msra.mxu0 0.0
    %2781 = vmatprep.subr.mxu0 0.0
    %2782 = vmatpush1.msra.mxu0 0.0
    %2783 = vmatprep.subr.mxu0 0.0
    %2784 = vmatpush1.msra.mxu0 0.0
    %2785 = vmatprep.subr.mxu0 0.0
    %2786 = vmatpush1.msra.mxu0 0.0
    %2787 = vmatprep.subr.mxu0 0.0
    %2788 = vmatpush1.msra.mxu0 0.0
    %2789 = vmatprep.subr.mxu0 0.0
    %2790 = vmatpush1.msra.mxu0 0.0
    %2791 = vmatprep.subr.mxu0 0.0
    %2792 = vmatpush1.msra.mxu0 0.0
    %2793 = vmatprep.subr.mxu0 0.0
    %2794 = vmatpush1.msra.mxu0 0.0
    %2795 = vmatprep.subr.mxu0 0.0
    %2796 = vmatpush1.msra.mxu0 0.0
    %2797 = vmatprep.subr.mxu0 0.0
    %2798 = vmatpush1.msra.mxu0 0.0
    %2799 = vmatprep.subr.mxu0 0.0
    %2800 = vmatpush1.msra.mxu0 0.0
    %2801 = vmatprep.subr.mxu0 0.0
    %2802 = vmatpush1.msra.mxu0 0.0
    %2803 = vmatprep.subr.mxu0 0.0
    %2804 = vmatpush1.msra.mxu0 0.0
    %2805 = vmatprep.subr.mxu0 0.0
    %2806 = vmatpush1.msra.mxu0 0.0
    %2807 = vmatprep.subr.mxu0 0.0
    %2808 = vmatpush1.msra.mxu0 0.0
    %2809 = vmatprep.subr.mxu0 0.0
    %2810 = vmatpush1.msra.mxu0 %v2771
    %2811 = vmatprep.subr.mxu0 0.0
    %2812 = vmatpush2.msra.mxu0 0.0
    %2813 = vmatprep.subr.mxu0 0.0
    %2814 = vmatpush2.msra.mxu0 0.0
    %2815 = vmatprep.subr.mxu0 0.0
    %2816 = vmatpush2.msra.mxu0 0.0
    %2817 = vmatprep.subr.mxu0 0.0
    %2818 = vmatpush2.msra.mxu0 0.0
    %2819 = vmatprep.subr.mxu0 0.0
    %2820 = vmatpush2.msra.mxu0 0.0
    %2821 = vmatprep.subr.mxu0 0.0
    %2822 = vmatpush2.msra.mxu0 0.0
    %2823 = vmatprep.subr.mxu0 0.0
    %2824 = vmatpush2.msra.mxu0 0.0
    %2825 = vmatprep.subr.mxu0 0.0
    %2826 = vmatpush2.msra.mxu0 0.0
    %2827 = vmatprep.subr.mxu0 0.0
    %2828 = vmatpush2.msra.mxu0 0.0
    %2829 = vmatprep.subr.mxu0 0.0
    %2830 = vmatpush2.msra.mxu0 0.0
    %2831 = vmatprep.subr.mxu0 0.0
    %2832 = vmatpush2.msra.mxu0 0.0
    %2833 = vmatprep.subr.mxu0 0.0
    %2834 = vmatpush2.msra.mxu0 0.0
    %2835 = vmatprep.subr.mxu0 0.0
    %2836 = vmatpush2.msra.mxu0 0.0
    %2837 = vmatprep.subr.mxu0 0.0
    %2838 = vmatpush2.msra.mxu0 0.0
    %2839 = vmatprep.subr.mxu0 0.0
    %2840 = vmatpush2.msra.mxu0 0.0
    %2841 = vmatprep.subr.mxu0 0.0
    %2842 = vmatpush2.msra.mxu0 0.0
    %2843 = vmatprep.mubr.f32.mxu0 0.0
    %2844 = vmatmul.mubr.f32.gmra.mxu0 %v2774
    %v2845 = vpop.f32.mrf.mxu0
    %v2846 = vadd.f32 0.0, %v2845
    %v2847 = vpop.f32.mrf.mxu0
    %2848 = vmatprep.mubr.f32.mxu0 0.0
    %2849 = vmatmul.mubr.f32.gmra.mxu0 %v2777
    %v2850 = vpop.f32.mrf.mxu0
    %v2851 = vadd.f32 0.0, %v2850
    %v2852 = vpop.f32.mrf.mxu0
    %2853 = vdwg.mxu0
    %v2854 = vadd.f32 %v2567, %v2846
    %v2855 = vadd.f32 %v2568, %v2851
    %2857 = vrot.lane.b32.xlu0 %v1630, 32
    %v2858 = vpop.permute.xlu0 %2857
    %v2860 = vadd.f32 %v2854, %v2858
    %v2861 = vadd.f32 %v2855, %v2858
    %v2864 = vadd.f32 %v2860, %v1634
    %v2865 = vadd.f32 %v2861, %v1636
    %v2866 = vsel %vm83, %v2864, 0.0
    %2867 = vadd.xlane.f32.xlu0 %v2866
    %v2868 = vpop.xlane.xlu0 %2867
    %v2869 = vsel %vm83, %v2865, 0.0
    %2870 = vadd.xlane.f32.xlu0 %v2869
    %v2871 = vpop.xlane.xlu0 %2870
    %v2872 = vmul.f32 %v2868, %v1321
    %v2873 = vmul.f32 %v2871, %v1321
    %v2874 = vsub.f32 %v2864, %v2872
    %v2875 = vsub.f32 %v2865, %v2873
    %v2876 = vmul.f32 %v2874, %v2874
    %v2877 = vmul.f32 %v2875, %v2875
    %v2878 = vsel %vm83, %v2876, 0.0
    %2879 = vadd.xlane.f32.xlu0 %v2878
    %v2880 = vpop.xlane.xlu0 %2879
    %v2881 = vsel %vm83, %v2877, 0.0
    %2882 = vadd.xlane.f32.xlu0 %v2881
    %v2883 = vpop.xlane.xlu0 %2882
    %v2884 = vmul.f32 %v2880, 0.032258064
    %v2885 = vmul.f32 %v2883, 0.032258064
    %v2886 = vrsqrt.pop %v2884
    %v2887 = vmul.f32 %v2884, %v2886
    %vm2888 = vcmp.eq.f32.partialorder %v2884, inf
    %v2889 = vsel %vm2888, %v2884, %v2887
    %vm2890 = vcmp.eq.f32.partialorder %v2884, 0.0
    %v2891 = vand.u32 %v2884, 2147483648
    %v2892 = vsel %vm2890, %v2891, %v2889
    %v2893 = vrsqrt.pop %v2885
    %v2894 = vmul.f32 %v2885, %v2893
    %vm2895 = vcmp.eq.f32.partialorder %v2885, inf
    %v2896 = vsel %vm2895, %v2885, %v2894
    %vm2897 = vcmp.eq.f32.partialorder %v2885, 0.0
    %v2898 = vand.u32 %v2885, 2147483648
    %v2899 = vsel %vm2897, %v2898, %v2896
    %v2900 = vadd.f32 %v2892, 1e-06
    %v2901 = vadd.f32 %v2899, 1e-06
    %v2902 = vrcp.pop %v2900
    %v2903 = vrcp.pop %v2901
    %v2904 = vlaneseq
    %v2905 = vshrl.u32 %v2904, 7
    %v2906 = vsub.s32 0, %v2905
    %v2907 = vrot.slane %v1626, %v2906
    %v2908 = vmul.f32 %v2907, %v2874
    %v2909 = vmul.f32 %v2907, %v2875
    %v2910 = vmul.f32 %v2908, %v2902
    %v2911 = vmul.f32 %v2909, %v2903
    %2913 = vrot.lane.b32.xlu0 %v2907, 96
    %v2914 = vpop.permute.xlu0 %2913
    %v2916 = vadd.f32 %v2910, %v2914
    %v2917 = vadd.f32 %v2911, %v2914
    %v2918 = vlaneseq
    %v2919 = vshrl.u32 %v2918, 7
    %v2920 = vsub.s32 0, %v2919
    %v2921 = vrot.slane %v1625, %v2920
    %v2923 = vsel %vm83, %v2916, 0
    %v2926 = vsel %vm83, %v2917, 0
    %2928 = vmatprep.subr.mxu0 0.0
    %2929 = vmatpush1.msra.mxu0 0.0
    %2930 = vmatprep.subr.mxu0 0.0
    %2931 = vmatpush1.msra.mxu0 0.0
    %2932 = vmatprep.subr.mxu0 0.0
    %2933 = vmatpush1.msra.mxu0 0.0
    %2934 = vmatprep.subr.mxu0 0.0
    %2935 = vmatpush1.msra.mxu0 0.0
    %2936 = vmatprep.subr.mxu0 0.0
    %2937 = vmatpush1.msra.mxu0 0.0
    %2938 = vmatprep.subr.mxu0 0.0
    %2939 = vmatpush1.msra.mxu0 0.0
    %2940 = vmatprep.subr.mxu0 0.0
    %2941 = vmatpush1.msra.mxu0 0.0
    %2942 = vmatprep.subr.mxu0 0.0
    %2943 = vmatpush1.msra.mxu0 0.0
    %2944 = vmatprep.subr.mxu0 0.0
    %2945 = vmatpush1.msra.mxu0 0.0
    %2946 = vmatprep.subr.mxu0 0.0
    %2947 = vmatpush1.msra.mxu0 0.0
    %2948 = vmatprep.subr.mxu0 0.0
    %2949 = vmatpush1.msra.mxu0 0.0
    %2950 = vmatprep.subr.mxu0 0.0
    %2951 = vmatpush1.msra.mxu0 0.0
    %2952 = vmatprep.subr.mxu0 0.0
    %2953 = vmatpush1.msra.mxu0 %v1623
    %2954 = vmatprep.subr.mxu0 0.0
    %2955 = vmatpush1.msra.mxu0 %v1622
    %2956 = vmatprep.subr.mxu0 0.0
    %2957 = vmatpush1.msra.mxu0 %v1621
    %2958 = vmatprep.subr.mxu0 0.0
    %2959 = vmatpush1.msra.mxu0 %v1620
    %2960 = vmatprep.subr.mxu0 0.0
    %2961 = vmatpush2.msra.mxu0 0.0
    %2962 = vmatprep.subr.mxu0 0.0
    %2963 = vmatpush2.msra.mxu0 0.0
    %2964 = vmatprep.subr.mxu0 0.0
    %2965 = vmatpush2.msra.mxu0 0.0
    %2966 = vmatprep.subr.mxu0 0.0
    %2967 = vmatpush2.msra.mxu0 0.0
    %2968 = vmatprep.subr.mxu0 0.0
    %2969 = vmatpush2.msra.mxu0 0.0
    %2970 = vmatprep.subr.mxu0 0.0
    %2971 = vmatpush2.msra.mxu0 0.0
    %2972 = vmatprep.subr.mxu0 0.0
    %2973 = vmatpush2.msra.mxu0 0.0
    %2974 = vmatprep.subr.mxu0 0.0
    %2975 = vmatpush2.msra.mxu0 0.0
    %2976 = vmatprep.subr.mxu0 0.0
    %2977 = vmatpush2.msra.mxu0 0.0
    %2978 = vmatprep.subr.mxu0 0.0
    %2979 = vmatpush2.msra.mxu0 0.0
    %2980 = vmatprep.subr.mxu0 0.0
    %2981 = vmatpush2.msra.mxu0 0.0
    %2982 = vmatprep.subr.mxu0 0.0
    %2983 = vmatpush2.msra.mxu0 0.0
    %2984 = vmatprep.subr.mxu0 0.0
    %2985 = vmatpush2.msra.mxu0 0.0
    %2986 = vmatprep.subr.mxu0 0.0
    %2987 = vmatpush2.msra.mxu0 0.0
    %2988 = vmatprep.subr.mxu0 0.0
    %2989 = vmatpush2.msra.mxu0 0.0
    %2990 = vmatprep.subr.mxu0 0.0
    %2991 = vmatpush2.msra.mxu0 0.0
    %2992 = vmatprep.mubr.f32.mxu0 0.0
    %2993 = vmatmul.mubr.f32.gmra.mxu0 %v2923
    %v2994 = vpop.f32.mrf.mxu0
    %v2995 = vadd.f32 %v2921, %v2994
    %v2996 = vpop.f32.mrf.mxu0
    %2997 = vmatprep.mubr.f32.mxu0 0.0
    %2998 = vmatmul.mubr.f32.gmra.mxu0 %v2926
    %v2999 = vpop.f32.mrf.mxu0
    %v3000 = vadd.f32 %v2921, %v2999
    %v3001 = vpop.f32.mrf.mxu0
    %3002 = vdwg.mxu0
    %v3003 = vmax.f32 %v2995, 0.0
    %v3004 = vmax.f32 %v3000, 0.0
    %3009 = vrot.lane.b32.xlu0 %v1620, 64
    %v3010 = vpop.permute.xlu0 %3009
    %3011 = vrot.lane.b32.xlu0 %v1621, 64
    %v3012 = vpop.permute.xlu0 %3011
    %3013 = vrot.lane.b32.xlu0 %v1622, 64
    %v3014 = vpop.permute.xlu0 %3013
    %3015 = vrot.lane.b32.xlu0 %v1623, 64
    %v3016 = vpop.permute.xlu0 %3015
    %3018 = vrot.lane.b32.xlu0 %v2921, 64
    %v3019 = vpop.permute.xlu0 %3018
    %v3022 = vsel %vm1471, %v3003, 0
    %v3025 = vsel %vm1471, %v3004, 0
    %v3027 = vsel %vm1471, %v3010, 0
    %v3029 = vsel %vm1471, %v3012, 0
    %v3031 = vsel %vm1471, %v3014, 0
    %v3033 = vsel %vm1471, %v3016, 0
    %3035 = vmatprep.subr.mxu0 0.0
    %3036 = vmatpush1.xpose.msra.mxu0 0.0
    %3037 = vmatprep.subr.mxu0 0.0
    %3038 = vmatpush1.xpose.msra.mxu0 0.0
    %3039 = vmatprep.subr.mxu0 0.0
    %3040 = vmatpush1.xpose.msra.mxu0 0.0
    %3041 = vmatprep.subr.mxu0 0.0
    %3042 = vmatpush1.xpose.msra.mxu0 0.0
    %3043 = vmatprep.subr.mxu0 0.0
    %3044 = vmatpush1.xpose.msra.mxu0 0.0
    %3045 = vmatprep.subr.mxu0 0.0
    %3046 = vmatpush1.xpose.msra.mxu0 0.0
    %3047 = vmatprep.subr.mxu0 0.0
    %3048 = vmatpush1.xpose.msra.mxu0 0.0
    %3049 = vmatprep.subr.mxu0 0.0
    %3050 = vmatpush1.xpose.msra.mxu0 0.0
    %3051 = vmatprep.subr.mxu0 0.0
    %3052 = vmatpush1.xpose.msra.mxu0 0.0
    %3053 = vmatprep.subr.mxu0 0.0
    %3054 = vmatpush1.xpose.msra.mxu0 0.0
    %3055 = vmatprep.subr.mxu0 0.0
    %3056 = vmatpush1.xpose.msra.mxu0 0.0
    %3057 = vmatprep.subr.mxu0 0.0
    %3058 = vmatpush1.xpose.msra.mxu0 0.0
    %3059 = vmatprep.subr.mxu0 0.0
    %3060 = vmatpush1.xpose.msra.mxu0 %v3033
    %3061 = vmatprep.subr.mxu0 0.0
    %3062 = vmatpush1.xpose.msra.mxu0 %v3031
    %3063 = vmatprep.subr.mxu0 0.0
    %3064 = vmatpush1.xpose.msra.mxu0 %v3029
    %3065 = vmatprep.subr.mxu0 0.0
    %3066 = vmatpush1.xpose.msra.mxu0 %v3027
    %3067 = vmatprep.subr.mxu0 0.0
    %3068 = vmatpush2.xpose.msra.mxu0 0.0
    %3069 = vmatprep.subr.mxu0 0.0
    %3070 = vmatpush2.xpose.msra.mxu0 0.0
    %3071 = vmatprep.subr.mxu0 0.0
    %3072 = vmatpush2.xpose.msra.mxu0 0.0
    %3073 = vmatprep.subr.mxu0 0.0
    %3074 = vmatpush2.xpose.msra.mxu0 0.0
    %3075 = vmatprep.subr.mxu0 0.0
    %3076 = vmatpush2.xpose.msra.mxu0 0.0
    %3077 = vmatprep.subr.mxu0 0.0
    %3078 = vmatpush2.xpose.msra.mxu0 0.0
    %3079 = vmatprep.subr.mxu0 0.0
    %3080 = vmatpush2.xpose.msra.mxu0 0.0
    %3081 = vmatprep.subr.mxu0 0.0
    %3082 = vmatpush2.xpose.msra.mxu0 0.0
    %3083 = vmatprep.subr.mxu0 0.0
    %3084 = vmatpush2.xpose.msra.mxu0 0.0
    %3085 = vmatprep.subr.mxu0 0.0
    %3086 = vmatpush2.xpose.msra.mxu0 0.0
    %3087 = vmatprep.subr.mxu0 0.0
    %3088 = vmatpush2.xpose.msra.mxu0 0.0
    %3089 = vmatprep.subr.mxu0 0.0
    %3090 = vmatpush2.xpose.msra.mxu0 0.0
    %3091 = vmatprep.subr.mxu0 0.0
    %3092 = vmatpush2.xpose.msra.mxu0 0.0
    %3093 = vmatprep.subr.mxu0 0.0
    %3094 = vmatpush2.xpose.msra.mxu0 0.0
    %3095 = vmatprep.subr.mxu0 0.0
    %3096 = vmatpush2.xpose.msra.mxu0 0.0
    %3097 = vmatprep.subr.mxu0 0.0
    %3098 = vmatpush2.xpose.msra.mxu0 0.0
    %3099 = vmatprep.mubr.f32.mxu0 0.0
    %3100 = vmatmul.mubr.f32.gmra.mxu0 %v3022
    %v3101 = vpop.f32.mrf.mxu0
    %v3102 = vadd.f32 %v3019, %v3101
    %v3103 = vpop.f32.mrf.mxu0
    %3104 = vmatprep.mubr.f32.mxu0 0.0
    %3105 = vmatmul.mubr.f32.gmra.mxu0 %v3025
    %v3106 = vpop.f32.mrf.mxu0
    %v3107 = vadd.f32 %v3019, %v3106
    %v3108 = vpop.f32.mrf.mxu0
    %3109 = vdwg.mxu0
    %v3110 = vadd.f32 %v3102, %v2916
    %v3111 = vadd.f32 %v3107, %v2917
    %v3112 = vsel %vm83, %v3110, 0.0
    %3113 = vadd.xlane.f32.xlu0 %v3112
    %v3114 = vpop.xlane.xlu0 %3113
    %v3115 = vsel %vm83, %v3111, 0.0
    %3116 = vadd.xlane.f32.xlu0 %v3115
    %v3117 = vpop.xlane.xlu0 %3116
    %v3118 = vmul.f32 %v3114, %v1321
    %v3119 = vmul.f32 %v3117, %v1321
    %v3120 = vsub.f32 %v3110, %v3118
    %v3121 = vsub.f32 %v3111, %v3119
    %v3122 = vmul.f32 %v3120, %v3120
    %v3123 = vmul.f32 %v3121, %v3121
    %v3124 = vsel %vm83, %v3122, 0.0
    %3125 = vadd.xlane.f32.xlu0 %v3124
    %v3126 = vpop.xlane.xlu0 %3125
    %v3127 = vsel %vm83, %v3123, 0.0
    %3128 = vadd.xlane.f32.xlu0 %v3127
    %v3129 = vpop.xlane.xlu0 %3128
    %v3130 = vmul.f32 %v3126, 0.032258064
    %v3131 = vmul.f32 %v3129, 0.032258064
    %v3132 = vrsqrt.pop %v3130
    %v3133 = vmul.f32 %v3130, %v3132
    %vm3134 = vcmp.eq.f32.partialorder %v3130, inf
    %v3135 = vsel %vm3134, %v3130, %v3133
    %vm3136 = vcmp.eq.f32.partialorder %v3130, 0.0
    %v3137 = vand.u32 %v3130, 2147483648
    %v3138 = vsel %vm3136, %v3137, %v3135
    %v3139 = vrsqrt.pop %v3131
    %v3140 = vmul.f32 %v3131, %v3139
    %vm3141 = vcmp.eq.f32.partialorder %v3131, inf
    %v3142 = vsel %vm3141, %v3131, %v3140
    %vm3143 = vcmp.eq.f32.partialorder %v3131, 0.0
    %v3144 = vand.u32 %v3131, 2147483648
    %v3145 = vsel %vm3143, %v3144, %v3142
    %v3146 = vadd.f32 %v3138, 1e-06
    %v3147 = vadd.f32 %v3145, 1e-06
    %v3148 = vrcp.pop %v3146
    %v3149 = vrcp.pop %v3147
    %3152 = vrot.lane.b32.xlu0 %v3120, 64
    %v3153 = vpop.permute.xlu0 %3152
    %3154 = vrot.lane.b32.xlu0 %v3121, 64
    %v3155 = vpop.permute.xlu0 %3154
    %v3158 = vmul.f32 %v2907, %v3153
    %v3159 = vmul.f32 %v2907, %v3155
    %v3160 = vmul.f32 %v3158, %v3148
    %v3161 = vmul.f32 %v3159, %v3149
    %v3162 = vadd.f32 %v3160, %v2914
    %v3163 = vadd.f32 %v3161, %v2914
    %v3164 = vld [vmem:[#allocation5] sm:$0xff]
    %v3165 = vld [vmem:[#allocation5 + $0x8] sm:$0xff]
    %v3166 = vld [vmem:[#allocation5 + $0x10] sm:$0xff]
    %v3167 = vld [vmem:[#allocation5 + $0x18] sm:$0xff]
    %v3168 = vld [vmem:[#allocation5 + $0x20] sm:$0xff]
    %v3169 = vld [vmem:[#allocation5 + $0x28] sm:$0xff]
    %v3170 = vld [vmem:[#allocation5 + $0x30] sm:$0xff]
    %v3171 = vld [vmem:[#allocation5 + $0x38] sm:$0xff]
    %v3172 = vld [vmem:[#allocation5 + $0x40] sm:$0xff]
    %v3173 = vld [vmem:[#allocation5 + $0x48] sm:$0xff]
    %v3174 = vld [vmem:[#allocation5 + $0x50] sm:$0xff]
    %v3175 = vld [vmem:[#allocation5 + $0x58] sm:$0xff]
    %v3176 = vld [vmem:[#allocation5 + $0x60] sm:$0x1]
    %v3177 = vld [vmem:[#allocation5 + $0x61] sm:$0x1]
    %v3178 = vld [vmem:[#allocation5 + $0x62] sm:$0x1]
    %v3179 = vld [vmem:[#allocation5 + $0x63] sm:$0x1]
    %v3180 = vld [vmem:[#allocation5 + $0x64] sm:$0x1]
    %v3181 = vlaneseq
    %v3182 = vshrl.u32 %v3181, 7
    %v3183 = vsub.s32 0, %v3182
    %v3184 = vrot.slane %v3176, %v3183
    %v3186 = vsel %vm83, %v60, 0
    %v3189 = vsel %vm83, %v61, 0
    %3191 = vmatprep.subr.mxu0 0.0
    %3192 = vmatpush1.msra.mxu0 0.0
    %3193 = vmatprep.subr.mxu0 0.0
    %3194 = vmatpush1.msra.mxu0 0.0
    %3195 = vmatprep.subr.mxu0 0.0
    %3196 = vmatpush1.msra.mxu0 0.0
    %3197 = vmatprep.subr.mxu0 0.0
    %3198 = vmatpush1.msra.mxu0 0.0
    %3199 = vmatprep.subr.mxu0 0.0
    %3200 = vmatpush1.msra.mxu0 0.0
    %3201 = vmatprep.subr.mxu0 0.0
    %3202 = vmatpush1.msra.mxu0 0.0
    %3203 = vmatprep.subr.mxu0 0.0
    %3204 = vmatpush1.msra.mxu0 0.0
    %3205 = vmatprep.subr.mxu0 0.0
    %3206 = vmatpush1.msra.mxu0 0.0
    %3207 = vmatprep.subr.mxu0 0.0
    %3208 = vmatpush1.msra.mxu0 0.0
    %3209 = vmatprep.subr.mxu0 0.0
    %3210 = vmatpush1.msra.mxu0 0.0
    %3211 = vmatprep.subr.mxu0 0.0
    %3212 = vmatpush1.msra.mxu0 0.0
    %3213 = vmatprep.subr.mxu0 0.0
    %3214 = vmatpush1.msra.mxu0 0.0
    %3215 = vmatprep.subr.mxu0 0.0
    %3216 = vmatpush1.msra.mxu0 %v3167
    %3217 = vmatprep.subr.mxu0 0.0
    %3218 = vmatpush1.msra.mxu0 %v3166
    %3219 = vmatprep.subr.mxu0 0.0
    %3220 = vmatpush1.msra.mxu0 %v3165
    %3221 = vmatprep.subr.mxu0 0.0
    %3222 = vmatpush1.msra.mxu0 %v3164
    %3223 = vmatprep.subr.mxu0 0.0
    %3224 = vmatpush2.msra.mxu0 0.0
    %3225 = vmatprep.subr.mxu0 0.0
    %3226 = vmatpush2.msra.mxu0 0.0
    %3227 = vmatprep.subr.mxu0 0.0
    %3228 = vmatpush2.msra.mxu0 0.0
    %3229 = vmatprep.subr.mxu0 0.0
    %3230 = vmatpush2.msra.mxu0 0.0
    %3231 = vmatprep.subr.mxu0 0.0
    %3232 = vmatpush2.msra.mxu0 0.0
    %3233 = vmatprep.subr.mxu0 0.0
    %3234 = vmatpush2.msra.mxu0 0.0
    %3235 = vmatprep.subr.mxu0 0.0
    %3236 = vmatpush2.msra.mxu0 0.0
    %3237 = vmatprep.subr.mxu0 0.0
    %3238 = vmatpush2.msra.mxu0 0.0
    %3239 = vmatprep.subr.mxu0 0.0
    %3240 = vmatpush2.msra.mxu0 0.0
    %3241 = vmatprep.subr.mxu0 0.0
    %3242 = vmatpush2.msra.mxu0 0.0
    %3243 = vmatprep.subr.mxu0 0.0
    %3244 = vmatpush2.msra.mxu0 0.0
    %3245 = vmatprep.subr.mxu0 0.0
    %3246 = vmatpush2.msra.mxu0 0.0
    %3247 = vmatprep.subr.mxu0 0.0
    %3248 = vmatpush2.msra.mxu0 0.0
    %3249 = vmatprep.subr.mxu0 0.0
    %3250 = vmatpush2.msra.mxu0 0.0
    %3251 = vmatprep.subr.mxu0 0.0
    %3252 = vmatpush2.msra.mxu0 0.0
    %3253 = vmatprep.subr.mxu0 0.0
    %3254 = vmatpush2.msra.mxu0 0.0
    %3255 = vmatprep.mubr.f32.mxu0 0.0
    %3256 = vmatmul.mubr.f32.gmra.mxu0 %v3186
    %v3257 = vpop.f32.mrf.mxu0
    %v3258 = vadd.f32 %v3184, %v3257
    %v3259 = vpop.f32.mrf.mxu0
    %3260 = vmatprep.mubr.f32.mxu0 0.0
    %3261 = vmatmul.mubr.f32.gmra.mxu0 %v3189
    %v3262 = vpop.f32.mrf.mxu0
    %v3263 = vadd.f32 %v3184, %v3262
    %v3264 = vpop.f32.mrf.mxu0
    %3265 = vdwg.mxu0
    %3268 = vrot.lane.b32.xlu0 %v3258, 64
    %v3269 = vpop.permute.xlu0 %3268
    %3270 = vrot.lane.b32.xlu0 %v3263, 64
    %v3271 = vpop.permute.xlu0 %3270
    %3272 = vrot.lane.b32.xlu0 %v3258, 96
    %v3273 = vpop.permute.xlu0 %3272
    %3274 = vrot.lane.b32.xlu0 %v3263, 96
    %v3275 = vpop.permute.xlu0 %3274
    %v3276 = vsel %vm175, %v3269, 0
    %v3278 = vsel %vm175, %v3271, 0
    %v3280 = vsel %vm175, %v3273, 0
    %v3282 = vsel %vm175, %v3275, 0
    %3284 = vmatprep.subr.mxu0 0.0
    %3285 = vmatpush1.xpose.msra.mxu0 0.0
    %3286 = vmatprep.subr.mxu0 0.0
    %3287 = vmatpush1.xpose.msra.mxu0 0.0
    %3288 = vmatprep.subr.mxu0 0.0
    %3289 = vmatpush1.xpose.msra.mxu0 0.0
    %3290 = vmatprep.subr.mxu0 0.0
    %3291 = vmatpush1.xpose.msra.mxu0 0.0
    %3292 = vmatprep.subr.mxu0 0.0
    %3293 = vmatpush1.xpose.msra.mxu0 0.0
    %3294 = vmatprep.subr.mxu0 0.0
    %3295 = vmatpush1.xpose.msra.mxu0 0.0
    %3296 = vmatprep.subr.mxu0 0.0
    %3297 = vmatpush1.xpose.msra.mxu0 0.0
    %3298 = vmatprep.subr.mxu0 0.0
    %3299 = vmatpush1.xpose.msra.mxu0 0.0
    %3300 = vmatprep.subr.mxu0 0.0
    %3301 = vmatpush1.xpose.msra.mxu0 0.0
    %3302 = vmatprep.subr.mxu0 0.0
    %3303 = vmatpush1.xpose.msra.mxu0 0.0
    %3304 = vmatprep.subr.mxu0 0.0
    %3305 = vmatpush1.xpose.msra.mxu0 0.0
    %3306 = vmatprep.subr.mxu0 0.0
    %3307 = vmatpush1.xpose.msra.mxu0 0.0
    %3308 = vmatprep.subr.mxu0 0.0
    %3309 = vmatpush1.xpose.msra.mxu0 0.0
    %3310 = vmatprep.subr.mxu0 0.0
    %3311 = vmatpush1.xpose.msra.mxu0 0.0
    %3312 = vmatprep.subr.mxu0 0.0
    %3313 = vmatpush1.xpose.msra.mxu0 %v3282
    %3314 = vmatprep.subr.mxu0 0.0
    %3315 = vmatpush1.xpose.msra.mxu0 %v3280
    %3316 = vmatprep.subr.mxu0 0.0
    %3317 = vmatpush2.xpose.msra.mxu0 0.0
    %3318 = vmatprep.subr.mxu0 0.0
    %3319 = vmatpush2.xpose.msra.mxu0 0.0
    %3320 = vmatprep.subr.mxu0 0.0
    %3321 = vmatpush2.xpose.msra.mxu0 0.0
    %3322 = vmatprep.subr.mxu0 0.0
    %3323 = vmatpush2.xpose.msra.mxu0 0.0
    %3324 = vmatprep.subr.mxu0 0.0
    %3325 = vmatpush2.xpose.msra.mxu0 0.0
    %3326 = vmatprep.subr.mxu0 0.0
    %3327 = vmatpush2.xpose.msra.mxu0 0.0
    %3328 = vmatprep.subr.mxu0 0.0
    %3329 = vmatpush2.xpose.msra.mxu0 0.0
    %3330 = vmatprep.subr.mxu0 0.0
    %3331 = vmatpush2.xpose.msra.mxu0 0.0
    %3332 = vmatprep.subr.mxu0 0.0
    %3333 = vmatpush2.xpose.msra.mxu0 0.0
    %3334 = vmatprep.subr.mxu0 0.0
    %3335 = vmatpush2.xpose.msra.mxu0 0.0
    %3336 = vmatprep.subr.mxu0 0.0
    %3337 = vmatpush2.xpose.msra.mxu0 0.0
    %3338 = vmatprep.subr.mxu0 0.0
    %3339 = vmatpush2.xpose.msra.mxu0 0.0
    %3340 = vmatprep.subr.mxu0 0.0
    %3341 = vmatpush2.xpose.msra.mxu0 0.0
    %3342 = vmatprep.subr.mxu0 0.0
    %3343 = vmatpush2.xpose.msra.mxu0 0.0
    %3344 = vmatprep.subr.mxu0 0.0
    %3345 = vmatpush2.xpose.msra.mxu0 0.0
    %3346 = vmatprep.subr.mxu0 0.0
    %3347 = vmatpush2.xpose.msra.mxu0 0.0
    %3348 = vmatprep.mubr.f32.mxu0 0.0
    %3349 = vmatmul.mubr.f32.gmra.mxu0 %v3276
    %v3350 = vpop.f32.mrf.mxu0
    %v3351 = vadd.f32 %v64, %v3350
    %v3352 = vpop.f32.mrf.mxu0
    %3353 = vmatprep.mubr.f32.mxu0 0.0
    %3354 = vmatmul.mubr.f32.gmra.mxu0 %v3278
    %v3355 = vpop.f32.mrf.mxu0
    %v3356 = vadd.f32 %v65, %v3355
    %v3357 = vpop.f32.mrf.mxu0
    %3358 = vdwg.mxu0
    %v3359 = vsel %vm259, %v3351, -inf
    %3360 = vmax.xlane.f32.xlu0 %v3359
    %v3361 = vpop.xlane.xlu0 %3360
    %v3362 = vsel %vm259, %v3356, -inf
    %3363 = vmax.xlane.f32.xlu0 %v3362
    %v3364 = vpop.xlane.xlu0 %3363
    %v3365 = vsub.f32 %v3351, %v3361
    %v3366 = vsub.f32 %v3356, %v3364
    %v3367 = vmul.f32 %v3365, 1.442695
    %v3368 = vpow.pop %v3367
    %v3369 = vmul.f32 %v3366, 1.442695
    %v3370 = vpow.pop %v3369
    %v3371 = vsel %vm259, %v3368, 0.0
    %3372 = vadd.xlane.f32.xlu0 %v3371
    %v3373 = vpop.xlane.xlu0 %3372
    %v3374 = vsel %vm259, %v3370, 0.0
    %3375 = vadd.xlane.f32.xlu0 %v3374
    %v3376 = vpop.xlane.xlu0 %3375
    %v3377 = vrcp.pop %v3373
    %v3378 = vrcp.pop %v3376
    %v3379 = vmul.f32 %v3368, %v3377
    %v3380 = vmul.f32 %v3370, %v3378
    %v3382 = vsel %vm259, %v3379, 0
    %v3385 = vsel %vm259, %v3380, 0
    %3387 = vmatprep.subr.mxu0 0.0
    %3388 = vmatpush1.msra.mxu0 0.0
    %3389 = vmatprep.subr.mxu0 0.0
    %3390 = vmatpush1.msra.mxu0 0.0
    %3391 = vmatprep.subr.mxu0 0.0
    %3392 = vmatpush1.msra.mxu0 0.0
    %3393 = vmatprep.subr.mxu0 0.0
    %3394 = vmatpush1.msra.mxu0 0.0
    %3395 = vmatprep.subr.mxu0 0.0
    %3396 = vmatpush1.msra.mxu0 0.0
    %3397 = vmatprep.subr.mxu0 0.0
    %3398 = vmatpush1.msra.mxu0 0.0
    %3399 = vmatprep.subr.mxu0 0.0
    %3400 = vmatpush1.msra.mxu0 0.0
    %3401 = vmatprep.subr.mxu0 0.0
    %3402 = vmatpush1.msra.mxu0 0.0
    %3403 = vmatprep.subr.mxu0 0.0
    %3404 = vmatpush1.msra.mxu0 0.0
    %3405 = vmatprep.subr.mxu0 0.0
    %3406 = vmatpush1.msra.mxu0 0.0
    %3407 = vmatprep.subr.mxu0 0.0
    %3408 = vmatpush1.msra.mxu0 0.0
    %3409 = vmatprep.subr.mxu0 0.0
    %3410 = vmatpush1.msra.mxu0 0.0
    %3411 = vmatprep.subr.mxu0 0.0
    %3412 = vmatpush1.msra.mxu0 0.0
    %3413 = vmatprep.subr.mxu0 0.0
    %3414 = vmatpush1.msra.mxu0 0.0
    %3415 = vmatprep.subr.mxu0 0.0
    %3416 = vmatpush1.msra.mxu0 %v3263
    %3417 = vmatprep.subr.mxu0 0.0
    %3418 = vmatpush1.msra.mxu0 %v3258
    %3419 = vmatprep.subr.mxu0 0.0
    %3420 = vmatpush2.msra.mxu0 0.0
    %3421 = vmatprep.subr.mxu0 0.0
    %3422 = vmatpush2.msra.mxu0 0.0
    %3423 = vmatprep.subr.mxu0 0.0
    %3424 = vmatpush2.msra.mxu0 0.0
    %3425 = vmatprep.subr.mxu0 0.0
    %3426 = vmatpush2.msra.mxu0 0.0
    %3427 = vmatprep.subr.mxu0 0.0
    %3428 = vmatpush2.msra.mxu0 0.0
    %3429 = vmatprep.subr.mxu0 0.0
    %3430 = vmatpush2.msra.mxu0 0.0
    %3431 = vmatprep.subr.mxu0 0.0
    %3432 = vmatpush2.msra.mxu0 0.0
    %3433 = vmatprep.subr.mxu0 0.0
    %3434 = vmatpush2.msra.mxu0 0.0
    %3435 = vmatprep.subr.mxu0 0.0
    %3436 = vmatpush2.msra.mxu0 0.0
    %3437 = vmatprep.subr.mxu0 0.0
    %3438 = vmatpush2.msra.mxu0 0.0
    %3439 = vmatprep.subr.mxu0 0.0
    %3440 = vmatpush2.msra.mxu0 0.0
    %3441 = vmatprep.subr.mxu0 0.0
    %3442 = vmatpush2.msra.mxu0 0.0
    %3443 = vmatprep.subr.mxu0 0.0
    %3444 = vmatpush2.msra.mxu0 0.0
    %3445 = vmatprep.subr.mxu0 0.0
    %3446 = vmatpush2.msra.mxu0 0.0
    %3447 = vmatprep.subr.mxu0 0.0
    %3448 = vmatpush2.msra.mxu0 0.0
    %3449 = vmatprep.subr.mxu0 0.0
    %3450 = vmatpush2.msra.mxu0 0.0
    %3451 = vmatprep.mubr.f32.mxu0 0.0
    %3452 = vmatmul.mubr.f32.gmra.mxu0 %v3382
    %v3453 = vpop.f32.mrf.mxu0
    %v3454 = vadd.f32 0.0, %v3453
    %v3455 = vpop.f32.mrf.mxu0
    %3456 = vmatprep.mubr.f32.mxu0 0.0
    %3457 = vmatmul.mubr.f32.gmra.mxu0 %v3385
    %v3458 = vpop.f32.mrf.mxu0
    %v3459 = vadd.f32 0.0, %v3458
    %v3460 = vpop.f32.mrf.mxu0
    %3461 = vdwg.mxu0
    %3462 = vrot.lane.b32.xlu0 %v3258, 56
    %v3463 = vpop.permute.xlu0 %3462
    %3464 = vrot.lane.b32.xlu0 %v3263, 56
    %v3465 = vpop.permute.xlu0 %3464
    %3466 = vrot.lane.b32.xlu0 %v3258, 88
    %v3467 = vpop.permute.xlu0 %3466
    %3468 = vrot.lane.b32.xlu0 %v3263, 88
    %v3469 = vpop.permute.xlu0 %3468
    %v3470 = vsel %vm175, %v3463, 0
    %v3472 = vsel %vm175, %v3465, 0
    %v3474 = vsel %vm175, %v3467, 0
    %v3476 = vsel %vm175, %v3469, 0
    %3478 = vmatprep.subr.mxu0 0.0
    %3479 = vmatpush1.xpose.msra.mxu0 0.0
    %3480 = vmatprep.subr.mxu0 0.0
    %3481 = vmatpush1.xpose.msra.mxu0 0.0
    %3482 = vmatprep.subr.mxu0 0.0
    %3483 = vmatpush1.xpose.msra.mxu0 0.0
    %3484 = vmatprep.subr.mxu0 0.0
    %3485 = vmatpush1.xpose.msra.mxu0 0.0
    %3486 = vmatprep.subr.mxu0 0.0
    %3487 = vmatpush1.xpose.msra.mxu0 0.0
    %3488 = vmatprep.subr.mxu0 0.0
    %3489 = vmatpush1.xpose.msra.mxu0 0.0
    %3490 = vmatprep.subr.mxu0 0.0
    %3491 = vmatpush1.xpose.msra.mxu0 0.0
    %3492 = vmatprep.subr.mxu0 0.0
    %3493 = vmatpush1.xpose.msra.mxu0 0.0
    %3494 = vmatprep.subr.mxu0 0.0
    %3495 = vmatpush1.xpose.msra.mxu0 0.0
    %3496 = vmatprep.subr.mxu0 0.0
    %3497 = vmatpush1.xpose.msra.mxu0 0.0
    %3498 = vmatprep.subr.mxu0 0.0
    %3499 = vmatpush1.xpose.msra.mxu0 0.0
    %3500 = vmatprep.subr.mxu0 0.0
    %3501 = vmatpush1.xpose.msra.mxu0 0.0
    %3502 = vmatprep.subr.mxu0 0.0
    %3503 = vmatpush1.xpose.msra.mxu0 0.0
    %3504 = vmatprep.subr.mxu0 0.0
    %3505 = vmatpush1.xpose.msra.mxu0 0.0
    %3506 = vmatprep.subr.mxu0 0.0
    %3507 = vmatpush1.xpose.msra.mxu0 %v3476
    %3508 = vmatprep.subr.mxu0 0.0
    %3509 = vmatpush1.xpose.msra.mxu0 %v3474
    %3510 = vmatprep.subr.mxu0 0.0
    %3511 = vmatpush2.xpose.msra.mxu0 0.0
    %3512 = vmatprep.subr.mxu0 0.0
    %3513 = vmatpush2.xpose.msra.mxu0 0.0
    %3514 = vmatprep.subr.mxu0 0.0
    %3515 = vmatpush2.xpose.msra.mxu0 0.0
    %3516 = vmatprep.subr.mxu0 0.0
    %3517 = vmatpush2.xpose.msra.mxu0 0.0
    %3518 = vmatprep.subr.mxu0 0.0
    %3519 = vmatpush2.xpose.msra.mxu0 0.0
    %3520 = vmatprep.subr.mxu0 0.0
    %3521 = vmatpush2.xpose.msra.mxu0 0.0
    %3522 = vmatprep.subr.mxu0 0.0
    %3523 = vmatpush2.xpose.msra.mxu0 0.0
    %3524 = vmatprep.subr.mxu0 0.0
    %3525 = vmatpush2.xpose.msra.mxu0 0.0
    %3526 = vmatprep.subr.mxu0 0.0
    %3527 = vmatpush2.xpose.msra.mxu0 0.0
    %3528 = vmatprep.subr.mxu0 0.0
    %3529 = vmatpush2.xpose.msra.mxu0 0.0
    %3530 = vmatprep.subr.mxu0 0.0
    %3531 = vmatpush2.xpose.msra.mxu0 0.0
    %3532 = vmatprep.subr.mxu0 0.0
    %3533 = vmatpush2.xpose.msra.mxu0 0.0
    %3534 = vmatprep.subr.mxu0 0.0
    %3535 = vmatpush2.xpose.msra.mxu0 0.0
    %3536 = vmatprep.subr.mxu0 0.0
    %3537 = vmatpush2.xpose.msra.mxu0 0.0
    %3538 = vmatprep.subr.mxu0 0.0
    %3539 = vmatpush2.xpose.msra.mxu0 0.0
    %3540 = vmatprep.subr.mxu0 0.0
    %3541 = vmatpush2.xpose.msra.mxu0 0.0
    %3542 = vmatprep.mubr.f32.mxu0 0.0
    %3543 = vmatmul.mubr.f32.gmra.mxu0 %v3470
    %v3544 = vpop.f32.mrf.mxu0
    %v3545 = vadd.f32 %v64, %v3544
    %v3546 = vpop.f32.mrf.mxu0
    %3547 = vmatprep.mubr.f32.mxu0 0.0
    %3548 = vmatmul.mubr.f32.gmra.mxu0 %v3472
    %v3549 = vpop.f32.mrf.mxu0
    %v3550 = vadd.f32 %v65, %v3549
    %v3551 = vpop.f32.mrf.mxu0
    %3552 = vdwg.mxu0
    %v3553 = vsel %vm259, %v3545, -inf
    %3554 = vmax.xlane.f32.xlu0 %v3553
    %v3555 = vpop.xlane.xlu0 %3554
    %v3556 = vsel %vm259, %v3550, -inf
    %3557 = vmax.xlane.f32.xlu0 %v3556
    %v3558 = vpop.xlane.xlu0 %3557
    %v3559 = vsub.f32 %v3545, %v3555
    %v3560 = vsub.f32 %v3550, %v3558
    %v3561 = vmul.f32 %v3559, 1.442695
    %v3562 = vpow.pop %v3561
    %v3563 = vmul.f32 %v3560, 1.442695
    %v3564 = vpow.pop %v3563
    %v3565 = vsel %vm259, %v3562, 0.0
    %3566 = vadd.xlane.f32.xlu0 %v3565
    %v3567 = vpop.xlane.xlu0 %3566
    %v3568 = vsel %vm259, %v3564, 0.0
    %3569 = vadd.xlane.f32.xlu0 %v3568
    %v3570 = vpop.xlane.xlu0 %3569
    %v3571 = vrcp.pop %v3567
    %v3572 = vrcp.pop %v3570
    %v3573 = vmul.f32 %v3562, %v3571
    %v3574 = vmul.f32 %v3564, %v3572
    %3575 = vrot.lane.b32.xlu0 %v3258, 120
    %v3576 = vpop.permute.xlu0 %3575
    %3577 = vrot.lane.b32.xlu0 %v3263, 120
    %v3578 = vpop.permute.xlu0 %3577
    %v3582 = vsel %vm259, %v3573, 0
    %v3585 = vsel %vm259, %v3574, 0
    %3587 = vmatprep.subr.mxu0 0.0
    %3588 = vmatpush1.msra.mxu0 0.0
    %3589 = vmatprep.subr.mxu0 0.0
    %3590 = vmatpush1.msra.mxu0 0.0
    %3591 = vmatprep.subr.mxu0 0.0
    %3592 = vmatpush1.msra.mxu0 0.0
    %3593 = vmatprep.subr.mxu0 0.0
    %3594 = vmatpush1.msra.mxu0 0.0
    %3595 = vmatprep.subr.mxu0 0.0
    %3596 = vmatpush1.msra.mxu0 0.0
    %3597 = vmatprep.subr.mxu0 0.0
    %3598 = vmatpush1.msra.mxu0 0.0
    %3599 = vmatprep.subr.mxu0 0.0
    %3600 = vmatpush1.msra.mxu0 0.0
    %3601 = vmatprep.subr.mxu0 0.0
    %3602 = vmatpush1.msra.mxu0 0.0
    %3603 = vmatprep.subr.mxu0 0.0
    %3604 = vmatpush1.msra.mxu0 0.0
    %3605 = vmatprep.subr.mxu0 0.0
    %3606 = vmatpush1.msra.mxu0 0.0
    %3607 = vmatprep.subr.mxu0 0.0
    %3608 = vmatpush1.msra.mxu0 0.0
    %3609 = vmatprep.subr.mxu0 0.0
    %3610 = vmatpush1.msra.mxu0 0.0
    %3611 = vmatprep.subr.mxu0 0.0
    %3612 = vmatpush1.msra.mxu0 0.0
    %3613 = vmatprep.subr.mxu0 0.0
    %3614 = vmatpush1.msra.mxu0 0.0
    %3615 = vmatprep.subr.mxu0 0.0
    %3616 = vmatpush1.msra.mxu0 %v3578
    %3617 = vmatprep.subr.mxu0 0.0
    %3618 = vmatpush1.msra.mxu0 %v3576
    %3619 = vmatprep.subr.mxu0 0.0
    %3620 = vmatpush2.msra.mxu0 0.0
    %3621 = vmatprep.subr.mxu0 0.0
    %3622 = vmatpush2.msra.mxu0 0.0
    %3623 = vmatprep.subr.mxu0 0.0
    %3624 = vmatpush2.msra.mxu0 0.0
    %3625 = vmatprep.subr.mxu0 0.0
    %3626 = vmatpush2.msra.mxu0 0.0
    %3627 = vmatprep.subr.mxu0 0.0
    %3628 = vmatpush2.msra.mxu0 0.0
    %3629 = vmatprep.subr.mxu0 0.0
    %3630 = vmatpush2.msra.mxu0 0.0
    %3631 = vmatprep.subr.mxu0 0.0
    %3632 = vmatpush2.msra.mxu0 0.0
    %3633 = vmatprep.subr.mxu0 0.0
    %3634 = vmatpush2.msra.mxu0 0.0
    %3635 = vmatprep.subr.mxu0 0.0
    %3636 = vmatpush2.msra.mxu0 0.0
    %3637 = vmatprep.subr.mxu0 0.0
    %3638 = vmatpush2.msra.mxu0 0.0
    %3639 = vmatprep.subr.mxu0 0.0
    %3640 = vmatpush2.msra.mxu0 0.0
    %3641 = vmatprep.subr.mxu0 0.0
    %3642 = vmatpush2.msra.mxu0 0.0
    %3643 = vmatprep.subr.mxu0 0.0
    %3644 = vmatpush2.msra.mxu0 0.0
    %3645 = vmatprep.subr.mxu0 0.0
    %3646 = vmatpush2.msra.mxu0 0.0
    %3647 = vmatprep.subr.mxu0 0.0
    %3648 = vmatpush2.msra.mxu0 0.0
    %3649 = vmatprep.subr.mxu0 0.0
    %3650 = vmatpush2.msra.mxu0 0.0
    %3651 = vmatprep.mubr.f32.mxu0 0.0
    %3652 = vmatmul.mubr.f32.gmra.mxu0 %v3582
    %v3653 = vpop.f32.mrf.mxu0
    %v3654 = vadd.f32 0.0, %v3653
    %v3655 = vpop.f32.mrf.mxu0
    %3656 = vmatprep.mubr.f32.mxu0 0.0
    %3657 = vmatmul.mubr.f32.gmra.mxu0 %v3585
    %v3658 = vpop.f32.mrf.mxu0
    %v3659 = vadd.f32 0.0, %v3658
    %v3660 = vpop.f32.mrf.mxu0
    %3661 = vdwg.mxu0
    %3663 = vrot.lane.b32.xlu0 %v3165, 32
    %v3664 = vpop.permute.xlu0 %3663
    %v3667 = vsel %vm175, %v3654, 0
    %v3670 = vsel %vm175, %v3659, 0
    %3672 = vmatprep.subr.mxu0 0.0
    %3673 = vmatpush1.msra.mxu0 0.0
    %3674 = vmatprep.subr.mxu0 0.0
    %3675 = vmatpush1.msra.mxu0 0.0
    %3676 = vmatprep.subr.mxu0 0.0
    %3677 = vmatpush1.msra.mxu0 0.0
    %3678 = vmatprep.subr.mxu0 0.0
    %3679 = vmatpush1.msra.mxu0 0.0
    %3680 = vmatprep.subr.mxu0 0.0
    %3681 = vmatpush1.msra.mxu0 0.0
    %3682 = vmatprep.subr.mxu0 0.0
    %3683 = vmatpush1.msra.mxu0 0.0
    %3684 = vmatprep.subr.mxu0 0.0
    %3685 = vmatpush1.msra.mxu0 0.0
    %3686 = vmatprep.subr.mxu0 0.0
    %3687 = vmatpush1.msra.mxu0 0.0
    %3688 = vmatprep.subr.mxu0 0.0
    %3689 = vmatpush1.msra.mxu0 0.0
    %3690 = vmatprep.subr.mxu0 0.0
    %3691 = vmatpush1.msra.mxu0 0.0
    %3692 = vmatprep.subr.mxu0 0.0
    %3693 = vmatpush1.msra.mxu0 0.0
    %3694 = vmatprep.subr.mxu0 0.0
    %3695 = vmatpush1.msra.mxu0 0.0
    %3696 = vmatprep.subr.mxu0 0.0
    %3697 = vmatpush1.msra.mxu0 0.0
    %3698 = vmatprep.subr.mxu0 0.0
    %3699 = vmatpush1.msra.mxu0 0.0
    %3700 = vmatprep.subr.mxu0 0.0
    %3701 = vmatpush1.msra.mxu0 0.0
    %3702 = vmatprep.subr.mxu0 0.0
    %3703 = vmatpush1.msra.mxu0 %v3664
    %3704 = vmatprep.subr.mxu0 0.0
    %3705 = vmatpush2.msra.mxu0 0.0
    %3706 = vmatprep.subr.mxu0 0.0
    %3707 = vmatpush2.msra.mxu0 0.0
    %3708 = vmatprep.subr.mxu0 0.0
    %3709 = vmatpush2.msra.mxu0 0.0
    %3710 = vmatprep.subr.mxu0 0.0
    %3711 = vmatpush2.msra.mxu0 0.0
    %3712 = vmatprep.subr.mxu0 0.0
    %3713 = vmatpush2.msra.mxu0 0.0
    %3714 = vmatprep.subr.mxu0 0.0
    %3715 = vmatpush2.msra.mxu0 0.0
    %3716 = vmatprep.subr.mxu0 0.0
    %3717 = vmatpush2.msra.mxu0 0.0
    %3718 = vmatprep.subr.mxu0 0.0
    %3719 = vmatpush2.msra.mxu0 0.0
    %3720 = vmatprep.subr.mxu0 0.0
    %3721 = vmatpush2.msra.mxu0 0.0
    %3722 = vmatprep.subr.mxu0 0.0
    %3723 = vmatpush2.msra.mxu0 0.0
    %3724 = vmatprep.subr.mxu0 0.0
    %3725 = vmatpush2.msra.mxu0 0.0
    %3726 = vmatprep.subr.mxu0 0.0
    %3727 = vmatpush2.msra.mxu0 0.0
    %3728 = vmatprep.subr.mxu0 0.0
    %3729 = vmatpush2.msra.mxu0 0.0
    %3730 = vmatprep.subr.mxu0 0.0
    %3731 = vmatpush2.msra.mxu0 0.0
    %3732 = vmatprep.subr.mxu0 0.0
    %3733 = vmatpush2.msra.mxu0 0.0
    %3734 = vmatprep.subr.mxu0 0.0
    %3735 = vmatpush2.msra.mxu0 0.0
    %3736 = vmatprep.mubr.f32.mxu0 0.0
    %3737 = vmatmul.mubr.f32.gmra.mxu0 %v3667
    %v3738 = vpop.f32.mrf.mxu0
    %v3739 = vadd.f32 0.0, %v3738
    %v3740 = vpop.f32.mrf.mxu0
    %3741 = vmatprep.mubr.f32.mxu0 0.0
    %3742 = vmatmul.mubr.f32.gmra.mxu0 %v3670
    %v3743 = vpop.f32.mrf.mxu0
    %v3744 = vadd.f32 0.0, %v3743
    %v3745 = vpop.f32.mrf.mxu0
    %3746 = vdwg.mxu0
    %3748 = vrot.lane.b32.xlu0 %v3164, 32
    %v3749 = vpop.permute.xlu0 %3748
    %v3752 = vsel %vm175, %v3454, 0
    %v3755 = vsel %vm175, %v3459, 0
    %3757 = vmatprep.subr.mxu0 0.0
    %3758 = vmatpush1.msra.mxu0 0.0
    %3759 = vmatprep.subr.mxu0 0.0
    %3760 = vmatpush1.msra.mxu0 0.0
    %3761 = vmatprep.subr.mxu0 0.0
    %3762 = vmatpush1.msra.mxu0 0.0
    %3763 = vmatprep.subr.mxu0 0.0
    %3764 = vmatpush1.msra.mxu0 0.0
    %3765 = vmatprep.subr.mxu0 0.0
    %3766 = vmatpush1.msra.mxu0 0.0
    %3767 = vmatprep.subr.mxu0 0.0
    %3768 = vmatpush1.msra.mxu0 0.0
    %3769 = vmatprep.subr.mxu0 0.0
    %3770 = vmatpush1.msra.mxu0 0.0
    %3771 = vmatprep.subr.mxu0 0.0
    %3772 = vmatpush1.msra.mxu0 0.0
    %3773 = vmatprep.subr.mxu0 0.0
    %3774 = vmatpush1.msra.mxu0 0.0
    %3775 = vmatprep.subr.mxu0 0.0
    %3776 = vmatpush1.msra.mxu0 0.0
    %3777 = vmatprep.subr.mxu0 0.0
    %3778 = vmatpush1.msra.mxu0 0.0
    %3779 = vmatprep.subr.mxu0 0.0
    %3780 = vmatpush1.msra.mxu0 0.0
    %3781 = vmatprep.subr.mxu0 0.0
    %3782 = vmatpush1.msra.mxu0 0.0
    %3783 = vmatprep.subr.mxu0 0.0
    %3784 = vmatpush1.msra.mxu0 0.0
    %3785 = vmatprep.subr.mxu0 0.0
    %3786 = vmatpush1.msra.mxu0 0.0
    %3787 = vmatprep.subr.mxu0 0.0
    %3788 = vmatpush1.msra.mxu0 %v3749
    %3789 = vmatprep.subr.mxu0 0.0
    %3790 = vmatpush2.msra.mxu0 0.0
    %3791 = vmatprep.subr.mxu0 0.0
    %3792 = vmatpush2.msra.mxu0 0.0
    %3793 = vmatprep.subr.mxu0 0.0
    %3794 = vmatpush2.msra.mxu0 0.0
    %3795 = vmatprep.subr.mxu0 0.0
    %3796 = vmatpush2.msra.mxu0 0.0
    %3797 = vmatprep.subr.mxu0 0.0
    %3798 = vmatpush2.msra.mxu0 0.0
    %3799 = vmatprep.subr.mxu0 0.0
    %3800 = vmatpush2.msra.mxu0 0.0
    %3801 = vmatprep.subr.mxu0 0.0
    %3802 = vmatpush2.msra.mxu0 0.0
    %3803 = vmatprep.subr.mxu0 0.0
    %3804 = vmatpush2.msra.mxu0 0.0
    %3805 = vmatprep.subr.mxu0 0.0
    %3806 = vmatpush2.msra.mxu0 0.0
    %3807 = vmatprep.subr.mxu0 0.0
    %3808 = vmatpush2.msra.mxu0 0.0
    %3809 = vmatprep.subr.mxu0 0.0
    %3810 = vmatpush2.msra.mxu0 0.0
    %3811 = vmatprep.subr.mxu0 0.0
    %3812 = vmatpush2.msra.mxu0 0.0
    %3813 = vmatprep.subr.mxu0 0.0
    %3814 = vmatpush2.msra.mxu0 0.0
    %3815 = vmatprep.subr.mxu0 0.0
    %3816 = vmatpush2.msra.mxu0 0.0
    %3817 = vmatprep.subr.mxu0 0.0
    %3818 = vmatpush2.msra.mxu0 0.0
    %3819 = vmatprep.subr.mxu0 0.0
    %3820 = vmatpush2.msra.mxu0 0.0
    %3821 = vmatprep.mubr.f32.mxu0 0.0
    %3822 = vmatmul.mubr.f32.gmra.mxu0 %v3752
    %v3823 = vpop.f32.mrf.mxu0
    %v3824 = vadd.f32 %v3739, %v3823
    %v3825 = vpop.f32.mrf.mxu0
    %3826 = vmatprep.mubr.f32.mxu0 0.0
    %3827 = vmatmul.mubr.f32.gmra.mxu0 %v3755
    %v3828 = vpop.f32.mrf.mxu0
    %v3829 = vadd.f32 %v3744, %v3828
    %v3830 = vpop.f32.mrf.mxu0
    %3831 = vdwg.mxu0
    %3832 = vrot.lane.b32.xlu0 %v3258, 48
    %v3833 = vpop.permute.xlu0 %3832
    %3834 = vrot.lane.b32.xlu0 %v3263, 48
    %v3835 = vpop.permute.xlu0 %3834
    %3836 = vrot.lane.b32.xlu0 %v3258, 80
    %v3837 = vpop.permute.xlu0 %3836
    %3838 = vrot.lane.b32.xlu0 %v3263, 80
    %v3839 = vpop.permute.xlu0 %3838
    %v3840 = vsel %vm175, %v3833, 0
    %v3842 = vsel %vm175, %v3835, 0
    %v3844 = vsel %vm175, %v3837, 0
    %v3846 = vsel %vm175, %v3839, 0
    %3848 = vmatprep.subr.mxu0 0.0
    %3849 = vmatpush1.xpose.msra.mxu0 0.0
    %3850 = vmatprep.subr.mxu0 0.0
    %3851 = vmatpush1.xpose.msra.mxu0 0.0
    %3852 = vmatprep.subr.mxu0 0.0
    %3853 = vmatpush1.xpose.msra.mxu0 0.0
    %3854 = vmatprep.subr.mxu0 0.0
    %3855 = vmatpush1.xpose.msra.mxu0 0.0
    %3856 = vmatprep.subr.mxu0 0.0
    %3857 = vmatpush1.xpose.msra.mxu0 0.0
    %3858 = vmatprep.subr.mxu0 0.0
    %3859 = vmatpush1.xpose.msra.mxu0 0.0
    %3860 = vmatprep.subr.mxu0 0.0
    %3861 = vmatpush1.xpose.msra.mxu0 0.0
    %3862 = vmatprep.subr.mxu0 0.0
    %3863 = vmatpush1.xpose.msra.mxu0 0.0
    %3864 = vmatprep.subr.mxu0 0.0
    %3865 = vmatpush1.xpose.msra.mxu0 0.0
    %3866 = vmatprep.subr.mxu0 0.0
    %3867 = vmatpush1.xpose.msra.mxu0 0.0
    %3868 = vmatprep.subr.mxu0 0.0
    %3869 = vmatpush1.xpose.msra.mxu0 0.0
    %3870 = vmatprep.subr.mxu0 0.0
    %3871 = vmatpush1.xpose.msra.mxu0 0.0
    %3872 = vmatprep.subr.mxu0 0.0
    %3873 = vmatpush1.xpose.msra.mxu0 0.0
    %3874 = vmatprep.subr.mxu0 0.0
    %3875 = vmatpush1.xpose.msra.mxu0 0.0
    %3876 = vmatprep.subr.mxu0 0.0
    %3877 = vmatpush1.xpose.msra.mxu0 %v3846
    %3878 = vmatprep.subr.mxu0 0.0
    %3879 = vmatpush1.xpose.msra.mxu0 %v3844
    %3880 = vmatprep.subr.mxu0 0.0
    %3881 = vmatpush2.xpose.msra.mxu0 0.0
    %3882 = vmatprep.subr.mxu0 0.0
    %3883 = vmatpush2.xpose.msra.mxu0 0.0
    %3884 = vmatprep.subr.mxu0 0.0
    %3885 = vmatpush2.xpose.msra.mxu0 0.0
    %3886 = vmatprep.subr.mxu0 0.0
    %3887 = vmatpush2.xpose.msra.mxu0 0.0
    %3888 = vmatprep.subr.mxu0 0.0
    %3889 = vmatpush2.xpose.msra.mxu0 0.0
    %3890 = vmatprep.subr.mxu0 0.0
    %3891 = vmatpush2.xpose.msra.mxu0 0.0
    %3892 = vmatprep.subr.mxu0 0.0
    %3893 = vmatpush2.xpose.msra.mxu0 0.0
    %3894 = vmatprep.subr.mxu0 0.0
    %3895 = vmatpush2.xpose.msra.mxu0 0.0
    %3896 = vmatprep.subr.mxu0 0.0
    %3897 = vmatpush2.xpose.msra.mxu0 0.0
    %3898 = vmatprep.subr.mxu0 0.0
    %3899 = vmatpush2.xpose.msra.mxu0 0.0
    %3900 = vmatprep.subr.mxu0 0.0
    %3901 = vmatpush2.xpose.msra.mxu0 0.0
    %3902 = vmatprep.subr.mxu0 0.0
    %3903 = vmatpush2.xpose.msra.mxu0 0.0
    %3904 = vmatprep.subr.mxu0 0.0
    %3905 = vmatpush2.xpose.msra.mxu0 0.0
    %3906 = vmatprep.subr.mxu0 0.0
    %3907 = vmatpush2.xpose.msra.mxu0 0.0
    %3908 = vmatprep.subr.mxu0 0.0
    %3909 = vmatpush2.xpose.msra.mxu0 0.0
    %3910 = vmatprep.subr.mxu0 0.0
    %3911 = vmatpush2.xpose.msra.mxu0 0.0
    %3912 = vmatprep.mubr.f32.mxu0 0.0
    %3913 = vmatmul.mubr.f32.gmra.mxu0 %v3840
    %v3914 = vpop.f32.mrf.mxu0
    %v3915 = vadd.f32 %v64, %v3914
    %v3916 = vpop.f32.mrf.mxu0
    %3917 = vmatprep.mubr.f32.mxu0 0.0
    %3918 = vmatmul.mubr.f32.gmra.mxu0 %v3842
    %v3919 = vpop.f32.mrf.mxu0
    %v3920 = vadd.f32 %v65, %v3919
    %v3921 = vpop.f32.mrf.mxu0
    %3922 = vdwg.mxu0
    %v3923 = vsel %vm259, %v3915, -inf
    %3924 = vmax.xlane.f32.xlu0 %v3923
    %v3925 = vpop.xlane.xlu0 %3924
    %v3926 = vsel %vm259, %v3920, -inf
    %3927 = vmax.xlane.f32.xlu0 %v3926
    %v3928 = vpop.xlane.xlu0 %3927
    %v3929 = vsub.f32 %v3915, %v3925
    %v3930 = vsub.f32 %v3920, %v3928
    %v3931 = vmul.f32 %v3929, 1.442695
    %v3932 = vpow.pop %v3931
    %v3933 = vmul.f32 %v3930, 1.442695
    %v3934 = vpow.pop %v3933
    %v3935 = vsel %vm259, %v3932, 0.0
    %3936 = vadd.xlane.f32.xlu0 %v3935
    %v3937 = vpop.xlane.xlu0 %3936
    %v3938 = vsel %vm259, %v3934, 0.0
    %3939 = vadd.xlane.f32.xlu0 %v3938
    %v3940 = vpop.xlane.xlu0 %3939
    %v3941 = vrcp.pop %v3937
    %v3942 = vrcp.pop %v3940
    %v3943 = vmul.f32 %v3932, %v3941
    %v3944 = vmul.f32 %v3934, %v3942
    %3945 = vrot.lane.b32.xlu0 %v3258, 112
    %v3946 = vpop.permute.xlu0 %3945
    %3947 = vrot.lane.b32.xlu0 %v3263, 112
    %v3948 = vpop.permute.xlu0 %3947
    %v3952 = vsel %vm259, %v3943, 0
    %v3955 = vsel %vm259, %v3944, 0
    %3957 = vmatprep.subr.mxu0 0.0
    %3958 = vmatpush1.msra.mxu0 0.0
    %3959 = vmatprep.subr.mxu0 0.0
    %3960 = vmatpush1.msra.mxu0 0.0
    %3961 = vmatprep.subr.mxu0 0.0
    %3962 = vmatpush1.msra.mxu0 0.0
    %3963 = vmatprep.subr.mxu0 0.0
    %3964 = vmatpush1.msra.mxu0 0.0
    %3965 = vmatprep.subr.mxu0 0.0
    %3966 = vmatpush1.msra.mxu0 0.0
    %3967 = vmatprep.subr.mxu0 0.0
    %3968 = vmatpush1.msra.mxu0 0.0
    %3969 = vmatprep.subr.mxu0 0.0
    %3970 = vmatpush1.msra.mxu0 0.0
    %3971 = vmatprep.subr.mxu0 0.0
    %3972 = vmatpush1.msra.mxu0 0.0
    %3973 = vmatprep.subr.mxu0 0.0
    %3974 = vmatpush1.msra.mxu0 0.0
    %3975 = vmatprep.subr.mxu0 0.0
    %3976 = vmatpush1.msra.mxu0 0.0
    %3977 = vmatprep.subr.mxu0 0.0
    %3978 = vmatpush1.msra.mxu0 0.0
    %3979 = vmatprep.subr.mxu0 0.0
    %3980 = vmatpush1.msra.mxu0 0.0
    %3981 = vmatprep.subr.mxu0 0.0
    %3982 = vmatpush1.msra.mxu0 0.0
    %3983 = vmatprep.subr.mxu0 0.0
    %3984 = vmatpush1.msra.mxu0 0.0
    %3985 = vmatprep.subr.mxu0 0.0
    %3986 = vmatpush1.msra.mxu0 %v3948
    %3987 = vmatprep.subr.mxu0 0.0
    %3988 = vmatpush1.msra.mxu0 %v3946
    %3989 = vmatprep.subr.mxu0 0.0
    %3990 = vmatpush2.msra.mxu0 0.0
    %3991 = vmatprep.subr.mxu0 0.0
    %3992 = vmatpush2.msra.mxu0 0.0
    %3993 = vmatprep.subr.mxu0 0.0
    %3994 = vmatpush2.msra.mxu0 0.0
    %3995 = vmatprep.subr.mxu0 0.0
    %3996 = vmatpush2.msra.mxu0 0.0
    %3997 = vmatprep.subr.mxu0 0.0
    %3998 = vmatpush2.msra.mxu0 0.0
    %3999 = vmatprep.subr.mxu0 0.0
    %4000 = vmatpush2.msra.mxu0 0.0
    %4001 = vmatprep.subr.mxu0 0.0
    %4002 = vmatpush2.msra.mxu0 0.0
    %4003 = vmatprep.subr.mxu0 0.0
    %4004 = vmatpush2.msra.mxu0 0.0
    %4005 = vmatprep.subr.mxu0 0.0
    %4006 = vmatpush2.msra.mxu0 0.0
    %4007 = vmatprep.subr.mxu0 0.0
    %4008 = vmatpush2.msra.mxu0 0.0
    %4009 = vmatprep.subr.mxu0 0.0
    %4010 = vmatpush2.msra.mxu0 0.0
    %4011 = vmatprep.subr.mxu0 0.0
    %4012 = vmatpush2.msra.mxu0 0.0
    %4013 = vmatprep.subr.mxu0 0.0
    %4014 = vmatpush2.msra.mxu0 0.0
    %4015 = vmatprep.subr.mxu0 0.0
    %4016 = vmatpush2.msra.mxu0 0.0
    %4017 = vmatprep.subr.mxu0 0.0
    %4018 = vmatpush2.msra.mxu0 0.0
    %4019 = vmatprep.subr.mxu0 0.0
    %4020 = vmatpush2.msra.mxu0 0.0
    %4021 = vmatprep.mubr.f32.mxu0 0.0
    %4022 = vmatmul.mubr.f32.gmra.mxu0 %v3952
    %v4023 = vpop.f32.mrf.mxu0
    %v4024 = vadd.f32 0.0, %v4023
    %v4025 = vpop.f32.mrf.mxu0
    %4026 = vmatprep.mubr.f32.mxu0 0.0
    %4027 = vmatmul.mubr.f32.gmra.mxu0 %v3955
    %v4028 = vpop.f32.mrf.mxu0
    %v4029 = vadd.f32 0.0, %v4028
    %v4030 = vpop.f32.mrf.mxu0
    %4031 = vdwg.mxu0
    %4033 = vrot.lane.b32.xlu0 %v3166, 32
    %v4034 = vpop.permute.xlu0 %4033
    %v4037 = vsel %vm175, %v4024, 0
    %v4040 = vsel %vm175, %v4029, 0
    %4042 = vmatprep.subr.mxu0 0.0
    %4043 = vmatpush1.msra.mxu0 0.0
    %4044 = vmatprep.subr.mxu0 0.0
    %4045 = vmatpush1.msra.mxu0 0.0
    %4046 = vmatprep.subr.mxu0 0.0
    %4047 = vmatpush1.msra.mxu0 0.0
    %4048 = vmatprep.subr.mxu0 0.0
    %4049 = vmatpush1.msra.mxu0 0.0
    %4050 = vmatprep.subr.mxu0 0.0
    %4051 = vmatpush1.msra.mxu0 0.0
    %4052 = vmatprep.subr.mxu0 0.0
    %4053 = vmatpush1.msra.mxu0 0.0
    %4054 = vmatprep.subr.mxu0 0.0
    %4055 = vmatpush1.msra.mxu0 0.0
    %4056 = vmatprep.subr.mxu0 0.0
    %4057 = vmatpush1.msra.mxu0 0.0
    %4058 = vmatprep.subr.mxu0 0.0
    %4059 = vmatpush1.msra.mxu0 0.0
    %4060 = vmatprep.subr.mxu0 0.0
    %4061 = vmatpush1.msra.mxu0 0.0
    %4062 = vmatprep.subr.mxu0 0.0
    %4063 = vmatpush1.msra.mxu0 0.0
    %4064 = vmatprep.subr.mxu0 0.0
    %4065 = vmatpush1.msra.mxu0 0.0
    %4066 = vmatprep.subr.mxu0 0.0
    %4067 = vmatpush1.msra.mxu0 0.0
    %4068 = vmatprep.subr.mxu0 0.0
    %4069 = vmatpush1.msra.mxu0 0.0
    %4070 = vmatprep.subr.mxu0 0.0
    %4071 = vmatpush1.msra.mxu0 0.0
    %4072 = vmatprep.subr.mxu0 0.0
    %4073 = vmatpush1.msra.mxu0 %v4034
    %4074 = vmatprep.subr.mxu0 0.0
    %4075 = vmatpush2.msra.mxu0 0.0
    %4076 = vmatprep.subr.mxu0 0.0
    %4077 = vmatpush2.msra.mxu0 0.0
    %4078 = vmatprep.subr.mxu0 0.0
    %4079 = vmatpush2.msra.mxu0 0.0
    %4080 = vmatprep.subr.mxu0 0.0
    %4081 = vmatpush2.msra.mxu0 0.0
    %4082 = vmatprep.subr.mxu0 0.0
    %4083 = vmatpush2.msra.mxu0 0.0
    %4084 = vmatprep.subr.mxu0 0.0
    %4085 = vmatpush2.msra.mxu0 0.0
    %4086 = vmatprep.subr.mxu0 0.0
    %4087 = vmatpush2.msra.mxu0 0.0
    %4088 = vmatprep.subr.mxu0 0.0
    %4089 = vmatpush2.msra.mxu0 0.0
    %4090 = vmatprep.subr.mxu0 0.0
    %4091 = vmatpush2.msra.mxu0 0.0
    %4092 = vmatprep.subr.mxu0 0.0
    %4093 = vmatpush2.msra.mxu0 0.0
    %4094 = vmatprep.subr.mxu0 0.0
    %4095 = vmatpush2.msra.mxu0 0.0
    %4096 = vmatprep.subr.mxu0 0.0
    %4097 = vmatpush2.msra.mxu0 0.0
    %4098 = vmatprep.subr.mxu0 0.0
    %4099 = vmatpush2.msra.mxu0 0.0
    %4100 = vmatprep.subr.mxu0 0.0
    %4101 = vmatpush2.msra.mxu0 0.0
    %4102 = vmatprep.subr.mxu0 0.0
    %4103 = vmatpush2.msra.mxu0 0.0
    %4104 = vmatprep.subr.mxu0 0.0
    %4105 = vmatpush2.msra.mxu0 0.0
    %4106 = vmatprep.mubr.f32.mxu0 0.0
    %4107 = vmatmul.mubr.f32.gmra.mxu0 %v4037
    %v4108 = vpop.f32.mrf.mxu0
    %v4109 = vadd.f32 0.0, %v4108
    %v4110 = vpop.f32.mrf.mxu0
    %4111 = vmatprep.mubr.f32.mxu0 0.0
    %4112 = vmatmul.mubr.f32.gmra.mxu0 %v4040
    %v4113 = vpop.f32.mrf.mxu0
    %v4114 = vadd.f32 0.0, %v4113
    %v4115 = vpop.f32.mrf.mxu0
    %4116 = vdwg.mxu0
    %v4117 = vadd.f32 %v3824, %v4109
    %v4118 = vadd.f32 %v3829, %v4114
    %4119 = vrot.lane.b32.xlu0 %v3258, 40
    %v4120 = vpop.permute.xlu0 %4119
    %4121 = vrot.lane.b32.xlu0 %v3263, 40
    %v4122 = vpop.permute.xlu0 %4121
    %4123 = vrot.lane.b32.xlu0 %v3258, 72
    %v4124 = vpop.permute.xlu0 %4123
    %4125 = vrot.lane.b32.xlu0 %v3263, 72
    %v4126 = vpop.permute.xlu0 %4125
    %v4127 = vsel %vm175, %v4120, 0
    %v4129 = vsel %vm175, %v4122, 0
    %v4131 = vsel %vm175, %v4124, 0
    %v4133 = vsel %vm175, %v4126, 0
    %4135 = vmatprep.subr.mxu0 0.0
    %4136 = vmatpush1.xpose.msra.mxu0 0.0
    %4137 = vmatprep.subr.mxu0 0.0
    %4138 = vmatpush1.xpose.msra.mxu0 0.0
    %4139 = vmatprep.subr.mxu0 0.0
    %4140 = vmatpush1.xpose.msra.mxu0 0.0
    %4141 = vmatprep.subr.mxu0 0.0
    %4142 = vmatpush1.xpose.msra.mxu0 0.0
    %4143 = vmatprep.subr.mxu0 0.0
    %4144 = vmatpush1.xpose.msra.mxu0 0.0
    %4145 = vmatprep.subr.mxu0 0.0
    %4146 = vmatpush1.xpose.msra.mxu0 0.0
    %4147 = vmatprep.subr.mxu0 0.0
    %4148 = vmatpush1.xpose.msra.mxu0 0.0
    %4149 = vmatprep.subr.mxu0 0.0
    %4150 = vmatpush1.xpose.msra.mxu0 0.0
    %4151 = vmatprep.subr.mxu0 0.0
    %4152 = vmatpush1.xpose.msra.mxu0 0.0
    %4153 = vmatprep.subr.mxu0 0.0
    %4154 = vmatpush1.xpose.msra.mxu0 0.0
    %4155 = vmatprep.subr.mxu0 0.0
    %4156 = vmatpush1.xpose.msra.mxu0 0.0
    %4157 = vmatprep.subr.mxu0 0.0
    %4158 = vmatpush1.xpose.msra.mxu0 0.0
    %4159 = vmatprep.subr.mxu0 0.0
    %4160 = vmatpush1.xpose.msra.mxu0 0.0
    %4161 = vmatprep.subr.mxu0 0.0
    %4162 = vmatpush1.xpose.msra.mxu0 0.0
    %4163 = vmatprep.subr.mxu0 0.0
    %4164 = vmatpush1.xpose.msra.mxu0 %v4133
    %4165 = vmatprep.subr.mxu0 0.0
    %4166 = vmatpush1.xpose.msra.mxu0 %v4131
    %4167 = vmatprep.subr.mxu0 0.0
    %4168 = vmatpush2.xpose.msra.mxu0 0.0
    %4169 = vmatprep.subr.mxu0 0.0
    %4170 = vmatpush2.xpose.msra.mxu0 0.0
    %4171 = vmatprep.subr.mxu0 0.0
    %4172 = vmatpush2.xpose.msra.mxu0 0.0
    %4173 = vmatprep.subr.mxu0 0.0
    %4174 = vmatpush2.xpose.msra.mxu0 0.0
    %4175 = vmatprep.subr.mxu0 0.0
    %4176 = vmatpush2.xpose.msra.mxu0 0.0
    %4177 = vmatprep.subr.mxu0 0.0
    %4178 = vmatpush2.xpose.msra.mxu0 0.0
    %4179 = vmatprep.subr.mxu0 0.0
    %4180 = vmatpush2.xpose.msra.mxu0 0.0
    %4181 = vmatprep.subr.mxu0 0.0
    %4182 = vmatpush2.xpose.msra.mxu0 0.0
    %4183 = vmatprep.subr.mxu0 0.0
    %4184 = vmatpush2.xpose.msra.mxu0 0.0
    %4185 = vmatprep.subr.mxu0 0.0
    %4186 = vmatpush2.xpose.msra.mxu0 0.0
    %4187 = vmatprep.subr.mxu0 0.0
    %4188 = vmatpush2.xpose.msra.mxu0 0.0
    %4189 = vmatprep.subr.mxu0 0.0
    %4190 = vmatpush2.xpose.msra.mxu0 0.0
    %4191 = vmatprep.subr.mxu0 0.0
    %4192 = vmatpush2.xpose.msra.mxu0 0.0
    %4193 = vmatprep.subr.mxu0 0.0
    %4194 = vmatpush2.xpose.msra.mxu0 0.0
    %4195 = vmatprep.subr.mxu0 0.0
    %4196 = vmatpush2.xpose.msra.mxu0 0.0
    %4197 = vmatprep.subr.mxu0 0.0
    %4198 = vmatpush2.xpose.msra.mxu0 0.0
    %4199 = vmatprep.mubr.f32.mxu0 0.0
    %4200 = vmatmul.mubr.f32.gmra.mxu0 %v4127
    %v4201 = vpop.f32.mrf.mxu0
    %v4202 = vadd.f32 %v64, %v4201
    %v4203 = vpop.f32.mrf.mxu0
    %4204 = vmatprep.mubr.f32.mxu0 0.0
    %4205 = vmatmul.mubr.f32.gmra.mxu0 %v4129
    %v4206 = vpop.f32.mrf.mxu0
    %v4207 = vadd.f32 %v65, %v4206
    %v4208 = vpop.f32.mrf.mxu0
    %4209 = vdwg.mxu0
    %v4210 = vsel %vm259, %v4202, -inf
    %4211 = vmax.xlane.f32.xlu0 %v4210
    %v4212 = vpop.xlane.xlu0 %4211
    %v4213 = vsel %vm259, %v4207, -inf
    %4214 = vmax.xlane.f32.xlu0 %v4213
    %v4215 = vpop.xlane.xlu0 %4214
    %v4216 = vsub.f32 %v4202, %v4212
    %v4217 = vsub.f32 %v4207, %v4215
    %v4218 = vmul.f32 %v4216, 1.442695
    %v4219 = vpow.pop %v4218
    %v4220 = vmul.f32 %v4217, 1.442695
    %v4221 = vpow.pop %v4220
    %v4222 = vsel %vm259, %v4219, 0.0
    %4223 = vadd.xlane.f32.xlu0 %v4222
    %v4224 = vpop.xlane.xlu0 %4223
    %v4225 = vsel %vm259, %v4221, 0.0
    %4226 = vadd.xlane.f32.xlu0 %v4225
    %v4227 = vpop.xlane.xlu0 %4226
    %v4228 = vrcp.pop %v4224
    %v4229 = vrcp.pop %v4227
    %v4230 = vmul.f32 %v4219, %v4228
    %v4231 = vmul.f32 %v4221, %v4229
    %4232 = vrot.lane.b32.xlu0 %v3258, 104
    %v4233 = vpop.permute.xlu0 %4232
    %4234 = vrot.lane.b32.xlu0 %v3263, 104
    %v4235 = vpop.permute.xlu0 %4234
    %v4239 = vsel %vm259, %v4230, 0
    %v4242 = vsel %vm259, %v4231, 0
    %4244 = vmatprep.subr.mxu0 0.0
    %4245 = vmatpush1.msra.mxu0 0.0
    %4246 = vmatprep.subr.mxu0 0.0
    %4247 = vmatpush1.msra.mxu0 0.0
    %4248 = vmatprep.subr.mxu0 0.0
    %4249 = vmatpush1.msra.mxu0 0.0
    %4250 = vmatprep.subr.mxu0 0.0
    %4251 = vmatpush1.msra.mxu0 0.0
    %4252 = vmatprep.subr.mxu0 0.0
    %4253 = vmatpush1.msra.mxu0 0.0
    %4254 = vmatprep.subr.mxu0 0.0
    %4255 = vmatpush1.msra.mxu0 0.0
    %4256 = vmatprep.subr.mxu0 0.0
    %4257 = vmatpush1.msra.mxu0 0.0
    %4258 = vmatprep.subr.mxu0 0.0
    %4259 = vmatpush1.msra.mxu0 0.0
    %4260 = vmatprep.subr.mxu0 0.0
    %4261 = vmatpush1.msra.mxu0 0.0
    %4262 = vmatprep.subr.mxu0 0.0
    %4263 = vmatpush1.msra.mxu0 0.0
    %4264 = vmatprep.subr.mxu0 0.0
    %4265 = vmatpush1.msra.mxu0 0.0
    %4266 = vmatprep.subr.mxu0 0.0
    %4267 = vmatpush1.msra.mxu0 0.0
    %4268 = vmatprep.subr.mxu0 0.0
    %4269 = vmatpush1.msra.mxu0 0.0
    %4270 = vmatprep.subr.mxu0 0.0
    %4271 = vmatpush1.msra.mxu0 0.0
    %4272 = vmatprep.subr.mxu0 0.0
    %4273 = vmatpush1.msra.mxu0 %v4235
    %4274 = vmatprep.subr.mxu0 0.0
    %4275 = vmatpush1.msra.mxu0 %v4233
    %4276 = vmatprep.subr.mxu0 0.0
    %4277 = vmatpush2.msra.mxu0 0.0
    %4278 = vmatprep.subr.mxu0 0.0
    %4279 = vmatpush2.msra.mxu0 0.0
    %4280 = vmatprep.subr.mxu0 0.0
    %4281 = vmatpush2.msra.mxu0 0.0
    %4282 = vmatprep.subr.mxu0 0.0
    %4283 = vmatpush2.msra.mxu0 0.0
    %4284 = vmatprep.subr.mxu0 0.0
    %4285 = vmatpush2.msra.mxu0 0.0
    %4286 = vmatprep.subr.mxu0 0.0
    %4287 = vmatpush2.msra.mxu0 0.0
    %4288 = vmatprep.subr.mxu0 0.0
    %4289 = vmatpush2.msra.mxu0 0.0
    %4290 = vmatprep.subr.mxu0 0.0
    %4291 = vmatpush2.msra.mxu0 0.0
    %4292 = vmatprep.subr.mxu0 0.0
    %4293 = vmatpush2.msra.mxu0 0.0
    %4294 = vmatprep.subr.mxu0 0.0
    %4295 = vmatpush2.msra.mxu0 0.0
    %4296 = vmatprep.subr.mxu0 0.0
    %4297 = vmatpush2.msra.mxu0 0.0
    %4298 = vmatprep.subr.mxu0 0.0
    %4299 = vmatpush2.msra.mxu0 0.0
    %4300 = vmatprep.subr.mxu0 0.0
    %4301 = vmatpush2.msra.mxu0 0.0
    %4302 = vmatprep.subr.mxu0 0.0
    %4303 = vmatpush2.msra.mxu0 0.0
    %4304 = vmatprep.subr.mxu0 0.0
    %4305 = vmatpush2.msra.mxu0 0.0
    %4306 = vmatprep.subr.mxu0 0.0
    %4307 = vmatpush2.msra.mxu0 0.0
    %4308 = vmatprep.mubr.f32.mxu0 0.0
    %4309 = vmatmul.mubr.f32.gmra.mxu0 %v4239
    %v4310 = vpop.f32.mrf.mxu0
    %v4311 = vadd.f32 0.0, %v4310
    %v4312 = vpop.f32.mrf.mxu0
    %4313 = vmatprep.mubr.f32.mxu0 0.0
    %4314 = vmatmul.mubr.f32.gmra.mxu0 %v4242
    %v4315 = vpop.f32.mrf.mxu0
    %v4316 = vadd.f32 0.0, %v4315
    %v4317 = vpop.f32.mrf.mxu0
    %4318 = vdwg.mxu0
    %4320 = vrot.lane.b32.xlu0 %v3167, 32
    %v4321 = vpop.permute.xlu0 %4320
    %v4324 = vsel %vm175, %v4311, 0
    %v4327 = vsel %vm175, %v4316, 0
    %4329 = vmatprep.subr.mxu0 0.0
    %4330 = vmatpush1.msra.mxu0 0.0
    %4331 = vmatprep.subr.mxu0 0.0
    %4332 = vmatpush1.msra.mxu0 0.0
    %4333 = vmatprep.subr.mxu0 0.0
    %4334 = vmatpush1.msra.mxu0 0.0
    %4335 = vmatprep.subr.mxu0 0.0
    %4336 = vmatpush1.msra.mxu0 0.0
    %4337 = vmatprep.subr.mxu0 0.0
    %4338 = vmatpush1.msra.mxu0 0.0
    %4339 = vmatprep.subr.mxu0 0.0
    %4340 = vmatpush1.msra.mxu0 0.0
    %4341 = vmatprep.subr.mxu0 0.0
    %4342 = vmatpush1.msra.mxu0 0.0
    %4343 = vmatprep.subr.mxu0 0.0
    %4344 = vmatpush1.msra.mxu0 0.0
    %4345 = vmatprep.subr.mxu0 0.0
    %4346 = vmatpush1.msra.mxu0 0.0
    %4347 = vmatprep.subr.mxu0 0.0
    %4348 = vmatpush1.msra.mxu0 0.0
    %4349 = vmatprep.subr.mxu0 0.0
    %4350 = vmatpush1.msra.mxu0 0.0
    %4351 = vmatprep.subr.mxu0 0.0
    %4352 = vmatpush1.msra.mxu0 0.0
    %4353 = vmatprep.subr.mxu0 0.0
    %4354 = vmatpush1.msra.mxu0 0.0
    %4355 = vmatprep.subr.mxu0 0.0
    %4356 = vmatpush1.msra.mxu0 0.0
    %4357 = vmatprep.subr.mxu0 0.0
    %4358 = vmatpush1.msra.mxu0 0.0
    %4359 = vmatprep.subr.mxu0 0.0
    %4360 = vmatpush1.msra.mxu0 %v4321
    %4361 = vmatprep.subr.mxu0 0.0
    %4362 = vmatpush2.msra.mxu0 0.0
    %4363 = vmatprep.subr.mxu0 0.0
    %4364 = vmatpush2.msra.mxu0 0.0
    %4365 = vmatprep.subr.mxu0 0.0
    %4366 = vmatpush2.msra.mxu0 0.0
    %4367 = vmatprep.subr.mxu0 0.0
    %4368 = vmatpush2.msra.mxu0 0.0
    %4369 = vmatprep.subr.mxu0 0.0
    %4370 = vmatpush2.msra.mxu0 0.0
    %4371 = vmatprep.subr.mxu0 0.0
    %4372 = vmatpush2.msra.mxu0 0.0
    %4373 = vmatprep.subr.mxu0 0.0
    %4374 = vmatpush2.msra.mxu0 0.0
    %4375 = vmatprep.subr.mxu0 0.0
    %4376 = vmatpush2.msra.mxu0 0.0
    %4377 = vmatprep.subr.mxu0 0.0
    %4378 = vmatpush2.msra.mxu0 0.0
    %4379 = vmatprep.subr.mxu0 0.0
    %4380 = vmatpush2.msra.mxu0 0.0
    %4381 = vmatprep.subr.mxu0 0.0
    %4382 = vmatpush2.msra.mxu0 0.0
    %4383 = vmatprep.subr.mxu0 0.0
    %4384 = vmatpush2.msra.mxu0 0.0
    %4385 = vmatprep.subr.mxu0 0.0
    %4386 = vmatpush2.msra.mxu0 0.0
    %4387 = vmatprep.subr.mxu0 0.0
    %4388 = vmatpush2.msra.mxu0 0.0
    %4389 = vmatprep.subr.mxu0 0.0
    %4390 = vmatpush2.msra.mxu0 0.0
    %4391 = vmatprep.subr.mxu0 0.0
    %4392 = vmatpush2.msra.mxu0 0.0
    %4393 = vmatprep.mubr.f32.mxu0 0.0
    %4394 = vmatmul.mubr.f32.gmra.mxu0 %v4324
    %v4395 = vpop.f32.mrf.mxu0
    %v4396 = vadd.f32 0.0, %v4395
    %v4397 = vpop.f32.mrf.mxu0
    %4398 = vmatprep.mubr.f32.mxu0 0.0
    %4399 = vmatmul.mubr.f32.gmra.mxu0 %v4327
    %v4400 = vpop.f32.mrf.mxu0
    %v4401 = vadd.f32 0.0, %v4400
    %v4402 = vpop.f32.mrf.mxu0
    %4403 = vdwg.mxu0
    %v4404 = vadd.f32 %v4117, %v4396
    %v4405 = vadd.f32 %v4118, %v4401
    %4407 = vrot.lane.b32.xlu0 %v3184, 32
    %v4408 = vpop.permute.xlu0 %4407
    %v4410 = vadd.f32 %v4404, %v4408
    %v4411 = vadd.f32 %v4405, %v4408
    %v4412 = vadd.f32 %v4410, %v60
    %v4413 = vadd.f32 %v4411, %v61
    %v4414 = vsel %vm83, %v4412, 0.0
    %4415 = vadd.xlane.f32.xlu0 %v4414
    %v4416 = vpop.xlane.xlu0 %4415
    %v4417 = vsel %vm83, %v4413, 0.0
    %4418 = vadd.xlane.f32.xlu0 %v4417
    %v4419 = vpop.xlane.xlu0 %4418
    %v4420 = vmul.f32 %v4416, %v1321
    %v4421 = vmul.f32 %v4419, %v1321
    %v4422 = vsub.f32 %v4412, %v4420
    %v4423 = vsub.f32 %v4413, %v4421
    %v4424 = vmul.f32 %v4422, %v4422
    %v4425 = vmul.f32 %v4423, %v4423
    %v4426 = vsel %vm83, %v4424, 0.0
    %4427 = vadd.xlane.f32.xlu0 %v4426
    %v4428 = vpop.xlane.xlu0 %4427
    %v4429 = vsel %vm83, %v4425, 0.0
    %4430 = vadd.xlane.f32.xlu0 %v4429
    %v4431 = vpop.xlane.xlu0 %4430
    %v4432 = vmul.f32 %v4428, 0.032258064
    %v4433 = vmul.f32 %v4431, 0.032258064
    %v4434 = vrsqrt.pop %v4432
    %v4435 = vmul.f32 %v4432, %v4434
    %vm4436 = vcmp.eq.f32.partialorder %v4432, inf
    %v4437 = vsel %vm4436, %v4432, %v4435
    %vm4438 = vcmp.eq.f32.partialorder %v4432, 0.0
    %v4439 = vand.u32 %v4432, 2147483648
    %v4440 = vsel %vm4438, %v4439, %v4437
    %v4441 = vrsqrt.pop %v4433
    %v4442 = vmul.f32 %v4433, %v4441
    %vm4443 = vcmp.eq.f32.partialorder %v4433, inf
    %v4444 = vsel %vm4443, %v4433, %v4442
    %vm4445 = vcmp.eq.f32.partialorder %v4433, 0.0
    %v4446 = vand.u32 %v4433, 2147483648
    %v4447 = vsel %vm4445, %v4446, %v4444
    %v4448 = vadd.f32 %v4440, 1e-06
    %v4449 = vadd.f32 %v4447, 1e-06
    %v4450 = vrcp.pop %v4448
    %v4451 = vrcp.pop %v4449
    %v4452 = vlaneseq
    %v4453 = vshrl.u32 %v4452, 7
    %v4454 = vsub.s32 0, %v4453
    %v4455 = vrot.slane %v3179, %v4454
    %v4456 = vmul.f32 %v4455, %v4422
    %v4457 = vmul.f32 %v4455, %v4423
    %v4458 = vmul.f32 %v4456, %v4450
    %v4459 = vmul.f32 %v4457, %v4451
    %4461 = vrot.lane.b32.xlu0 %v4455, 96
    %v4462 = vpop.permute.xlu0 %4461
    %v4464 = vadd.f32 %v4458, %v4462
    %v4465 = vadd.f32 %v4459, %v4462
    %v4466 = vlaneseq
    %v4467 = vshrl.u32 %v4466, 7
    %v4468 = vsub.s32 0, %v4467
    %v4469 = vrot.slane %v3177, %v4468
    %4472 = vrot.lane.b32.xlu0 %v3162, 64
    %v4473 = vpop.permute.xlu0 %4472
    %4474 = vrot.lane.b32.xlu0 %v3163, 64
    %v4475 = vpop.permute.xlu0 %4474
    %v4476 = vsel %vm83, %v4473, 0
    %v4478 = vsel %vm83, %v4475, 0
    %4480 = vmatprep.subr.mxu0 0.0
    %4481 = vmatpush1.msra.mxu0 0.0
    %4482 = vmatprep.subr.mxu0 0.0
    %4483 = vmatpush1.msra.mxu0 0.0
    %4484 = vmatprep.subr.mxu0 0.0
    %4485 = vmatpush1.msra.mxu0 0.0
    %4486 = vmatprep.subr.mxu0 0.0
    %4487 = vmatpush1.msra.mxu0 0.0
    %4488 = vmatprep.subr.mxu0 0.0
    %4489 = vmatpush1.msra.mxu0 0.0
    %4490 = vmatprep.subr.mxu0 0.0
    %4491 = vmatpush1.msra.mxu0 0.0
    %4492 = vmatprep.subr.mxu0 0.0
    %4493 = vmatpush1.msra.mxu0 0.0
    %4494 = vmatprep.subr.mxu0 0.0
    %4495 = vmatpush1.msra.mxu0 0.0
    %4496 = vmatprep.subr.mxu0 0.0
    %4497 = vmatpush1.msra.mxu0 0.0
    %4498 = vmatprep.subr.mxu0 0.0
    %4499 = vmatpush1.msra.mxu0 0.0
    %4500 = vmatprep.subr.mxu0 0.0
    %4501 = vmatpush1.msra.mxu0 0.0
    %4502 = vmatprep.subr.mxu0 0.0
    %4503 = vmatpush1.msra.mxu0 0.0
    %4504 = vmatprep.subr.mxu0 0.0
    %4505 = vmatpush1.msra.mxu0 %v3171
    %4506 = vmatprep.subr.mxu0 0.0
    %4507 = vmatpush1.msra.mxu0 %v3170
    %4508 = vmatprep.subr.mxu0 0.0
    %4509 = vmatpush1.msra.mxu0 %v3169
    %4510 = vmatprep.subr.mxu0 0.0
    %4511 = vmatpush1.msra.mxu0 %v3168
    %4512 = vmatprep.subr.mxu0 0.0
    %4513 = vmatpush2.msra.mxu0 0.0
    %4514 = vmatprep.subr.mxu0 0.0
    %4515 = vmatpush2.msra.mxu0 0.0
    %4516 = vmatprep.subr.mxu0 0.0
    %4517 = vmatpush2.msra.mxu0 0.0
    %4518 = vmatprep.subr.mxu0 0.0
    %4519 = vmatpush2.msra.mxu0 0.0
    %4520 = vmatprep.subr.mxu0 0.0
    %4521 = vmatpush2.msra.mxu0 0.0
    %4522 = vmatprep.subr.mxu0 0.0
    %4523 = vmatpush2.msra.mxu0 0.0
    %4524 = vmatprep.subr.mxu0 0.0
    %4525 = vmatpush2.msra.mxu0 0.0
    %4526 = vmatprep.subr.mxu0 0.0
    %4527 = vmatpush2.msra.mxu0 0.0
    %4528 = vmatprep.subr.mxu0 0.0
    %4529 = vmatpush2.msra.mxu0 0.0
    %4530 = vmatprep.subr.mxu0 0.0
    %4531 = vmatpush2.msra.mxu0 0.0
    %4532 = vmatprep.subr.mxu0 0.0
    %4533 = vmatpush2.msra.mxu0 0.0
    %4534 = vmatprep.subr.mxu0 0.0
    %4535 = vmatpush2.msra.mxu0 0.0
    %4536 = vmatprep.subr.mxu0 0.0
    %4537 = vmatpush2.msra.mxu0 0.0
    %4538 = vmatprep.subr.mxu0 0.0
    %4539 = vmatpush2.msra.mxu0 0.0
    %4540 = vmatprep.subr.mxu0 0.0
    %4541 = vmatpush2.msra.mxu0 0.0
    %4542 = vmatprep.subr.mxu0 0.0
    %4543 = vmatpush2.msra.mxu0 0.0
    %4544 = vmatprep.mubr.f32.mxu0 0.0
    %4545 = vmatmul.mubr.f32.gmra.mxu0 %v4476
    %v4546 = vpop.f32.mrf.mxu0
    %v4547 = vadd.f32 %v4469, %v4546
    %v4548 = vpop.f32.mrf.mxu0
    %4549 = vmatprep.mubr.f32.mxu0 0.0
    %4550 = vmatmul.mubr.f32.gmra.mxu0 %v4478
    %v4551 = vpop.f32.mrf.mxu0
    %v4552 = vadd.f32 %v4469, %v4551
    %v4553 = vpop.f32.mrf.mxu0
    %4554 = vdwg.mxu0
    %4559 = vrot.lane.b32.xlu0 %v3168, 64
    %v4560 = vpop.permute.xlu0 %4559
    %4561 = vrot.lane.b32.xlu0 %v3169, 64
    %v4562 = vpop.permute.xlu0 %4561
    %4563 = vrot.lane.b32.xlu0 %v3170, 64
    %v4564 = vpop.permute.xlu0 %4563
    %4565 = vrot.lane.b32.xlu0 %v3171, 64
    %v4566 = vpop.permute.xlu0 %4565
    %4572 = vrot.lane.b32.xlu0 %v4469, 64
    %v4573 = vpop.permute.xlu0 %4572
    %v4576 = vsel %vm83, %v4464, 0
    %v4579 = vsel %vm83, %v4465, 0
    %4581 = vmatprep.subr.mxu0 0.0
    %4582 = vmatpush1.msra.mxu0 0.0
    %4583 = vmatprep.subr.mxu0 0.0
    %4584 = vmatpush1.msra.mxu0 0.0
    %4585 = vmatprep.subr.mxu0 0.0
    %4586 = vmatpush1.msra.mxu0 0.0
    %4587 = vmatprep.subr.mxu0 0.0
    %4588 = vmatpush1.msra.mxu0 0.0
    %4589 = vmatprep.subr.mxu0 0.0
    %4590 = vmatpush1.msra.mxu0 0.0
    %4591 = vmatprep.subr.mxu0 0.0
    %4592 = vmatpush1.msra.mxu0 0.0
    %4593 = vmatprep.subr.mxu0 0.0
    %4594 = vmatpush1.msra.mxu0 0.0
    %4595 = vmatprep.subr.mxu0 0.0
    %4596 = vmatpush1.msra.mxu0 0.0
    %4597 = vmatprep.subr.mxu0 0.0
    %4598 = vmatpush1.msra.mxu0 0.0
    %4599 = vmatprep.subr.mxu0 0.0
    %4600 = vmatpush1.msra.mxu0 0.0
    %4601 = vmatprep.subr.mxu0 0.0
    %4602 = vmatpush1.msra.mxu0 0.0
    %4603 = vmatprep.subr.mxu0 0.0
    %4604 = vmatpush1.msra.mxu0 0.0
    %4605 = vmatprep.subr.mxu0 0.0
    %4606 = vmatpush1.msra.mxu0 %v4566
    %4607 = vmatprep.subr.mxu0 0.0
    %4608 = vmatpush1.msra.mxu0 %v4564
    %4609 = vmatprep.subr.mxu0 0.0
    %4610 = vmatpush1.msra.mxu0 %v4562
    %4611 = vmatprep.subr.mxu0 0.0
    %4612 = vmatpush1.msra.mxu0 %v4560
    %4613 = vmatprep.subr.mxu0 0.0
    %4614 = vmatpush2.msra.mxu0 0.0
    %4615 = vmatprep.subr.mxu0 0.0
    %4616 = vmatpush2.msra.mxu0 0.0
    %4617 = vmatprep.subr.mxu0 0.0
    %4618 = vmatpush2.msra.mxu0 0.0
    %4619 = vmatprep.subr.mxu0 0.0
    %4620 = vmatpush2.msra.mxu0 0.0
    %4621 = vmatprep.subr.mxu0 0.0
    %4622 = vmatpush2.msra.mxu0 0.0
    %4623 = vmatprep.subr.mxu0 0.0
    %4624 = vmatpush2.msra.mxu0 0.0
    %4625 = vmatprep.subr.mxu0 0.0
    %4626 = vmatpush2.msra.mxu0 0.0
    %4627 = vmatprep.subr.mxu0 0.0
    %4628 = vmatpush2.msra.mxu0 0.0
    %4629 = vmatprep.subr.mxu0 0.0
    %4630 = vmatpush2.msra.mxu0 0.0
    %4631 = vmatprep.subr.mxu0 0.0
    %4632 = vmatpush2.msra.mxu0 0.0
    %4633 = vmatprep.subr.mxu0 0.0
    %4634 = vmatpush2.msra.mxu0 0.0
    %4635 = vmatprep.subr.mxu0 0.0
    %4636 = vmatpush2.msra.mxu0 0.0
    %4637 = vmatprep.subr.mxu0 0.0
    %4638 = vmatpush2.msra.mxu0 0.0
    %4639 = vmatprep.subr.mxu0 0.0
    %4640 = vmatpush2.msra.mxu0 0.0
    %4641 = vmatprep.subr.mxu0 0.0
    %4642 = vmatpush2.msra.mxu0 0.0
    %4643 = vmatprep.subr.mxu0 0.0
    %4644 = vmatpush2.msra.mxu0 0.0
    %4645 = vmatprep.mubr.f32.mxu0 0.0
    %4646 = vmatmul.mubr.f32.gmra.mxu0 %v4576
    %v4647 = vpop.f32.mrf.mxu0
    %v4648 = vadd.f32 %v4573, %v4647
    %v4649 = vpop.f32.mrf.mxu0
    %4650 = vmatprep.mubr.f32.mxu0 0.0
    %4651 = vmatmul.mubr.f32.gmra.mxu0 %v4579
    %v4652 = vpop.f32.mrf.mxu0
    %v4653 = vadd.f32 %v4573, %v4652
    %v4654 = vpop.f32.mrf.mxu0
    %4655 = vdwg.mxu0
    %4658 = vrot.lane.b32.xlu0 %v4547, 96
    %v4659 = vpop.permute.xlu0 %4658
    %4660 = vrot.lane.b32.xlu0 %v4552, 96
    %v4661 = vpop.permute.xlu0 %4660
    %v4663 = vsel %vm175, %v4648, 0
    %v4666 = vsel %vm175, %v4653, 0
    %v4668 = vsel %vm175, %v4659, 0
    %v4670 = vsel %vm175, %v4661, 0
    %4672 = vmatprep.subr.mxu0 0.0
    %4673 = vmatpush1.xpose.msra.mxu0 0.0
    %4674 = vmatprep.subr.mxu0 0.0
    %4675 = vmatpush1.xpose.msra.mxu0 0.0
    %4676 = vmatprep.subr.mxu0 0.0
    %4677 = vmatpush1.xpose.msra.mxu0 0.0
    %4678 = vmatprep.subr.mxu0 0.0
    %4679 = vmatpush1.xpose.msra.mxu0 0.0
    %4680 = vmatprep.subr.mxu0 0.0
    %4681 = vmatpush1.xpose.msra.mxu0 0.0
    %4682 = vmatprep.subr.mxu0 0.0
    %4683 = vmatpush1.xpose.msra.mxu0 0.0
    %4684 = vmatprep.subr.mxu0 0.0
    %4685 = vmatpush1.xpose.msra.mxu0 0.0
    %4686 = vmatprep.subr.mxu0 0.0
    %4687 = vmatpush1.xpose.msra.mxu0 0.0
    %4688 = vmatprep.subr.mxu0 0.0
    %4689 = vmatpush1.xpose.msra.mxu0 0.0
    %4690 = vmatprep.subr.mxu0 0.0
    %4691 = vmatpush1.xpose.msra.mxu0 0.0
    %4692 = vmatprep.subr.mxu0 0.0
    %4693 = vmatpush1.xpose.msra.mxu0 0.0
    %4694 = vmatprep.subr.mxu0 0.0
    %4695 = vmatpush1.xpose.msra.mxu0 0.0
    %4696 = vmatprep.subr.mxu0 0.0
    %4697 = vmatpush1.xpose.msra.mxu0 0.0
    %4698 = vmatprep.subr.mxu0 0.0
    %4699 = vmatpush1.xpose.msra.mxu0 0.0
    %4700 = vmatprep.subr.mxu0 0.0
    %4701 = vmatpush1.xpose.msra.mxu0 %v4670
    %4702 = vmatprep.subr.mxu0 0.0
    %4703 = vmatpush1.xpose.msra.mxu0 %v4668
    %4704 = vmatprep.subr.mxu0 0.0
    %4705 = vmatpush2.xpose.msra.mxu0 0.0
    %4706 = vmatprep.subr.mxu0 0.0
    %4707 = vmatpush2.xpose.msra.mxu0 0.0
    %4708 = vmatprep.subr.mxu0 0.0
    %4709 = vmatpush2.xpose.msra.mxu0 0.0
    %4710 = vmatprep.subr.mxu0 0.0
    %4711 = vmatpush2.xpose.msra.mxu0 0.0
    %4712 = vmatprep.subr.mxu0 0.0
    %4713 = vmatpush2.xpose.msra.mxu0 0.0
    %4714 = vmatprep.subr.mxu0 0.0
    %4715 = vmatpush2.xpose.msra.mxu0 0.0
    %4716 = vmatprep.subr.mxu0 0.0
    %4717 = vmatpush2.xpose.msra.mxu0 0.0
    %4718 = vmatprep.subr.mxu0 0.0
    %4719 = vmatpush2.xpose.msra.mxu0 0.0
    %4720 = vmatprep.subr.mxu0 0.0
    %4721 = vmatpush2.xpose.msra.mxu0 0.0
    %4722 = vmatprep.subr.mxu0 0.0
    %4723 = vmatpush2.xpose.msra.mxu0 0.0
    %4724 = vmatprep.subr.mxu0 0.0
    %4725 = vmatpush2.xpose.msra.mxu0 0.0
    %4726 = vmatprep.subr.mxu0 0.0
    %4727 = vmatpush2.xpose.msra.mxu0 0.0
    %4728 = vmatprep.subr.mxu0 0.0
    %4729 = vmatpush2.xpose.msra.mxu0 0.0
    %4730 = vmatprep.subr.mxu0 0.0
    %4731 = vmatpush2.xpose.msra.mxu0 0.0
    %4732 = vmatprep.subr.mxu0 0.0
    %4733 = vmatpush2.xpose.msra.mxu0 0.0
    %4734 = vmatprep.subr.mxu0 0.0
    %4735 = vmatpush2.xpose.msra.mxu0 0.0
    %4736 = vmatprep.mubr.f32.mxu0 0.0
    %4737 = vmatmul.mubr.f32.gmra.mxu0 %v4663
    %v4738 = vpop.f32.mrf.mxu0
    %v4739 = vadd.f32 %v66, %v4738
    %v4740 = vpop.f32.mrf.mxu0
    %4741 = vmatprep.mubr.f32.mxu0 0.0
    %4742 = vmatmul.mubr.f32.gmra.mxu0 %v4666
    %v4743 = vpop.f32.mrf.mxu0
    %v4744 = vadd.f32 %v67, %v4743
    %v4745 = vpop.f32.mrf.mxu0
    %4746 = vdwg.mxu0
    %v4747 = vsel %vm259, %v4739, -inf
    %4748 = vmax.xlane.f32.xlu0 %v4747
    %v4749 = vpop.xlane.xlu0 %4748
    %v4750 = vsel %vm259, %v4744, -inf
    %4751 = vmax.xlane.f32.xlu0 %v4750
    %v4752 = vpop.xlane.xlu0 %4751
    %v4753 = vsub.f32 %v4739, %v4749
    %v4754 = vsub.f32 %v4744, %v4752
    %v4755 = vmul.f32 %v4753, 1.442695
    %v4756 = vpow.pop %v4755
    %v4757 = vmul.f32 %v4754, 1.442695
    %v4758 = vpow.pop %v4757
    %v4759 = vsel %vm259, %v4756, 0.0
    %4760 = vadd.xlane.f32.xlu0 %v4759
    %v4761 = vpop.xlane.xlu0 %4760
    %v4762 = vsel %vm259, %v4758, 0.0
    %4763 = vadd.xlane.f32.xlu0 %v4762
    %v4764 = vpop.xlane.xlu0 %4763
    %v4765 = vrcp.pop %v4761
    %v4766 = vrcp.pop %v4764
    %v4767 = vmul.f32 %v4756, %v4765
    %v4768 = vmul.f32 %v4758, %v4766
    %v4770 = vsel %vm259, %v4767, 0
    %v4773 = vsel %vm259, %v4768, 0
    %4775 = vmatprep.subr.mxu0 0.0
    %4776 = vmatpush1.msra.mxu0 0.0
    %4777 = vmatprep.subr.mxu0 0.0
    %4778 = vmatpush1.msra.mxu0 0.0
    %4779 = vmatprep.subr.mxu0 0.0
    %4780 = vmatpush1.msra.mxu0 0.0
    %4781 = vmatprep.subr.mxu0 0.0
    %4782 = vmatpush1.msra.mxu0 0.0
    %4783 = vmatprep.subr.mxu0 0.0
    %4784 = vmatpush1.msra.mxu0 0.0
    %4785 = vmatprep.subr.mxu0 0.0
    %4786 = vmatpush1.msra.mxu0 0.0
    %4787 = vmatprep.subr.mxu0 0.0
    %4788 = vmatpush1.msra.mxu0 0.0
    %4789 = vmatprep.subr.mxu0 0.0
    %4790 = vmatpush1.msra.mxu0 0.0
    %4791 = vmatprep.subr.mxu0 0.0
    %4792 = vmatpush1.msra.mxu0 0.0
    %4793 = vmatprep.subr.mxu0 0.0
    %4794 = vmatpush1.msra.mxu0 0.0
    %4795 = vmatprep.subr.mxu0 0.0
    %4796 = vmatpush1.msra.mxu0 0.0
    %4797 = vmatprep.subr.mxu0 0.0
    %4798 = vmatpush1.msra.mxu0 0.0
    %4799 = vmatprep.subr.mxu0 0.0
    %4800 = vmatpush1.msra.mxu0 0.0
    %4801 = vmatprep.subr.mxu0 0.0
    %4802 = vmatpush1.msra.mxu0 0.0
    %4803 = vmatprep.subr.mxu0 0.0
    %4804 = vmatpush1.msra.mxu0 %v4552
    %4805 = vmatprep.subr.mxu0 0.0
    %4806 = vmatpush1.msra.mxu0 %v4547
    %4807 = vmatprep.subr.mxu0 0.0
    %4808 = vmatpush2.msra.mxu0 0.0
    %4809 = vmatprep.subr.mxu0 0.0
    %4810 = vmatpush2.msra.mxu0 0.0
    %4811 = vmatprep.subr.mxu0 0.0
    %4812 = vmatpush2.msra.mxu0 0.0
    %4813 = vmatprep.subr.mxu0 0.0
    %4814 = vmatpush2.msra.mxu0 0.0
    %4815 = vmatprep.subr.mxu0 0.0
    %4816 = vmatpush2.msra.mxu0 0.0
    %4817 = vmatprep.subr.mxu0 0.0
    %4818 = vmatpush2.msra.mxu0 0.0
    %4819 = vmatprep.subr.mxu0 0.0
    %4820 = vmatpush2.msra.mxu0 0.0
    %4821 = vmatprep.subr.mxu0 0.0
    %4822 = vmatpush2.msra.mxu0 0.0
    %4823 = vmatprep.subr.mxu0 0.0
    %4824 = vmatpush2.msra.mxu0 0.0
    %4825 = vmatprep.subr.mxu0 0.0
    %4826 = vmatpush2.msra.mxu0 0.0
    %4827 = vmatprep.subr.mxu0 0.0
    %4828 = vmatpush2.msra.mxu0 0.0
    %4829 = vmatprep.subr.mxu0 0.0
    %4830 = vmatpush2.msra.mxu0 0.0
    %4831 = vmatprep.subr.mxu0 0.0
    %4832 = vmatpush2.msra.mxu0 0.0
    %4833 = vmatprep.subr.mxu0 0.0
    %4834 = vmatpush2.msra.mxu0 0.0
    %4835 = vmatprep.subr.mxu0 0.0
    %4836 = vmatpush2.msra.mxu0 0.0
    %4837 = vmatprep.subr.mxu0 0.0
    %4838 = vmatpush2.msra.mxu0 0.0
    %4839 = vmatprep.mubr.f32.mxu0 0.0
    %4840 = vmatmul.mubr.f32.gmra.mxu0 %v4770
    %v4841 = vpop.f32.mrf.mxu0
    %v4842 = vadd.f32 0.0, %v4841
    %v4843 = vpop.f32.mrf.mxu0
    %4844 = vmatprep.mubr.f32.mxu0 0.0
    %4845 = vmatmul.mubr.f32.gmra.mxu0 %v4773
    %v4846 = vpop.f32.mrf.mxu0
    %v4847 = vadd.f32 0.0, %v4846
    %v4848 = vpop.f32.mrf.mxu0
    %4849 = vdwg.mxu0
    %4850 = vrot.lane.b32.xlu0 %v4648, 120
    %v4851 = vpop.permute.xlu0 %4850
    %4852 = vrot.lane.b32.xlu0 %v4653, 120
    %v4853 = vpop.permute.xlu0 %4852
    %4854 = vrot.lane.b32.xlu0 %v4547, 88
    %v4855 = vpop.permute.xlu0 %4854
    %4856 = vrot.lane.b32.xlu0 %v4552, 88
    %v4857 = vpop.permute.xlu0 %4856
    %v4858 = vsel %vm175, %v4851, 0
    %v4860 = vsel %vm175, %v4853, 0
    %v4862 = vsel %vm175, %v4855, 0
    %v4864 = vsel %vm175, %v4857, 0
    %4866 = vmatprep.subr.mxu0 0.0
    %4867 = vmatpush1.xpose.msra.mxu0 0.0
    %4868 = vmatprep.subr.mxu0 0.0
    %4869 = vmatpush1.xpose.msra.mxu0 0.0
    %4870 = vmatprep.subr.mxu0 0.0
    %4871 = vmatpush1.xpose.msra.mxu0 0.0
    %4872 = vmatprep.subr.mxu0 0.0
    %4873 = vmatpush1.xpose.msra.mxu0 0.0
    %4874 = vmatprep.subr.mxu0 0.0
    %4875 = vmatpush1.xpose.msra.mxu0 0.0
    %4876 = vmatprep.subr.mxu0 0.0
    %4877 = vmatpush1.xpose.msra.mxu0 0.0
    %4878 = vmatprep.subr.mxu0 0.0
    %4879 = vmatpush1.xpose.msra.mxu0 0.0
    %4880 = vmatprep.subr.mxu0 0.0
    %4881 = vmatpush1.xpose.msra.mxu0 0.0
    %4882 = vmatprep.subr.mxu0 0.0
    %4883 = vmatpush1.xpose.msra.mxu0 0.0
    %4884 = vmatprep.subr.mxu0 0.0
    %4885 = vmatpush1.xpose.msra.mxu0 0.0
    %4886 = vmatprep.subr.mxu0 0.0
    %4887 = vmatpush1.xpose.msra.mxu0 0.0
    %4888 = vmatprep.subr.mxu0 0.0
    %4889 = vmatpush1.xpose.msra.mxu0 0.0
    %4890 = vmatprep.subr.mxu0 0.0
    %4891 = vmatpush1.xpose.msra.mxu0 0.0
    %4892 = vmatprep.subr.mxu0 0.0
    %4893 = vmatpush1.xpose.msra.mxu0 0.0
    %4894 = vmatprep.subr.mxu0 0.0
    %4895 = vmatpush1.xpose.msra.mxu0 %v4864
    %4896 = vmatprep.subr.mxu0 0.0
    %4897 = vmatpush1.xpose.msra.mxu0 %v4862
    %4898 = vmatprep.subr.mxu0 0.0
    %4899 = vmatpush2.xpose.msra.mxu0 0.0
    %4900 = vmatprep.subr.mxu0 0.0
    %4901 = vmatpush2.xpose.msra.mxu0 0.0
    %4902 = vmatprep.subr.mxu0 0.0
    %4903 = vmatpush2.xpose.msra.mxu0 0.0
    %4904 = vmatprep.subr.mxu0 0.0
    %4905 = vmatpush2.xpose.msra.mxu0 0.0
    %4906 = vmatprep.subr.mxu0 0.0
    %4907 = vmatpush2.xpose.msra.mxu0 0.0
    %4908 = vmatprep.subr.mxu0 0.0
    %4909 = vmatpush2.xpose.msra.mxu0 0.0
    %4910 = vmatprep.subr.mxu0 0.0
    %4911 = vmatpush2.xpose.msra.mxu0 0.0
    %4912 = vmatprep.subr.mxu0 0.0
    %4913 = vmatpush2.xpose.msra.mxu0 0.0
    %4914 = vmatprep.subr.mxu0 0.0
    %4915 = vmatpush2.xpose.msra.mxu0 0.0
    %4916 = vmatprep.subr.mxu0 0.0
    %4917 = vmatpush2.xpose.msra.mxu0 0.0
    %4918 = vmatprep.subr.mxu0 0.0
    %4919 = vmatpush2.xpose.msra.mxu0 0.0
    %4920 = vmatprep.subr.mxu0 0.0
    %4921 = vmatpush2.xpose.msra.mxu0 0.0
    %4922 = vmatprep.subr.mxu0 0.0
    %4923 = vmatpush2.xpose.msra.mxu0 0.0
    %4924 = vmatprep.subr.mxu0 0.0
    %4925 = vmatpush2.xpose.msra.mxu0 0.0
    %4926 = vmatprep.subr.mxu0 0.0
    %4927 = vmatpush2.xpose.msra.mxu0 0.0
    %4928 = vmatprep.subr.mxu0 0.0
    %4929 = vmatpush2.xpose.msra.mxu0 0.0
    %4930 = vmatprep.mubr.f32.mxu0 0.0
    %4931 = vmatmul.mubr.f32.gmra.mxu0 %v4858
    %v4932 = vpop.f32.mrf.mxu0
    %v4933 = vadd.f32 %v66, %v4932
    %v4934 = vpop.f32.mrf.mxu0
    %4935 = vmatprep.mubr.f32.mxu0 0.0
    %4936 = vmatmul.mubr.f32.gmra.mxu0 %v4860
    %v4937 = vpop.f32.mrf.mxu0
    %v4938 = vadd.f32 %v67, %v4937
    %v4939 = vpop.f32.mrf.mxu0
    %4940 = vdwg.mxu0
    %v4941 = vsel %vm259, %v4933, -inf
    %4942 = vmax.xlane.f32.xlu0 %v4941
    %v4943 = vpop.xlane.xlu0 %4942
    %v4944 = vsel %vm259, %v4938, -inf
    %4945 = vmax.xlane.f32.xlu0 %v4944
    %v4946 = vpop.xlane.xlu0 %4945
    %v4947 = vsub.f32 %v4933, %v4943
    %v4948 = vsub.f32 %v4938, %v4946
    %v4949 = vmul.f32 %v4947, 1.442695
    %v4950 = vpow.pop %v4949
    %v4951 = vmul.f32 %v4948, 1.442695
    %v4952 = vpow.pop %v4951
    %v4953 = vsel %vm259, %v4950, 0.0
    %4954 = vadd.xlane.f32.xlu0 %v4953
    %v4955 = vpop.xlane.xlu0 %4954
    %v4956 = vsel %vm259, %v4952, 0.0
    %4957 = vadd.xlane.f32.xlu0 %v4956
    %v4958 = vpop.xlane.xlu0 %4957
    %v4959 = vrcp.pop %v4955
    %v4960 = vrcp.pop %v4958
    %v4961 = vmul.f32 %v4950, %v4959
    %v4962 = vmul.f32 %v4952, %v4960
    %4963 = vrot.lane.b32.xlu0 %v4547, 120
    %v4964 = vpop.permute.xlu0 %4963
    %4965 = vrot.lane.b32.xlu0 %v4552, 120
    %v4966 = vpop.permute.xlu0 %4965
    %v4970 = vsel %vm259, %v4961, 0
    %v4973 = vsel %vm259, %v4962, 0
    %4975 = vmatprep.subr.mxu0 0.0
    %4976 = vmatpush1.msra.mxu0 0.0
    %4977 = vmatprep.subr.mxu0 0.0
    %4978 = vmatpush1.msra.mxu0 0.0
    %4979 = vmatprep.subr.mxu0 0.0
    %4980 = vmatpush1.msra.mxu0 0.0
    %4981 = vmatprep.subr.mxu0 0.0
    %4982 = vmatpush1.msra.mxu0 0.0
    %4983 = vmatprep.subr.mxu0 0.0
    %4984 = vmatpush1.msra.mxu0 0.0
    %4985 = vmatprep.subr.mxu0 0.0
    %4986 = vmatpush1.msra.mxu0 0.0
    %4987 = vmatprep.subr.mxu0 0.0
    %4988 = vmatpush1.msra.mxu0 0.0
    %4989 = vmatprep.subr.mxu0 0.0
    %4990 = vmatpush1.msra.mxu0 0.0
    %4991 = vmatprep.subr.mxu0 0.0
    %4992 = vmatpush1.msra.mxu0 0.0
    %4993 = vmatprep.subr.mxu0 0.0
    %4994 = vmatpush1.msra.mxu0 0.0
    %4995 = vmatprep.subr.mxu0 0.0
    %4996 = vmatpush1.msra.mxu0 0.0
    %4997 = vmatprep.subr.mxu0 0.0
    %4998 = vmatpush1.msra.mxu0 0.0
    %4999 = vmatprep.subr.mxu0 0.0
    %5000 = vmatpush1.msra.mxu0 0.0
    %5001 = vmatprep.subr.mxu0 0.0
    %5002 = vmatpush1.msra.mxu0 0.0
    %5003 = vmatprep.subr.mxu0 0.0
    %5004 = vmatpush1.msra.mxu0 %v4966
    %5005 = vmatprep.subr.mxu0 0.0
    %5006 = vmatpush1.msra.mxu0 %v4964
    %5007 = vmatprep.subr.mxu0 0.0
    %5008 = vmatpush2.msra.mxu0 0.0
    %5009 = vmatprep.subr.mxu0 0.0
    %5010 = vmatpush2.msra.mxu0 0.0
    %5011 = vmatprep.subr.mxu0 0.0
    %5012 = vmatpush2.msra.mxu0 0.0
    %5013 = vmatprep.subr.mxu0 0.0
    %5014 = vmatpush2.msra.mxu0 0.0
    %5015 = vmatprep.subr.mxu0 0.0
    %5016 = vmatpush2.msra.mxu0 0.0
    %5017 = vmatprep.subr.mxu0 0.0
    %5018 = vmatpush2.msra.mxu0 0.0
    %5019 = vmatprep.subr.mxu0 0.0
    %5020 = vmatpush2.msra.mxu0 0.0
    %5021 = vmatprep.subr.mxu0 0.0
    %5022 = vmatpush2.msra.mxu0 0.0
    %5023 = vmatprep.subr.mxu0 0.0
    %5024 = vmatpush2.msra.mxu0 0.0
    %5025 = vmatprep.subr.mxu0 0.0
    %5026 = vmatpush2.msra.mxu0 0.0
    %5027 = vmatprep.subr.mxu0 0.0
    %5028 = vmatpush2.msra.mxu0 0.0
    %5029 = vmatprep.subr.mxu0 0.0
    %5030 = vmatpush2.msra.mxu0 0.0
    %5031 = vmatprep.subr.mxu0 0.0
    %5032 = vmatpush2.msra.mxu0 0.0
    %5033 = vmatprep.subr.mxu0 0.0
    %5034 = vmatpush2.msra.mxu0 0.0
    %5035 = vmatprep.subr.mxu0 0.0
    %5036 = vmatpush2.msra.mxu0 0.0
    %5037 = vmatprep.subr.mxu0 0.0
    %5038 = vmatpush2.msra.mxu0 0.0
    %5039 = vmatprep.mubr.f32.mxu0 0.0
    %5040 = vmatmul.mubr.f32.gmra.mxu0 %v4970
    %v5041 = vpop.f32.mrf.mxu0
    %v5042 = vadd.f32 0.0, %v5041
    %v5043 = vpop.f32.mrf.mxu0
    %5044 = vmatprep.mubr.f32.mxu0 0.0
    %5045 = vmatmul.mubr.f32.gmra.mxu0 %v4973
    %v5046 = vpop.f32.mrf.mxu0
    %v5047 = vadd.f32 0.0, %v5046
    %v5048 = vpop.f32.mrf.mxu0
    %5049 = vdwg.mxu0
    %5050 = vrot.lane.b32.xlu0 %v3169, 32
    %v5051 = vpop.permute.xlu0 %5050
    %v5054 = vsel %vm175, %v5042, 0
    %v5057 = vsel %vm175, %v5047, 0
    %5059 = vmatprep.subr.mxu0 0.0
    %5060 = vmatpush1.msra.mxu0 0.0
    %5061 = vmatprep.subr.mxu0 0.0
    %5062 = vmatpush1.msra.mxu0 0.0
    %5063 = vmatprep.subr.mxu0 0.0
    %5064 = vmatpush1.msra.mxu0 0.0
    %5065 = vmatprep.subr.mxu0 0.0
    %5066 = vmatpush1.msra.mxu0 0.0
    %5067 = vmatprep.subr.mxu0 0.0
    %5068 = vmatpush1.msra.mxu0 0.0
    %5069 = vmatprep.subr.mxu0 0.0
    %5070 = vmatpush1.msra.mxu0 0.0
    %5071 = vmatprep.subr.mxu0 0.0
    %5072 = vmatpush1.msra.mxu0 0.0
    %5073 = vmatprep.subr.mxu0 0.0
    %5074 = vmatpush1.msra.mxu0 0.0
    %5075 = vmatprep.subr.mxu0 0.0
    %5076 = vmatpush1.msra.mxu0 0.0
    %5077 = vmatprep.subr.mxu0 0.0
    %5078 = vmatpush1.msra.mxu0 0.0
    %5079 = vmatprep.subr.mxu0 0.0
    %5080 = vmatpush1.msra.mxu0 0.0
    %5081 = vmatprep.subr.mxu0 0.0
    %5082 = vmatpush1.msra.mxu0 0.0
    %5083 = vmatprep.subr.mxu0 0.0
    %5084 = vmatpush1.msra.mxu0 0.0
    %5085 = vmatprep.subr.mxu0 0.0
    %5086 = vmatpush1.msra.mxu0 0.0
    %5087 = vmatprep.subr.mxu0 0.0
    %5088 = vmatpush1.msra.mxu0 0.0
    %5089 = vmatprep.subr.mxu0 0.0
    %5090 = vmatpush1.msra.mxu0 %v5051
    %5091 = vmatprep.subr.mxu0 0.0
    %5092 = vmatpush2.msra.mxu0 0.0
    %5093 = vmatprep.subr.mxu0 0.0
    %5094 = vmatpush2.msra.mxu0 0.0
    %5095 = vmatprep.subr.mxu0 0.0
    %5096 = vmatpush2.msra.mxu0 0.0
    %5097 = vmatprep.subr.mxu0 0.0
    %5098 = vmatpush2.msra.mxu0 0.0
    %5099 = vmatprep.subr.mxu0 0.0
    %5100 = vmatpush2.msra.mxu0 0.0
    %5101 = vmatprep.subr.mxu0 0.0
    %5102 = vmatpush2.msra.mxu0 0.0
    %5103 = vmatprep.subr.mxu0 0.0
    %5104 = vmatpush2.msra.mxu0 0.0
    %5105 = vmatprep.subr.mxu0 0.0
    %5106 = vmatpush2.msra.mxu0 0.0
    %5107 = vmatprep.subr.mxu0 0.0
    %5108 = vmatpush2.msra.mxu0 0.0
    %5109 = vmatprep.subr.mxu0 0.0
    %5110 = vmatpush2.msra.mxu0 0.0
    %5111 = vmatprep.subr.mxu0 0.0
    %5112 = vmatpush2.msra.mxu0 0.0
    %5113 = vmatprep.subr.mxu0 0.0
    %5114 = vmatpush2.msra.mxu0 0.0
    %5115 = vmatprep.subr.mxu0 0.0
    %5116 = vmatpush2.msra.mxu0 0.0
    %5117 = vmatprep.subr.mxu0 0.0
    %5118 = vmatpush2.msra.mxu0 0.0
    %5119 = vmatprep.subr.mxu0 0.0
    %5120 = vmatpush2.msra.mxu0 0.0
    %5121 = vmatprep.subr.mxu0 0.0
    %5122 = vmatpush2.msra.mxu0 0.0
    %5123 = vmatprep.mubr.f32.mxu0 0.0
    %5124 = vmatmul.mubr.f32.gmra.mxu0 %v5054
    %v5125 = vpop.f32.mrf.mxu0
    %v5126 = vadd.f32 0.0, %v5125
    %v5127 = vpop.f32.mrf.mxu0
    %5128 = vmatprep.mubr.f32.mxu0 0.0
    %5129 = vmatmul.mubr.f32.gmra.mxu0 %v5057
    %v5130 = vpop.f32.mrf.mxu0
    %v5131 = vadd.f32 0.0, %v5130
    %v5132 = vpop.f32.mrf.mxu0
    %5133 = vdwg.mxu0
    %5134 = vrot.lane.b32.xlu0 %v3168, 32
    %v5135 = vpop.permute.xlu0 %5134
    %v5138 = vsel %vm175, %v4842, 0
    %v5141 = vsel %vm175, %v4847, 0
    %5143 = vmatprep.subr.mxu0 0.0
    %5144 = vmatpush1.msra.mxu0 0.0
    %5145 = vmatprep.subr.mxu0 0.0
    %5146 = vmatpush1.msra.mxu0 0.0
    %5147 = vmatprep.subr.mxu0 0.0
    %5148 = vmatpush1.msra.mxu0 0.0
    %5149 = vmatprep.subr.mxu0 0.0
    %5150 = vmatpush1.msra.mxu0 0.0
    %5151 = vmatprep.subr.mxu0 0.0
    %5152 = vmatpush1.msra.mxu0 0.0
    %5153 = vmatprep.subr.mxu0 0.0
    %5154 = vmatpush1.msra.mxu0 0.0
    %5155 = vmatprep.subr.mxu0 0.0
    %5156 = vmatpush1.msra.mxu0 0.0
    %5157 = vmatprep.subr.mxu0 0.0
    %5158 = vmatpush1.msra.mxu0 0.0
    %5159 = vmatprep.subr.mxu0 0.0
    %5160 = vmatpush1.msra.mxu0 0.0
    %5161 = vmatprep.subr.mxu0 0.0
    %5162 = vmatpush1.msra.mxu0 0.0
    %5163 = vmatprep.subr.mxu0 0.0
    %5164 = vmatpush1.msra.mxu0 0.0
    %5165 = vmatprep.subr.mxu0 0.0
    %5166 = vmatpush1.msra.mxu0 0.0
    %5167 = vmatprep.subr.mxu0 0.0
    %5168 = vmatpush1.msra.mxu0 0.0
    %5169 = vmatprep.subr.mxu0 0.0
    %5170 = vmatpush1.msra.mxu0 0.0
    %5171 = vmatprep.subr.mxu0 0.0
    %5172 = vmatpush1.msra.mxu0 0.0
    %5173 = vmatprep.subr.mxu0 0.0
    %5174 = vmatpush1.msra.mxu0 %v5135
    %5175 = vmatprep.subr.mxu0 0.0
    %5176 = vmatpush2.msra.mxu0 0.0
    %5177 = vmatprep.subr.mxu0 0.0
    %5178 = vmatpush2.msra.mxu0 0.0
    %5179 = vmatprep.subr.mxu0 0.0
    %5180 = vmatpush2.msra.mxu0 0.0
    %5181 = vmatprep.subr.mxu0 0.0
    %5182 = vmatpush2.msra.mxu0 0.0
    %5183 = vmatprep.subr.mxu0 0.0
    %5184 = vmatpush2.msra.mxu0 0.0
    %5185 = vmatprep.subr.mxu0 0.0
    %5186 = vmatpush2.msra.mxu0 0.0
    %5187 = vmatprep.subr.mxu0 0.0
    %5188 = vmatpush2.msra.mxu0 0.0
    %5189 = vmatprep.subr.mxu0 0.0
    %5190 = vmatpush2.msra.mxu0 0.0
    %5191 = vmatprep.subr.mxu0 0.0
    %5192 = vmatpush2.msra.mxu0 0.0
    %5193 = vmatprep.subr.mxu0 0.0
    %5194 = vmatpush2.msra.mxu0 0.0
    %5195 = vmatprep.subr.mxu0 0.0
    %5196 = vmatpush2.msra.mxu0 0.0
    %5197 = vmatprep.subr.mxu0 0.0
    %5198 = vmatpush2.msra.mxu0 0.0
    %5199 = vmatprep.subr.mxu0 0.0
    %5200 = vmatpush2.msra.mxu0 0.0
    %5201 = vmatprep.subr.mxu0 0.0
    %5202 = vmatpush2.msra.mxu0 0.0
    %5203 = vmatprep.subr.mxu0 0.0
    %5204 = vmatpush2.msra.mxu0 0.0
    %5205 = vmatprep.subr.mxu0 0.0
    %5206 = vmatpush2.msra.mxu0 0.0
    %5207 = vmatprep.mubr.f32.mxu0 0.0
    %5208 = vmatmul.mubr.f32.gmra.mxu0 %v5138
    %v5209 = vpop.f32.mrf.mxu0
    %v5210 = vadd.f32 %v5126, %v5209
    %v5211 = vpop.f32.mrf.mxu0
    %5212 = vmatprep.mubr.f32.mxu0 0.0
    %5213 = vmatmul.mubr.f32.gmra.mxu0 %v5141
    %v5214 = vpop.f32.mrf.mxu0
    %v5215 = vadd.f32 %v5131, %v5214
    %v5216 = vpop.f32.mrf.mxu0
    %5217 = vdwg.mxu0
    %5218 = vrot.lane.b32.xlu0 %v4648, 112
    %v5219 = vpop.permute.xlu0 %5218
    %5220 = vrot.lane.b32.xlu0 %v4653, 112
    %v5221 = vpop.permute.xlu0 %5220
    %5222 = vrot.lane.b32.xlu0 %v4547, 80
    %v5223 = vpop.permute.xlu0 %5222
    %5224 = vrot.lane.b32.xlu0 %v4552, 80
    %v5225 = vpop.permute.xlu0 %5224
    %v5226 = vsel %vm175, %v5219, 0
    %v5228 = vsel %vm175, %v5221, 0
    %v5230 = vsel %vm175, %v5223, 0
    %v5232 = vsel %vm175, %v5225, 0
    %5234 = vmatprep.subr.mxu0 0.0
    %5235 = vmatpush1.xpose.msra.mxu0 0.0
    %5236 = vmatprep.subr.mxu0 0.0
    %5237 = vmatpush1.xpose.msra.mxu0 0.0
    %5238 = vmatprep.subr.mxu0 0.0
    %5239 = vmatpush1.xpose.msra.mxu0 0.0
    %5240 = vmatprep.subr.mxu0 0.0
    %5241 = vmatpush1.xpose.msra.mxu0 0.0
    %5242 = vmatprep.subr.mxu0 0.0
    %5243 = vmatpush1.xpose.msra.mxu0 0.0
    %5244 = vmatprep.subr.mxu0 0.0
    %5245 = vmatpush1.xpose.msra.mxu0 0.0
    %5246 = vmatprep.subr.mxu0 0.0
    %5247 = vmatpush1.xpose.msra.mxu0 0.0
    %5248 = vmatprep.subr.mxu0 0.0
    %5249 = vmatpush1.xpose.msra.mxu0 0.0
    %5250 = vmatprep.subr.mxu0 0.0
    %5251 = vmatpush1.xpose.msra.mxu0 0.0
    %5252 = vmatprep.subr.mxu0 0.0
    %5253 = vmatpush1.xpose.msra.mxu0 0.0
    %5254 = vmatprep.subr.mxu0 0.0
    %5255 = vmatpush1.xpose.msra.mxu0 0.0
    %5256 = vmatprep.subr.mxu0 0.0
    %5257 = vmatpush1.xpose.msra.mxu0 0.0
    %5258 = vmatprep.subr.mxu0 0.0
    %5259 = vmatpush1.xpose.msra.mxu0 0.0
    %5260 = vmatprep.subr.mxu0 0.0
    %5261 = vmatpush1.xpose.msra.mxu0 0.0
    %5262 = vmatprep.subr.mxu0 0.0
    %5263 = vmatpush1.xpose.msra.mxu0 %v5232
    %5264 = vmatprep.subr.mxu0 0.0
    %5265 = vmatpush1.xpose.msra.mxu0 %v5230
    %5266 = vmatprep.subr.mxu0 0.0
    %5267 = vmatpush2.xpose.msra.mxu0 0.0
    %5268 = vmatprep.subr.mxu0 0.0
    %5269 = vmatpush2.xpose.msra.mxu0 0.0
    %5270 = vmatprep.subr.mxu0 0.0
    %5271 = vmatpush2.xpose.msra.mxu0 0.0
    %5272 = vmatprep.subr.mxu0 0.0
    %5273 = vmatpush2.xpose.msra.mxu0 0.0
    %5274 = vmatprep.subr.mxu0 0.0
    %5275 = vmatpush2.xpose.msra.mxu0 0.0
    %5276 = vmatprep.subr.mxu0 0.0
    %5277 = vmatpush2.xpose.msra.mxu0 0.0
    %5278 = vmatprep.subr.mxu0 0.0
    %5279 = vmatpush2.xpose.msra.mxu0 0.0
    %5280 = vmatprep.subr.mxu0 0.0
    %5281 = vmatpush2.xpose.msra.mxu0 0.0
    %5282 = vmatprep.subr.mxu0 0.0
    %5283 = vmatpush2.xpose.msra.mxu0 0.0
    %5284 = vmatprep.subr.mxu0 0.0
    %5285 = vmatpush2.xpose.msra.mxu0 0.0
    %5286 = vmatprep.subr.mxu0 0.0
    %5287 = vmatpush2.xpose.msra.mxu0 0.0
    %5288 = vmatprep.subr.mxu0 0.0
    %5289 = vmatpush2.xpose.msra.mxu0 0.0
    %5290 = vmatprep.subr.mxu0 0.0
    %5291 = vmatpush2.xpose.msra.mxu0 0.0
    %5292 = vmatprep.subr.mxu0 0.0
    %5293 = vmatpush2.xpose.msra.mxu0 0.0
    %5294 = vmatprep.subr.mxu0 0.0
    %5295 = vmatpush2.xpose.msra.mxu0 0.0
    %5296 = vmatprep.subr.mxu0 0.0
    %5297 = vmatpush2.xpose.msra.mxu0 0.0
    %5298 = vmatprep.mubr.f32.mxu0 0.0
    %5299 = vmatmul.mubr.f32.gmra.mxu0 %v5226
    %v5300 = vpop.f32.mrf.mxu0
    %v5301 = vadd.f32 %v66, %v5300
    %v5302 = vpop.f32.mrf.mxu0
    %5303 = vmatprep.mubr.f32.mxu0 0.0
    %5304 = vmatmul.mubr.f32.gmra.mxu0 %v5228
    %v5305 = vpop.f32.mrf.mxu0
    %v5306 = vadd.f32 %v67, %v5305
    %v5307 = vpop.f32.mrf.mxu0
    %5308 = vdwg.mxu0
    %v5309 = vsel %vm259, %v5301, -inf
    %5310 = vmax.xlane.f32.xlu0 %v5309
    %v5311 = vpop.xlane.xlu0 %5310
    %v5312 = vsel %vm259, %v5306, -inf
    %5313 = vmax.xlane.f32.xlu0 %v5312
    %v5314 = vpop.xlane.xlu0 %5313
    %v5315 = vsub.f32 %v5301, %v5311
    %v5316 = vsub.f32 %v5306, %v5314
    %v5317 = vmul.f32 %v5315, 1.442695
    %v5318 = vpow.pop %v5317
    %v5319 = vmul.f32 %v5316, 1.442695
    %v5320 = vpow.pop %v5319
    %v5321 = vsel %vm259, %v5318, 0.0
    %5322 = vadd.xlane.f32.xlu0 %v5321
    %v5323 = vpop.xlane.xlu0 %5322
    %v5324 = vsel %vm259, %v5320, 0.0
    %5325 = vadd.xlane.f32.xlu0 %v5324
    %v5326 = vpop.xlane.xlu0 %5325
    %v5327 = vrcp.pop %v5323
    %v5328 = vrcp.pop %v5326
    %v5329 = vmul.f32 %v5318, %v5327
    %v5330 = vmul.f32 %v5320, %v5328
    %5331 = vrot.lane.b32.xlu0 %v4547, 112
    %v5332 = vpop.permute.xlu0 %5331
    %5333 = vrot.lane.b32.xlu0 %v4552, 112
    %v5334 = vpop.permute.xlu0 %5333
    %v5338 = vsel %vm259, %v5329, 0
    %v5341 = vsel %vm259, %v5330, 0
    %5343 = vmatprep.subr.mxu0 0.0
    %5344 = vmatpush1.msra.mxu0 0.0
    %5345 = vmatprep.subr.mxu0 0.0
    %5346 = vmatpush1.msra.mxu0 0.0
    %5347 = vmatprep.subr.mxu0 0.0
    %5348 = vmatpush1.msra.mxu0 0.0
    %5349 = vmatprep.subr.mxu0 0.0
    %5350 = vmatpush1.msra.mxu0 0.0
    %5351 = vmatprep.subr.mxu0 0.0
    %5352 = vmatpush1.msra.mxu0 0.0
    %5353 = vmatprep.subr.mxu0 0.0
    %5354 = vmatpush1.msra.mxu0 0.0
    %5355 = vmatprep.subr.mxu0 0.0
    %5356 = vmatpush1.msra.mxu0 0.0
    %5357 = vmatprep.subr.mxu0 0.0
    %5358 = vmatpush1.msra.mxu0 0.0
    %5359 = vmatprep.subr.mxu0 0.0
    %5360 = vmatpush1.msra.mxu0 0.0
    %5361 = vmatprep.subr.mxu0 0.0
    %5362 = vmatpush1.msra.mxu0 0.0
    %5363 = vmatprep.subr.mxu0 0.0
    %5364 = vmatpush1.msra.mxu0 0.0
    %5365 = vmatprep.subr.mxu0 0.0
    %5366 = vmatpush1.msra.mxu0 0.0
    %5367 = vmatprep.subr.mxu0 0.0
    %5368 = vmatpush1.msra.mxu0 0.0
    %5369 = vmatprep.subr.mxu0 0.0
    %5370 = vmatpush1.msra.mxu0 0.0
    %5371 = vmatprep.subr.mxu0 0.0
    %5372 = vmatpush1.msra.mxu0 %v5334
    %5373 = vmatprep.subr.mxu0 0.0
    %5374 = vmatpush1.msra.mxu0 %v5332
    %5375 = vmatprep.subr.mxu0 0.0
    %5376 = vmatpush2.msra.mxu0 0.0
    %5377 = vmatprep.subr.mxu0 0.0
    %5378 = vmatpush2.msra.mxu0 0.0
    %5379 = vmatprep.subr.mxu0 0.0
    %5380 = vmatpush2.msra.mxu0 0.0
    %5381 = vmatprep.subr.mxu0 0.0
    %5382 = vmatpush2.msra.mxu0 0.0
    %5383 = vmatprep.subr.mxu0 0.0
    %5384 = vmatpush2.msra.mxu0 0.0
    %5385 = vmatprep.subr.mxu0 0.0
    %5386 = vmatpush2.msra.mxu0 0.0
    %5387 = vmatprep.subr.mxu0 0.0
    %5388 = vmatpush2.msra.mxu0 0.0
    %5389 = vmatprep.subr.mxu0 0.0
    %5390 = vmatpush2.msra.mxu0 0.0
    %5391 = vmatprep.subr.mxu0 0.0
    %5392 = vmatpush2.msra.mxu0 0.0
    %5393 = vmatprep.subr.mxu0 0.0
    %5394 = vmatpush2.msra.mxu0 0.0
    %5395 = vmatprep.subr.mxu0 0.0
    %5396 = vmatpush2.msra.mxu0 0.0
    %5397 = vmatprep.subr.mxu0 0.0
    %5398 = vmatpush2.msra.mxu0 0.0
    %5399 = vmatprep.subr.mxu0 0.0
    %5400 = vmatpush2.msra.mxu0 0.0
    %5401 = vmatprep.subr.mxu0 0.0
    %5402 = vmatpush2.msra.mxu0 0.0
    %5403 = vmatprep.subr.mxu0 0.0
    %5404 = vmatpush2.msra.mxu0 0.0
    %5405 = vmatprep.subr.mxu0 0.0
    %5406 = vmatpush2.msra.mxu0 0.0
    %5407 = vmatprep.mubr.f32.mxu0 0.0
    %5408 = vmatmul.mubr.f32.gmra.mxu0 %v5338
    %v5409 = vpop.f32.mrf.mxu0
    %v5410 = vadd.f32 0.0, %v5409
    %v5411 = vpop.f32.mrf.mxu0
    %5412 = vmatprep.mubr.f32.mxu0 0.0
    %5413 = vmatmul.mubr.f32.gmra.mxu0 %v5341
    %v5414 = vpop.f32.mrf.mxu0
    %v5415 = vadd.f32 0.0, %v5414
    %v5416 = vpop.f32.mrf.mxu0
    %5417 = vdwg.mxu0
    %5418 = vrot.lane.b32.xlu0 %v3170, 32
    %v5419 = vpop.permute.xlu0 %5418
    %v5422 = vsel %vm175, %v5410, 0
    %v5425 = vsel %vm175, %v5415, 0
    %5427 = vmatprep.subr.mxu0 0.0
    %5428 = vmatpush1.msra.mxu0 0.0
    %5429 = vmatprep.subr.mxu0 0.0
    %5430 = vmatpush1.msra.mxu0 0.0
    %5431 = vmatprep.subr.mxu0 0.0
    %5432 = vmatpush1.msra.mxu0 0.0
    %5433 = vmatprep.subr.mxu0 0.0
    %5434 = vmatpush1.msra.mxu0 0.0
    %5435 = vmatprep.subr.mxu0 0.0
    %5436 = vmatpush1.msra.mxu0 0.0
    %5437 = vmatprep.subr.mxu0 0.0
    %5438 = vmatpush1.msra.mxu0 0.0
    %5439 = vmatprep.subr.mxu0 0.0
    %5440 = vmatpush1.msra.mxu0 0.0
    %5441 = vmatprep.subr.mxu0 0.0
    %5442 = vmatpush1.msra.mxu0 0.0
    %5443 = vmatprep.subr.mxu0 0.0
    %5444 = vmatpush1.msra.mxu0 0.0
    %5445 = vmatprep.subr.mxu0 0.0
    %5446 = vmatpush1.msra.mxu0 0.0
    %5447 = vmatprep.subr.mxu0 0.0
    %5448 = vmatpush1.msra.mxu0 0.0
    %5449 = vmatprep.subr.mxu0 0.0
    %5450 = vmatpush1.msra.mxu0 0.0
    %5451 = vmatprep.subr.mxu0 0.0
    %5452 = vmatpush1.msra.mxu0 0.0
    %5453 = vmatprep.subr.mxu0 0.0
    %5454 = vmatpush1.msra.mxu0 0.0
    %5455 = vmatprep.subr.mxu0 0.0
    %5456 = vmatpush1.msra.mxu0 0.0
    %5457 = vmatprep.subr.mxu0 0.0
    %5458 = vmatpush1.msra.mxu0 %v5419
    %5459 = vmatprep.subr.mxu0 0.0
    %5460 = vmatpush2.msra.mxu0 0.0
    %5461 = vmatprep.subr.mxu0 0.0
    %5462 = vmatpush2.msra.mxu0 0.0
    %5463 = vmatprep.subr.mxu0 0.0
    %5464 = vmatpush2.msra.mxu0 0.0
    %5465 = vmatprep.subr.mxu0 0.0
    %5466 = vmatpush2.msra.mxu0 0.0
    %5467 = vmatprep.subr.mxu0 0.0
    %5468 = vmatpush2.msra.mxu0 0.0
    %5469 = vmatprep.subr.mxu0 0.0
    %5470 = vmatpush2.msra.mxu0 0.0
    %5471 = vmatprep.subr.mxu0 0.0
    %5472 = vmatpush2.msra.mxu0 0.0
    %5473 = vmatprep.subr.mxu0 0.0
    %5474 = vmatpush2.msra.mxu0 0.0
    %5475 = vmatprep.subr.mxu0 0.0
    %5476 = vmatpush2.msra.mxu0 0.0
    %5477 = vmatprep.subr.mxu0 0.0
    %5478 = vmatpush2.msra.mxu0 0.0
    %5479 = vmatprep.subr.mxu0 0.0
    %5480 = vmatpush2.msra.mxu0 0.0
    %5481 = vmatprep.subr.mxu0 0.0
    %5482 = vmatpush2.msra.mxu0 0.0
    %5483 = vmatprep.subr.mxu0 0.0
    %5484 = vmatpush2.msra.mxu0 0.0
    %5485 = vmatprep.subr.mxu0 0.0
    %5486 = vmatpush2.msra.mxu0 0.0
    %5487 = vmatprep.subr.mxu0 0.0
    %5488 = vmatpush2.msra.mxu0 0.0
    %5489 = vmatprep.subr.mxu0 0.0
    %5490 = vmatpush2.msra.mxu0 0.0
    %5491 = vmatprep.mubr.f32.mxu0 0.0
    %5492 = vmatmul.mubr.f32.gmra.mxu0 %v5422
    %v5493 = vpop.f32.mrf.mxu0
    %v5494 = vadd.f32 0.0, %v5493
    %v5495 = vpop.f32.mrf.mxu0
    %5496 = vmatprep.mubr.f32.mxu0 0.0
    %5497 = vmatmul.mubr.f32.gmra.mxu0 %v5425
    %v5498 = vpop.f32.mrf.mxu0
    %v5499 = vadd.f32 0.0, %v5498
    %v5500 = vpop.f32.mrf.mxu0
    %5501 = vdwg.mxu0
    %v5502 = vadd.f32 %v5210, %v5494
    %v5503 = vadd.f32 %v5215, %v5499
    %5504 = vrot.lane.b32.xlu0 %v4648, 104
    %v5505 = vpop.permute.xlu0 %5504
    %5506 = vrot.lane.b32.xlu0 %v4653, 104
    %v5507 = vpop.permute.xlu0 %5506
    %5508 = vrot.lane.b32.xlu0 %v4547, 72
    %v5509 = vpop.permute.xlu0 %5508
    %5510 = vrot.lane.b32.xlu0 %v4552, 72
    %v5511 = vpop.permute.xlu0 %5510
    %v5512 = vsel %vm175, %v5505, 0
    %v5514 = vsel %vm175, %v5507, 0
    %v5516 = vsel %vm175, %v5509, 0
    %v5518 = vsel %vm175, %v5511, 0
    %5520 = vmatprep.subr.mxu0 0.0
    %5521 = vmatpush1.xpose.msra.mxu0 0.0
    %5522 = vmatprep.subr.mxu0 0.0
    %5523 = vmatpush1.xpose.msra.mxu0 0.0
    %5524 = vmatprep.subr.mxu0 0.0
    %5525 = vmatpush1.xpose.msra.mxu0 0.0
    %5526 = vmatprep.subr.mxu0 0.0
    %5527 = vmatpush1.xpose.msra.mxu0 0.0
    %5528 = vmatprep.subr.mxu0 0.0
    %5529 = vmatpush1.xpose.msra.mxu0 0.0
    %5530 = vmatprep.subr.mxu0 0.0
    %5531 = vmatpush1.xpose.msra.mxu0 0.0
    %5532 = vmatprep.subr.mxu0 0.0
    %5533 = vmatpush1.xpose.msra.mxu0 0.0
    %5534 = vmatprep.subr.mxu0 0.0
    %5535 = vmatpush1.xpose.msra.mxu0 0.0
    %5536 = vmatprep.subr.mxu0 0.0
    %5537 = vmatpush1.xpose.msra.mxu0 0.0
    %5538 = vmatprep.subr.mxu0 0.0
    %5539 = vmatpush1.xpose.msra.mxu0 0.0
    %5540 = vmatprep.subr.mxu0 0.0
    %5541 = vmatpush1.xpose.msra.mxu0 0.0
    %5542 = vmatprep.subr.mxu0 0.0
    %5543 = vmatpush1.xpose.msra.mxu0 0.0
    %5544 = vmatprep.subr.mxu0 0.0
    %5545 = vmatpush1.xpose.msra.mxu0 0.0
    %5546 = vmatprep.subr.mxu0 0.0
    %5547 = vmatpush1.xpose.msra.mxu0 0.0
    %5548 = vmatprep.subr.mxu0 0.0
    %5549 = vmatpush1.xpose.msra.mxu0 %v5518
    %5550 = vmatprep.subr.mxu0 0.0
    %5551 = vmatpush1.xpose.msra.mxu0 %v5516
    %5552 = vmatprep.subr.mxu0 0.0
    %5553 = vmatpush2.xpose.msra.mxu0 0.0
    %5554 = vmatprep.subr.mxu0 0.0
    %5555 = vmatpush2.xpose.msra.mxu0 0.0
    %5556 = vmatprep.subr.mxu0 0.0
    %5557 = vmatpush2.xpose.msra.mxu0 0.0
    %5558 = vmatprep.subr.mxu0 0.0
    %5559 = vmatpush2.xpose.msra.mxu0 0.0
    %5560 = vmatprep.subr.mxu0 0.0
    %5561 = vmatpush2.xpose.msra.mxu0 0.0
    %5562 = vmatprep.subr.mxu0 0.0
    %5563 = vmatpush2.xpose.msra.mxu0 0.0
    %5564 = vmatprep.subr.mxu0 0.0
    %5565 = vmatpush2.xpose.msra.mxu0 0.0
    %5566 = vmatprep.subr.mxu0 0.0
    %5567 = vmatpush2.xpose.msra.mxu0 0.0
    %5568 = vmatprep.subr.mxu0 0.0
    %5569 = vmatpush2.xpose.msra.mxu0 0.0
    %5570 = vmatprep.subr.mxu0 0.0
    %5571 = vmatpush2.xpose.msra.mxu0 0.0
    %5572 = vmatprep.subr.mxu0 0.0
    %5573 = vmatpush2.xpose.msra.mxu0 0.0
    %5574 = vmatprep.subr.mxu0 0.0
    %5575 = vmatpush2.xpose.msra.mxu0 0.0
    %5576 = vmatprep.subr.mxu0 0.0
    %5577 = vmatpush2.xpose.msra.mxu0 0.0
    %5578 = vmatprep.subr.mxu0 0.0
    %5579 = vmatpush2.xpose.msra.mxu0 0.0
    %5580 = vmatprep.subr.mxu0 0.0
    %5581 = vmatpush2.xpose.msra.mxu0 0.0
    %5582 = vmatprep.subr.mxu0 0.0
    %5583 = vmatpush2.xpose.msra.mxu0 0.0
    %5584 = vmatprep.mubr.f32.mxu0 0.0
    %5585 = vmatmul.mubr.f32.gmra.mxu0 %v5512
    %v5586 = vpop.f32.mrf.mxu0
    %v5587 = vadd.f32 %v66, %v5586
    %v5588 = vpop.f32.mrf.mxu0
    %5589 = vmatprep.mubr.f32.mxu0 0.0
    %5590 = vmatmul.mubr.f32.gmra.mxu0 %v5514
    %v5591 = vpop.f32.mrf.mxu0
    %v5592 = vadd.f32 %v67, %v5591
    %v5593 = vpop.f32.mrf.mxu0
    %5594 = vdwg.mxu0
    %v5595 = vsel %vm259, %v5587, -inf
    %5596 = vmax.xlane.f32.xlu0 %v5595
    %v5597 = vpop.xlane.xlu0 %5596
    %v5598 = vsel %vm259, %v5592, -inf
    %5599 = vmax.xlane.f32.xlu0 %v5598
    %v5600 = vpop.xlane.xlu0 %5599
    %v5601 = vsub.f32 %v5587, %v5597
    %v5602 = vsub.f32 %v5592, %v5600
    %v5603 = vmul.f32 %v5601, 1.442695
    %v5604 = vpow.pop %v5603
    %v5605 = vmul.f32 %v5602, 1.442695
    %v5606 = vpow.pop %v5605
    %v5607 = vsel %vm259, %v5604, 0.0
    %5608 = vadd.xlane.f32.xlu0 %v5607
    %v5609 = vpop.xlane.xlu0 %5608
    %v5610 = vsel %vm259, %v5606, 0.0
    %5611 = vadd.xlane.f32.xlu0 %v5610
    %v5612 = vpop.xlane.xlu0 %5611
    %v5613 = vrcp.pop %v5609
    %v5614 = vrcp.pop %v5612
    %v5615 = vmul.f32 %v5604, %v5613
    %v5616 = vmul.f32 %v5606, %v5614
    %5617 = vrot.lane.b32.xlu0 %v4547, 104
    %v5618 = vpop.permute.xlu0 %5617
    %5619 = vrot.lane.b32.xlu0 %v4552, 104
    %v5620 = vpop.permute.xlu0 %5619
    %v5624 = vsel %vm259, %v5615, 0
    %v5627 = vsel %vm259, %v5616, 0
    %5629 = vmatprep.subr.mxu0 0.0
    %5630 = vmatpush1.msra.mxu0 0.0
    %5631 = vmatprep.subr.mxu0 0.0
    %5632 = vmatpush1.msra.mxu0 0.0
    %5633 = vmatprep.subr.mxu0 0.0
    %5634 = vmatpush1.msra.mxu0 0.0
    %5635 = vmatprep.subr.mxu0 0.0
    %5636 = vmatpush1.msra.mxu0 0.0
    %5637 = vmatprep.subr.mxu0 0.0
    %5638 = vmatpush1.msra.mxu0 0.0
    %5639 = vmatprep.subr.mxu0 0.0
    %5640 = vmatpush1.msra.mxu0 0.0
    %5641 = vmatprep.subr.mxu0 0.0
    %5642 = vmatpush1.msra.mxu0 0.0
    %5643 = vmatprep.subr.mxu0 0.0
    %5644 = vmatpush1.msra.mxu0 0.0
    %5645 = vmatprep.subr.mxu0 0.0
    %5646 = vmatpush1.msra.mxu0 0.0
    %5647 = vmatprep.subr.mxu0 0.0
    %5648 = vmatpush1.msra.mxu0 0.0
    %5649 = vmatprep.subr.mxu0 0.0
    %5650 = vmatpush1.msra.mxu0 0.0
    %5651 = vmatprep.subr.mxu0 0.0
    %5652 = vmatpush1.msra.mxu0 0.0
    %5653 = vmatprep.subr.mxu0 0.0
    %5654 = vmatpush1.msra.mxu0 0.0
    %5655 = vmatprep.subr.mxu0 0.0
    %5656 = vmatpush1.msra.mxu0 0.0
    %5657 = vmatprep.subr.mxu0 0.0
    %5658 = vmatpush1.msra.mxu0 %v5620
    %5659 = vmatprep.subr.mxu0 0.0
    %5660 = vmatpush1.msra.mxu0 %v5618
    %5661 = vmatprep.subr.mxu0 0.0
    %5662 = vmatpush2.msra.mxu0 0.0
    %5663 = vmatprep.subr.mxu0 0.0
    %5664 = vmatpush2.msra.mxu0 0.0
    %5665 = vmatprep.subr.mxu0 0.0
    %5666 = vmatpush2.msra.mxu0 0.0
    %5667 = vmatprep.subr.mxu0 0.0
    %5668 = vmatpush2.msra.mxu0 0.0
    %5669 = vmatprep.subr.mxu0 0.0
    %5670 = vmatpush2.msra.mxu0 0.0
    %5671 = vmatprep.subr.mxu0 0.0
    %5672 = vmatpush2.msra.mxu0 0.0
    %5673 = vmatprep.subr.mxu0 0.0
    %5674 = vmatpush2.msra.mxu0 0.0
    %5675 = vmatprep.subr.mxu0 0.0
    %5676 = vmatpush2.msra.mxu0 0.0
    %5677 = vmatprep.subr.mxu0 0.0
    %5678 = vmatpush2.msra.mxu0 0.0
    %5679 = vmatprep.subr.mxu0 0.0
    %5680 = vmatpush2.msra.mxu0 0.0
    %5681 = vmatprep.subr.mxu0 0.0
    %5682 = vmatpush2.msra.mxu0 0.0
    %5683 = vmatprep.subr.mxu0 0.0
    %5684 = vmatpush2.msra.mxu0 0.0
    %5685 = vmatprep.subr.mxu0 0.0
    %5686 = vmatpush2.msra.mxu0 0.0
    %5687 = vmatprep.subr.mxu0 0.0
    %5688 = vmatpush2.msra.mxu0 0.0
    %5689 = vmatprep.subr.mxu0 0.0
    %5690 = vmatpush2.msra.mxu0 0.0
    %5691 = vmatprep.subr.mxu0 0.0
    %5692 = vmatpush2.msra.mxu0 0.0
    %5693 = vmatprep.mubr.f32.mxu0 0.0
    %5694 = vmatmul.mubr.f32.gmra.mxu0 %v5624
    %v5695 = vpop.f32.mrf.mxu0
    %v5696 = vadd.f32 0.0, %v5695
    %v5697 = vpop.f32.mrf.mxu0
    %5698 = vmatprep.mubr.f32.mxu0 0.0
    %5699 = vmatmul.mubr.f32.gmra.mxu0 %v5627
    %v5700 = vpop.f32.mrf.mxu0
    %v5701 = vadd.f32 0.0, %v5700
    %v5702 = vpop.f32.mrf.mxu0
    %5703 = vdwg.mxu0
    %5704 = vrot.lane.b32.xlu0 %v3171, 32
    %v5705 = vpop.permute.xlu0 %5704
    %v5708 = vsel %vm175, %v5696, 0
    %v5711 = vsel %vm175, %v5701, 0
    %5713 = vmatprep.subr.mxu0 0.0
    %5714 = vmatpush1.msra.mxu0 0.0
    %5715 = vmatprep.subr.mxu0 0.0
    %5716 = vmatpush1.msra.mxu0 0.0
    %5717 = vmatprep.subr.mxu0 0.0
    %5718 = vmatpush1.msra.mxu0 0.0
    %5719 = vmatprep.subr.mxu0 0.0
    %5720 = vmatpush1.msra.mxu0 0.0
    %5721 = vmatprep.subr.mxu0 0.0
    %5722 = vmatpush1.msra.mxu0 0.0
    %5723 = vmatprep.subr.mxu0 0.0
    %5724 = vmatpush1.msra.mxu0 0.0
    %5725 = vmatprep.subr.mxu0 0.0
    %5726 = vmatpush1.msra.mxu0 0.0
    %5727 = vmatprep.subr.mxu0 0.0
    %5728 = vmatpush1.msra.mxu0 0.0
    %5729 = vmatprep.subr.mxu0 0.0
    %5730 = vmatpush1.msra.mxu0 0.0
    %5731 = vmatprep.subr.mxu0 0.0
    %5732 = vmatpush1.msra.mxu0 0.0
    %5733 = vmatprep.subr.mxu0 0.0
    %5734 = vmatpush1.msra.mxu0 0.0
    %5735 = vmatprep.subr.mxu0 0.0
    %5736 = vmatpush1.msra.mxu0 0.0
    %5737 = vmatprep.subr.mxu0 0.0
    %5738 = vmatpush1.msra.mxu0 0.0
    %5739 = vmatprep.subr.mxu0 0.0
    %5740 = vmatpush1.msra.mxu0 0.0
    %5741 = vmatprep.subr.mxu0 0.0
    %5742 = vmatpush1.msra.mxu0 0.0
    %5743 = vmatprep.subr.mxu0 0.0
    %5744 = vmatpush1.msra.mxu0 %v5705
    %5745 = vmatprep.subr.mxu0 0.0
    %5746 = vmatpush2.msra.mxu0 0.0
    %5747 = vmatprep.subr.mxu0 0.0
    %5748 = vmatpush2.msra.mxu0 0.0
    %5749 = vmatprep.subr.mxu0 0.0
    %5750 = vmatpush2.msra.mxu0 0.0
    %5751 = vmatprep.subr.mxu0 0.0
    %5752 = vmatpush2.msra.mxu0 0.0
    %5753 = vmatprep.subr.mxu0 0.0
    %5754 = vmatpush2.msra.mxu0 0.0
    %5755 = vmatprep.subr.mxu0 0.0
    %5756 = vmatpush2.msra.mxu0 0.0
    %5757 = vmatprep.subr.mxu0 0.0
    %5758 = vmatpush2.msra.mxu0 0.0
    %5759 = vmatprep.subr.mxu0 0.0
    %5760 = vmatpush2.msra.mxu0 0.0
    %5761 = vmatprep.subr.mxu0 0.0
    %5762 = vmatpush2.msra.mxu0 0.0
    %5763 = vmatprep.subr.mxu0 0.0
    %5764 = vmatpush2.msra.mxu0 0.0
    %5765 = vmatprep.subr.mxu0 0.0
    %5766 = vmatpush2.msra.mxu0 0.0
    %5767 = vmatprep.subr.mxu0 0.0
    %5768 = vmatpush2.msra.mxu0 0.0
    %5769 = vmatprep.subr.mxu0 0.0
    %5770 = vmatpush2.msra.mxu0 0.0
    %5771 = vmatprep.subr.mxu0 0.0
    %5772 = vmatpush2.msra.mxu0 0.0
    %5773 = vmatprep.subr.mxu0 0.0
    %5774 = vmatpush2.msra.mxu0 0.0
    %5775 = vmatprep.subr.mxu0 0.0
    %5776 = vmatpush2.msra.mxu0 0.0
    %5777 = vmatprep.mubr.f32.mxu0 0.0
    %5778 = vmatmul.mubr.f32.gmra.mxu0 %v5708
    %v5779 = vpop.f32.mrf.mxu0
    %v5780 = vadd.f32 0.0, %v5779
    %v5781 = vpop.f32.mrf.mxu0
    %5782 = vmatprep.mubr.f32.mxu0 0.0
    %5783 = vmatmul.mubr.f32.gmra.mxu0 %v5711
    %v5784 = vpop.f32.mrf.mxu0
    %v5785 = vadd.f32 0.0, %v5784
    %v5786 = vpop.f32.mrf.mxu0
    %5787 = vdwg.mxu0
    %v5788 = vadd.f32 %v5502, %v5780
    %v5789 = vadd.f32 %v5503, %v5785
    %5790 = vrot.lane.b32.xlu0 %v4469, 32
    %v5791 = vpop.permute.xlu0 %5790
    %v5793 = vadd.f32 %v5788, %v5791
    %v5794 = vadd.f32 %v5789, %v5791
    %v5795 = vadd.f32 %v5793, %v4464
    %v5796 = vadd.f32 %v5794, %v4465
    %v5797 = vsel %vm83, %v5795, 0.0
    %5798 = vadd.xlane.f32.xlu0 %v5797
    %v5799 = vpop.xlane.xlu0 %5798
    %v5800 = vsel %vm83, %v5796, 0.0
    %5801 = vadd.xlane.f32.xlu0 %v5800
    %v5802 = vpop.xlane.xlu0 %5801
    %v5803 = vmul.f32 %v5799, %v1321
    %v5804 = vmul.f32 %v5802, %v1321
    %v5805 = vsub.f32 %v5795, %v5803
    %v5806 = vsub.f32 %v5796, %v5804
    %v5807 = vmul.f32 %v5805, %v5805
    %v5808 = vmul.f32 %v5806, %v5806
    %v5809 = vsel %vm83, %v5807, 0.0
    %5810 = vadd.xlane.f32.xlu0 %v5809
    %v5811 = vpop.xlane.xlu0 %5810
    %v5812 = vsel %vm83, %v5808, 0.0
    %5813 = vadd.xlane.f32.xlu0 %v5812
    %v5814 = vpop.xlane.xlu0 %5813
    %v5815 = vmul.f32 %v5811, 0.032258064
    %v5816 = vmul.f32 %v5814, 0.032258064
    %v5817 = vrsqrt.pop %v5815
    %v5818 = vmul.f32 %v5815, %v5817
    %vm5819 = vcmp.eq.f32.partialorder %v5815, inf
    %v5820 = vsel %vm5819, %v5815, %v5818
    %vm5821 = vcmp.eq.f32.partialorder %v5815, 0.0
    %v5822 = vand.u32 %v5815, 2147483648
    %v5823 = vsel %vm5821, %v5822, %v5820
    %v5824 = vrsqrt.pop %v5816
    %v5825 = vmul.f32 %v5816, %v5824
    %vm5826 = vcmp.eq.f32.partialorder %v5816, inf
    %v5827 = vsel %vm5826, %v5816, %v5825
    %vm5828 = vcmp.eq.f32.partialorder %v5816, 0.0
    %v5829 = vand.u32 %v5816, 2147483648
    %v5830 = vsel %vm5828, %v5829, %v5827
    %v5831 = vadd.f32 %v5823, 1e-06
    %v5832 = vadd.f32 %v5830, 1e-06
    %v5833 = vrcp.pop %v5831
    %v5834 = vrcp.pop %v5832
    %5837 = vrot.lane.b32.xlu0 %v5805, 64
    %v5838 = vpop.permute.xlu0 %5837
    %5839 = vrot.lane.b32.xlu0 %v5806, 64
    %v5840 = vpop.permute.xlu0 %5839
    %v5843 = vmul.f32 %v4455, %v5838
    %v5844 = vmul.f32 %v4455, %v5840
    %v5845 = vmul.f32 %v5843, %v5833
    %v5846 = vmul.f32 %v5844, %v5834
    %v5847 = vadd.f32 %v5845, %v4462
    %v5848 = vadd.f32 %v5846, %v4462
    %v5849 = vlaneseq
    %v5850 = vshrl.u32 %v5849, 7
    %v5851 = vsub.s32 0, %v5850
    %v5852 = vrot.slane %v3178, %v5851
    %5855 = vrot.lane.b32.xlu0 %v5847, 64
    %v5856 = vpop.permute.xlu0 %5855
    %5857 = vrot.lane.b32.xlu0 %v5848, 64
    %v5858 = vpop.permute.xlu0 %5857
    %v5859 = vsel %vm83, %v5856, 0
    %v5861 = vsel %vm83, %v5858, 0
    %5863 = vmatprep.subr.mxu0 0.0
    %5864 = vmatpush1.msra.mxu0 0.0
    %5865 = vmatprep.subr.mxu0 0.0
    %5866 = vmatpush1.msra.mxu0 0.0
    %5867 = vmatprep.subr.mxu0 0.0
    %5868 = vmatpush1.msra.mxu0 0.0
    %5869 = vmatprep.subr.mxu0 0.0
    %5870 = vmatpush1.msra.mxu0 0.0
    %5871 = vmatprep.subr.mxu0 0.0
    %5872 = vmatpush1.msra.mxu0 0.0
    %5873 = vmatprep.subr.mxu0 0.0
    %5874 = vmatpush1.msra.mxu0 0.0
    %5875 = vmatprep.subr.mxu0 0.0
    %5876 = vmatpush1.msra.mxu0 0.0
    %5877 = vmatprep.subr.mxu0 0.0
    %5878 = vmatpush1.msra.mxu0 0.0
    %5879 = vmatprep.subr.mxu0 0.0
    %5880 = vmatpush1.msra.mxu0 0.0
    %5881 = vmatprep.subr.mxu0 0.0
    %5882 = vmatpush1.msra.mxu0 0.0
    %5883 = vmatprep.subr.mxu0 0.0
    %5884 = vmatpush1.msra.mxu0 0.0
    %5885 = vmatprep.subr.mxu0 0.0
    %5886 = vmatpush1.msra.mxu0 0.0
    %5887 = vmatprep.subr.mxu0 0.0
    %5888 = vmatpush1.msra.mxu0 %v3175
    %5889 = vmatprep.subr.mxu0 0.0
    %5890 = vmatpush1.msra.mxu0 %v3174
    %5891 = vmatprep.subr.mxu0 0.0
    %5892 = vmatpush1.msra.mxu0 %v3173
    %5893 = vmatprep.subr.mxu0 0.0
    %5894 = vmatpush1.msra.mxu0 %v3172
    %5895 = vmatprep.subr.mxu0 0.0
    %5896 = vmatpush2.msra.mxu0 0.0
    %5897 = vmatprep.subr.mxu0 0.0
    %5898 = vmatpush2.msra.mxu0 0.0
    %5899 = vmatprep.subr.mxu0 0.0
    %5900 = vmatpush2.msra.mxu0 0.0
    %5901 = vmatprep.subr.mxu0 0.0
    %5902 = vmatpush2.msra.mxu0 0.0
    %5903 = vmatprep.subr.mxu0 0.0
    %5904 = vmatpush2.msra.mxu0 0.0
    %5905 = vmatprep.subr.mxu0 0.0
    %5906 = vmatpush2.msra.mxu0 0.0
    %5907 = vmatprep.subr.mxu0 0.0
    %5908 = vmatpush2.msra.mxu0 0.0
    %5909 = vmatprep.subr.mxu0 0.0
    %5910 = vmatpush2.msra.mxu0 0.0
    %5911 = vmatprep.subr.mxu0 0.0
    %5912 = vmatpush2.msra.mxu0 0.0
    %5913 = vmatprep.subr.mxu0 0.0
    %5914 = vmatpush2.msra.mxu0 0.0
    %5915 = vmatprep.subr.mxu0 0.0
    %5916 = vmatpush2.msra.mxu0 0.0
    %5917 = vmatprep.subr.mxu0 0.0
    %5918 = vmatpush2.msra.mxu0 0.0
    %5919 = vmatprep.subr.mxu0 0.0
    %5920 = vmatpush2.msra.mxu0 0.0
    %5921 = vmatprep.subr.mxu0 0.0
    %5922 = vmatpush2.msra.mxu0 0.0
    %5923 = vmatprep.subr.mxu0 0.0
    %5924 = vmatpush2.msra.mxu0 0.0
    %5925 = vmatprep.subr.mxu0 0.0
    %5926 = vmatpush2.msra.mxu0 0.0
    %5927 = vmatprep.mubr.f32.mxu0 0.0
    %5928 = vmatmul.mubr.f32.gmra.mxu0 %v5859
    %v5929 = vpop.f32.mrf.mxu0
    %v5930 = vadd.f32 %v5852, %v5929
    %v5931 = vpop.f32.mrf.mxu0
    %5932 = vmatprep.mubr.f32.mxu0 0.0
    %5933 = vmatmul.mubr.f32.gmra.mxu0 %v5861
    %v5934 = vpop.f32.mrf.mxu0
    %v5935 = vadd.f32 %v5852, %v5934
    %v5936 = vpop.f32.mrf.mxu0
    %5937 = vdwg.mxu0
    %v5938 = vmax.f32 %v5930, 0.0
    %v5939 = vmax.f32 %v5935, 0.0
    %5944 = vrot.lane.b32.xlu0 %v3172, 64
    %v5945 = vpop.permute.xlu0 %5944
    %5946 = vrot.lane.b32.xlu0 %v3173, 64
    %v5947 = vpop.permute.xlu0 %5946
    %5948 = vrot.lane.b32.xlu0 %v3174, 64
    %v5949 = vpop.permute.xlu0 %5948
    %5950 = vrot.lane.b32.xlu0 %v3175, 64
    %v5951 = vpop.permute.xlu0 %5950
    %5953 = vrot.lane.b32.xlu0 %v5852, 64
    %v5954 = vpop.permute.xlu0 %5953
    %v5957 = vsel %vm1471, %v5938, 0
    %v5960 = vsel %vm1471, %v5939, 0
    %v5962 = vsel %vm1471, %v5945, 0
    %v5964 = vsel %vm1471, %v5947, 0
    %v5966 = vsel %vm1471, %v5949, 0
    %v5968 = vsel %vm1471, %v5951, 0
    %5970 = vmatprep.subr.mxu0 0.0
    %5971 = vmatpush1.xpose.msra.mxu0 0.0
    %5972 = vmatprep.subr.mxu0 0.0
    %5973 = vmatpush1.xpose.msra.mxu0 0.0
    %5974 = vmatprep.subr.mxu0 0.0
    %5975 = vmatpush1.xpose.msra.mxu0 0.0
    %5976 = vmatprep.subr.mxu0 0.0
    %5977 = vmatpush1.xpose.msra.mxu0 0.0
    %5978 = vmatprep.subr.mxu0 0.0
    %5979 = vmatpush1.xpose.msra.mxu0 0.0
    %5980 = vmatprep.subr.mxu0 0.0
    %5981 = vmatpush1.xpose.msra.mxu0 0.0
    %5982 = vmatprep.subr.mxu0 0.0
    %5983 = vmatpush1.xpose.msra.mxu0 0.0
    %5984 = vmatprep.subr.mxu0 0.0
    %5985 = vmatpush1.xpose.msra.mxu0 0.0
    %5986 = vmatprep.subr.mxu0 0.0
    %5987 = vmatpush1.xpose.msra.mxu0 0.0
    %5988 = vmatprep.subr.mxu0 0.0
    %5989 = vmatpush1.xpose.msra.mxu0 0.0
    %5990 = vmatprep.subr.mxu0 0.0
    %5991 = vmatpush1.xpose.msra.mxu0 0.0
    %5992 = vmatprep.subr.mxu0 0.0
    %5993 = vmatpush1.xpose.msra.mxu0 0.0
    %5994 = vmatprep.subr.mxu0 0.0
    %5995 = vmatpush1.xpose.msra.mxu0 %v5968
    %5996 = vmatprep.subr.mxu0 0.0
    %5997 = vmatpush1.xpose.msra.mxu0 %v5966
    %5998 = vmatprep.subr.mxu0 0.0
    %5999 = vmatpush1.xpose.msra.mxu0 %v5964
    %6000 = vmatprep.subr.mxu0 0.0
    %6001 = vmatpush1.xpose.msra.mxu0 %v5962
    %6002 = vmatprep.subr.mxu0 0.0
    %6003 = vmatpush2.xpose.msra.mxu0 0.0
    %6004 = vmatprep.subr.mxu0 0.0
    %6005 = vmatpush2.xpose.msra.mxu0 0.0
    %6006 = vmatprep.subr.mxu0 0.0
    %6007 = vmatpush2.xpose.msra.mxu0 0.0
    %6008 = vmatprep.subr.mxu0 0.0
    %6009 = vmatpush2.xpose.msra.mxu0 0.0
    %6010 = vmatprep.subr.mxu0 0.0
    %6011 = vmatpush2.xpose.msra.mxu0 0.0
    %6012 = vmatprep.subr.mxu0 0.0
    %6013 = vmatpush2.xpose.msra.mxu0 0.0
    %6014 = vmatprep.subr.mxu0 0.0
    %6015 = vmatpush2.xpose.msra.mxu0 0.0
    %6016 = vmatprep.subr.mxu0 0.0
    %6017 = vmatpush2.xpose.msra.mxu0 0.0
    %6018 = vmatprep.subr.mxu0 0.0
    %6019 = vmatpush2.xpose.msra.mxu0 0.0
    %6020 = vmatprep.subr.mxu0 0.0
    %6021 = vmatpush2.xpose.msra.mxu0 0.0
    %6022 = vmatprep.subr.mxu0 0.0
    %6023 = vmatpush2.xpose.msra.mxu0 0.0
    %6024 = vmatprep.subr.mxu0 0.0
    %6025 = vmatpush2.xpose.msra.mxu0 0.0
    %6026 = vmatprep.subr.mxu0 0.0
    %6027 = vmatpush2.xpose.msra.mxu0 0.0
    %6028 = vmatprep.subr.mxu0 0.0
    %6029 = vmatpush2.xpose.msra.mxu0 0.0
    %6030 = vmatprep.subr.mxu0 0.0
    %6031 = vmatpush2.xpose.msra.mxu0 0.0
    %6032 = vmatprep.subr.mxu0 0.0
    %6033 = vmatpush2.xpose.msra.mxu0 0.0
    %6034 = vmatprep.mubr.f32.mxu0 0.0
    %6035 = vmatmul.mubr.f32.gmra.mxu0 %v5957
    %v6036 = vpop.f32.mrf.mxu0
    %v6037 = vadd.f32 %v5954, %v6036
    %v6038 = vpop.f32.mrf.mxu0
    %6039 = vmatprep.mubr.f32.mxu0 0.0
    %6040 = vmatmul.mubr.f32.gmra.mxu0 %v5960
    %v6041 = vpop.f32.mrf.mxu0
    %v6042 = vadd.f32 %v5954, %v6041
    %v6043 = vpop.f32.mrf.mxu0
    %6044 = vdwg.mxu0
    %v6047 = vadd.f32 %v6037, %v5856
    %v6048 = vadd.f32 %v6042, %v5858
    %v6049 = vsel %vm83, %v6047, 0.0
    %6050 = vadd.xlane.f32.xlu0 %v6049
    %v6051 = vpop.xlane.xlu0 %6050
    %v6052 = vsel %vm83, %v6048, 0.0
    %6053 = vadd.xlane.f32.xlu0 %v6052
    %v6054 = vpop.xlane.xlu0 %6053
    %v6055 = vmul.f32 %v6051, %v1321
    %v6056 = vmul.f32 %v6054, %v1321
    %v6057 = vsub.f32 %v6047, %v6055
    %v6058 = vsub.f32 %v6048, %v6056
    %v6059 = vmul.f32 %v6057, %v6057
    %v6060 = vmul.f32 %v6058, %v6058
    %v6061 = vsel %vm83, %v6059, 0.0
    %6062 = vadd.xlane.f32.xlu0 %v6061
    %v6063 = vpop.xlane.xlu0 %6062
    %v6064 = vsel %vm83, %v6060, 0.0
    %6065 = vadd.xlane.f32.xlu0 %v6064
    %v6066 = vpop.xlane.xlu0 %6065
    %v6067 = vmul.f32 %v6063, 0.032258064
    %v6068 = vmul.f32 %v6066, 0.032258064
    %v6069 = vrsqrt.pop %v6067
    %v6070 = vmul.f32 %v6067, %v6069
    %vm6071 = vcmp.eq.f32.partialorder %v6067, inf
    %v6072 = vsel %vm6071, %v6067, %v6070
    %vm6073 = vcmp.eq.f32.partialorder %v6067, 0.0
    %v6074 = vand.u32 %v6067, 2147483648
    %v6075 = vsel %vm6073, %v6074, %v6072
    %v6076 = vrsqrt.pop %v6068
    %v6077 = vmul.f32 %v6068, %v6076
    %vm6078 = vcmp.eq.f32.partialorder %v6068, inf
    %v6079 = vsel %vm6078, %v6068, %v6077
    %vm6080 = vcmp.eq.f32.partialorder %v6068, 0.0
    %v6081 = vand.u32 %v6068, 2147483648
    %v6082 = vsel %vm6080, %v6081, %v6079
    %v6083 = vadd.f32 %v6075, 1e-06
    %v6084 = vadd.f32 %v6082, 1e-06
    %v6085 = vrcp.pop %v6083
    %v6086 = vrcp.pop %v6084
    %v6087 = vlaneseq
    %v6088 = vshrl.u32 %v6087, 7
    %v6089 = vsub.s32 0, %v6088
    %v6090 = vrot.slane %v3180, %v6089
    %v6091 = vmul.f32 %v6090, %v6057
    %v6092 = vmul.f32 %v6090, %v6058
    %v6093 = vmul.f32 %v6091, %v6085
    %v6094 = vmul.f32 %v6092, %v6086
    %6096 = vrot.lane.b32.xlu0 %v6090, 96
    %v6097 = vpop.permute.xlu0 %6096
    %v6099 = vadd.f32 %v6093, %v6097
    %v6100 = vadd.f32 %v6094, %v6097
    %s6101 = scalar_lea.vmem [#allocation5], 104
    %v6102 = vld [vmem:[%s6101] sm:$0xff]
    %v6103 = vld [vmem:[%s6101 + $0x8] sm:$0xff]
    %v6104 = vld [vmem:[%s6101 + $0x10] sm:$0xff]
    %v6105 = vld [vmem:[%s6101 + $0x18] sm:$0xff]
    %v6106 = vld [vmem:[%s6101 + $0x20] sm:$0xff]
    %v6107 = vld [vmem:[%s6101 + $0x28] sm:$0xff]
    %v6108 = vld [vmem:[%s6101 + $0x30] sm:$0xff]
    %v6109 = vld [vmem:[%s6101 + $0x38] sm:$0xff]
    %v6110 = vld [vmem:[%s6101 + $0x40] sm:$0xff]
    %v6111 = vld [vmem:[%s6101 + $0x48] sm:$0xff]
    %v6112 = vld [vmem:[%s6101 + $0x50] sm:$0xff]
    %v6113 = vld [vmem:[%s6101 + $0x58] sm:$0xff]
    %v6114 = vld [vmem:[%s6101 + $0x60] sm:$0x1]
    %v6115 = vld [vmem:[%s6101 + $0x61] sm:$0x1]
    %v6116 = vld [vmem:[%s6101 + $0x62] sm:$0x1]
    %v6117 = vld [vmem:[%s6101 + $0x63] sm:$0x1]
    %v6118 = vld [vmem:[%s6101 + $0x64] sm:$0x1]
    %v6119 = vlaneseq
    %v6120 = vshrl.u32 %v6119, 7
    %v6121 = vsub.s32 0, %v6120
    %v6122 = vrot.slane %v6114, %v6121
    %v6124 = vsel %vm83, %v6099, 0
    %v6127 = vsel %vm83, %v6100, 0
    %6129 = vmatprep.subr.mxu0 0.0
    %6130 = vmatpush1.msra.mxu0 0.0
    %6131 = vmatprep.subr.mxu0 0.0
    %6132 = vmatpush1.msra.mxu0 0.0
    %6133 = vmatprep.subr.mxu0 0.0
    %6134 = vmatpush1.msra.mxu0 0.0
    %6135 = vmatprep.subr.mxu0 0.0
    %6136 = vmatpush1.msra.mxu0 0.0
    %6137 = vmatprep.subr.mxu0 0.0
    %6138 = vmatpush1.msra.mxu0 0.0
    %6139 = vmatprep.subr.mxu0 0.0
    %6140 = vmatpush1.msra.mxu0 0.0
    %6141 = vmatprep.subr.mxu0 0.0
    %6142 = vmatpush1.msra.mxu0 0.0
    %6143 = vmatprep.subr.mxu0 0.0
    %6144 = vmatpush1.msra.mxu0 0.0
    %6145 = vmatprep.subr.mxu0 0.0
    %6146 = vmatpush1.msra.mxu0 0.0
    %6147 = vmatprep.subr.mxu0 0.0
    %6148 = vmatpush1.msra.mxu0 0.0
    %6149 = vmatprep.subr.mxu0 0.0
    %6150 = vmatpush1.msra.mxu0 0.0
    %6151 = vmatprep.subr.mxu0 0.0
    %6152 = vmatpush1.msra.mxu0 0.0
    %6153 = vmatprep.subr.mxu0 0.0
    %6154 = vmatpush1.msra.mxu0 %v6105
    %6155 = vmatprep.subr.mxu0 0.0
    %6156 = vmatpush1.msra.mxu0 %v6104
    %6157 = vmatprep.subr.mxu0 0.0
    %6158 = vmatpush1.msra.mxu0 %v6103
    %6159 = vmatprep.subr.mxu0 0.0
    %6160 = vmatpush1.msra.mxu0 %v6102
    %6161 = vmatprep.subr.mxu0 0.0
    %6162 = vmatpush2.msra.mxu0 0.0
    %6163 = vmatprep.subr.mxu0 0.0
    %6164 = vmatpush2.msra.mxu0 0.0
    %6165 = vmatprep.subr.mxu0 0.0
    %6166 = vmatpush2.msra.mxu0 0.0
    %6167 = vmatprep.subr.mxu0 0.0
    %6168 = vmatpush2.msra.mxu0 0.0
    %6169 = vmatprep.subr.mxu0 0.0
    %6170 = vmatpush2.msra.mxu0 0.0
    %6171 = vmatprep.subr.mxu0 0.0
    %6172 = vmatpush2.msra.mxu0 0.0
    %6173 = vmatprep.subr.mxu0 0.0
    %6174 = vmatpush2.msra.mxu0 0.0
    %6175 = vmatprep.subr.mxu0 0.0
    %6176 = vmatpush2.msra.mxu0 0.0
    %6177 = vmatprep.subr.mxu0 0.0
    %6178 = vmatpush2.msra.mxu0 0.0
    %6179 = vmatprep.subr.mxu0 0.0
    %6180 = vmatpush2.msra.mxu0 0.0
    %6181 = vmatprep.subr.mxu0 0.0
    %6182 = vmatpush2.msra.mxu0 0.0
    %6183 = vmatprep.subr.mxu0 0.0
    %6184 = vmatpush2.msra.mxu0 0.0
    %6185 = vmatprep.subr.mxu0 0.0
    %6186 = vmatpush2.msra.mxu0 0.0
    %6187 = vmatprep.subr.mxu0 0.0
    %6188 = vmatpush2.msra.mxu0 0.0
    %6189 = vmatprep.subr.mxu0 0.0
    %6190 = vmatpush2.msra.mxu0 0.0
    %6191 = vmatprep.subr.mxu0 0.0
    %6192 = vmatpush2.msra.mxu0 0.0
    %6193 = vmatprep.mubr.f32.mxu0 0.0
    %6194 = vmatmul.mubr.f32.gmra.mxu0 %v6124
    %v6195 = vpop.f32.mrf.mxu0
    %v6196 = vadd.f32 %v6122, %v6195
    %v6197 = vpop.f32.mrf.mxu0
    %6198 = vmatprep.mubr.f32.mxu0 0.0
    %6199 = vmatmul.mubr.f32.gmra.mxu0 %v6127
    %v6200 = vpop.f32.mrf.mxu0
    %v6201 = vadd.f32 %v6122, %v6200
    %v6202 = vpop.f32.mrf.mxu0
    %6203 = vdwg.mxu0
    %6206 = vrot.lane.b32.xlu0 %v6196, 64
    %v6207 = vpop.permute.xlu0 %6206
    %6208 = vrot.lane.b32.xlu0 %v6201, 64
    %v6209 = vpop.permute.xlu0 %6208
    %6210 = vrot.lane.b32.xlu0 %v6196, 96
    %v6211 = vpop.permute.xlu0 %6210
    %6212 = vrot.lane.b32.xlu0 %v6201, 96
    %v6213 = vpop.permute.xlu0 %6212
    %v6214 = vsel %vm175, %v6207, 0
    %v6216 = vsel %vm175, %v6209, 0
    %v6218 = vsel %vm175, %v6211, 0
    %v6220 = vsel %vm175, %v6213, 0
    %6222 = vmatprep.subr.mxu0 0.0
    %6223 = vmatpush1.xpose.msra.mxu0 0.0
    %6224 = vmatprep.subr.mxu0 0.0
    %6225 = vmatpush1.xpose.msra.mxu0 0.0
    %6226 = vmatprep.subr.mxu0 0.0
    %6227 = vmatpush1.xpose.msra.mxu0 0.0
    %6228 = vmatprep.subr.mxu0 0.0
    %6229 = vmatpush1.xpose.msra.mxu0 0.0
    %6230 = vmatprep.subr.mxu0 0.0
    %6231 = vmatpush1.xpose.msra.mxu0 0.0
    %6232 = vmatprep.subr.mxu0 0.0
    %6233 = vmatpush1.xpose.msra.mxu0 0.0
    %6234 = vmatprep.subr.mxu0 0.0
    %6235 = vmatpush1.xpose.msra.mxu0 0.0
    %6236 = vmatprep.subr.mxu0 0.0
    %6237 = vmatpush1.xpose.msra.mxu0 0.0
    %6238 = vmatprep.subr.mxu0 0.0
    %6239 = vmatpush1.xpose.msra.mxu0 0.0
    %6240 = vmatprep.subr.mxu0 0.0
    %6241 = vmatpush1.xpose.msra.mxu0 0.0
    %6242 = vmatprep.subr.mxu0 0.0
    %6243 = vmatpush1.xpose.msra.mxu0 0.0
    %6244 = vmatprep.subr.mxu0 0.0
    %6245 = vmatpush1.xpose.msra.mxu0 0.0
    %6246 = vmatprep.subr.mxu0 0.0
    %6247 = vmatpush1.xpose.msra.mxu0 0.0
    %6248 = vmatprep.subr.mxu0 0.0
    %6249 = vmatpush1.xpose.msra.mxu0 0.0
    %6250 = vmatprep.subr.mxu0 0.0
    %6251 = vmatpush1.xpose.msra.mxu0 %v6220
    %6252 = vmatprep.subr.mxu0 0.0
    %6253 = vmatpush1.xpose.msra.mxu0 %v6218
    %6254 = vmatprep.subr.mxu0 0.0
    %6255 = vmatpush2.xpose.msra.mxu0 0.0
    %6256 = vmatprep.subr.mxu0 0.0
    %6257 = vmatpush2.xpose.msra.mxu0 0.0
    %6258 = vmatprep.subr.mxu0 0.0
    %6259 = vmatpush2.xpose.msra.mxu0 0.0
    %6260 = vmatprep.subr.mxu0 0.0
    %6261 = vmatpush2.xpose.msra.mxu0 0.0
    %6262 = vmatprep.subr.mxu0 0.0
    %6263 = vmatpush2.xpose.msra.mxu0 0.0
    %6264 = vmatprep.subr.mxu0 0.0
    %6265 = vmatpush2.xpose.msra.mxu0 0.0
    %6266 = vmatprep.subr.mxu0 0.0
    %6267 = vmatpush2.xpose.msra.mxu0 0.0
    %6268 = vmatprep.subr.mxu0 0.0
    %6269 = vmatpush2.xpose.msra.mxu0 0.0
    %6270 = vmatprep.subr.mxu0 0.0
    %6271 = vmatpush2.xpose.msra.mxu0 0.0
    %6272 = vmatprep.subr.mxu0 0.0
    %6273 = vmatpush2.xpose.msra.mxu0 0.0
    %6274 = vmatprep.subr.mxu0 0.0
    %6275 = vmatpush2.xpose.msra.mxu0 0.0
    %6276 = vmatprep.subr.mxu0 0.0
    %6277 = vmatpush2.xpose.msra.mxu0 0.0
    %6278 = vmatprep.subr.mxu0 0.0
    %6279 = vmatpush2.xpose.msra.mxu0 0.0
    %6280 = vmatprep.subr.mxu0 0.0
    %6281 = vmatpush2.xpose.msra.mxu0 0.0
    %6282 = vmatprep.subr.mxu0 0.0
    %6283 = vmatpush2.xpose.msra.mxu0 0.0
    %6284 = vmatprep.subr.mxu0 0.0
    %6285 = vmatpush2.xpose.msra.mxu0 0.0
    %6286 = vmatprep.mubr.f32.mxu0 0.0
    %6287 = vmatmul.mubr.f32.gmra.mxu0 %v6214
    %v6288 = vpop.f32.mrf.mxu0
    %v6289 = vadd.f32 %v64, %v6288
    %v6290 = vpop.f32.mrf.mxu0
    %6291 = vmatprep.mubr.f32.mxu0 0.0
    %6292 = vmatmul.mubr.f32.gmra.mxu0 %v6216
    %v6293 = vpop.f32.mrf.mxu0
    %v6294 = vadd.f32 %v65, %v6293
    %v6295 = vpop.f32.mrf.mxu0
    %6296 = vdwg.mxu0
    %v6297 = vsel %vm259, %v6289, -inf
    %6298 = vmax.xlane.f32.xlu0 %v6297
    %v6299 = vpop.xlane.xlu0 %6298
    %v6300 = vsel %vm259, %v6294, -inf
    %6301 = vmax.xlane.f32.xlu0 %v6300
    %v6302 = vpop.xlane.xlu0 %6301
    %v6303 = vsub.f32 %v6289, %v6299
    %v6304 = vsub.f32 %v6294, %v6302
    %v6305 = vmul.f32 %v6303, 1.442695
    %v6306 = vpow.pop %v6305
    %v6307 = vmul.f32 %v6304, 1.442695
    %v6308 = vpow.pop %v6307
    %v6309 = vsel %vm259, %v6306, 0.0
    %6310 = vadd.xlane.f32.xlu0 %v6309
    %v6311 = vpop.xlane.xlu0 %6310
    %v6312 = vsel %vm259, %v6308, 0.0
    %6313 = vadd.xlane.f32.xlu0 %v6312
    %v6314 = vpop.xlane.xlu0 %6313
    %v6315 = vrcp.pop %v6311
    %v6316 = vrcp.pop %v6314
    %v6317 = vmul.f32 %v6306, %v6315
    %v6318 = vmul.f32 %v6308, %v6316
    %v6320 = vsel %vm259, %v6317, 0
    %v6323 = vsel %vm259, %v6318, 0
    %6325 = vmatprep.subr.mxu0 0.0
    %6326 = vmatpush1.msra.mxu0 0.0
    %6327 = vmatprep.subr.mxu0 0.0
    %6328 = vmatpush1.msra.mxu0 0.0
    %6329 = vmatprep.subr.mxu0 0.0
    %6330 = vmatpush1.msra.mxu0 0.0
    %6331 = vmatprep.subr.mxu0 0.0
    %6332 = vmatpush1.msra.mxu0 0.0
    %6333 = vmatprep.subr.mxu0 0.0
    %6334 = vmatpush1.msra.mxu0 0.0
    %6335 = vmatprep.subr.mxu0 0.0
    %6336 = vmatpush1.msra.mxu0 0.0
    %6337 = vmatprep.subr.mxu0 0.0
    %6338 = vmatpush1.msra.mxu0 0.0
    %6339 = vmatprep.subr.mxu0 0.0
    %6340 = vmatpush1.msra.mxu0 0.0
    %6341 = vmatprep.subr.mxu0 0.0
    %6342 = vmatpush1.msra.mxu0 0.0
    %6343 = vmatprep.subr.mxu0 0.0
    %6344 = vmatpush1.msra.mxu0 0.0
    %6345 = vmatprep.subr.mxu0 0.0
    %6346 = vmatpush1.msra.mxu0 0.0
    %6347 = vmatprep.subr.mxu0 0.0
    %6348 = vmatpush1.msra.mxu0 0.0
    %6349 = vmatprep.subr.mxu0 0.0
    %6350 = vmatpush1.msra.mxu0 0.0
    %6351 = vmatprep.subr.mxu0 0.0
    %6352 = vmatpush1.msra.mxu0 0.0
    %6353 = vmatprep.subr.mxu0 0.0
    %6354 = vmatpush1.msra.mxu0 %v6201
    %6355 = vmatprep.subr.mxu0 0.0
    %6356 = vmatpush1.msra.mxu0 %v6196
    %6357 = vmatprep.subr.mxu0 0.0
    %6358 = vmatpush2.msra.mxu0 0.0
    %6359 = vmatprep.subr.mxu0 0.0
    %6360 = vmatpush2.msra.mxu0 0.0
    %6361 = vmatprep.subr.mxu0 0.0
    %6362 = vmatpush2.msra.mxu0 0.0
    %6363 = vmatprep.subr.mxu0 0.0
    %6364 = vmatpush2.msra.mxu0 0.0
    %6365 = vmatprep.subr.mxu0 0.0
    %6366 = vmatpush2.msra.mxu0 0.0
    %6367 = vmatprep.subr.mxu0 0.0
    %6368 = vmatpush2.msra.mxu0 0.0
    %6369 = vmatprep.subr.mxu0 0.0
    %6370 = vmatpush2.msra.mxu0 0.0
    %6371 = vmatprep.subr.mxu0 0.0
    %6372 = vmatpush2.msra.mxu0 0.0
    %6373 = vmatprep.subr.mxu0 0.0
    %6374 = vmatpush2.msra.mxu0 0.0
    %6375 = vmatprep.subr.mxu0 0.0
    %6376 = vmatpush2.msra.mxu0 0.0
    %6377 = vmatprep.subr.mxu0 0.0
    %6378 = vmatpush2.msra.mxu0 0.0
    %6379 = vmatprep.subr.mxu0 0.0
    %6380 = vmatpush2.msra.mxu0 0.0
    %6381 = vmatprep.subr.mxu0 0.0
    %6382 = vmatpush2.msra.mxu0 0.0
    %6383 = vmatprep.subr.mxu0 0.0
    %6384 = vmatpush2.msra.mxu0 0.0
    %6385 = vmatprep.subr.mxu0 0.0
    %6386 = vmatpush2.msra.mxu0 0.0
    %6387 = vmatprep.subr.mxu0 0.0
    %6388 = vmatpush2.msra.mxu0 0.0
    %6389 = vmatprep.mubr.f32.mxu0 0.0
    %6390 = vmatmul.mubr.f32.gmra.mxu0 %v6320
    %v6391 = vpop.f32.mrf.mxu0
    %v6392 = vadd.f32 0.0, %v6391
    %v6393 = vpop.f32.mrf.mxu0
    %6394 = vmatprep.mubr.f32.mxu0 0.0
    %6395 = vmatmul.mubr.f32.gmra.mxu0 %v6323
    %v6396 = vpop.f32.mrf.mxu0
    %v6397 = vadd.f32 0.0, %v6396
    %v6398 = vpop.f32.mrf.mxu0
    %6399 = vdwg.mxu0
    %6400 = vrot.lane.b32.xlu0 %v6196, 56
    %v6401 = vpop.permute.xlu0 %6400
    %6402 = vrot.lane.b32.xlu0 %v6201, 56
    %v6403 = vpop.permute.xlu0 %6402
    %6404 = vrot.lane.b32.xlu0 %v6196, 88
    %v6405 = vpop.permute.xlu0 %6404
    %6406 = vrot.lane.b32.xlu0 %v6201, 88
    %v6407 = vpop.permute.xlu0 %6406
    %v6408 = vsel %vm175, %v6401, 0
    %v6410 = vsel %vm175, %v6403, 0
    %v6412 = vsel %vm175, %v6405, 0
    %v6414 = vsel %vm175, %v6407, 0
    %6416 = vmatprep.subr.mxu0 0.0
    %6417 = vmatpush1.xpose.msra.mxu0 0.0
    %6418 = vmatprep.subr.mxu0 0.0
    %6419 = vmatpush1.xpose.msra.mxu0 0.0
    %6420 = vmatprep.subr.mxu0 0.0
    %6421 = vmatpush1.xpose.msra.mxu0 0.0
    %6422 = vmatprep.subr.mxu0 0.0
    %6423 = vmatpush1.xpose.msra.mxu0 0.0
    %6424 = vmatprep.subr.mxu0 0.0
    %6425 = vmatpush1.xpose.msra.mxu0 0.0
    %6426 = vmatprep.subr.mxu0 0.0
    %6427 = vmatpush1.xpose.msra.mxu0 0.0
    %6428 = vmatprep.subr.mxu0 0.0
    %6429 = vmatpush1.xpose.msra.mxu0 0.0
    %6430 = vmatprep.subr.mxu0 0.0
    %6431 = vmatpush1.xpose.msra.mxu0 0.0
    %6432 = vmatprep.subr.mxu0 0.0
    %6433 = vmatpush1.xpose.msra.mxu0 0.0
    %6434 = vmatprep.subr.mxu0 0.0
    %6435 = vmatpush1.xpose.msra.mxu0 0.0
    %6436 = vmatprep.subr.mxu0 0.0
    %6437 = vmatpush1.xpose.msra.mxu0 0.0
    %6438 = vmatprep.subr.mxu0 0.0
    %6439 = vmatpush1.xpose.msra.mxu0 0.0
    %6440 = vmatprep.subr.mxu0 0.0
    %6441 = vmatpush1.xpose.msra.mxu0 0.0
    %6442 = vmatprep.subr.mxu0 0.0
    %6443 = vmatpush1.xpose.msra.mxu0 0.0
    %6444 = vmatprep.subr.mxu0 0.0
    %6445 = vmatpush1.xpose.msra.mxu0 %v6414
    %6446 = vmatprep.subr.mxu0 0.0
    %6447 = vmatpush1.xpose.msra.mxu0 %v6412
    %6448 = vmatprep.subr.mxu0 0.0
    %6449 = vmatpush2.xpose.msra.mxu0 0.0
    %6450 = vmatprep.subr.mxu0 0.0
    %6451 = vmatpush2.xpose.msra.mxu0 0.0
    %6452 = vmatprep.subr.mxu0 0.0
    %6453 = vmatpush2.xpose.msra.mxu0 0.0
    %6454 = vmatprep.subr.mxu0 0.0
    %6455 = vmatpush2.xpose.msra.mxu0 0.0
    %6456 = vmatprep.subr.mxu0 0.0
    %6457 = vmatpush2.xpose.msra.mxu0 0.0
    %6458 = vmatprep.subr.mxu0 0.0
    %6459 = vmatpush2.xpose.msra.mxu0 0.0
    %6460 = vmatprep.subr.mxu0 0.0
    %6461 = vmatpush2.xpose.msra.mxu0 0.0
    %6462 = vmatprep.subr.mxu0 0.0
    %6463 = vmatpush2.xpose.msra.mxu0 0.0
    %6464 = vmatprep.subr.mxu0 0.0
    %6465 = vmatpush2.xpose.msra.mxu0 0.0
    %6466 = vmatprep.subr.mxu0 0.0
    %6467 = vmatpush2.xpose.msra.mxu0 0.0
    %6468 = vmatprep.subr.mxu0 0.0
    %6469 = vmatpush2.xpose.msra.mxu0 0.0
    %6470 = vmatprep.subr.mxu0 0.0
    %6471 = vmatpush2.xpose.msra.mxu0 0.0
    %6472 = vmatprep.subr.mxu0 0.0
    %6473 = vmatpush2.xpose.msra.mxu0 0.0
    %6474 = vmatprep.subr.mxu0 0.0
    %6475 = vmatpush2.xpose.msra.mxu0 0.0
    %6476 = vmatprep.subr.mxu0 0.0
    %6477 = vmatpush2.xpose.msra.mxu0 0.0
    %6478 = vmatprep.subr.mxu0 0.0
    %6479 = vmatpush2.xpose.msra.mxu0 0.0
    %6480 = vmatprep.mubr.f32.mxu0 0.0
    %6481 = vmatmul.mubr.f32.gmra.mxu0 %v6408
    %v6482 = vpop.f32.mrf.mxu0
    %v6483 = vadd.f32 %v64, %v6482
    %v6484 = vpop.f32.mrf.mxu0
    %6485 = vmatprep.mubr.f32.mxu0 0.0
    %6486 = vmatmul.mubr.f32.gmra.mxu0 %v6410
    %v6487 = vpop.f32.mrf.mxu0
    %v6488 = vadd.f32 %v65, %v6487
    %v6489 = vpop.f32.mrf.mxu0
    %6490 = vdwg.mxu0
    %v6491 = vsel %vm259, %v6483, -inf
    %6492 = vmax.xlane.f32.xlu0 %v6491
    %v6493 = vpop.xlane.xlu0 %6492
    %v6494 = vsel %vm259, %v6488, -inf
    %6495 = vmax.xlane.f32.xlu0 %v6494
    %v6496 = vpop.xlane.xlu0 %6495
    %v6497 = vsub.f32 %v6483, %v6493
    %v6498 = vsub.f32 %v6488, %v6496
    %v6499 = vmul.f32 %v6497, 1.442695
    %v6500 = vpow.pop %v6499
    %v6501 = vmul.f32 %v6498, 1.442695
    %v6502 = vpow.pop %v6501
    %v6503 = vsel %vm259, %v6500, 0.0
    %6504 = vadd.xlane.f32.xlu0 %v6503
    %v6505 = vpop.xlane.xlu0 %6504
    %v6506 = vsel %vm259, %v6502, 0.0
    %6507 = vadd.xlane.f32.xlu0 %v6506
    %v6508 = vpop.xlane.xlu0 %6507
    %v6509 = vrcp.pop %v6505
    %v6510 = vrcp.pop %v6508
    %v6511 = vmul.f32 %v6500, %v6509
    %v6512 = vmul.f32 %v6502, %v6510
    %6513 = vrot.lane.b32.xlu0 %v6196, 120
    %v6514 = vpop.permute.xlu0 %6513
    %6515 = vrot.lane.b32.xlu0 %v6201, 120
    %v6516 = vpop.permute.xlu0 %6515
    %v6520 = vsel %vm259, %v6511, 0
    %v6523 = vsel %vm259, %v6512, 0
    %6525 = vmatprep.subr.mxu0 0.0
    %6526 = vmatpush1.msra.mxu0 0.0
    %6527 = vmatprep.subr.mxu0 0.0
    %6528 = vmatpush1.msra.mxu0 0.0
    %6529 = vmatprep.subr.mxu0 0.0
    %6530 = vmatpush1.msra.mxu0 0.0
    %6531 = vmatprep.subr.mxu0 0.0
    %6532 = vmatpush1.msra.mxu0 0.0
    %6533 = vmatprep.subr.mxu0 0.0
    %6534 = vmatpush1.msra.mxu0 0.0
    %6535 = vmatprep.subr.mxu0 0.0
    %6536 = vmatpush1.msra.mxu0 0.0
    %6537 = vmatprep.subr.mxu0 0.0
    %6538 = vmatpush1.msra.mxu0 0.0
    %6539 = vmatprep.subr.mxu0 0.0
    %6540 = vmatpush1.msra.mxu0 0.0
    %6541 = vmatprep.subr.mxu0 0.0
    %6542 = vmatpush1.msra.mxu0 0.0
    %6543 = vmatprep.subr.mxu0 0.0
    %6544 = vmatpush1.msra.mxu0 0.0
    %6545 = vmatprep.subr.mxu0 0.0
    %6546 = vmatpush1.msra.mxu0 0.0
    %6547 = vmatprep.subr.mxu0 0.0
    %6548 = vmatpush1.msra.mxu0 0.0
    %6549 = vmatprep.subr.mxu0 0.0
    %6550 = vmatpush1.msra.mxu0 0.0
    %6551 = vmatprep.subr.mxu0 0.0
    %6552 = vmatpush1.msra.mxu0 0.0
    %6553 = vmatprep.subr.mxu0 0.0
    %6554 = vmatpush1.msra.mxu0 %v6516
    %6555 = vmatprep.subr.mxu0 0.0
    %6556 = vmatpush1.msra.mxu0 %v6514
    %6557 = vmatprep.subr.mxu0 0.0
    %6558 = vmatpush2.msra.mxu0 0.0
    %6559 = vmatprep.subr.mxu0 0.0
    %6560 = vmatpush2.msra.mxu0 0.0
    %6561 = vmatprep.subr.mxu0 0.0
    %6562 = vmatpush2.msra.mxu0 0.0
    %6563 = vmatprep.subr.mxu0 0.0
    %6564 = vmatpush2.msra.mxu0 0.0
    %6565 = vmatprep.subr.mxu0 0.0
    %6566 = vmatpush2.msra.mxu0 0.0
    %6567 = vmatprep.subr.mxu0 0.0
    %6568 = vmatpush2.msra.mxu0 0.0
    %6569 = vmatprep.subr.mxu0 0.0
    %6570 = vmatpush2.msra.mxu0 0.0
    %6571 = vmatprep.subr.mxu0 0.0
    %6572 = vmatpush2.msra.mxu0 0.0
    %6573 = vmatprep.subr.mxu0 0.0
    %6574 = vmatpush2.msra.mxu0 0.0
    %6575 = vmatprep.subr.mxu0 0.0
    %6576 = vmatpush2.msra.mxu0 0.0
    %6577 = vmatprep.subr.mxu0 0.0
    %6578 = vmatpush2.msra.mxu0 0.0
    %6579 = vmatprep.subr.mxu0 0.0
    %6580 = vmatpush2.msra.mxu0 0.0
    %6581 = vmatprep.subr.mxu0 0.0
    %6582 = vmatpush2.msra.mxu0 0.0
    %6583 = vmatprep.subr.mxu0 0.0
    %6584 = vmatpush2.msra.mxu0 0.0
    %6585 = vmatprep.subr.mxu0 0.0
    %6586 = vmatpush2.msra.mxu0 0.0
    %6587 = vmatprep.subr.mxu0 0.0
    %6588 = vmatpush2.msra.mxu0 0.0
    %6589 = vmatprep.mubr.f32.mxu0 0.0
    %6590 = vmatmul.mubr.f32.gmra.mxu0 %v6520
    %v6591 = vpop.f32.mrf.mxu0
    %v6592 = vadd.f32 0.0, %v6591
    %v6593 = vpop.f32.mrf.mxu0
    %6594 = vmatprep.mubr.f32.mxu0 0.0
    %6595 = vmatmul.mubr.f32.gmra.mxu0 %v6523
    %v6596 = vpop.f32.mrf.mxu0
    %v6597 = vadd.f32 0.0, %v6596
    %v6598 = vpop.f32.mrf.mxu0
    %6599 = vdwg.mxu0
    %6601 = vrot.lane.b32.xlu0 %v6103, 32
    %v6602 = vpop.permute.xlu0 %6601
    %v6605 = vsel %vm175, %v6592, 0
    %v6608 = vsel %vm175, %v6597, 0
    %6610 = vmatprep.subr.mxu0 0.0
    %6611 = vmatpush1.msra.mxu0 0.0
    %6612 = vmatprep.subr.mxu0 0.0
    %6613 = vmatpush1.msra.mxu0 0.0
    %6614 = vmatprep.subr.mxu0 0.0
    %6615 = vmatpush1.msra.mxu0 0.0
    %6616 = vmatprep.subr.mxu0 0.0
    %6617 = vmatpush1.msra.mxu0 0.0
    %6618 = vmatprep.subr.mxu0 0.0
    %6619 = vmatpush1.msra.mxu0 0.0
    %6620 = vmatprep.subr.mxu0 0.0
    %6621 = vmatpush1.msra.mxu0 0.0
    %6622 = vmatprep.subr.mxu0 0.0
    %6623 = vmatpush1.msra.mxu0 0.0
    %6624 = vmatprep.subr.mxu0 0.0
    %6625 = vmatpush1.msra.mxu0 0.0
    %6626 = vmatprep.subr.mxu0 0.0
    %6627 = vmatpush1.msra.mxu0 0.0
    %6628 = vmatprep.subr.mxu0 0.0
    %6629 = vmatpush1.msra.mxu0 0.0
    %6630 = vmatprep.subr.mxu0 0.0
    %6631 = vmatpush1.msra.mxu0 0.0
    %6632 = vmatprep.subr.mxu0 0.0
    %6633 = vmatpush1.msra.mxu0 0.0
    %6634 = vmatprep.subr.mxu0 0.0
    %6635 = vmatpush1.msra.mxu0 0.0
    %6636 = vmatprep.subr.mxu0 0.0
    %6637 = vmatpush1.msra.mxu0 0.0
    %6638 = vmatprep.subr.mxu0 0.0
    %6639 = vmatpush1.msra.mxu0 0.0
    %6640 = vmatprep.subr.mxu0 0.0
    %6641 = vmatpush1.msra.mxu0 %v6602
    %6642 = vmatprep.subr.mxu0 0.0
    %6643 = vmatpush2.msra.mxu0 0.0
    %6644 = vmatprep.subr.mxu0 0.0
    %6645 = vmatpush2.msra.mxu0 0.0
    %6646 = vmatprep.subr.mxu0 0.0
    %6647 = vmatpush2.msra.mxu0 0.0
    %6648 = vmatprep.subr.mxu0 0.0
    %6649 = vmatpush2.msra.mxu0 0.0
    %6650 = vmatprep.subr.mxu0 0.0
    %6651 = vmatpush2.msra.mxu0 0.0
    %6652 = vmatprep.subr.mxu0 0.0
    %6653 = vmatpush2.msra.mxu0 0.0
    %6654 = vmatprep.subr.mxu0 0.0
    %6655 = vmatpush2.msra.mxu0 0.0
    %6656 = vmatprep.subr.mxu0 0.0
    %6657 = vmatpush2.msra.mxu0 0.0
    %6658 = vmatprep.subr.mxu0 0.0
    %6659 = vmatpush2.msra.mxu0 0.0
    %6660 = vmatprep.subr.mxu0 0.0
    %6661 = vmatpush2.msra.mxu0 0.0
    %6662 = vmatprep.subr.mxu0 0.0
    %6663 = vmatpush2.msra.mxu0 0.0
    %6664 = vmatprep.subr.mxu0 0.0
    %6665 = vmatpush2.msra.mxu0 0.0
    %6666 = vmatprep.subr.mxu0 0.0
    %6667 = vmatpush2.msra.mxu0 0.0
    %6668 = vmatprep.subr.mxu0 0.0
    %6669 = vmatpush2.msra.mxu0 0.0
    %6670 = vmatprep.subr.mxu0 0.0
    %6671 = vmatpush2.msra.mxu0 0.0
    %6672 = vmatprep.subr.mxu0 0.0
    %6673 = vmatpush2.msra.mxu0 0.0
    %6674 = vmatprep.mubr.f32.mxu0 0.0
    %6675 = vmatmul.mubr.f32.gmra.mxu0 %v6605
    %v6676 = vpop.f32.mrf.mxu0
    %v6677 = vadd.f32 0.0, %v6676
    %v6678 = vpop.f32.mrf.mxu0
    %6679 = vmatprep.mubr.f32.mxu0 0.0
    %6680 = vmatmul.mubr.f32.gmra.mxu0 %v6608
    %v6681 = vpop.f32.mrf.mxu0
    %v6682 = vadd.f32 0.0, %v6681
    %v6683 = vpop.f32.mrf.mxu0
    %6684 = vdwg.mxu0
    %6686 = vrot.lane.b32.xlu0 %v6102, 32
    %v6687 = vpop.permute.xlu0 %6686
    %v6690 = vsel %vm175, %v6392, 0
    %v6693 = vsel %vm175, %v6397, 0
    %6695 = vmatprep.subr.mxu0 0.0
    %6696 = vmatpush1.msra.mxu0 0.0
    %6697 = vmatprep.subr.mxu0 0.0
    %6698 = vmatpush1.msra.mxu0 0.0
    %6699 = vmatprep.subr.mxu0 0.0
    %6700 = vmatpush1.msra.mxu0 0.0
    %6701 = vmatprep.subr.mxu0 0.0
    %6702 = vmatpush1.msra.mxu0 0.0
    %6703 = vmatprep.subr.mxu0 0.0
    %6704 = vmatpush1.msra.mxu0 0.0
    %6705 = vmatprep.subr.mxu0 0.0
    %6706 = vmatpush1.msra.mxu0 0.0
    %6707 = vmatprep.subr.mxu0 0.0
    %6708 = vmatpush1.msra.mxu0 0.0
    %6709 = vmatprep.subr.mxu0 0.0
    %6710 = vmatpush1.msra.mxu0 0.0
    %6711 = vmatprep.subr.mxu0 0.0
    %6712 = vmatpush1.msra.mxu0 0.0
    %6713 = vmatprep.subr.mxu0 0.0
    %6714 = vmatpush1.msra.mxu0 0.0
    %6715 = vmatprep.subr.mxu0 0.0
    %6716 = vmatpush1.msra.mxu0 0.0
    %6717 = vmatprep.subr.mxu0 0.0
    %6718 = vmatpush1.msra.mxu0 0.0
    %6719 = vmatprep.subr.mxu0 0.0
    %6720 = vmatpush1.msra.mxu0 0.0
    %6721 = vmatprep.subr.mxu0 0.0
    %6722 = vmatpush1.msra.mxu0 0.0
    %6723 = vmatprep.subr.mxu0 0.0
    %6724 = vmatpush1.msra.mxu0 0.0
    %6725 = vmatprep.subr.mxu0 0.0
    %6726 = vmatpush1.msra.mxu0 %v6687
    %6727 = vmatprep.subr.mxu0 0.0
    %6728 = vmatpush2.msra.mxu0 0.0
    %6729 = vmatprep.subr.mxu0 0.0
    %6730 = vmatpush2.msra.mxu0 0.0
    %6731 = vmatprep.subr.mxu0 0.0
    %6732 = vmatpush2.msra.mxu0 0.0
    %6733 = vmatprep.subr.mxu0 0.0
    %6734 = vmatpush2.msra.mxu0 0.0
    %6735 = vmatprep.subr.mxu0 0.0
    %6736 = vmatpush2.msra.mxu0 0.0
    %6737 = vmatprep.subr.mxu0 0.0
    %6738 = vmatpush2.msra.mxu0 0.0
    %6739 = vmatprep.subr.mxu0 0.0
    %6740 = vmatpush2.msra.mxu0 0.0
    %6741 = vmatprep.subr.mxu0 0.0
    %6742 = vmatpush2.msra.mxu0 0.0
    %6743 = vmatprep.subr.mxu0 0.0
    %6744 = vmatpush2.msra.mxu0 0.0
    %6745 = vmatprep.subr.mxu0 0.0
    %6746 = vmatpush2.msra.mxu0 0.0
    %6747 = vmatprep.subr.mxu0 0.0
    %6748 = vmatpush2.msra.mxu0 0.0
    %6749 = vmatprep.subr.mxu0 0.0
    %6750 = vmatpush2.msra.mxu0 0.0
    %6751 = vmatprep.subr.mxu0 0.0
    %6752 = vmatpush2.msra.mxu0 0.0
    %6753 = vmatprep.subr.mxu0 0.0
    %6754 = vmatpush2.msra.mxu0 0.0
    %6755 = vmatprep.subr.mxu0 0.0
    %6756 = vmatpush2.msra.mxu0 0.0
    %6757 = vmatprep.subr.mxu0 0.0
    %6758 = vmatpush2.msra.mxu0 0.0
    %6759 = vmatprep.mubr.f32.mxu0 0.0
    %6760 = vmatmul.mubr.f32.gmra.mxu0 %v6690
    %v6761 = vpop.f32.mrf.mxu0
    %v6762 = vadd.f32 %v6677, %v6761
    %v6763 = vpop.f32.mrf.mxu0
    %6764 = vmatprep.mubr.f32.mxu0 0.0
    %6765 = vmatmul.mubr.f32.gmra.mxu0 %v6693
    %v6766 = vpop.f32.mrf.mxu0
    %v6767 = vadd.f32 %v6682, %v6766
    %v6768 = vpop.f32.mrf.mxu0
    %6769 = vdwg.mxu0
    %6770 = vrot.lane.b32.xlu0 %v6196, 48
    %v6771 = vpop.permute.xlu0 %6770
    %6772 = vrot.lane.b32.xlu0 %v6201, 48
    %v6773 = vpop.permute.xlu0 %6772
    %6774 = vrot.lane.b32.xlu0 %v6196, 80
    %v6775 = vpop.permute.xlu0 %6774
    %6776 = vrot.lane.b32.xlu0 %v6201, 80
    %v6777 = vpop.permute.xlu0 %6776
    %v6778 = vsel %vm175, %v6771, 0
    %v6780 = vsel %vm175, %v6773, 0
    %v6782 = vsel %vm175, %v6775, 0
    %v6784 = vsel %vm175, %v6777, 0
    %6786 = vmatprep.subr.mxu0 0.0
    %6787 = vmatpush1.xpose.msra.mxu0 0.0
    %6788 = vmatprep.subr.mxu0 0.0
    %6789 = vmatpush1.xpose.msra.mxu0 0.0
    %6790 = vmatprep.subr.mxu0 0.0
    %6791 = vmatpush1.xpose.msra.mxu0 0.0
    %6792 = vmatprep.subr.mxu0 0.0
    %6793 = vmatpush1.xpose.msra.mxu0 0.0
    %6794 = vmatprep.subr.mxu0 0.0
    %6795 = vmatpush1.xpose.msra.mxu0 0.0
    %6796 = vmatprep.subr.mxu0 0.0
    %6797 = vmatpush1.xpose.msra.mxu0 0.0
    %6798 = vmatprep.subr.mxu0 0.0
    %6799 = vmatpush1.xpose.msra.mxu0 0.0
    %6800 = vmatprep.subr.mxu0 0.0
    %6801 = vmatpush1.xpose.msra.mxu0 0.0
    %6802 = vmatprep.subr.mxu0 0.0
    %6803 = vmatpush1.xpose.msra.mxu0 0.0
    %6804 = vmatprep.subr.mxu0 0.0
    %6805 = vmatpush1.xpose.msra.mxu0 0.0
    %6806 = vmatprep.subr.mxu0 0.0
    %6807 = vmatpush1.xpose.msra.mxu0 0.0
    %6808 = vmatprep.subr.mxu0 0.0
    %6809 = vmatpush1.xpose.msra.mxu0 0.0
    %6810 = vmatprep.subr.mxu0 0.0
    %6811 = vmatpush1.xpose.msra.mxu0 0.0
    %6812 = vmatprep.subr.mxu0 0.0
    %6813 = vmatpush1.xpose.msra.mxu0 0.0
    %6814 = vmatprep.subr.mxu0 0.0
    %6815 = vmatpush1.xpose.msra.mxu0 %v6784
    %6816 = vmatprep.subr.mxu0 0.0
    %6817 = vmatpush1.xpose.msra.mxu0 %v6782
    %6818 = vmatprep.subr.mxu0 0.0
    %6819 = vmatpush2.xpose.msra.mxu0 0.0
    %6820 = vmatprep.subr.mxu0 0.0
    %6821 = vmatpush2.xpose.msra.mxu0 0.0
    %6822 = vmatprep.subr.mxu0 0.0
    %6823 = vmatpush2.xpose.msra.mxu0 0.0
    %6824 = vmatprep.subr.mxu0 0.0
    %6825 = vmatpush2.xpose.msra.mxu0 0.0
    %6826 = vmatprep.subr.mxu0 0.0
    %6827 = vmatpush2.xpose.msra.mxu0 0.0
    %6828 = vmatprep.subr.mxu0 0.0
    %6829 = vmatpush2.xpose.msra.mxu0 0.0
    %6830 = vmatprep.subr.mxu0 0.0
    %6831 = vmatpush2.xpose.msra.mxu0 0.0
    %6832 = vmatprep.subr.mxu0 0.0
    %6833 = vmatpush2.xpose.msra.mxu0 0.0
    %6834 = vmatprep.subr.mxu0 0.0
    %6835 = vmatpush2.xpose.msra.mxu0 0.0
    %6836 = vmatprep.subr.mxu0 0.0
    %6837 = vmatpush2.xpose.msra.mxu0 0.0
    %6838 = vmatprep.subr.mxu0 0.0
    %6839 = vmatpush2.xpose.msra.mxu0 0.0
    %6840 = vmatprep.subr.mxu0 0.0
    %6841 = vmatpush2.xpose.msra.mxu0 0.0
    %6842 = vmatprep.subr.mxu0 0.0
    %6843 = vmatpush2.xpose.msra.mxu0 0.0
    %6844 = vmatprep.subr.mxu0 0.0
    %6845 = vmatpush2.xpose.msra.mxu0 0.0
    %6846 = vmatprep.subr.mxu0 0.0
    %6847 = vmatpush2.xpose.msra.mxu0 0.0
    %6848 = vmatprep.subr.mxu0 0.0
    %6849 = vmatpush2.xpose.msra.mxu0 0.0
    %6850 = vmatprep.mubr.f32.mxu0 0.0
    %6851 = vmatmul.mubr.f32.gmra.mxu0 %v6778
    %v6852 = vpop.f32.mrf.mxu0
    %v6853 = vadd.f32 %v64, %v6852
    %v6854 = vpop.f32.mrf.mxu0
    %6855 = vmatprep.mubr.f32.mxu0 0.0
    %6856 = vmatmul.mubr.f32.gmra.mxu0 %v6780
    %v6857 = vpop.f32.mrf.mxu0
    %v6858 = vadd.f32 %v65, %v6857
    %v6859 = vpop.f32.mrf.mxu0
    %6860 = vdwg.mxu0
    %v6861 = vsel %vm259, %v6853, -inf
    %6862 = vmax.xlane.f32.xlu0 %v6861
    %v6863 = vpop.xlane.xlu0 %6862
    %v6864 = vsel %vm259, %v6858, -inf
    %6865 = vmax.xlane.f32.xlu0 %v6864
    %v6866 = vpop.xlane.xlu0 %6865
    %v6867 = vsub.f32 %v6853, %v6863
    %v6868 = vsub.f32 %v6858, %v6866
    %v6869 = vmul.f32 %v6867, 1.442695
    %v6870 = vpow.pop %v6869
    %v6871 = vmul.f32 %v6868, 1.442695
    %v6872 = vpow.pop %v6871
    %v6873 = vsel %vm259, %v6870, 0.0
    %6874 = vadd.xlane.f32.xlu0 %v6873
    %v6875 = vpop.xlane.xlu0 %6874
    %v6876 = vsel %vm259, %v6872, 0.0
    %6877 = vadd.xlane.f32.xlu0 %v6876
    %v6878 = vpop.xlane.xlu0 %6877
    %v6879 = vrcp.pop %v6875
    %v6880 = vrcp.pop %v6878
    %v6881 = vmul.f32 %v6870, %v6879
    %v6882 = vmul.f32 %v6872, %v6880
    %6883 = vrot.lane.b32.xlu0 %v6196, 112
    %v6884 = vpop.permute.xlu0 %6883
    %6885 = vrot.lane.b32.xlu0 %v6201, 112
    %v6886 = vpop.permute.xlu0 %6885
    %v6890 = vsel %vm259, %v6881, 0
    %v6893 = vsel %vm259, %v6882, 0
    %6895 = vmatprep.subr.mxu0 0.0
    %6896 = vmatpush1.msra.mxu0 0.0
    %6897 = vmatprep.subr.mxu0 0.0
    %6898 = vmatpush1.msra.mxu0 0.0
    %6899 = vmatprep.subr.mxu0 0.0
    %6900 = vmatpush1.msra.mxu0 0.0
    %6901 = vmatprep.subr.mxu0 0.0
    %6902 = vmatpush1.msra.mxu0 0.0
    %6903 = vmatprep.subr.mxu0 0.0
    %6904 = vmatpush1.msra.mxu0 0.0
    %6905 = vmatprep.subr.mxu0 0.0
    %6906 = vmatpush1.msra.mxu0 0.0
    %6907 = vmatprep.subr.mxu0 0.0
    %6908 = vmatpush1.msra.mxu0 0.0
    %6909 = vmatprep.subr.mxu0 0.0
    %6910 = vmatpush1.msra.mxu0 0.0
    %6911 = vmatprep.subr.mxu0 0.0
    %6912 = vmatpush1.msra.mxu0 0.0
    %6913 = vmatprep.subr.mxu0 0.0
    %6914 = vmatpush1.msra.mxu0 0.0
    %6915 = vmatprep.subr.mxu0 0.0
    %6916 = vmatpush1.msra.mxu0 0.0
    %6917 = vmatprep.subr.mxu0 0.0
    %6918 = vmatpush1.msra.mxu0 0.0
    %6919 = vmatprep.subr.mxu0 0.0
    %6920 = vmatpush1.msra.mxu0 0.0
    %6921 = vmatprep.subr.mxu0 0.0
    %6922 = vmatpush1.msra.mxu0 0.0
    %6923 = vmatprep.subr.mxu0 0.0
    %6924 = vmatpush1.msra.mxu0 %v6886
    %6925 = vmatprep.subr.mxu0 0.0
    %6926 = vmatpush1.msra.mxu0 %v6884
    %6927 = vmatprep.subr.mxu0 0.0
    %6928 = vmatpush2.msra.mxu0 0.0
    %6929 = vmatprep.subr.mxu0 0.0
    %6930 = vmatpush2.msra.mxu0 0.0
    %6931 = vmatprep.subr.mxu0 0.0
    %6932 = vmatpush2.msra.mxu0 0.0
    %6933 = vmatprep.subr.mxu0 0.0
    %6934 = vmatpush2.msra.mxu0 0.0
    %6935 = vmatprep.subr.mxu0 0.0
    %6936 = vmatpush2.msra.mxu0 0.0
    %6937 = vmatprep.subr.mxu0 0.0
    %6938 = vmatpush2.msra.mxu0 0.0
    %6939 = vmatprep.subr.mxu0 0.0
    %6940 = vmatpush2.msra.mxu0 0.0
    %6941 = vmatprep.subr.mxu0 0.0
    %6942 = vmatpush2.msra.mxu0 0.0
    %6943 = vmatprep.subr.mxu0 0.0
    %6944 = vmatpush2.msra.mxu0 0.0
    %6945 = vmatprep.subr.mxu0 0.0
    %6946 = vmatpush2.msra.mxu0 0.0
    %6947 = vmatprep.subr.mxu0 0.0
    %6948 = vmatpush2.msra.mxu0 0.0
    %6949 = vmatprep.subr.mxu0 0.0
    %6950 = vmatpush2.msra.mxu0 0.0
    %6951 = vmatprep.subr.mxu0 0.0
    %6952 = vmatpush2.msra.mxu0 0.0
    %6953 = vmatprep.subr.mxu0 0.0
    %6954 = vmatpush2.msra.mxu0 0.0
    %6955 = vmatprep.subr.mxu0 0.0
    %6956 = vmatpush2.msra.mxu0 0.0
    %6957 = vmatprep.subr.mxu0 0.0
    %6958 = vmatpush2.msra.mxu0 0.0
    %6959 = vmatprep.mubr.f32.mxu0 0.0
    %6960 = vmatmul.mubr.f32.gmra.mxu0 %v6890
    %v6961 = vpop.f32.mrf.mxu0
    %v6962 = vadd.f32 0.0, %v6961
    %v6963 = vpop.f32.mrf.mxu0
    %6964 = vmatprep.mubr.f32.mxu0 0.0
    %6965 = vmatmul.mubr.f32.gmra.mxu0 %v6893
    %v6966 = vpop.f32.mrf.mxu0
    %v6967 = vadd.f32 0.0, %v6966
    %v6968 = vpop.f32.mrf.mxu0
    %6969 = vdwg.mxu0
    %6971 = vrot.lane.b32.xlu0 %v6104, 32
    %v6972 = vpop.permute.xlu0 %6971
    %v6975 = vsel %vm175, %v6962, 0
    %v6978 = vsel %vm175, %v6967, 0
    %6980 = vmatprep.subr.mxu0 0.0
    %6981 = vmatpush1.msra.mxu0 0.0
    %6982 = vmatprep.subr.mxu0 0.0
    %6983 = vmatpush1.msra.mxu0 0.0
    %6984 = vmatprep.subr.mxu0 0.0
    %6985 = vmatpush1.msra.mxu0 0.0
    %6986 = vmatprep.subr.mxu0 0.0
    %6987 = vmatpush1.msra.mxu0 0.0
    %6988 = vmatprep.subr.mxu0 0.0
    %6989 = vmatpush1.msra.mxu0 0.0
    %6990 = vmatprep.subr.mxu0 0.0
    %6991 = vmatpush1.msra.mxu0 0.0
    %6992 = vmatprep.subr.mxu0 0.0
    %6993 = vmatpush1.msra.mxu0 0.0
    %6994 = vmatprep.subr.mxu0 0.0
    %6995 = vmatpush1.msra.mxu0 0.0
    %6996 = vmatprep.subr.mxu0 0.0
    %6997 = vmatpush1.msra.mxu0 0.0
    %6998 = vmatprep.subr.mxu0 0.0
    %6999 = vmatpush1.msra.mxu0 0.0
    %7000 = vmatprep.subr.mxu0 0.0
    %7001 = vmatpush1.msra.mxu0 0.0
    %7002 = vmatprep.subr.mxu0 0.0
    %7003 = vmatpush1.msra.mxu0 0.0
    %7004 = vmatprep.subr.mxu0 0.0
    %7005 = vmatpush1.msra.mxu0 0.0
    %7006 = vmatprep.subr.mxu0 0.0
    %7007 = vmatpush1.msra.mxu0 0.0
    %7008 = vmatprep.subr.mxu0 0.0
    %7009 = vmatpush1.msra.mxu0 0.0
    %7010 = vmatprep.subr.mxu0 0.0
    %7011 = vmatpush1.msra.mxu0 %v6972
    %7012 = vmatprep.subr.mxu0 0.0
    %7013 = vmatpush2.msra.mxu0 0.0
    %7014 = vmatprep.subr.mxu0 0.0
    %7015 = vmatpush2.msra.mxu0 0.0
    %7016 = vmatprep.subr.mxu0 0.0
    %7017 = vmatpush2.msra.mxu0 0.0
    %7018 = vmatprep.subr.mxu0 0.0
    %7019 = vmatpush2.msra.mxu0 0.0
    %7020 = vmatprep.subr.mxu0 0.0
    %7021 = vmatpush2.msra.mxu0 0.0
    %7022 = vmatprep.subr.mxu0 0.0
    %7023 = vmatpush2.msra.mxu0 0.0
    %7024 = vmatprep.subr.mxu0 0.0
    %7025 = vmatpush2.msra.mxu0 0.0
    %7026 = vmatprep.subr.mxu0 0.0
    %7027 = vmatpush2.msra.mxu0 0.0
    %7028 = vmatprep.subr.mxu0 0.0
    %7029 = vmatpush2.msra.mxu0 0.0
    %7030 = vmatprep.subr.mxu0 0.0
    %7031 = vmatpush2.msra.mxu0 0.0
    %7032 = vmatprep.subr.mxu0 0.0
    %7033 = vmatpush2.msra.mxu0 0.0
    %7034 = vmatprep.subr.mxu0 0.0
    %7035 = vmatpush2.msra.mxu0 0.0
    %7036 = vmatprep.subr.mxu0 0.0
    %7037 = vmatpush2.msra.mxu0 0.0
    %7038 = vmatprep.subr.mxu0 0.0
    %7039 = vmatpush2.msra.mxu0 0.0
    %7040 = vmatprep.subr.mxu0 0.0
    %7041 = vmatpush2.msra.mxu0 0.0
    %7042 = vmatprep.subr.mxu0 0.0
    %7043 = vmatpush2.msra.mxu0 0.0
    %7044 = vmatprep.mubr.f32.mxu0 0.0
    %7045 = vmatmul.mubr.f32.gmra.mxu0 %v6975
    %v7046 = vpop.f32.mrf.mxu0
    %v7047 = vadd.f32 0.0, %v7046
    %v7048 = vpop.f32.mrf.mxu0
    %7049 = vmatprep.mubr.f32.mxu0 0.0
    %7050 = vmatmul.mubr.f32.gmra.mxu0 %v6978
    %v7051 = vpop.f32.mrf.mxu0
    %v7052 = vadd.f32 0.0, %v7051
    %v7053 = vpop.f32.mrf.mxu0
    %7054 = vdwg.mxu0
    %v7055 = vadd.f32 %v6762, %v7047
    %v7056 = vadd.f32 %v6767, %v7052
    %7057 = vrot.lane.b32.xlu0 %v6196, 40
    %v7058 = vpop.permute.xlu0 %7057
    %7059 = vrot.lane.b32.xlu0 %v6201, 40
    %v7060 = vpop.permute.xlu0 %7059
    %7061 = vrot.lane.b32.xlu0 %v6196, 72
    %v7062 = vpop.permute.xlu0 %7061
    %7063 = vrot.lane.b32.xlu0 %v6201, 72
    %v7064 = vpop.permute.xlu0 %7063
    %v7065 = vsel %vm175, %v7058, 0
    %v7067 = vsel %vm175, %v7060, 0
    %v7069 = vsel %vm175, %v7062, 0
    %v7071 = vsel %vm175, %v7064, 0
    %7073 = vmatprep.subr.mxu0 0.0
    %7074 = vmatpush1.xpose.msra.mxu0 0.0
    %7075 = vmatprep.subr.mxu0 0.0
    %7076 = vmatpush1.xpose.msra.mxu0 0.0
    %7077 = vmatprep.subr.mxu0 0.0
    %7078 = vmatpush1.xpose.msra.mxu0 0.0
    %7079 = vmatprep.subr.mxu0 0.0
    %7080 = vmatpush1.xpose.msra.mxu0 0.0
    %7081 = vmatprep.subr.mxu0 0.0
    %7082 = vmatpush1.xpose.msra.mxu0 0.0
    %7083 = vmatprep.subr.mxu0 0.0
    %7084 = vmatpush1.xpose.msra.mxu0 0.0
    %7085 = vmatprep.subr.mxu0 0.0
    %7086 = vmatpush1.xpose.msra.mxu0 0.0
    %7087 = vmatprep.subr.mxu0 0.0
    %7088 = vmatpush1.xpose.msra.mxu0 0.0
    %7089 = vmatprep.subr.mxu0 0.0
    %7090 = vmatpush1.xpose.msra.mxu0 0.0
    %7091 = vmatprep.subr.mxu0 0.0
    %7092 = vmatpush1.xpose.msra.mxu0 0.0
    %7093 = vmatprep.subr.mxu0 0.0
    %7094 = vmatpush1.xpose.msra.mxu0 0.0
    %7095 = vmatprep.subr.mxu0 0.0
    %7096 = vmatpush1.xpose.msra.mxu0 0.0
    %7097 = vmatprep.subr.mxu0 0.0
    %7098 = vmatpush1.xpose.msra.mxu0 0.0
    %7099 = vmatprep.subr.mxu0 0.0
    %7100 = vmatpush1.xpose.msra.mxu0 0.0
    %7101 = vmatprep.subr.mxu0 0.0
    %7102 = vmatpush1.xpose.msra.mxu0 %v7071
    %7103 = vmatprep.subr.mxu0 0.0
    %7104 = vmatpush1.xpose.msra.mxu0 %v7069
    %7105 = vmatprep.subr.mxu0 0.0
    %7106 = vmatpush2.xpose.msra.mxu0 0.0
    %7107 = vmatprep.subr.mxu0 0.0
    %7108 = vmatpush2.xpose.msra.mxu0 0.0
    %7109 = vmatprep.subr.mxu0 0.0
    %7110 = vmatpush2.xpose.msra.mxu0 0.0
    %7111 = vmatprep.subr.mxu0 0.0
    %7112 = vmatpush2.xpose.msra.mxu0 0.0
    %7113 = vmatprep.subr.mxu0 0.0
    %7114 = vmatpush2.xpose.msra.mxu0 0.0
    %7115 = vmatprep.subr.mxu0 0.0
    %7116 = vmatpush2.xpose.msra.mxu0 0.0
    %7117 = vmatprep.subr.mxu0 0.0
    %7118 = vmatpush2.xpose.msra.mxu0 0.0
    %7119 = vmatprep.subr.mxu0 0.0
    %7120 = vmatpush2.xpose.msra.mxu0 0.0
    %7121 = vmatprep.subr.mxu0 0.0
    %7122 = vmatpush2.xpose.msra.mxu0 0.0
    %7123 = vmatprep.subr.mxu0 0.0
    %7124 = vmatpush2.xpose.msra.mxu0 0.0
    %7125 = vmatprep.subr.mxu0 0.0
    %7126 = vmatpush2.xpose.msra.mxu0 0.0
    %7127 = vmatprep.subr.mxu0 0.0
    %7128 = vmatpush2.xpose.msra.mxu0 0.0
    %7129 = vmatprep.subr.mxu0 0.0
    %7130 = vmatpush2.xpose.msra.mxu0 0.0
    %7131 = vmatprep.subr.mxu0 0.0
    %7132 = vmatpush2.xpose.msra.mxu0 0.0
    %7133 = vmatprep.subr.mxu0 0.0
    %7134 = vmatpush2.xpose.msra.mxu0 0.0
    %7135 = vmatprep.subr.mxu0 0.0
    %7136 = vmatpush2.xpose.msra.mxu0 0.0
    %7137 = vmatprep.mubr.f32.mxu0 0.0
    %7138 = vmatmul.mubr.f32.gmra.mxu0 %v7065
    %v7139 = vpop.f32.mrf.mxu0
    %v7140 = vadd.f32 %v64, %v7139
    %v7141 = vpop.f32.mrf.mxu0
    %7142 = vmatprep.mubr.f32.mxu0 0.0
    %7143 = vmatmul.mubr.f32.gmra.mxu0 %v7067
    %v7144 = vpop.f32.mrf.mxu0
    %v7145 = vadd.f32 %v65, %v7144
    %v7146 = vpop.f32.mrf.mxu0
    %7147 = vdwg.mxu0
    %v7148 = vsel %vm259, %v7140, -inf
    %7149 = vmax.xlane.f32.xlu0 %v7148
    %v7150 = vpop.xlane.xlu0 %7149
    %v7151 = vsel %vm259, %v7145, -inf
    %7152 = vmax.xlane.f32.xlu0 %v7151
    %v7153 = vpop.xlane.xlu0 %7152
    %v7154 = vsub.f32 %v7140, %v7150
    %v7155 = vsub.f32 %v7145, %v7153
    %v7156 = vmul.f32 %v7154, 1.442695
    %v7157 = vpow.pop %v7156
    %v7158 = vmul.f32 %v7155, 1.442695
    %v7159 = vpow.pop %v7158
    %v7160 = vsel %vm259, %v7157, 0.0
    %7161 = vadd.xlane.f32.xlu0 %v7160
    %v7162 = vpop.xlane.xlu0 %7161
    %v7163 = vsel %vm259, %v7159, 0.0
    %7164 = vadd.xlane.f32.xlu0 %v7163
    %v7165 = vpop.xlane.xlu0 %7164
    %v7166 = vrcp.pop %v7162
    %v7167 = vrcp.pop %v7165
    %v7168 = vmul.f32 %v7157, %v7166
    %v7169 = vmul.f32 %v7159, %v7167
    %7170 = vrot.lane.b32.xlu0 %v6196, 104
    %v7171 = vpop.permute.xlu0 %7170
    %7172 = vrot.lane.b32.xlu0 %v6201, 104
    %v7173 = vpop.permute.xlu0 %7172
    %v7177 = vsel %vm259, %v7168, 0
    %v7180 = vsel %vm259, %v7169, 0
    %7182 = vmatprep.subr.mxu0 0.0
    %7183 = vmatpush1.msra.mxu0 0.0
    %7184 = vmatprep.subr.mxu0 0.0
    %7185 = vmatpush1.msra.mxu0 0.0
    %7186 = vmatprep.subr.mxu0 0.0
    %7187 = vmatpush1.msra.mxu0 0.0
    %7188 = vmatprep.subr.mxu0 0.0
    %7189 = vmatpush1.msra.mxu0 0.0
    %7190 = vmatprep.subr.mxu0 0.0
    %7191 = vmatpush1.msra.mxu0 0.0
    %7192 = vmatprep.subr.mxu0 0.0
    %7193 = vmatpush1.msra.mxu0 0.0
    %7194 = vmatprep.subr.mxu0 0.0
    %7195 = vmatpush1.msra.mxu0 0.0
    %7196 = vmatprep.subr.mxu0 0.0
    %7197 = vmatpush1.msra.mxu0 0.0
    %7198 = vmatprep.subr.mxu0 0.0
    %7199 = vmatpush1.msra.mxu0 0.0
    %7200 = vmatprep.subr.mxu0 0.0
    %7201 = vmatpush1.msra.mxu0 0.0
    %7202 = vmatprep.subr.mxu0 0.0
    %7203 = vmatpush1.msra.mxu0 0.0
    %7204 = vmatprep.subr.mxu0 0.0
    %7205 = vmatpush1.msra.mxu0 0.0
    %7206 = vmatprep.subr.mxu0 0.0
    %7207 = vmatpush1.msra.mxu0 0.0
    %7208 = vmatprep.subr.mxu0 0.0
    %7209 = vmatpush1.msra.mxu0 0.0
    %7210 = vmatprep.subr.mxu0 0.0
    %7211 = vmatpush1.msra.mxu0 %v7173
    %7212 = vmatprep.subr.mxu0 0.0
    %7213 = vmatpush1.msra.mxu0 %v7171
    %7214 = vmatprep.subr.mxu0 0.0
    %7215 = vmatpush2.msra.mxu0 0.0
    %7216 = vmatprep.subr.mxu0 0.0
    %7217 = vmatpush2.msra.mxu0 0.0
    %7218 = vmatprep.subr.mxu0 0.0
    %7219 = vmatpush2.msra.mxu0 0.0
    %7220 = vmatprep.subr.mxu0 0.0
    %7221 = vmatpush2.msra.mxu0 0.0
    %7222 = vmatprep.subr.mxu0 0.0
    %7223 = vmatpush2.msra.mxu0 0.0
    %7224 = vmatprep.subr.mxu0 0.0
    %7225 = vmatpush2.msra.mxu0 0.0
    %7226 = vmatprep.subr.mxu0 0.0
    %7227 = vmatpush2.msra.mxu0 0.0
    %7228 = vmatprep.subr.mxu0 0.0
    %7229 = vmatpush2.msra.mxu0 0.0
    %7230 = vmatprep.subr.mxu0 0.0
    %7231 = vmatpush2.msra.mxu0 0.0
    %7232 = vmatprep.subr.mxu0 0.0
    %7233 = vmatpush2.msra.mxu0 0.0
    %7234 = vmatprep.subr.mxu0 0.0
    %7235 = vmatpush2.msra.mxu0 0.0
    %7236 = vmatprep.subr.mxu0 0.0
    %7237 = vmatpush2.msra.mxu0 0.0
    %7238 = vmatprep.subr.mxu0 0.0
    %7239 = vmatpush2.msra.mxu0 0.0
    %7240 = vmatprep.subr.mxu0 0.0
    %7241 = vmatpush2.msra.mxu0 0.0
    %7242 = vmatprep.subr.mxu0 0.0
    %7243 = vmatpush2.msra.mxu0 0.0
    %7244 = vmatprep.subr.mxu0 0.0
    %7245 = vmatpush2.msra.mxu0 0.0
    %7246 = vmatprep.mubr.f32.mxu0 0.0
    %7247 = vmatmul.mubr.f32.gmra.mxu0 %v7177
    %v7248 = vpop.f32.mrf.mxu0
    %v7249 = vadd.f32 0.0, %v7248
    %v7250 = vpop.f32.mrf.mxu0
    %7251 = vmatprep.mubr.f32.mxu0 0.0
    %7252 = vmatmul.mubr.f32.gmra.mxu0 %v7180
    %v7253 = vpop.f32.mrf.mxu0
    %v7254 = vadd.f32 0.0, %v7253
    %v7255 = vpop.f32.mrf.mxu0
    %7256 = vdwg.mxu0
    %7258 = vrot.lane.b32.xlu0 %v6105, 32
    %v7259 = vpop.permute.xlu0 %7258
    %v7262 = vsel %vm175, %v7249, 0
    %v7265 = vsel %vm175, %v7254, 0
    %7267 = vmatprep.subr.mxu0 0.0
    %7268 = vmatpush1.msra.mxu0 0.0
    %7269 = vmatprep.subr.mxu0 0.0
    %7270 = vmatpush1.msra.mxu0 0.0
    %7271 = vmatprep.subr.mxu0 0.0
    %7272 = vmatpush1.msra.mxu0 0.0
    %7273 = vmatprep.subr.mxu0 0.0
    %7274 = vmatpush1.msra.mxu0 0.0
    %7275 = vmatprep.subr.mxu0 0.0
    %7276 = vmatpush1.msra.mxu0 0.0
    %7277 = vmatprep.subr.mxu0 0.0
    %7278 = vmatpush1.msra.mxu0 0.0
    %7279 = vmatprep.subr.mxu0 0.0
    %7280 = vmatpush1.msra.mxu0 0.0
    %7281 = vmatprep.subr.mxu0 0.0
    %7282 = vmatpush1.msra.mxu0 0.0
    %7283 = vmatprep.subr.mxu0 0.0
    %7284 = vmatpush1.msra.mxu0 0.0
    %7285 = vmatprep.subr.mxu0 0.0
    %7286 = vmatpush1.msra.mxu0 0.0
    %7287 = vmatprep.subr.mxu0 0.0
    %7288 = vmatpush1.msra.mxu0 0.0
    %7289 = vmatprep.subr.mxu0 0.0
    %7290 = vmatpush1.msra.mxu0 0.0
    %7291 = vmatprep.subr.mxu0 0.0
    %7292 = vmatpush1.msra.mxu0 0.0
    %7293 = vmatprep.subr.mxu0 0.0
    %7294 = vmatpush1.msra.mxu0 0.0
    %7295 = vmatprep.subr.mxu0 0.0
    %7296 = vmatpush1.msra.mxu0 0.0
    %7297 = vmatprep.subr.mxu0 0.0
    %7298 = vmatpush1.msra.mxu0 %v7259
    %7299 = vmatprep.subr.mxu0 0.0
    %7300 = vmatpush2.msra.mxu0 0.0
    %7301 = vmatprep.subr.mxu0 0.0
    %7302 = vmatpush2.msra.mxu0 0.0
    %7303 = vmatprep.subr.mxu0 0.0
    %7304 = vmatpush2.msra.mxu0 0.0
    %7305 = vmatprep.subr.mxu0 0.0
    %7306 = vmatpush2.msra.mxu0 0.0
    %7307 = vmatprep.subr.mxu0 0.0
    %7308 = vmatpush2.msra.mxu0 0.0
    %7309 = vmatprep.subr.mxu0 0.0
    %7310 = vmatpush2.msra.mxu0 0.0
    %7311 = vmatprep.subr.mxu0 0.0
    %7312 = vmatpush2.msra.mxu0 0.0
    %7313 = vmatprep.subr.mxu0 0.0
    %7314 = vmatpush2.msra.mxu0 0.0
    %7315 = vmatprep.subr.mxu0 0.0
    %7316 = vmatpush2.msra.mxu0 0.0
    %7317 = vmatprep.subr.mxu0 0.0
    %7318 = vmatpush2.msra.mxu0 0.0
    %7319 = vmatprep.subr.mxu0 0.0
    %7320 = vmatpush2.msra.mxu0 0.0
    %7321 = vmatprep.subr.mxu0 0.0
    %7322 = vmatpush2.msra.mxu0 0.0
    %7323 = vmatprep.subr.mxu0 0.0
    %7324 = vmatpush2.msra.mxu0 0.0
    %7325 = vmatprep.subr.mxu0 0.0
    %7326 = vmatpush2.msra.mxu0 0.0
    %7327 = vmatprep.subr.mxu0 0.0
    %7328 = vmatpush2.msra.mxu0 0.0
    %7329 = vmatprep.subr.mxu0 0.0
    %7330 = vmatpush2.msra.mxu0 0.0
    %7331 = vmatprep.mubr.f32.mxu0 0.0
    %7332 = vmatmul.mubr.f32.gmra.mxu0 %v7262
    %v7333 = vpop.f32.mrf.mxu0
    %v7334 = vadd.f32 0.0, %v7333
    %v7335 = vpop.f32.mrf.mxu0
    %7336 = vmatprep.mubr.f32.mxu0 0.0
    %7337 = vmatmul.mubr.f32.gmra.mxu0 %v7265
    %v7338 = vpop.f32.mrf.mxu0
    %v7339 = vadd.f32 0.0, %v7338
    %v7340 = vpop.f32.mrf.mxu0
    %7341 = vdwg.mxu0
    %v7342 = vadd.f32 %v7055, %v7334
    %v7343 = vadd.f32 %v7056, %v7339
    %7345 = vrot.lane.b32.xlu0 %v6122, 32
    %v7346 = vpop.permute.xlu0 %7345
    %v7348 = vadd.f32 %v7342, %v7346
    %v7349 = vadd.f32 %v7343, %v7346
    %v7350 = vadd.f32 %v7348, %v6099
    %v7351 = vadd.f32 %v7349, %v6100
    %v7352 = vsel %vm83, %v7350, 0.0
    %7353 = vadd.xlane.f32.xlu0 %v7352
    %v7354 = vpop.xlane.xlu0 %7353
    %v7355 = vsel %vm83, %v7351, 0.0
    %7356 = vadd.xlane.f32.xlu0 %v7355
    %v7357 = vpop.xlane.xlu0 %7356
    %v7358 = vmul.f32 %v7354, %v1321
    %v7359 = vmul.f32 %v7357, %v1321
    %v7360 = vsub.f32 %v7350, %v7358
    %v7361 = vsub.f32 %v7351, %v7359
    %v7362 = vmul.f32 %v7360, %v7360
    %v7363 = vmul.f32 %v7361, %v7361
    %v7364 = vsel %vm83, %v7362, 0.0
    %7365 = vadd.xlane.f32.xlu0 %v7364
    %v7366 = vpop.xlane.xlu0 %7365
    %v7367 = vsel %vm83, %v7363, 0.0
    %7368 = vadd.xlane.f32.xlu0 %v7367
    %v7369 = vpop.xlane.xlu0 %7368
    %v7370 = vmul.f32 %v7366, 0.032258064
    %v7371 = vmul.f32 %v7369, 0.032258064
    %v7372 = vrsqrt.pop %v7370
    %v7373 = vmul.f32 %v7370, %v7372
    %vm7374 = vcmp.eq.f32.partialorder %v7370, inf
    %v7375 = vsel %vm7374, %v7370, %v7373
    %vm7376 = vcmp.eq.f32.partialorder %v7370, 0.0
    %v7377 = vand.u32 %v7370, 2147483648
    %v7378 = vsel %vm7376, %v7377, %v7375
    %v7379 = vrsqrt.pop %v7371
    %v7380 = vmul.f32 %v7371, %v7379
    %vm7381 = vcmp.eq.f32.partialorder %v7371, inf
    %v7382 = vsel %vm7381, %v7371, %v7380
    %vm7383 = vcmp.eq.f32.partialorder %v7371, 0.0
    %v7384 = vand.u32 %v7371, 2147483648
    %v7385 = vsel %vm7383, %v7384, %v7382
    %v7386 = vadd.f32 %v7378, 1e-06
    %v7387 = vadd.f32 %v7385, 1e-06
    %v7388 = vrcp.pop %v7386
    %v7389 = vrcp.pop %v7387
    %v7390 = vlaneseq
    %v7391 = vshrl.u32 %v7390, 7
    %v7392 = vsub.s32 0, %v7391
    %v7393 = vrot.slane %v6117, %v7392
    %v7394 = vmul.f32 %v7393, %v7360
    %v7395 = vmul.f32 %v7393, %v7361
    %v7396 = vmul.f32 %v7394, %v7388
    %v7397 = vmul.f32 %v7395, %v7389
    %7399 = vrot.lane.b32.xlu0 %v7393, 96
    %v7400 = vpop.permute.xlu0 %7399
    %v7402 = vadd.f32 %v7396, %v7400
    %v7403 = vadd.f32 %v7397, %v7400
    %v7404 = vlaneseq
    %v7405 = vshrl.u32 %v7404, 7
    %v7406 = vsub.s32 0, %v7405
    %v7407 = vrot.slane %v6115, %v7406
    %7408 = vmatprep.subr.mxu0 0.0
    %7409 = vmatpush1.msra.mxu0 0.0
    %7410 = vmatprep.subr.mxu0 0.0
    %7411 = vmatpush1.msra.mxu0 0.0
    %7412 = vmatprep.subr.mxu0 0.0
    %7413 = vmatpush1.msra.mxu0 0.0
    %7414 = vmatprep.subr.mxu0 0.0
    %7415 = vmatpush1.msra.mxu0 0.0
    %7416 = vmatprep.subr.mxu0 0.0
    %7417 = vmatpush1.msra.mxu0 0.0
    %7418 = vmatprep.subr.mxu0 0.0
    %7419 = vmatpush1.msra.mxu0 0.0
    %7420 = vmatprep.subr.mxu0 0.0
    %7421 = vmatpush1.msra.mxu0 0.0
    %7422 = vmatprep.subr.mxu0 0.0
    %7423 = vmatpush1.msra.mxu0 0.0
    %7424 = vmatprep.subr.mxu0 0.0
    %7425 = vmatpush1.msra.mxu0 0.0
    %7426 = vmatprep.subr.mxu0 0.0
    %7427 = vmatpush1.msra.mxu0 0.0
    %7428 = vmatprep.subr.mxu0 0.0
    %7429 = vmatpush1.msra.mxu0 0.0
    %7430 = vmatprep.subr.mxu0 0.0
    %7431 = vmatpush1.msra.mxu0 0.0
    %7432 = vmatprep.subr.mxu0 0.0
    %7433 = vmatpush1.msra.mxu0 %v6109
    %7434 = vmatprep.subr.mxu0 0.0
    %7435 = vmatpush1.msra.mxu0 %v6108
    %7436 = vmatprep.subr.mxu0 0.0
    %7437 = vmatpush1.msra.mxu0 %v6107
    %7438 = vmatprep.subr.mxu0 0.0
    %7439 = vmatpush1.msra.mxu0 %v6106
    %7440 = vmatprep.subr.mxu0 0.0
    %7441 = vmatpush2.msra.mxu0 0.0
    %7442 = vmatprep.subr.mxu0 0.0
    %7443 = vmatpush2.msra.mxu0 0.0
    %7444 = vmatprep.subr.mxu0 0.0
    %7445 = vmatpush2.msra.mxu0 0.0
    %7446 = vmatprep.subr.mxu0 0.0
    %7447 = vmatpush2.msra.mxu0 0.0
    %7448 = vmatprep.subr.mxu0 0.0
    %7449 = vmatpush2.msra.mxu0 0.0
    %7450 = vmatprep.subr.mxu0 0.0
    %7451 = vmatpush2.msra.mxu0 0.0
    %7452 = vmatprep.subr.mxu0 0.0
    %7453 = vmatpush2.msra.mxu0 0.0
    %7454 = vmatprep.subr.mxu0 0.0
    %7455 = vmatpush2.msra.mxu0 0.0
    %7456 = vmatprep.subr.mxu0 0.0
    %7457 = vmatpush2.msra.mxu0 0.0
    %7458 = vmatprep.subr.mxu0 0.0
    %7459 = vmatpush2.msra.mxu0 0.0
    %7460 = vmatprep.subr.mxu0 0.0
    %7461 = vmatpush2.msra.mxu0 0.0
    %7462 = vmatprep.subr.mxu0 0.0
    %7463 = vmatpush2.msra.mxu0 0.0
    %7464 = vmatprep.subr.mxu0 0.0
    %7465 = vmatpush2.msra.mxu0 0.0
    %7466 = vmatprep.subr.mxu0 0.0
    %7467 = vmatpush2.msra.mxu0 0.0
    %7468 = vmatprep.subr.mxu0 0.0
    %7469 = vmatpush2.msra.mxu0 0.0
    %7470 = vmatprep.subr.mxu0 0.0
    %7471 = vmatpush2.msra.mxu0 0.0
    %7472 = vmatprep.mubr.f32.mxu0 0.0
    %7473 = vmatmul.mubr.f32.gmra.mxu0 %v4476
    %v7474 = vpop.f32.mrf.mxu0
    %v7475 = vadd.f32 %v7407, %v7474
    %v7476 = vpop.f32.mrf.mxu0
    %7477 = vmatprep.mubr.f32.mxu0 0.0
    %7478 = vmatmul.mubr.f32.gmra.mxu0 %v4478
    %v7479 = vpop.f32.mrf.mxu0
    %v7480 = vadd.f32 %v7407, %v7479
    %v7481 = vpop.f32.mrf.mxu0
    %7482 = vdwg.mxu0
    %7487 = vrot.lane.b32.xlu0 %v6106, 64
    %v7488 = vpop.permute.xlu0 %7487
    %7489 = vrot.lane.b32.xlu0 %v6107, 64
    %v7490 = vpop.permute.xlu0 %7489
    %7491 = vrot.lane.b32.xlu0 %v6108, 64
    %v7492 = vpop.permute.xlu0 %7491
    %7493 = vrot.lane.b32.xlu0 %v6109, 64
    %v7494 = vpop.permute.xlu0 %7493
    %7500 = vrot.lane.b32.xlu0 %v7407, 64
    %v7501 = vpop.permute.xlu0 %7500
    %v7504 = vsel %vm83, %v7402, 0
    %v7507 = vsel %vm83, %v7403, 0
    %7509 = vmatprep.subr.mxu0 0.0
    %7510 = vmatpush1.msra.mxu0 0.0
    %7511 = vmatprep.subr.mxu0 0.0
    %7512 = vmatpush1.msra.mxu0 0.0
    %7513 = vmatprep.subr.mxu0 0.0
    %7514 = vmatpush1.msra.mxu0 0.0
    %7515 = vmatprep.subr.mxu0 0.0
    %7516 = vmatpush1.msra.mxu0 0.0
    %7517 = vmatprep.subr.mxu0 0.0
    %7518 = vmatpush1.msra.mxu0 0.0
    %7519 = vmatprep.subr.mxu0 0.0
    %7520 = vmatpush1.msra.mxu0 0.0
    %7521 = vmatprep.subr.mxu0 0.0
    %7522 = vmatpush1.msra.mxu0 0.0
    %7523 = vmatprep.subr.mxu0 0.0
    %7524 = vmatpush1.msra.mxu0 0.0
    %7525 = vmatprep.subr.mxu0 0.0
    %7526 = vmatpush1.msra.mxu0 0.0
    %7527 = vmatprep.subr.mxu0 0.0
    %7528 = vmatpush1.msra.mxu0 0.0
    %7529 = vmatprep.subr.mxu0 0.0
    %7530 = vmatpush1.msra.mxu0 0.0
    %7531 = vmatprep.subr.mxu0 0.0
    %7532 = vmatpush1.msra.mxu0 0.0
    %7533 = vmatprep.subr.mxu0 0.0
    %7534 = vmatpush1.msra.mxu0 %v7494
    %7535 = vmatprep.subr.mxu0 0.0
    %7536 = vmatpush1.msra.mxu0 %v7492
    %7537 = vmatprep.subr.mxu0 0.0
    %7538 = vmatpush1.msra.mxu0 %v7490
    %7539 = vmatprep.subr.mxu0 0.0
    %7540 = vmatpush1.msra.mxu0 %v7488
    %7541 = vmatprep.subr.mxu0 0.0
    %7542 = vmatpush2.msra.mxu0 0.0
    %7543 = vmatprep.subr.mxu0 0.0
    %7544 = vmatpush2.msra.mxu0 0.0
    %7545 = vmatprep.subr.mxu0 0.0
    %7546 = vmatpush2.msra.mxu0 0.0
    %7547 = vmatprep.subr.mxu0 0.0
    %7548 = vmatpush2.msra.mxu0 0.0
    %7549 = vmatprep.subr.mxu0 0.0
    %7550 = vmatpush2.msra.mxu0 0.0
    %7551 = vmatprep.subr.mxu0 0.0
    %7552 = vmatpush2.msra.mxu0 0.0
    %7553 = vmatprep.subr.mxu0 0.0
    %7554 = vmatpush2.msra.mxu0 0.0
    %7555 = vmatprep.subr.mxu0 0.0
    %7556 = vmatpush2.msra.mxu0 0.0
    %7557 = vmatprep.subr.mxu0 0.0
    %7558 = vmatpush2.msra.mxu0 0.0
    %7559 = vmatprep.subr.mxu0 0.0
    %7560 = vmatpush2.msra.mxu0 0.0
    %7561 = vmatprep.subr.mxu0 0.0
    %7562 = vmatpush2.msra.mxu0 0.0
    %7563 = vmatprep.subr.mxu0 0.0
    %7564 = vmatpush2.msra.mxu0 0.0
    %7565 = vmatprep.subr.mxu0 0.0
    %7566 = vmatpush2.msra.mxu0 0.0
    %7567 = vmatprep.subr.mxu0 0.0
    %7568 = vmatpush2.msra.mxu0 0.0
    %7569 = vmatprep.subr.mxu0 0.0
    %7570 = vmatpush2.msra.mxu0 0.0
    %7571 = vmatprep.subr.mxu0 0.0
    %7572 = vmatpush2.msra.mxu0 0.0
    %7573 = vmatprep.mubr.f32.mxu0 0.0
    %7574 = vmatmul.mubr.f32.gmra.mxu0 %v7504
    %v7575 = vpop.f32.mrf.mxu0
    %v7576 = vadd.f32 %v7501, %v7575
    %v7577 = vpop.f32.mrf.mxu0
    %7578 = vmatprep.mubr.f32.mxu0 0.0
    %7579 = vmatmul.mubr.f32.gmra.mxu0 %v7507
    %v7580 = vpop.f32.mrf.mxu0
    %v7581 = vadd.f32 %v7501, %v7580
    %v7582 = vpop.f32.mrf.mxu0
    %7583 = vdwg.mxu0
    %7586 = vrot.lane.b32.xlu0 %v7475, 96
    %v7587 = vpop.permute.xlu0 %7586
    %7588 = vrot.lane.b32.xlu0 %v7480, 96
    %v7589 = vpop.permute.xlu0 %7588
    %v7591 = vsel %vm175, %v7576, 0
    %v7594 = vsel %vm175, %v7581, 0
    %v7596 = vsel %vm175, %v7587, 0
    %v7598 = vsel %vm175, %v7589, 0
    %7600 = vmatprep.subr.mxu0 0.0
    %7601 = vmatpush1.xpose.msra.mxu0 0.0
    %7602 = vmatprep.subr.mxu0 0.0
    %7603 = vmatpush1.xpose.msra.mxu0 0.0
    %7604 = vmatprep.subr.mxu0 0.0
    %7605 = vmatpush1.xpose.msra.mxu0 0.0
    %7606 = vmatprep.subr.mxu0 0.0
    %7607 = vmatpush1.xpose.msra.mxu0 0.0
    %7608 = vmatprep.subr.mxu0 0.0
    %7609 = vmatpush1.xpose.msra.mxu0 0.0
    %7610 = vmatprep.subr.mxu0 0.0
    %7611 = vmatpush1.xpose.msra.mxu0 0.0
    %7612 = vmatprep.subr.mxu0 0.0
    %7613 = vmatpush1.xpose.msra.mxu0 0.0
    %7614 = vmatprep.subr.mxu0 0.0
    %7615 = vmatpush1.xpose.msra.mxu0 0.0
    %7616 = vmatprep.subr.mxu0 0.0
    %7617 = vmatpush1.xpose.msra.mxu0 0.0
    %7618 = vmatprep.subr.mxu0 0.0
    %7619 = vmatpush1.xpose.msra.mxu0 0.0
    %7620 = vmatprep.subr.mxu0 0.0
    %7621 = vmatpush1.xpose.msra.mxu0 0.0
    %7622 = vmatprep.subr.mxu0 0.0
    %7623 = vmatpush1.xpose.msra.mxu0 0.0
    %7624 = vmatprep.subr.mxu0 0.0
    %7625 = vmatpush1.xpose.msra.mxu0 0.0
    %7626 = vmatprep.subr.mxu0 0.0
    %7627 = vmatpush1.xpose.msra.mxu0 0.0
    %7628 = vmatprep.subr.mxu0 0.0
    %7629 = vmatpush1.xpose.msra.mxu0 %v7598
    %7630 = vmatprep.subr.mxu0 0.0
    %7631 = vmatpush1.xpose.msra.mxu0 %v7596
    %7632 = vmatprep.subr.mxu0 0.0
    %7633 = vmatpush2.xpose.msra.mxu0 0.0
    %7634 = vmatprep.subr.mxu0 0.0
    %7635 = vmatpush2.xpose.msra.mxu0 0.0
    %7636 = vmatprep.subr.mxu0 0.0
    %7637 = vmatpush2.xpose.msra.mxu0 0.0
    %7638 = vmatprep.subr.mxu0 0.0
    %7639 = vmatpush2.xpose.msra.mxu0 0.0
    %7640 = vmatprep.subr.mxu0 0.0
    %7641 = vmatpush2.xpose.msra.mxu0 0.0
    %7642 = vmatprep.subr.mxu0 0.0
    %7643 = vmatpush2.xpose.msra.mxu0 0.0
    %7644 = vmatprep.subr.mxu0 0.0
    %7645 = vmatpush2.xpose.msra.mxu0 0.0
    %7646 = vmatprep.subr.mxu0 0.0
    %7647 = vmatpush2.xpose.msra.mxu0 0.0
    %7648 = vmatprep.subr.mxu0 0.0
    %7649 = vmatpush2.xpose.msra.mxu0 0.0
    %7650 = vmatprep.subr.mxu0 0.0
    %7651 = vmatpush2.xpose.msra.mxu0 0.0
    %7652 = vmatprep.subr.mxu0 0.0
    %7653 = vmatpush2.xpose.msra.mxu0 0.0
    %7654 = vmatprep.subr.mxu0 0.0
    %7655 = vmatpush2.xpose.msra.mxu0 0.0
    %7656 = vmatprep.subr.mxu0 0.0
    %7657 = vmatpush2.xpose.msra.mxu0 0.0
    %7658 = vmatprep.subr.mxu0 0.0
    %7659 = vmatpush2.xpose.msra.mxu0 0.0
    %7660 = vmatprep.subr.mxu0 0.0
    %7661 = vmatpush2.xpose.msra.mxu0 0.0
    %7662 = vmatprep.subr.mxu0 0.0
    %7663 = vmatpush2.xpose.msra.mxu0 0.0
    %7664 = vmatprep.mubr.f32.mxu0 0.0
    %7665 = vmatmul.mubr.f32.gmra.mxu0 %v7591
    %v7666 = vpop.f32.mrf.mxu0
    %v7667 = vadd.f32 %v66, %v7666
    %v7668 = vpop.f32.mrf.mxu0
    %7669 = vmatprep.mubr.f32.mxu0 0.0
    %7670 = vmatmul.mubr.f32.gmra.mxu0 %v7594
    %v7671 = vpop.f32.mrf.mxu0
    %v7672 = vadd.f32 %v67, %v7671
    %v7673 = vpop.f32.mrf.mxu0
    %7674 = vdwg.mxu0
    %v7675 = vsel %vm259, %v7667, -inf
    %7676 = vmax.xlane.f32.xlu0 %v7675
    %v7677 = vpop.xlane.xlu0 %7676
    %v7678 = vsel %vm259, %v7672, -inf
    %7679 = vmax.xlane.f32.xlu0 %v7678
    %v7680 = vpop.xlane.xlu0 %7679
    %v7681 = vsub.f32 %v7667, %v7677
    %v7682 = vsub.f32 %v7672, %v7680
    %v7683 = vmul.f32 %v7681, 1.442695
    %v7684 = vpow.pop %v7683
    %v7685 = vmul.f32 %v7682, 1.442695
    %v7686 = vpow.pop %v7685
    %v7687 = vsel %vm259, %v7684, 0.0
    %7688 = vadd.xlane.f32.xlu0 %v7687
    %v7689 = vpop.xlane.xlu0 %7688
    %v7690 = vsel %vm259, %v7686, 0.0
    %7691 = vadd.xlane.f32.xlu0 %v7690
    %v7692 = vpop.xlane.xlu0 %7691
    %v7693 = vrcp.pop %v7689
    %v7694 = vrcp.pop %v7692
    %v7695 = vmul.f32 %v7684, %v7693
    %v7696 = vmul.f32 %v7686, %v7694
    %v7698 = vsel %vm259, %v7695, 0
    %v7701 = vsel %vm259, %v7696, 0
    %7703 = vmatprep.subr.mxu0 0.0
    %7704 = vmatpush1.msra.mxu0 0.0
    %7705 = vmatprep.subr.mxu0 0.0
    %7706 = vmatpush1.msra.mxu0 0.0
    %7707 = vmatprep.subr.mxu0 0.0
    %7708 = vmatpush1.msra.mxu0 0.0
    %7709 = vmatprep.subr.mxu0 0.0
    %7710 = vmatpush1.msra.mxu0 0.0
    %7711 = vmatprep.subr.mxu0 0.0
    %7712 = vmatpush1.msra.mxu0 0.0
    %7713 = vmatprep.subr.mxu0 0.0
    %7714 = vmatpush1.msra.mxu0 0.0
    %7715 = vmatprep.subr.mxu0 0.0
    %7716 = vmatpush1.msra.mxu0 0.0
    %7717 = vmatprep.subr.mxu0 0.0
    %7718 = vmatpush1.msra.mxu0 0.0
    %7719 = vmatprep.subr.mxu0 0.0
    %7720 = vmatpush1.msra.mxu0 0.0
    %7721 = vmatprep.subr.mxu0 0.0
    %7722 = vmatpush1.msra.mxu0 0.0
    %7723 = vmatprep.subr.mxu0 0.0
    %7724 = vmatpush1.msra.mxu0 0.0
    %7725 = vmatprep.subr.mxu0 0.0
    %7726 = vmatpush1.msra.mxu0 0.0
    %7727 = vmatprep.subr.mxu0 0.0
    %7728 = vmatpush1.msra.mxu0 0.0
    %7729 = vmatprep.subr.mxu0 0.0
    %7730 = vmatpush1.msra.mxu0 0.0
    %7731 = vmatprep.subr.mxu0 0.0
    %7732 = vmatpush1.msra.mxu0 %v7480
    %7733 = vmatprep.subr.mxu0 0.0
    %7734 = vmatpush1.msra.mxu0 %v7475
    %7735 = vmatprep.subr.mxu0 0.0
    %7736 = vmatpush2.msra.mxu0 0.0
    %7737 = vmatprep.subr.mxu0 0.0
    %7738 = vmatpush2.msra.mxu0 0.0
    %7739 = vmatprep.subr.mxu0 0.0
    %7740 = vmatpush2.msra.mxu0 0.0
    %7741 = vmatprep.subr.mxu0 0.0
    %7742 = vmatpush2.msra.mxu0 0.0
    %7743 = vmatprep.subr.mxu0 0.0
    %7744 = vmatpush2.msra.mxu0 0.0
    %7745 = vmatprep.subr.mxu0 0.0
    %7746 = vmatpush2.msra.mxu0 0.0
    %7747 = vmatprep.subr.mxu0 0.0
    %7748 = vmatpush2.msra.mxu0 0.0
    %7749 = vmatprep.subr.mxu0 0.0
    %7750 = vmatpush2.msra.mxu0 0.0
    %7751 = vmatprep.subr.mxu0 0.0
    %7752 = vmatpush2.msra.mxu0 0.0
    %7753 = vmatprep.subr.mxu0 0.0
    %7754 = vmatpush2.msra.mxu0 0.0
    %7755 = vmatprep.subr.mxu0 0.0
    %7756 = vmatpush2.msra.mxu0 0.0
    %7757 = vmatprep.subr.mxu0 0.0
    %7758 = vmatpush2.msra.mxu0 0.0
    %7759 = vmatprep.subr.mxu0 0.0
    %7760 = vmatpush2.msra.mxu0 0.0
    %7761 = vmatprep.subr.mxu0 0.0
    %7762 = vmatpush2.msra.mxu0 0.0
    %7763 = vmatprep.subr.mxu0 0.0
    %7764 = vmatpush2.msra.mxu0 0.0
    %7765 = vmatprep.subr.mxu0 0.0
    %7766 = vmatpush2.msra.mxu0 0.0
    %7767 = vmatprep.mubr.f32.mxu0 0.0
    %7768 = vmatmul.mubr.f32.gmra.mxu0 %v7698
    %v7769 = vpop.f32.mrf.mxu0
    %v7770 = vadd.f32 0.0, %v7769
    %v7771 = vpop.f32.mrf.mxu0
    %7772 = vmatprep.mubr.f32.mxu0 0.0
    %7773 = vmatmul.mubr.f32.gmra.mxu0 %v7701
    %v7774 = vpop.f32.mrf.mxu0
    %v7775 = vadd.f32 0.0, %v7774
    %v7776 = vpop.f32.mrf.mxu0
    %7777 = vdwg.mxu0
    %7778 = vrot.lane.b32.xlu0 %v7576, 120
    %v7779 = vpop.permute.xlu0 %7778
    %7780 = vrot.lane.b32.xlu0 %v7581, 120
    %v7781 = vpop.permute.xlu0 %7780
    %7782 = vrot.lane.b32.xlu0 %v7475, 88
    %v7783 = vpop.permute.xlu0 %7782
    %7784 = vrot.lane.b32.xlu0 %v7480, 88
    %v7785 = vpop.permute.xlu0 %7784
    %v7786 = vsel %vm175, %v7779, 0
    %v7788 = vsel %vm175, %v7781, 0
    %v7790 = vsel %vm175, %v7783, 0
    %v7792 = vsel %vm175, %v7785, 0
    %7794 = vmatprep.subr.mxu0 0.0
    %7795 = vmatpush1.xpose.msra.mxu0 0.0
    %7796 = vmatprep.subr.mxu0 0.0
    %7797 = vmatpush1.xpose.msra.mxu0 0.0
    %7798 = vmatprep.subr.mxu0 0.0
    %7799 = vmatpush1.xpose.msra.mxu0 0.0
    %7800 = vmatprep.subr.mxu0 0.0
    %7801 = vmatpush1.xpose.msra.mxu0 0.0
    %7802 = vmatprep.subr.mxu0 0.0
    %7803 = vmatpush1.xpose.msra.mxu0 0.0
    %7804 = vmatprep.subr.mxu0 0.0
    %7805 = vmatpush1.xpose.msra.mxu0 0.0
    %7806 = vmatprep.subr.mxu0 0.0
    %7807 = vmatpush1.xpose.msra.mxu0 0.0
    %7808 = vmatprep.subr.mxu0 0.0
    %7809 = vmatpush1.xpose.msra.mxu0 0.0
    %7810 = vmatprep.subr.mxu0 0.0
    %7811 = vmatpush1.xpose.msra.mxu0 0.0
    %7812 = vmatprep.subr.mxu0 0.0
    %7813 = vmatpush1.xpose.msra.mxu0 0.0
    %7814 = vmatprep.subr.mxu0 0.0
    %7815 = vmatpush1.xpose.msra.mxu0 0.0
    %7816 = vmatprep.subr.mxu0 0.0
    %7817 = vmatpush1.xpose.msra.mxu0 0.0
    %7818 = vmatprep.subr.mxu0 0.0
    %7819 = vmatpush1.xpose.msra.mxu0 0.0
    %7820 = vmatprep.subr.mxu0 0.0
    %7821 = vmatpush1.xpose.msra.mxu0 0.0
    %7822 = vmatprep.subr.mxu0 0.0
    %7823 = vmatpush1.xpose.msra.mxu0 %v7792
    %7824 = vmatprep.subr.mxu0 0.0
    %7825 = vmatpush1.xpose.msra.mxu0 %v7790
    %7826 = vmatprep.subr.mxu0 0.0
    %7827 = vmatpush2.xpose.msra.mxu0 0.0
    %7828 = vmatprep.subr.mxu0 0.0
    %7829 = vmatpush2.xpose.msra.mxu0 0.0
    %7830 = vmatprep.subr.mxu0 0.0
    %7831 = vmatpush2.xpose.msra.mxu0 0.0
    %7832 = vmatprep.subr.mxu0 0.0
    %7833 = vmatpush2.xpose.msra.mxu0 0.0
    %7834 = vmatprep.subr.mxu0 0.0
    %7835 = vmatpush2.xpose.msra.mxu0 0.0
    %7836 = vmatprep.subr.mxu0 0.0
    %7837 = vmatpush2.xpose.msra.mxu0 0.0
    %7838 = vmatprep.subr.mxu0 0.0
    %7839 = vmatpush2.xpose.msra.mxu0 0.0
    %7840 = vmatprep.subr.mxu0 0.0
    %7841 = vmatpush2.xpose.msra.mxu0 0.0
    %7842 = vmatprep.subr.mxu0 0.0
    %7843 = vmatpush2.xpose.msra.mxu0 0.0
    %7844 = vmatprep.subr.mxu0 0.0
    %7845 = vmatpush2.xpose.msra.mxu0 0.0
    %7846 = vmatprep.subr.mxu0 0.0
    %7847 = vmatpush2.xpose.msra.mxu0 0.0
    %7848 = vmatprep.subr.mxu0 0.0
    %7849 = vmatpush2.xpose.msra.mxu0 0.0
    %7850 = vmatprep.subr.mxu0 0.0
    %7851 = vmatpush2.xpose.msra.mxu0 0.0
    %7852 = vmatprep.subr.mxu0 0.0
    %7853 = vmatpush2.xpose.msra.mxu0 0.0
    %7854 = vmatprep.subr.mxu0 0.0
    %7855 = vmatpush2.xpose.msra.mxu0 0.0
    %7856 = vmatprep.subr.mxu0 0.0
    %7857 = vmatpush2.xpose.msra.mxu0 0.0
    %7858 = vmatprep.mubr.f32.mxu0 0.0
    %7859 = vmatmul.mubr.f32.gmra.mxu0 %v7786
    %v7860 = vpop.f32.mrf.mxu0
    %v7861 = vadd.f32 %v66, %v7860
    %v7862 = vpop.f32.mrf.mxu0
    %7863 = vmatprep.mubr.f32.mxu0 0.0
    %7864 = vmatmul.mubr.f32.gmra.mxu0 %v7788
    %v7865 = vpop.f32.mrf.mxu0
    %v7866 = vadd.f32 %v67, %v7865
    %v7867 = vpop.f32.mrf.mxu0
    %7868 = vdwg.mxu0
    %v7869 = vsel %vm259, %v7861, -inf
    %7870 = vmax.xlane.f32.xlu0 %v7869
    %v7871 = vpop.xlane.xlu0 %7870
    %v7872 = vsel %vm259, %v7866, -inf
    %7873 = vmax.xlane.f32.xlu0 %v7872
    %v7874 = vpop.xlane.xlu0 %7873
    %v7875 = vsub.f32 %v7861, %v7871
    %v7876 = vsub.f32 %v7866, %v7874
    %v7877 = vmul.f32 %v7875, 1.442695
    %v7878 = vpow.pop %v7877
    %v7879 = vmul.f32 %v7876, 1.442695
    %v7880 = vpow.pop %v7879
    %v7881 = vsel %vm259, %v7878, 0.0
    %7882 = vadd.xlane.f32.xlu0 %v7881
    %v7883 = vpop.xlane.xlu0 %7882
    %v7884 = vsel %vm259, %v7880, 0.0
    %7885 = vadd.xlane.f32.xlu0 %v7884
    %v7886 = vpop.xlane.xlu0 %7885
    %v7887 = vrcp.pop %v7883
    %v7888 = vrcp.pop %v7886
    %v7889 = vmul.f32 %v7878, %v7887
    %v7890 = vmul.f32 %v7880, %v7888
    %7891 = vrot.lane.b32.xlu0 %v7475, 120
    %v7892 = vpop.permute.xlu0 %7891
    %7893 = vrot.lane.b32.xlu0 %v7480, 120
    %v7894 = vpop.permute.xlu0 %7893
    %v7898 = vsel %vm259, %v7889, 0
    %v7901 = vsel %vm259, %v7890, 0
    %7903 = vmatprep.subr.mxu0 0.0
    %7904 = vmatpush1.msra.mxu0 0.0
    %7905 = vmatprep.subr.mxu0 0.0
    %7906 = vmatpush1.msra.mxu0 0.0
    %7907 = vmatprep.subr.mxu0 0.0
    %7908 = vmatpush1.msra.mxu0 0.0
    %7909 = vmatprep.subr.mxu0 0.0
    %7910 = vmatpush1.msra.mxu0 0.0
    %7911 = vmatprep.subr.mxu0 0.0
    %7912 = vmatpush1.msra.mxu0 0.0
    %7913 = vmatprep.subr.mxu0 0.0
    %7914 = vmatpush1.msra.mxu0 0.0
    %7915 = vmatprep.subr.mxu0 0.0
    %7916 = vmatpush1.msra.mxu0 0.0
    %7917 = vmatprep.subr.mxu0 0.0
    %7918 = vmatpush1.msra.mxu0 0.0
    %7919 = vmatprep.subr.mxu0 0.0
    %7920 = vmatpush1.msra.mxu0 0.0
    %7921 = vmatprep.subr.mxu0 0.0
    %7922 = vmatpush1.msra.mxu0 0.0
    %7923 = vmatprep.subr.mxu0 0.0
    %7924 = vmatpush1.msra.mxu0 0.0
    %7925 = vmatprep.subr.mxu0 0.0
    %7926 = vmatpush1.msra.mxu0 0.0
    %7927 = vmatprep.subr.mxu0 0.0
    %7928 = vmatpush1.msra.mxu0 0.0
    %7929 = vmatprep.subr.mxu0 0.0
    %7930 = vmatpush1.msra.mxu0 0.0
    %7931 = vmatprep.subr.mxu0 0.0
    %7932 = vmatpush1.msra.mxu0 %v7894
    %7933 = vmatprep.subr.mxu0 0.0
    %7934 = vmatpush1.msra.mxu0 %v7892
    %7935 = vmatprep.subr.mxu0 0.0
    %7936 = vmatpush2.msra.mxu0 0.0
    %7937 = vmatprep.subr.mxu0 0.0
    %7938 = vmatpush2.msra.mxu0 0.0
    %7939 = vmatprep.subr.mxu0 0.0
    %7940 = vmatpush2.msra.mxu0 0.0
    %7941 = vmatprep.subr.mxu0 0.0
    %7942 = vmatpush2.msra.mxu0 0.0
    %7943 = vmatprep.subr.mxu0 0.0
    %7944 = vmatpush2.msra.mxu0 0.0
    %7945 = vmatprep.subr.mxu0 0.0
    %7946 = vmatpush2.msra.mxu0 0.0
    %7947 = vmatprep.subr.mxu0 0.0
    %7948 = vmatpush2.msra.mxu0 0.0
    %7949 = vmatprep.subr.mxu0 0.0
    %7950 = vmatpush2.msra.mxu0 0.0
    %7951 = vmatprep.subr.mxu0 0.0
    %7952 = vmatpush2.msra.mxu0 0.0
    %7953 = vmatprep.subr.mxu0 0.0
    %7954 = vmatpush2.msra.mxu0 0.0
    %7955 = vmatprep.subr.mxu0 0.0
    %7956 = vmatpush2.msra.mxu0 0.0
    %7957 = vmatprep.subr.mxu0 0.0
    %7958 = vmatpush2.msra.mxu0 0.0
    %7959 = vmatprep.subr.mxu0 0.0
    %7960 = vmatpush2.msra.mxu0 0.0
    %7961 = vmatprep.subr.mxu0 0.0
    %7962 = vmatpush2.msra.mxu0 0.0
    %7963 = vmatprep.subr.mxu0 0.0
    %7964 = vmatpush2.msra.mxu0 0.0
    %7965 = vmatprep.subr.mxu0 0.0
    %7966 = vmatpush2.msra.mxu0 0.0
    %7967 = vmatprep.mubr.f32.mxu0 0.0
    %7968 = vmatmul.mubr.f32.gmra.mxu0 %v7898
    %v7969 = vpop.f32.mrf.mxu0
    %v7970 = vadd.f32 0.0, %v7969
    %v7971 = vpop.f32.mrf.mxu0
    %7972 = vmatprep.mubr.f32.mxu0 0.0
    %7973 = vmatmul.mubr.f32.gmra.mxu0 %v7901
    %v7974 = vpop.f32.mrf.mxu0
    %v7975 = vadd.f32 0.0, %v7974
    %v7976 = vpop.f32.mrf.mxu0
    %7977 = vdwg.mxu0
    %7978 = vrot.lane.b32.xlu0 %v6107, 32
    %v7979 = vpop.permute.xlu0 %7978
    %v7982 = vsel %vm175, %v7970, 0
    %v7985 = vsel %vm175, %v7975, 0
    %7987 = vmatprep.subr.mxu0 0.0
    %7988 = vmatpush1.msra.mxu0 0.0
    %7989 = vmatprep.subr.mxu0 0.0
    %7990 = vmatpush1.msra.mxu0 0.0
    %7991 = vmatprep.subr.mxu0 0.0
    %7992 = vmatpush1.msra.mxu0 0.0
    %7993 = vmatprep.subr.mxu0 0.0
    %7994 = vmatpush1.msra.mxu0 0.0
    %7995 = vmatprep.subr.mxu0 0.0
    %7996 = vmatpush1.msra.mxu0 0.0
    %7997 = vmatprep.subr.mxu0 0.0
    %7998 = vmatpush1.msra.mxu0 0.0
    %7999 = vmatprep.subr.mxu0 0.0
    %8000 = vmatpush1.msra.mxu0 0.0
    %8001 = vmatprep.subr.mxu0 0.0
    %8002 = vmatpush1.msra.mxu0 0.0
    %8003 = vmatprep.subr.mxu0 0.0
    %8004 = vmatpush1.msra.mxu0 0.0
    %8005 = vmatprep.subr.mxu0 0.0
    %8006 = vmatpush1.msra.mxu0 0.0
    %8007 = vmatprep.subr.mxu0 0.0
    %8008 = vmatpush1.msra.mxu0 0.0
    %8009 = vmatprep.subr.mxu0 0.0
    %8010 = vmatpush1.msra.mxu0 0.0
    %8011 = vmatprep.subr.mxu0 0.0
    %8012 = vmatpush1.msra.mxu0 0.0
    %8013 = vmatprep.subr.mxu0 0.0
    %8014 = vmatpush1.msra.mxu0 0.0
    %8015 = vmatprep.subr.mxu0 0.0
    %8016 = vmatpush1.msra.mxu0 0.0
    %8017 = vmatprep.subr.mxu0 0.0
    %8018 = vmatpush1.msra.mxu0 %v7979
    %8019 = vmatprep.subr.mxu0 0.0
    %8020 = vmatpush2.msra.mxu0 0.0
    %8021 = vmatprep.subr.mxu0 0.0
    %8022 = vmatpush2.msra.mxu0 0.0
    %8023 = vmatprep.subr.mxu0 0.0
    %8024 = vmatpush2.msra.mxu0 0.0
    %8025 = vmatprep.subr.mxu0 0.0
    %8026 = vmatpush2.msra.mxu0 0.0
    %8027 = vmatprep.subr.mxu0 0.0
    %8028 = vmatpush2.msra.mxu0 0.0
    %8029 = vmatprep.subr.mxu0 0.0
    %8030 = vmatpush2.msra.mxu0 0.0
    %8031 = vmatprep.subr.mxu0 0.0
    %8032 = vmatpush2.msra.mxu0 0.0
    %8033 = vmatprep.subr.mxu0 0.0
    %8034 = vmatpush2.msra.mxu0 0.0
    %8035 = vmatprep.subr.mxu0 0.0
    %8036 = vmatpush2.msra.mxu0 0.0
    %8037 = vmatprep.subr.mxu0 0.0
    %8038 = vmatpush2.msra.mxu0 0.0
    %8039 = vmatprep.subr.mxu0 0.0
    %8040 = vmatpush2.msra.mxu0 0.0
    %8041 = vmatprep.subr.mxu0 0.0
    %8042 = vmatpush2.msra.mxu0 0.0
    %8043 = vmatprep.subr.mxu0 0.0
    %8044 = vmatpush2.msra.mxu0 0.0
    %8045 = vmatprep.subr.mxu0 0.0
    %8046 = vmatpush2.msra.mxu0 0.0
    %8047 = vmatprep.subr.mxu0 0.0
    %8048 = vmatpush2.msra.mxu0 0.0
    %8049 = vmatprep.subr.mxu0 0.0
    %8050 = vmatpush2.msra.mxu0 0.0
    %8051 = vmatprep.mubr.f32.mxu0 0.0
    %8052 = vmatmul.mubr.f32.gmra.mxu0 %v7982
    %v8053 = vpop.f32.mrf.mxu0
    %v8054 = vadd.f32 0.0, %v8053
    %v8055 = vpop.f32.mrf.mxu0
    %8056 = vmatprep.mubr.f32.mxu0 0.0
    %8057 = vmatmul.mubr.f32.gmra.mxu0 %v7985
    %v8058 = vpop.f32.mrf.mxu0
    %v8059 = vadd.f32 0.0, %v8058
    %v8060 = vpop.f32.mrf.mxu0
    %8061 = vdwg.mxu0
    %8062 = vrot.lane.b32.xlu0 %v6106, 32
    %v8063 = vpop.permute.xlu0 %8062
    %v8066 = vsel %vm175, %v7770, 0
    %v8069 = vsel %vm175, %v7775, 0
    %8071 = vmatprep.subr.mxu0 0.0
    %8072 = vmatpush1.msra.mxu0 0.0
    %8073 = vmatprep.subr.mxu0 0.0
    %8074 = vmatpush1.msra.mxu0 0.0
    %8075 = vmatprep.subr.mxu0 0.0
    %8076 = vmatpush1.msra.mxu0 0.0
    %8077 = vmatprep.subr.mxu0 0.0
    %8078 = vmatpush1.msra.mxu0 0.0
    %8079 = vmatprep.subr.mxu0 0.0
    %8080 = vmatpush1.msra.mxu0 0.0
    %8081 = vmatprep.subr.mxu0 0.0
    %8082 = vmatpush1.msra.mxu0 0.0
    %8083 = vmatprep.subr.mxu0 0.0
    %8084 = vmatpush1.msra.mxu0 0.0
    %8085 = vmatprep.subr.mxu0 0.0
    %8086 = vmatpush1.msra.mxu0 0.0
    %8087 = vmatprep.subr.mxu0 0.0
    %8088 = vmatpush1.msra.mxu0 0.0
    %8089 = vmatprep.subr.mxu0 0.0
    %8090 = vmatpush1.msra.mxu0 0.0
    %8091 = vmatprep.subr.mxu0 0.0
    %8092 = vmatpush1.msra.mxu0 0.0
    %8093 = vmatprep.subr.mxu0 0.0
    %8094 = vmatpush1.msra.mxu0 0.0
    %8095 = vmatprep.subr.mxu0 0.0
    %8096 = vmatpush1.msra.mxu0 0.0
    %8097 = vmatprep.subr.mxu0 0.0
    %8098 = vmatpush1.msra.mxu0 0.0
    %8099 = vmatprep.subr.mxu0 0.0
    %8100 = vmatpush1.msra.mxu0 0.0
    %8101 = vmatprep.subr.mxu0 0.0
    %8102 = vmatpush1.msra.mxu0 %v8063
    %8103 = vmatprep.subr.mxu0 0.0
    %8104 = vmatpush2.msra.mxu0 0.0
    %8105 = vmatprep.subr.mxu0 0.0
    %8106 = vmatpush2.msra.mxu0 0.0
    %8107 = vmatprep.subr.mxu0 0.0
    %8108 = vmatpush2.msra.mxu0 0.0
    %8109 = vmatprep.subr.mxu0 0.0
    %8110 = vmatpush2.msra.mxu0 0.0
    %8111 = vmatprep.subr.mxu0 0.0
    %8112 = vmatpush2.msra.mxu0 0.0
    %8113 = vmatprep.subr.mxu0 0.0
    %8114 = vmatpush2.msra.mxu0 0.0
    %8115 = vmatprep.subr.mxu0 0.0
    %8116 = vmatpush2.msra.mxu0 0.0
    %8117 = vmatprep.subr.mxu0 0.0
    %8118 = vmatpush2.msra.mxu0 0.0
    %8119 = vmatprep.subr.mxu0 0.0
    %8120 = vmatpush2.msra.mxu0 0.0
    %8121 = vmatprep.subr.mxu0 0.0
    %8122 = vmatpush2.msra.mxu0 0.0
    %8123 = vmatprep.subr.mxu0 0.0
    %8124 = vmatpush2.msra.mxu0 0.0
    %8125 = vmatprep.subr.mxu0 0.0
    %8126 = vmatpush2.msra.mxu0 0.0
    %8127 = vmatprep.subr.mxu0 0.0
    %8128 = vmatpush2.msra.mxu0 0.0
    %8129 = vmatprep.subr.mxu0 0.0
    %8130 = vmatpush2.msra.mxu0 0.0
    %8131 = vmatprep.subr.mxu0 0.0
    %8132 = vmatpush2.msra.mxu0 0.0
    %8133 = vmatprep.subr.mxu0 0.0
    %8134 = vmatpush2.msra.mxu0 0.0
    %8135 = vmatprep.mubr.f32.mxu0 0.0
    %8136 = vmatmul.mubr.f32.gmra.mxu0 %v8066
    %v8137 = vpop.f32.mrf.mxu0
    %v8138 = vadd.f32 %v8054, %v8137
    %v8139 = vpop.f32.mrf.mxu0
    %8140 = vmatprep.mubr.f32.mxu0 0.0
    %8141 = vmatmul.mubr.f32.gmra.mxu0 %v8069
    %v8142 = vpop.f32.mrf.mxu0
    %v8143 = vadd.f32 %v8059, %v8142
    %v8144 = vpop.f32.mrf.mxu0
    %8145 = vdwg.mxu0
    %8146 = vrot.lane.b32.xlu0 %v7576, 112
    %v8147 = vpop.permute.xlu0 %8146
    %8148 = vrot.lane.b32.xlu0 %v7581, 112
    %v8149 = vpop.permute.xlu0 %8148
    %8150 = vrot.lane.b32.xlu0 %v7475, 80
    %v8151 = vpop.permute.xlu0 %8150
    %8152 = vrot.lane.b32.xlu0 %v7480, 80
    %v8153 = vpop.permute.xlu0 %8152
    %v8154 = vsel %vm175, %v8147, 0
    %v8156 = vsel %vm175, %v8149, 0
    %v8158 = vsel %vm175, %v8151, 0
    %v8160 = vsel %vm175, %v8153, 0
    %8162 = vmatprep.subr.mxu0 0.0
    %8163 = vmatpush1.xpose.msra.mxu0 0.0
    %8164 = vmatprep.subr.mxu0 0.0
    %8165 = vmatpush1.xpose.msra.mxu0 0.0
    %8166 = vmatprep.subr.mxu0 0.0
    %8167 = vmatpush1.xpose.msra.mxu0 0.0
    %8168 = vmatprep.subr.mxu0 0.0
    %8169 = vmatpush1.xpose.msra.mxu0 0.0
    %8170 = vmatprep.subr.mxu0 0.0
    %8171 = vmatpush1.xpose.msra.mxu0 0.0
    %8172 = vmatprep.subr.mxu0 0.0
    %8173 = vmatpush1.xpose.msra.mxu0 0.0
    %8174 = vmatprep.subr.mxu0 0.0
    %8175 = vmatpush1.xpose.msra.mxu0 0.0
    %8176 = vmatprep.subr.mxu0 0.0
    %8177 = vmatpush1.xpose.msra.mxu0 0.0
    %8178 = vmatprep.subr.mxu0 0.0
    %8179 = vmatpush1.xpose.msra.mxu0 0.0
    %8180 = vmatprep.subr.mxu0 0.0
    %8181 = vmatpush1.xpose.msra.mxu0 0.0
    %8182 = vmatprep.subr.mxu0 0.0
    %8183 = vmatpush1.xpose.msra.mxu0 0.0
    %8184 = vmatprep.subr.mxu0 0.0
    %8185 = vmatpush1.xpose.msra.mxu0 0.0
    %8186 = vmatprep.subr.mxu0 0.0
    %8187 = vmatpush1.xpose.msra.mxu0 0.0
    %8188 = vmatprep.subr.mxu0 0.0
    %8189 = vmatpush1.xpose.msra.mxu0 0.0
    %8190 = vmatprep.subr.mxu0 0.0
    %8191 = vmatpush1.xpose.msra.mxu0 %v8160
    %8192 = vmatprep.subr.mxu0 0.0
    %8193 = vmatpush1.xpose.msra.mxu0 %v8158
    %8194 = vmatprep.subr.mxu0 0.0
    %8195 = vmatpush2.xpose.msra.mxu0 0.0
    %8196 = vmatprep.subr.mxu0 0.0
    %8197 = vmatpush2.xpose.msra.mxu0 0.0
    %8198 = vmatprep.subr.mxu0 0.0
    %8199 = vmatpush2.xpose.msra.mxu0 0.0
    %8200 = vmatprep.subr.mxu0 0.0
    %8201 = vmatpush2.xpose.msra.mxu0 0.0
    %8202 = vmatprep.subr.mxu0 0.0
    %8203 = vmatpush2.xpose.msra.mxu0 0.0
    %8204 = vmatprep.subr.mxu0 0.0
    %8205 = vmatpush2.xpose.msra.mxu0 0.0
    %8206 = vmatprep.subr.mxu0 0.0
    %8207 = vmatpush2.xpose.msra.mxu0 0.0
    %8208 = vmatprep.subr.mxu0 0.0
    %8209 = vmatpush2.xpose.msra.mxu0 0.0
    %8210 = vmatprep.subr.mxu0 0.0
    %8211 = vmatpush2.xpose.msra.mxu0 0.0
    %8212 = vmatprep.subr.mxu0 0.0
    %8213 = vmatpush2.xpose.msra.mxu0 0.0
    %8214 = vmatprep.subr.mxu0 0.0
    %8215 = vmatpush2.xpose.msra.mxu0 0.0
    %8216 = vmatprep.subr.mxu0 0.0
    %8217 = vmatpush2.xpose.msra.mxu0 0.0
    %8218 = vmatprep.subr.mxu0 0.0
    %8219 = vmatpush2.xpose.msra.mxu0 0.0
    %8220 = vmatprep.subr.mxu0 0.0
    %8221 = vmatpush2.xpose.msra.mxu0 0.0
    %8222 = vmatprep.subr.mxu0 0.0
    %8223 = vmatpush2.xpose.msra.mxu0 0.0
    %8224 = vmatprep.subr.mxu0 0.0
    %8225 = vmatpush2.xpose.msra.mxu0 0.0
    %8226 = vmatprep.mubr.f32.mxu0 0.0
    %8227 = vmatmul.mubr.f32.gmra.mxu0 %v8154
    %v8228 = vpop.f32.mrf.mxu0
    %v8229 = vadd.f32 %v66, %v8228
    %v8230 = vpop.f32.mrf.mxu0
    %8231 = vmatprep.mubr.f32.mxu0 0.0
    %8232 = vmatmul.mubr.f32.gmra.mxu0 %v8156
    %v8233 = vpop.f32.mrf.mxu0
    %v8234 = vadd.f32 %v67, %v8233
    %v8235 = vpop.f32.mrf.mxu0
    %8236 = vdwg.mxu0
    %v8237 = vsel %vm259, %v8229, -inf
    %8238 = vmax.xlane.f32.xlu0 %v8237
    %v8239 = vpop.xlane.xlu0 %8238
    %v8240 = vsel %vm259, %v8234, -inf
    %8241 = vmax.xlane.f32.xlu0 %v8240
    %v8242 = vpop.xlane.xlu0 %8241
    %v8243 = vsub.f32 %v8229, %v8239
    %v8244 = vsub.f32 %v8234, %v8242
    %v8245 = vmul.f32 %v8243, 1.442695
    %v8246 = vpow.pop %v8245
    %v8247 = vmul.f32 %v8244, 1.442695
    %v8248 = vpow.pop %v8247
    %v8249 = vsel %vm259, %v8246, 0.0
    %8250 = vadd.xlane.f32.xlu0 %v8249
    %v8251 = vpop.xlane.xlu0 %8250
    %v8252 = vsel %vm259, %v8248, 0.0
    %8253 = vadd.xlane.f32.xlu0 %v8252
    %v8254 = vpop.xlane.xlu0 %8253
    %v8255 = vrcp.pop %v8251
    %v8256 = vrcp.pop %v8254
    %v8257 = vmul.f32 %v8246, %v8255
    %v8258 = vmul.f32 %v8248, %v8256
    %8259 = vrot.lane.b32.xlu0 %v7475, 112
    %v8260 = vpop.permute.xlu0 %8259
    %8261 = vrot.lane.b32.xlu0 %v7480, 112
    %v8262 = vpop.permute.xlu0 %8261
    %v8266 = vsel %vm259, %v8257, 0
    %v8269 = vsel %vm259, %v8258, 0
    %8271 = vmatprep.subr.mxu0 0.0
    %8272 = vmatpush1.msra.mxu0 0.0
    %8273 = vmatprep.subr.mxu0 0.0
    %8274 = vmatpush1.msra.mxu0 0.0
    %8275 = vmatprep.subr.mxu0 0.0
    %8276 = vmatpush1.msra.mxu0 0.0
    %8277 = vmatprep.subr.mxu0 0.0
    %8278 = vmatpush1.msra.mxu0 0.0
    %8279 = vmatprep.subr.mxu0 0.0
    %8280 = vmatpush1.msra.mxu0 0.0
    %8281 = vmatprep.subr.mxu0 0.0
    %8282 = vmatpush1.msra.mxu0 0.0
    %8283 = vmatprep.subr.mxu0 0.0
    %8284 = vmatpush1.msra.mxu0 0.0
    %8285 = vmatprep.subr.mxu0 0.0
    %8286 = vmatpush1.msra.mxu0 0.0
    %8287 = vmatprep.subr.mxu0 0.0
    %8288 = vmatpush1.msra.mxu0 0.0
    %8289 = vmatprep.subr.mxu0 0.0
    %8290 = vmatpush1.msra.mxu0 0.0
    %8291 = vmatprep.subr.mxu0 0.0
    %8292 = vmatpush1.msra.mxu0 0.0
    %8293 = vmatprep.subr.mxu0 0.0
    %8294 = vmatpush1.msra.mxu0 0.0
    %8295 = vmatprep.subr.mxu0 0.0
    %8296 = vmatpush1.msra.mxu0 0.0
    %8297 = vmatprep.subr.mxu0 0.0
    %8298 = vmatpush1.msra.mxu0 0.0
    %8299 = vmatprep.subr.mxu0 0.0
    %8300 = vmatpush1.msra.mxu0 %v8262
    %8301 = vmatprep.subr.mxu0 0.0
    %8302 = vmatpush1.msra.mxu0 %v8260
    %8303 = vmatprep.subr.mxu0 0.0
    %8304 = vmatpush2.msra.mxu0 0.0
    %8305 = vmatprep.subr.mxu0 0.0
    %8306 = vmatpush2.msra.mxu0 0.0
    %8307 = vmatprep.subr.mxu0 0.0
    %8308 = vmatpush2.msra.mxu0 0.0
    %8309 = vmatprep.subr.mxu0 0.0
    %8310 = vmatpush2.msra.mxu0 0.0
    %8311 = vmatprep.subr.mxu0 0.0
    %8312 = vmatpush2.msra.mxu0 0.0
    %8313 = vmatprep.subr.mxu0 0.0
    %8314 = vmatpush2.msra.mxu0 0.0
    %8315 = vmatprep.subr.mxu0 0.0
    %8316 = vmatpush2.msra.mxu0 0.0
    %8317 = vmatprep.subr.mxu0 0.0
    %8318 = vmatpush2.msra.mxu0 0.0
    %8319 = vmatprep.subr.mxu0 0.0
    %8320 = vmatpush2.msra.mxu0 0.0
    %8321 = vmatprep.subr.mxu0 0.0
    %8322 = vmatpush2.msra.mxu0 0.0
    %8323 = vmatprep.subr.mxu0 0.0
    %8324 = vmatpush2.msra.mxu0 0.0
    %8325 = vmatprep.subr.mxu0 0.0
    %8326 = vmatpush2.msra.mxu0 0.0
    %8327 = vmatprep.subr.mxu0 0.0
    %8328 = vmatpush2.msra.mxu0 0.0
    %8329 = vmatprep.subr.mxu0 0.0
    %8330 = vmatpush2.msra.mxu0 0.0
    %8331 = vmatprep.subr.mxu0 0.0
    %8332 = vmatpush2.msra.mxu0 0.0
    %8333 = vmatprep.subr.mxu0 0.0
    %8334 = vmatpush2.msra.mxu0 0.0
    %8335 = vmatprep.mubr.f32.mxu0 0.0
    %8336 = vmatmul.mubr.f32.gmra.mxu0 %v8266
    %v8337 = vpop.f32.mrf.mxu0
    %v8338 = vadd.f32 0.0, %v8337
    %v8339 = vpop.f32.mrf.mxu0
    %8340 = vmatprep.mubr.f32.mxu0 0.0
    %8341 = vmatmul.mubr.f32.gmra.mxu0 %v8269
    %v8342 = vpop.f32.mrf.mxu0
    %v8343 = vadd.f32 0.0, %v8342
    %v8344 = vpop.f32.mrf.mxu0
    %8345 = vdwg.mxu0
    %8346 = vrot.lane.b32.xlu0 %v6108, 32
    %v8347 = vpop.permute.xlu0 %8346
    %v8350 = vsel %vm175, %v8338, 0
    %v8353 = vsel %vm175, %v8343, 0
    %8355 = vmatprep.subr.mxu0 0.0
    %8356 = vmatpush1.msra.mxu0 0.0
    %8357 = vmatprep.subr.mxu0 0.0
    %8358 = vmatpush1.msra.mxu0 0.0
    %8359 = vmatprep.subr.mxu0 0.0
    %8360 = vmatpush1.msra.mxu0 0.0
    %8361 = vmatprep.subr.mxu0 0.0
    %8362 = vmatpush1.msra.mxu0 0.0
    %8363 = vmatprep.subr.mxu0 0.0
    %8364 = vmatpush1.msra.mxu0 0.0
    %8365 = vmatprep.subr.mxu0 0.0
    %8366 = vmatpush1.msra.mxu0 0.0
    %8367 = vmatprep.subr.mxu0 0.0
    %8368 = vmatpush1.msra.mxu0 0.0
    %8369 = vmatprep.subr.mxu0 0.0
    %8370 = vmatpush1.msra.mxu0 0.0
    %8371 = vmatprep.subr.mxu0 0.0
    %8372 = vmatpush1.msra.mxu0 0.0
    %8373 = vmatprep.subr.mxu0 0.0
    %8374 = vmatpush1.msra.mxu0 0.0
    %8375 = vmatprep.subr.mxu0 0.0
    %8376 = vmatpush1.msra.mxu0 0.0
    %8377 = vmatprep.subr.mxu0 0.0
    %8378 = vmatpush1.msra.mxu0 0.0
    %8379 = vmatprep.subr.mxu0 0.0
    %8380 = vmatpush1.msra.mxu0 0.0
    %8381 = vmatprep.subr.mxu0 0.0
    %8382 = vmatpush1.msra.mxu0 0.0
    %8383 = vmatprep.subr.mxu0 0.0
    %8384 = vmatpush1.msra.mxu0 0.0
    %8385 = vmatprep.subr.mxu0 0.0
    %8386 = vmatpush1.msra.mxu0 %v8347
    %8387 = vmatprep.subr.mxu0 0.0
    %8388 = vmatpush2.msra.mxu0 0.0
    %8389 = vmatprep.subr.mxu0 0.0
    %8390 = vmatpush2.msra.mxu0 0.0
    %8391 = vmatprep.subr.mxu0 0.0
    %8392 = vmatpush2.msra.mxu0 0.0
    %8393 = vmatprep.subr.mxu0 0.0
    %8394 = vmatpush2.msra.mxu0 0.0
    %8395 = vmatprep.subr.mxu0 0.0
    %8396 = vmatpush2.msra.mxu0 0.0
    %8397 = vmatprep.subr.mxu0 0.0
    %8398 = vmatpush2.msra.mxu0 0.0
    %8399 = vmatprep.subr.mxu0 0.0
    %8400 = vmatpush2.msra.mxu0 0.0
    %8401 = vmatprep.subr.mxu0 0.0
    %8402 = vmatpush2.msra.mxu0 0.0
    %8403 = vmatprep.subr.mxu0 0.0
    %8404 = vmatpush2.msra.mxu0 0.0
    %8405 = vmatprep.subr.mxu0 0.0
    %8406 = vmatpush2.msra.mxu0 0.0
    %8407 = vmatprep.subr.mxu0 0.0
    %8408 = vmatpush2.msra.mxu0 0.0
    %8409 = vmatprep.subr.mxu0 0.0
    %8410 = vmatpush2.msra.mxu0 0.0
    %8411 = vmatprep.subr.mxu0 0.0
    %8412 = vmatpush2.msra.mxu0 0.0
    %8413 = vmatprep.subr.mxu0 0.0
    %8414 = vmatpush2.msra.mxu0 0.0
    %8415 = vmatprep.subr.mxu0 0.0
    %8416 = vmatpush2.msra.mxu0 0.0
    %8417 = vmatprep.subr.mxu0 0.0
    %8418 = vmatpush2.msra.mxu0 0.0
    %8419 = vmatprep.mubr.f32.mxu0 0.0
    %8420 = vmatmul.mubr.f32.gmra.mxu0 %v8350
    %v8421 = vpop.f32.mrf.mxu0
    %v8422 = vadd.f32 0.0, %v8421
    %v8423 = vpop.f32.mrf.mxu0
    %8424 = vmatprep.mubr.f32.mxu0 0.0
    %8425 = vmatmul.mubr.f32.gmra.mxu0 %v8353
    %v8426 = vpop.f32.mrf.mxu0
    %v8427 = vadd.f32 0.0, %v8426
    %v8428 = vpop.f32.mrf.mxu0
    %8429 = vdwg.mxu0
    %v8430 = vadd.f32 %v8138, %v8422
    %v8431 = vadd.f32 %v8143, %v8427
    %8432 = vrot.lane.b32.xlu0 %v7576, 104
    %v8433 = vpop.permute.xlu0 %8432
    %8434 = vrot.lane.b32.xlu0 %v7581, 104
    %v8435 = vpop.permute.xlu0 %8434
    %8436 = vrot.lane.b32.xlu0 %v7475, 72
    %v8437 = vpop.permute.xlu0 %8436
    %8438 = vrot.lane.b32.xlu0 %v7480, 72
    %v8439 = vpop.permute.xlu0 %8438
    %v8440 = vsel %vm175, %v8433, 0
    %v8442 = vsel %vm175, %v8435, 0
    %v8444 = vsel %vm175, %v8437, 0
    %v8446 = vsel %vm175, %v8439, 0
    %8448 = vmatprep.subr.mxu0 0.0
    %8449 = vmatpush1.xpose.msra.mxu0 0.0
    %8450 = vmatprep.subr.mxu0 0.0
    %8451 = vmatpush1.xpose.msra.mxu0 0.0
    %8452 = vmatprep.subr.mxu0 0.0
    %8453 = vmatpush1.xpose.msra.mxu0 0.0
    %8454 = vmatprep.subr.mxu0 0.0
    %8455 = vmatpush1.xpose.msra.mxu0 0.0
    %8456 = vmatprep.subr.mxu0 0.0
    %8457 = vmatpush1.xpose.msra.mxu0 0.0
    %8458 = vmatprep.subr.mxu0 0.0
    %8459 = vmatpush1.xpose.msra.mxu0 0.0
    %8460 = vmatprep.subr.mxu0 0.0
    %8461 = vmatpush1.xpose.msra.mxu0 0.0
    %8462 = vmatprep.subr.mxu0 0.0
    %8463 = vmatpush1.xpose.msra.mxu0 0.0
    %8464 = vmatprep.subr.mxu0 0.0
    %8465 = vmatpush1.xpose.msra.mxu0 0.0
    %8466 = vmatprep.subr.mxu0 0.0
    %8467 = vmatpush1.xpose.msra.mxu0 0.0
    %8468 = vmatprep.subr.mxu0 0.0
    %8469 = vmatpush1.xpose.msra.mxu0 0.0
    %8470 = vmatprep.subr.mxu0 0.0
    %8471 = vmatpush1.xpose.msra.mxu0 0.0
    %8472 = vmatprep.subr.mxu0 0.0
    %8473 = vmatpush1.xpose.msra.mxu0 0.0
    %8474 = vmatprep.subr.mxu0 0.0
    %8475 = vmatpush1.xpose.msra.mxu0 0.0
    %8476 = vmatprep.subr.mxu0 0.0
    %8477 = vmatpush1.xpose.msra.mxu0 %v8446
    %8478 = vmatprep.subr.mxu0 0.0
    %8479 = vmatpush1.xpose.msra.mxu0 %v8444
    %8480 = vmatprep.subr.mxu0 0.0
    %8481 = vmatpush2.xpose.msra.mxu0 0.0
    %8482 = vmatprep.subr.mxu0 0.0
    %8483 = vmatpush2.xpose.msra.mxu0 0.0
    %8484 = vmatprep.subr.mxu0 0.0
    %8485 = vmatpush2.xpose.msra.mxu0 0.0
    %8486 = vmatprep.subr.mxu0 0.0
    %8487 = vmatpush2.xpose.msra.mxu0 0.0
    %8488 = vmatprep.subr.mxu0 0.0
    %8489 = vmatpush2.xpose.msra.mxu0 0.0
    %8490 = vmatprep.subr.mxu0 0.0
    %8491 = vmatpush2.xpose.msra.mxu0 0.0
    %8492 = vmatprep.subr.mxu0 0.0
    %8493 = vmatpush2.xpose.msra.mxu0 0.0
    %8494 = vmatprep.subr.mxu0 0.0
    %8495 = vmatpush2.xpose.msra.mxu0 0.0
    %8496 = vmatprep.subr.mxu0 0.0
    %8497 = vmatpush2.xpose.msra.mxu0 0.0
    %8498 = vmatprep.subr.mxu0 0.0
    %8499 = vmatpush2.xpose.msra.mxu0 0.0
    %8500 = vmatprep.subr.mxu0 0.0
    %8501 = vmatpush2.xpose.msra.mxu0 0.0
    %8502 = vmatprep.subr.mxu0 0.0
    %8503 = vmatpush2.xpose.msra.mxu0 0.0
    %8504 = vmatprep.subr.mxu0 0.0
    %8505 = vmatpush2.xpose.msra.mxu0 0.0
    %8506 = vmatprep.subr.mxu0 0.0
    %8507 = vmatpush2.xpose.msra.mxu0 0.0
    %8508 = vmatprep.subr.mxu0 0.0
    %8509 = vmatpush2.xpose.msra.mxu0 0.0
    %8510 = vmatprep.subr.mxu0 0.0
    %8511 = vmatpush2.xpose.msra.mxu0 0.0
    %8512 = vmatprep.mubr.f32.mxu0 0.0
    %8513 = vmatmul.mubr.f32.gmra.mxu0 %v8440
    %v8514 = vpop.f32.mrf.mxu0
    %v8515 = vadd.f32 %v66, %v8514
    %v8516 = vpop.f32.mrf.mxu0
    %8517 = vmatprep.mubr.f32.mxu0 0.0
    %8518 = vmatmul.mubr.f32.gmra.mxu0 %v8442
    %v8519 = vpop.f32.mrf.mxu0
    %v8520 = vadd.f32 %v67, %v8519
    %v8521 = vpop.f32.mrf.mxu0
    %8522 = vdwg.mxu0
    %v8523 = vsel %vm259, %v8515, -inf
    %8524 = vmax.xlane.f32.xlu0 %v8523
    %v8525 = vpop.xlane.xlu0 %8524
    %v8526 = vsel %vm259, %v8520, -inf
    %8527 = vmax.xlane.f32.xlu0 %v8526
    %v8528 = vpop.xlane.xlu0 %8527
    %v8529 = vsub.f32 %v8515, %v8525
    %v8530 = vsub.f32 %v8520, %v8528
    %v8531 = vmul.f32 %v8529, 1.442695
    %v8532 = vpow.pop %v8531
    %v8533 = vmul.f32 %v8530, 1.442695
    %v8534 = vpow.pop %v8533
    %v8535 = vsel %vm259, %v8532, 0.0
    %8536 = vadd.xlane.f32.xlu0 %v8535
    %v8537 = vpop.xlane.xlu0 %8536
    %v8538 = vsel %vm259, %v8534, 0.0
    %8539 = vadd.xlane.f32.xlu0 %v8538
    %v8540 = vpop.xlane.xlu0 %8539
    %v8541 = vrcp.pop %v8537
    %v8542 = vrcp.pop %v8540
    %v8543 = vmul.f32 %v8532, %v8541
    %v8544 = vmul.f32 %v8534, %v8542
    %8545 = vrot.lane.b32.xlu0 %v7475, 104
    %v8546 = vpop.permute.xlu0 %8545
    %8547 = vrot.lane.b32.xlu0 %v7480, 104
    %v8548 = vpop.permute.xlu0 %8547
    %v8552 = vsel %vm259, %v8543, 0
    %v8555 = vsel %vm259, %v8544, 0
    %8557 = vmatprep.subr.mxu0 0.0
    %8558 = vmatpush1.msra.mxu0 0.0
    %8559 = vmatprep.subr.mxu0 0.0
    %8560 = vmatpush1.msra.mxu0 0.0
    %8561 = vmatprep.subr.mxu0 0.0
    %8562 = vmatpush1.msra.mxu0 0.0
    %8563 = vmatprep.subr.mxu0 0.0
    %8564 = vmatpush1.msra.mxu0 0.0
    %8565 = vmatprep.subr.mxu0 0.0
    %8566 = vmatpush1.msra.mxu0 0.0
    %8567 = vmatprep.subr.mxu0 0.0
    %8568 = vmatpush1.msra.mxu0 0.0
    %8569 = vmatprep.subr.mxu0 0.0
    %8570 = vmatpush1.msra.mxu0 0.0
    %8571 = vmatprep.subr.mxu0 0.0
    %8572 = vmatpush1.msra.mxu0 0.0
    %8573 = vmatprep.subr.mxu0 0.0
    %8574 = vmatpush1.msra.mxu0 0.0
    %8575 = vmatprep.subr.mxu0 0.0
    %8576 = vmatpush1.msra.mxu0 0.0
    %8577 = vmatprep.subr.mxu0 0.0
    %8578 = vmatpush1.msra.mxu0 0.0
    %8579 = vmatprep.subr.mxu0 0.0
    %8580 = vmatpush1.msra.mxu0 0.0
    %8581 = vmatprep.subr.mxu0 0.0
    %8582 = vmatpush1.msra.mxu0 0.0
    %8583 = vmatprep.subr.mxu0 0.0
    %8584 = vmatpush1.msra.mxu0 0.0
    %8585 = vmatprep.subr.mxu0 0.0
    %8586 = vmatpush1.msra.mxu0 %v8548
    %8587 = vmatprep.subr.mxu0 0.0
    %8588 = vmatpush1.msra.mxu0 %v8546
    %8589 = vmatprep.subr.mxu0 0.0
    %8590 = vmatpush2.msra.mxu0 0.0
    %8591 = vmatprep.subr.mxu0 0.0
    %8592 = vmatpush2.msra.mxu0 0.0
    %8593 = vmatprep.subr.mxu0 0.0
    %8594 = vmatpush2.msra.mxu0 0.0
    %8595 = vmatprep.subr.mxu0 0.0
    %8596 = vmatpush2.msra.mxu0 0.0
    %8597 = vmatprep.subr.mxu0 0.0
    %8598 = vmatpush2.msra.mxu0 0.0
    %8599 = vmatprep.subr.mxu0 0.0
    %8600 = vmatpush2.msra.mxu0 0.0
    %8601 = vmatprep.subr.mxu0 0.0
    %8602 = vmatpush2.msra.mxu0 0.0
    %8603 = vmatprep.subr.mxu0 0.0
    %8604 = vmatpush2.msra.mxu0 0.0
    %8605 = vmatprep.subr.mxu0 0.0
    %8606 = vmatpush2.msra.mxu0 0.0
    %8607 = vmatprep.subr.mxu0 0.0
    %8608 = vmatpush2.msra.mxu0 0.0
    %8609 = vmatprep.subr.mxu0 0.0
    %8610 = vmatpush2.msra.mxu0 0.0
    %8611 = vmatprep.subr.mxu0 0.0
    %8612 = vmatpush2.msra.mxu0 0.0
    %8613 = vmatprep.subr.mxu0 0.0
    %8614 = vmatpush2.msra.mxu0 0.0
    %8615 = vmatprep.subr.mxu0 0.0
    %8616 = vmatpush2.msra.mxu0 0.0
    %8617 = vmatprep.subr.mxu0 0.0
    %8618 = vmatpush2.msra.mxu0 0.0
    %8619 = vmatprep.subr.mxu0 0.0
    %8620 = vmatpush2.msra.mxu0 0.0
    %8621 = vmatprep.mubr.f32.mxu0 0.0
    %8622 = vmatmul.mubr.f32.gmra.mxu0 %v8552
    %v8623 = vpop.f32.mrf.mxu0
    %v8624 = vadd.f32 0.0, %v8623
    %v8625 = vpop.f32.mrf.mxu0
    %8626 = vmatprep.mubr.f32.mxu0 0.0
    %8627 = vmatmul.mubr.f32.gmra.mxu0 %v8555
    %v8628 = vpop.f32.mrf.mxu0
    %v8629 = vadd.f32 0.0, %v8628
    %v8630 = vpop.f32.mrf.mxu0
    %8631 = vdwg.mxu0
    %8632 = vrot.lane.b32.xlu0 %v6109, 32
    %v8633 = vpop.permute.xlu0 %8632
    %v8636 = vsel %vm175, %v8624, 0
    %v8639 = vsel %vm175, %v8629, 0
    %8641 = vmatprep.subr.mxu0 0.0
    %8642 = vmatpush1.msra.mxu0 0.0
    %8643 = vmatprep.subr.mxu0 0.0
    %8644 = vmatpush1.msra.mxu0 0.0
    %8645 = vmatprep.subr.mxu0 0.0
    %8646 = vmatpush1.msra.mxu0 0.0
    %8647 = vmatprep.subr.mxu0 0.0
    %8648 = vmatpush1.msra.mxu0 0.0
    %8649 = vmatprep.subr.mxu0 0.0
    %8650 = vmatpush1.msra.mxu0 0.0
    %8651 = vmatprep.subr.mxu0 0.0
    %8652 = vmatpush1.msra.mxu0 0.0
    %8653 = vmatprep.subr.mxu0 0.0
    %8654 = vmatpush1.msra.mxu0 0.0
    %8655 = vmatprep.subr.mxu0 0.0
    %8656 = vmatpush1.msra.mxu0 0.0
    %8657 = vmatprep.subr.mxu0 0.0
    %8658 = vmatpush1.msra.mxu0 0.0
    %8659 = vmatprep.subr.mxu0 0.0
    %8660 = vmatpush1.msra.mxu0 0.0
    %8661 = vmatprep.subr.mxu0 0.0
    %8662 = vmatpush1.msra.mxu0 0.0
    %8663 = vmatprep.subr.mxu0 0.0
    %8664 = vmatpush1.msra.mxu0 0.0
    %8665 = vmatprep.subr.mxu0 0.0
    %8666 = vmatpush1.msra.mxu0 0.0
    %8667 = vmatprep.subr.mxu0 0.0
    %8668 = vmatpush1.msra.mxu0 0.0
    %8669 = vmatprep.subr.mxu0 0.0
    %8670 = vmatpush1.msra.mxu0 0.0
    %8671 = vmatprep.subr.mxu0 0.0
    %8672 = vmatpush1.msra.mxu0 %v8633
    %8673 = vmatprep.subr.mxu0 0.0
    %8674 = vmatpush2.msra.mxu0 0.0
    %8675 = vmatprep.subr.mxu0 0.0
    %8676 = vmatpush2.msra.mxu0 0.0
    %8677 = vmatprep.subr.mxu0 0.0
    %8678 = vmatpush2.msra.mxu0 0.0
    %8679 = vmatprep.subr.mxu0 0.0
    %8680 = vmatpush2.msra.mxu0 0.0
    %8681 = vmatprep.subr.mxu0 0.0
    %8682 = vmatpush2.msra.mxu0 0.0
    %8683 = vmatprep.subr.mxu0 0.0
    %8684 = vmatpush2.msra.mxu0 0.0
    %8685 = vmatprep.subr.mxu0 0.0
    %8686 = vmatpush2.msra.mxu0 0.0
    %8687 = vmatprep.subr.mxu0 0.0
    %8688 = vmatpush2.msra.mxu0 0.0
    %8689 = vmatprep.subr.mxu0 0.0
    %8690 = vmatpush2.msra.mxu0 0.0
    %8691 = vmatprep.subr.mxu0 0.0
    %8692 = vmatpush2.msra.mxu0 0.0
    %8693 = vmatprep.subr.mxu0 0.0
    %8694 = vmatpush2.msra.mxu0 0.0
    %8695 = vmatprep.subr.mxu0 0.0
    %8696 = vmatpush2.msra.mxu0 0.0
    %8697 = vmatprep.subr.mxu0 0.0
    %8698 = vmatpush2.msra.mxu0 0.0
    %8699 = vmatprep.subr.mxu0 0.0
    %8700 = vmatpush2.msra.mxu0 0.0
    %8701 = vmatprep.subr.mxu0 0.0
    %8702 = vmatpush2.msra.mxu0 0.0
    %8703 = vmatprep.subr.mxu0 0.0
    %8704 = vmatpush2.msra.mxu0 0.0
    %8705 = vmatprep.mubr.f32.mxu0 0.0
    %8706 = vmatmul.mubr.f32.gmra.mxu0 %v8636
    %v8707 = vpop.f32.mrf.mxu0
    %v8708 = vadd.f32 0.0, %v8707
    %v8709 = vpop.f32.mrf.mxu0
    %8710 = vmatprep.mubr.f32.mxu0 0.0
    %8711 = vmatmul.mubr.f32.gmra.mxu0 %v8639
    %v8712 = vpop.f32.mrf.mxu0
    %v8713 = vadd.f32 0.0, %v8712
    %v8714 = vpop.f32.mrf.mxu0
    %8715 = vdwg.mxu0
    %v8716 = vadd.f32 %v8430, %v8708
    %v8717 = vadd.f32 %v8431, %v8713
    %8718 = vrot.lane.b32.xlu0 %v7407, 32
    %v8719 = vpop.permute.xlu0 %8718
    %v8721 = vadd.f32 %v8716, %v8719
    %v8722 = vadd.f32 %v8717, %v8719
    %v8723 = vadd.f32 %v8721, %v7402
    %v8724 = vadd.f32 %v8722, %v7403
    %v8725 = vsel %vm83, %v8723, 0.0
    %8726 = vadd.xlane.f32.xlu0 %v8725
    %v8727 = vpop.xlane.xlu0 %8726
    %v8728 = vsel %vm83, %v8724, 0.0
    %8729 = vadd.xlane.f32.xlu0 %v8728
    %v8730 = vpop.xlane.xlu0 %8729
    %v8731 = vmul.f32 %v8727, %v1321
    %v8732 = vmul.f32 %v8730, %v1321
    %v8733 = vsub.f32 %v8723, %v8731
    %v8734 = vsub.f32 %v8724, %v8732
    %v8735 = vmul.f32 %v8733, %v8733
    %v8736 = vmul.f32 %v8734, %v8734
    %v8737 = vsel %vm83, %v8735, 0.0
    %8738 = vadd.xlane.f32.xlu0 %v8737
    %v8739 = vpop.xlane.xlu0 %8738
    %v8740 = vsel %vm83, %v8736, 0.0
    %8741 = vadd.xlane.f32.xlu0 %v8740
    %v8742 = vpop.xlane.xlu0 %8741
    %v8743 = vmul.f32 %v8739, 0.032258064
    %v8744 = vmul.f32 %v8742, 0.032258064
    %v8745 = vrsqrt.pop %v8743
    %v8746 = vmul.f32 %v8743, %v8745
    %vm8747 = vcmp.eq.f32.partialorder %v8743, inf
    %v8748 = vsel %vm8747, %v8743, %v8746
    %vm8749 = vcmp.eq.f32.partialorder %v8743, 0.0
    %v8750 = vand.u32 %v8743, 2147483648
    %v8751 = vsel %vm8749, %v8750, %v8748
    %v8752 = vrsqrt.pop %v8744
    %v8753 = vmul.f32 %v8744, %v8752
    %vm8754 = vcmp.eq.f32.partialorder %v8744, inf
    %v8755 = vsel %vm8754, %v8744, %v8753
    %vm8756 = vcmp.eq.f32.partialorder %v8744, 0.0
    %v8757 = vand.u32 %v8744, 2147483648
    %v8758 = vsel %vm8756, %v8757, %v8755
    %v8759 = vadd.f32 %v8751, 1e-06
    %v8760 = vadd.f32 %v8758, 1e-06
    %v8761 = vrcp.pop %v8759
    %v8762 = vrcp.pop %v8760
    %8765 = vrot.lane.b32.xlu0 %v8733, 64
    %v8766 = vpop.permute.xlu0 %8765
    %8767 = vrot.lane.b32.xlu0 %v8734, 64
    %v8768 = vpop.permute.xlu0 %8767
    %v8771 = vmul.f32 %v7393, %v8766
    %v8772 = vmul.f32 %v7393, %v8768
    %v8773 = vmul.f32 %v8771, %v8761
    %v8774 = vmul.f32 %v8772, %v8762
    %v8775 = vadd.f32 %v8773, %v7400
    %v8776 = vadd.f32 %v8774, %v7400
    %v8777 = vlaneseq
    %v8778 = vshrl.u32 %v8777, 7
    %v8779 = vsub.s32 0, %v8778
    %v8780 = vrot.slane %v6116, %v8779
    %8783 = vrot.lane.b32.xlu0 %v8775, 64
    %v8784 = vpop.permute.xlu0 %8783
    %8785 = vrot.lane.b32.xlu0 %v8776, 64
    %v8786 = vpop.permute.xlu0 %8785
    %v8787 = vsel %vm83, %v8784, 0
    %v8789 = vsel %vm83, %v8786, 0
    %8791 = vmatprep.subr.mxu0 0.0
    %8792 = vmatpush1.msra.mxu0 0.0
    %8793 = vmatprep.subr.mxu0 0.0
    %8794 = vmatpush1.msra.mxu0 0.0
    %8795 = vmatprep.subr.mxu0 0.0
    %8796 = vmatpush1.msra.mxu0 0.0
    %8797 = vmatprep.subr.mxu0 0.0
    %8798 = vmatpush1.msra.mxu0 0.0
    %8799 = vmatprep.subr.mxu0 0.0
    %8800 = vmatpush1.msra.mxu0 0.0
    %8801 = vmatprep.subr.mxu0 0.0
    %8802 = vmatpush1.msra.mxu0 0.0
    %8803 = vmatprep.subr.mxu0 0.0
    %8804 = vmatpush1.msra.mxu0 0.0
    %8805 = vmatprep.subr.mxu0 0.0
    %8806 = vmatpush1.msra.mxu0 0.0
    %8807 = vmatprep.subr.mxu0 0.0
    %8808 = vmatpush1.msra.mxu0 0.0
    %8809 = vmatprep.subr.mxu0 0.0
    %8810 = vmatpush1.msra.mxu0 0.0
    %8811 = vmatprep.subr.mxu0 0.0
    %8812 = vmatpush1.msra.mxu0 0.0
    %8813 = vmatprep.subr.mxu0 0.0
    %8814 = vmatpush1.msra.mxu0 0.0
    %8815 = vmatprep.subr.mxu0 0.0
    %8816 = vmatpush1.msra.mxu0 %v6113
    %8817 = vmatprep.subr.mxu0 0.0
    %8818 = vmatpush1.msra.mxu0 %v6112
    %8819 = vmatprep.subr.mxu0 0.0
    %8820 = vmatpush1.msra.mxu0 %v6111
    %8821 = vmatprep.subr.mxu0 0.0
    %8822 = vmatpush1.msra.mxu0 %v6110
    %8823 = vmatprep.subr.mxu0 0.0
    %8824 = vmatpush2.msra.mxu0 0.0
    %8825 = vmatprep.subr.mxu0 0.0
    %8826 = vmatpush2.msra.mxu0 0.0
    %8827 = vmatprep.subr.mxu0 0.0
    %8828 = vmatpush2.msra.mxu0 0.0
    %8829 = vmatprep.subr.mxu0 0.0
    %8830 = vmatpush2.msra.mxu0 0.0
    %8831 = vmatprep.subr.mxu0 0.0
    %8832 = vmatpush2.msra.mxu0 0.0
    %8833 = vmatprep.subr.mxu0 0.0
    %8834 = vmatpush2.msra.mxu0 0.0
    %8835 = vmatprep.subr.mxu0 0.0
    %8836 = vmatpush2.msra.mxu0 0.0
    %8837 = vmatprep.subr.mxu0 0.0
    %8838 = vmatpush2.msra.mxu0 0.0
    %8839 = vmatprep.subr.mxu0 0.0
    %8840 = vmatpush2.msra.mxu0 0.0
    %8841 = vmatprep.subr.mxu0 0.0
    %8842 = vmatpush2.msra.mxu0 0.0
    %8843 = vmatprep.subr.mxu0 0.0
    %8844 = vmatpush2.msra.mxu0 0.0
    %8845 = vmatprep.subr.mxu0 0.0
    %8846 = vmatpush2.msra.mxu0 0.0
    %8847 = vmatprep.subr.mxu0 0.0
    %8848 = vmatpush2.msra.mxu0 0.0
    %8849 = vmatprep.subr.mxu0 0.0
    %8850 = vmatpush2.msra.mxu0 0.0
    %8851 = vmatprep.subr.mxu0 0.0
    %8852 = vmatpush2.msra.mxu0 0.0
    %8853 = vmatprep.subr.mxu0 0.0
    %8854 = vmatpush2.msra.mxu0 0.0
    %8855 = vmatprep.mubr.f32.mxu0 0.0
    %8856 = vmatmul.mubr.f32.gmra.mxu0 %v8787
    %v8857 = vpop.f32.mrf.mxu0
    %v8858 = vadd.f32 %v8780, %v8857
    %v8859 = vpop.f32.mrf.mxu0
    %8860 = vmatprep.mubr.f32.mxu0 0.0
    %8861 = vmatmul.mubr.f32.gmra.mxu0 %v8789
    %v8862 = vpop.f32.mrf.mxu0
    %v8863 = vadd.f32 %v8780, %v8862
    %v8864 = vpop.f32.mrf.mxu0
    %8865 = vdwg.mxu0
    %v8866 = vmax.f32 %v8858, 0.0
    %v8867 = vmax.f32 %v8863, 0.0
    %8872 = vrot.lane.b32.xlu0 %v6110, 64
    %v8873 = vpop.permute.xlu0 %8872
    %8874 = vrot.lane.b32.xlu0 %v6111, 64
    %v8875 = vpop.permute.xlu0 %8874
    %8876 = vrot.lane.b32.xlu0 %v6112, 64
    %v8877 = vpop.permute.xlu0 %8876
    %8878 = vrot.lane.b32.xlu0 %v6113, 64
    %v8879 = vpop.permute.xlu0 %8878
    %8881 = vrot.lane.b32.xlu0 %v8780, 64
    %v8882 = vpop.permute.xlu0 %8881
    %v8885 = vsel %vm1471, %v8866, 0
    %v8888 = vsel %vm1471, %v8867, 0
    %v8890 = vsel %vm1471, %v8873, 0
    %v8892 = vsel %vm1471, %v8875, 0
    %v8894 = vsel %vm1471, %v8877, 0
    %v8896 = vsel %vm1471, %v8879, 0
    %8898 = vmatprep.subr.mxu0 0.0
    %8899 = vmatpush1.xpose.msra.mxu0 0.0
    %8900 = vmatprep.subr.mxu0 0.0
    %8901 = vmatpush1.xpose.msra.mxu0 0.0
    %8902 = vmatprep.subr.mxu0 0.0
    %8903 = vmatpush1.xpose.msra.mxu0 0.0
    %8904 = vmatprep.subr.mxu0 0.0
    %8905 = vmatpush1.xpose.msra.mxu0 0.0
    %8906 = vmatprep.subr.mxu0 0.0
    %8907 = vmatpush1.xpose.msra.mxu0 0.0
    %8908 = vmatprep.subr.mxu0 0.0
    %8909 = vmatpush1.xpose.msra.mxu0 0.0
    %8910 = vmatprep.subr.mxu0 0.0
    %8911 = vmatpush1.xpose.msra.mxu0 0.0
    %8912 = vmatprep.subr.mxu0 0.0
    %8913 = vmatpush1.xpose.msra.mxu0 0.0
    %8914 = vmatprep.subr.mxu0 0.0
    %8915 = vmatpush1.xpose.msra.mxu0 0.0
    %8916 = vmatprep.subr.mxu0 0.0
    %8917 = vmatpush1.xpose.msra.mxu0 0.0
    %8918 = vmatprep.subr.mxu0 0.0
    %8919 = vmatpush1.xpose.msra.mxu0 0.0
    %8920 = vmatprep.subr.mxu0 0.0
    %8921 = vmatpush1.xpose.msra.mxu0 0.0
    %8922 = vmatprep.subr.mxu0 0.0
    %8923 = vmatpush1.xpose.msra.mxu0 %v8896
    %8924 = vmatprep.subr.mxu0 0.0
    %8925 = vmatpush1.xpose.msra.mxu0 %v8894
    %8926 = vmatprep.subr.mxu0 0.0
    %8927 = vmatpush1.xpose.msra.mxu0 %v8892
    %8928 = vmatprep.subr.mxu0 0.0
    %8929 = vmatpush1.xpose.msra.mxu0 %v8890
    %8930 = vmatprep.subr.mxu0 0.0
    %8931 = vmatpush2.xpose.msra.mxu0 0.0
    %8932 = vmatprep.subr.mxu0 0.0
    %8933 = vmatpush2.xpose.msra.mxu0 0.0
    %8934 = vmatprep.subr.mxu0 0.0
    %8935 = vmatpush2.xpose.msra.mxu0 0.0
    %8936 = vmatprep.subr.mxu0 0.0
    %8937 = vmatpush2.xpose.msra.mxu0 0.0
    %8938 = vmatprep.subr.mxu0 0.0
    %8939 = vmatpush2.xpose.msra.mxu0 0.0
    %8940 = vmatprep.subr.mxu0 0.0
    %8941 = vmatpush2.xpose.msra.mxu0 0.0
    %8942 = vmatprep.subr.mxu0 0.0
    %8943 = vmatpush2.xpose.msra.mxu0 0.0
    %8944 = vmatprep.subr.mxu0 0.0
    %8945 = vmatpush2.xpose.msra.mxu0 0.0
    %8946 = vmatprep.subr.mxu0 0.0
    %8947 = vmatpush2.xpose.msra.mxu0 0.0
    %8948 = vmatprep.subr.mxu0 0.0
    %8949 = vmatpush2.xpose.msra.mxu0 0.0
    %8950 = vmatprep.subr.mxu0 0.0
    %8951 = vmatpush2.xpose.msra.mxu0 0.0
    %8952 = vmatprep.subr.mxu0 0.0
    %8953 = vmatpush2.xpose.msra.mxu0 0.0
    %8954 = vmatprep.subr.mxu0 0.0
    %8955 = vmatpush2.xpose.msra.mxu0 0.0
    %8956 = vmatprep.subr.mxu0 0.0
    %8957 = vmatpush2.xpose.msra.mxu0 0.0
    %8958 = vmatprep.subr.mxu0 0.0
    %8959 = vmatpush2.xpose.msra.mxu0 0.0
    %8960 = vmatprep.subr.mxu0 0.0
    %8961 = vmatpush2.xpose.msra.mxu0 0.0
    %8962 = vmatprep.mubr.f32.mxu0 0.0
    %8963 = vmatmul.mubr.f32.gmra.mxu0 %v8885
    %v8964 = vpop.f32.mrf.mxu0
    %v8965 = vadd.f32 %v8882, %v8964
    %v8966 = vpop.f32.mrf.mxu0
    %8967 = vmatprep.mubr.f32.mxu0 0.0
    %8968 = vmatmul.mubr.f32.gmra.mxu0 %v8888
    %v8969 = vpop.f32.mrf.mxu0
    %v8970 = vadd.f32 %v8882, %v8969
    %v8971 = vpop.f32.mrf.mxu0
    %8972 = vdwg.mxu0
    %v8975 = vadd.f32 %v8965, %v8784
    %v8976 = vadd.f32 %v8970, %v8786
    %v8977 = vsel %vm83, %v8975, 0.0
    %8978 = vadd.xlane.f32.xlu0 %v8977
    %v8979 = vpop.xlane.xlu0 %8978
    %v8980 = vsel %vm83, %v8976, 0.0
    %8981 = vadd.xlane.f32.xlu0 %v8980
    %v8982 = vpop.xlane.xlu0 %8981
    %v8983 = vmul.f32 %v8979, %v1321
    %v8984 = vmul.f32 %v8982, %v1321
    %v8985 = vsub.f32 %v8975, %v8983
    %v8986 = vsub.f32 %v8976, %v8984
    %v8987 = vmul.f32 %v8985, %v8985
    %v8988 = vmul.f32 %v8986, %v8986
    %v8989 = vsel %vm83, %v8987, 0.0
    %8990 = vadd.xlane.f32.xlu0 %v8989
    %v8991 = vpop.xlane.xlu0 %8990
    %v8992 = vsel %vm83, %v8988, 0.0
    %8993 = vadd.xlane.f32.xlu0 %v8992
    %v8994 = vpop.xlane.xlu0 %8993
    %v8995 = vmul.f32 %v8991, 0.032258064
    %v8996 = vmul.f32 %v8994, 0.032258064
    %v8997 = vrsqrt.pop %v8995
    %v8998 = vmul.f32 %v8995, %v8997
    %vm8999 = vcmp.eq.f32.partialorder %v8995, inf
    %v9000 = vsel %vm8999, %v8995, %v8998
    %vm9001 = vcmp.eq.f32.partialorder %v8995, 0.0
    %v9002 = vand.u32 %v8995, 2147483648
    %v9003 = vsel %vm9001, %v9002, %v9000
    %v9004 = vrsqrt.pop %v8996
    %v9005 = vmul.f32 %v8996, %v9004
    %vm9006 = vcmp.eq.f32.partialorder %v8996, inf
    %v9007 = vsel %vm9006, %v8996, %v9005
    %vm9008 = vcmp.eq.f32.partialorder %v8996, 0.0
    %v9009 = vand.u32 %v8996, 2147483648
    %v9010 = vsel %vm9008, %v9009, %v9007
    %v9011 = vadd.f32 %v9003, 1e-06
    %v9012 = vadd.f32 %v9010, 1e-06
    %v9013 = vrcp.pop %v9011
    %v9014 = vrcp.pop %v9012
    %v9015 = vlaneseq
    %v9016 = vshrl.u32 %v9015, 7
    %v9017 = vsub.s32 0, %v9016
    %v9018 = vrot.slane %v6118, %v9017
    %v9019 = vmul.f32 %v9018, %v8985
    %v9020 = vmul.f32 %v9018, %v8986
    %v9021 = vmul.f32 %v9019, %v9013
    %v9022 = vmul.f32 %v9020, %v9014
    %9024 = vrot.lane.b32.xlu0 %v9018, 96
    %v9025 = vpop.permute.xlu0 %9024
    %v9027 = vadd.f32 %v9021, %v9025
    %v9028 = vadd.f32 %v9022, %v9025
    %9031 = vst.msk [vmem:[#allocation7] sm:$0xff] %vm83, %v4473
    %9032 = vst.msk [vmem:[#allocation7 + $0x8] sm:$0xff] %vm83, %v4475
    %9033 = vst.msk [vmem:[#allocation8] sm:$0xff] %vm83, %v9027
    %9034 = vst.msk [vmem:[#allocation8 + $0x8] sm:$0xff] %vm83, %v9028
    // Predicated region
    $region38: #{mca_ed.1} parent=1 // pred_check
      _
    $region39: #{mca_ed.1} parent=1 // pred_check_branch
      %9036 = sbr.rel (0) target = $region41
    $region40: #{mca_ed.1} parent=1 // pred_region
      %s9038 = ssub.s32 256, 256
      %9039 = vsyncadd [#allocation4], %s9038
      %s9040 = sshll.u32 [#allocation7], 4
      %s9041 = int_to_ptr.vmem [resolvable:$true] %s9040
      %9046 = dma.vmem_to_hbm [thread:$0]  %s9041, 256, %s7, [#allocation4], 128, 128, 8
    $region41: #{mca_ed.1} parent=1 // pred_fallthru
      _
    // Predicated region
    $region42: #{mca_ed.1} parent=1 // pred_check
      _
    $region43: #{mca_ed.1} parent=1 // pred_check_branch
      %9048 = sbr.rel (0) target = $region45
    $region44: #{mca_ed.1} parent=1 // pred_region
      %s9050 = ssub.s32 256, 256
      %9051 = vsyncadd [#allocation9], %s9050
      %s9052 = sshll.u32 [#allocation8], 4
      %s9053 = int_to_ptr.vmem [resolvable:$true] %s9052
      %9058 = dma.vmem_to_hbm [thread:$0]  %s9053, 256, %s8, [#allocation9], 128, 128, 8
    $region45: #{mca_ed.1} parent=1 // pred_fallthru
      _
    // Predicated region
    $region46: #{mca_ed.1} parent=1 // pred_check
      _
    $region47: #{mca_ed.1} parent=1 // pred_check_branch
      %9060 = sbr.rel (0) target = $region49
    $region48: #{mca_ed.1} parent=1 // pred_region
      %9061 = dma.done [#allocation4], 256
    $region49: #{mca_ed.1} parent=1 // pred_fallthru
      _
    // Predicated region
    $region50: #{mca_ed.1} parent=1 // pred_check
      _
    $region51: #{mca_ed.1} parent=1 // pred_check_branch
      %9063 = sbr.rel (0) target = $region53
    $region52: #{mca_ed.1} parent=1 // pred_region
      %9064 = dma.done [#allocation9], 256
    $region53: #{mca_ed.1} parent=1 // pred_fallthru
      _
    %9065 = vsyncpa [#allocation3], 1
    %9066 = vsyncpa [#allocation6], 1
    %9067 = vsyncpa [#allocation4], 1
    %9068 = vsyncpa [#allocation9], 1

</llo_original>
